<compile_context>
chip_gen: v7x
topology: tpu7x:2x2x1
jax: 0.10.0
libtpu: 0.0.40
codegen_flags: <defaults>
</compile_context>

<pallas_src>
import itertools
import math

import numpy as np
import jax
import jax.numpy as jnp
from jax.experimental import pallas as pl
from jax.experimental.pallas import tpu as pltpu

NB = 8          # 2**3 blades of Cl(3)
NGRADES = 4     # grades 0..3
EPS = 1e-6      # NormalizationLayer epsilon (CGENN)
GRADE_OF_BLADE = (0, 1, 1, 1, 2, 2, 2, 3)
HI = jax.lax.Precision.HIGHEST     # only used by the pure-JAX reference check


# ----------------------------------------------------------------------------
# Clifford algebra tables (glue, numpy)
# ----------------------------------------------------------------------------
def _blade_mul(a, b, metric_diag):
    """Product of two basis blades in an orthogonal basis with diagonal metric."""
    lst = list(a) + list(b)
    coeff = 1.0
    while True:
        changed = False
        j = 0
        while j < len(lst) - 1:
            if lst[j] == lst[j + 1]:
                coeff *= float(metric_diag[lst[j]])
                del lst[j + 1]
                del lst[j]
                changed = True
                j = max(j - 1, 0)
            elif lst[j] > lst[j + 1]:
                lst[j], lst[j + 1] = lst[j + 1], lst[j]
                coeff = -coeff
                changed = True
                j += 1
            else:
                j += 1
        if not changed:
            break
    return coeff, tuple(lst)


def build_algebra(metric_diag):
    blades = [()]
    for r in range(1, 4):
        blades += list(itertools.combinations(range(3), r))
    index_of = {b: i for i, b in enumerate(blades)}
    cayley = np.zeros((NB, NB, NB), np.float32)
    for i, bi in enumerate(blades):
        for k, bk in enumerate(blades):
            c, res = _blade_mul(bi, bk, metric_diag)
            cayley[i, index_of[res], k] += c
    grades = np.array([len(b) for b in blades], np.int32)          # [8]
    blade_q = np.array(
        [np.prod([metric_diag[g] for g in b]) if b else 1.0 for b in blades],
        np.float32,
    )                                                              # [8]
    return cayley, grades, blade_q


# ----------------------------------------------------------------------------
# Dense operand construction (glue, numpy)
# ----------------------------------------------------------------------------
def _sigmoid_np(x):
    return 1.0 / (1.0 + np.exp(-x))


def mvlinear_dense(w, grades):
    """w: [Cout, Cin, 4] per-grade MVLinear weight -> dense [Cin*8, Cout*8]."""
    c_out, c_in, _ = w.shape
    w_exp = w[..., grades]                                  # [Cout, Cin, 8]
    m = np.einsum("mni,ij->nimj", w_exp, np.eye(NB, dtype=np.float32))
    return m.reshape(c_in * NB, c_out * NB).astype(np.float32)


def fcgp_dense(wr, wl, wp, bias, a_norm, grades, blade_q, cayley):
    """Dense operands for one FullyConnectedSteerableGP layer.

    wr : [Cin, Cin, 4]   (linear_right, no bias)
    wl : [Cout, Cin, 4]  (linear_left, scalar bias)
    wp : [Cout, Cin, 4, 4, 4]
    Large matrices are stored bf16 (kernel accumulates in f32); small
    elementwise operands (sab, bias) stay f32.  The final 1/sqrt(2) is folded
    into wgp / wl / bias.
    """
    c_out, c_in = wl.shape[0], wl.shape[1]
    f_in = c_in * NB
    f_out = c_out * NB
    s = 1.0 / math.sqrt(2.0)

    Wr = mvlinear_dense(wr, grades)                         # [f_in, f_in]

    # wrb_cat: column block k broadcasts blade k of xr_raw over the 8 blades of
    # each channel:  (x @ wrb_cat)[:, k*f_in + n*8 + i'] = xr_raw[:, n*8 + k]
    Wr3 = Wr.reshape(f_in, c_in, NB)
    wrb = np.concatenate(
        [np.repeat(Wr3[:, :, k][:, :, None], NB, axis=2).reshape(f_in, f_in)
         for k in range(NB)], axis=1).astype(np.float32)    # [f_in, 8*f_in]

    # qnb_cat / sab_cat: one block per GRADE (deduplicated from 8 blades to 4):
    #   (xr_raw^2 @ qnb_cat)[:, g*f_in + n*8 + i'] = q[b, n, g]
    sig = _sigmoid_np(a_norm).astype(np.float32)            # [c_in, 4]
    qnb_blocks, sab_blocks = [], []
    for g in range(NGRADES):
        blk = (blade_q * (grades == g))[:, None] * np.ones((1, NB), np.float32)
        qnb_blocks.append(np.kron(np.eye(c_in, dtype=np.float32), blk))
        sab_blocks.append(np.repeat(sig[:, g], NB)[None, :])
    qnb = np.concatenate(qnb_blocks, axis=1).astype(np.float32)   # [f_in, 4*f_in]
    sab = np.concatenate(sab_blocks, axis=1).astype(np.float32)   # [1, 4*f_in]

    # wgp_big: stacked geometric-product matrices, row block k:
    #   wgp_big[k*f_in + (n*8+i), m*8+j] = cayley[i,j,k] * w5[m,n,i,j,k] / sqrt(2)
    w5 = wp[:, :, grades][:, :, :, grades][:, :, :, :, grades]    # [Cout,Cin,8,8,8]
    wgp = (np.einsum("ijk,mnijk->knimj", cayley, w5) * s).reshape(
        NB * f_in, f_out).astype(np.float32)                       # [8*f_in, f_out]

    Wl = (mvlinear_dense(wl, grades) * s).astype(np.float32)       # [f_in, f_out]
    bvec = np.zeros((1, f_out), np.float32)
    bvec[0, np.arange(c_out) * NB] = bias * s                      # bias -> grade 0

    return dict(wr=jnp.asarray(Wr, jnp.bfloat16),
                wrb=jnp.asarray(wrb, jnp.bfloat16),
                qnb=jnp.asarray(qnb, jnp.bfloat16),
                sab=jnp.asarray(sab),
                wgp=jnp.asarray(wgp, jnp.bfloat16),
                wl=jnp.asarray(Wl, jnp.bfloat16),
                bias=jnp.asarray(bvec))


def mvsilu_dense(c, grades, blade_q, a_list, b_list):
    blk = (grades[:, None] == grades[None, :]).astype(np.float32) * blade_q[:, None]
    qm = np.kron(np.eye(c, dtype=np.float32), blk).astype(np.float32)
    mask = (np.arange(c * NB) % NB == 0).astype(np.float32).reshape(1, c * NB)
    a_all = np.stack([a[:, grades].reshape(1, c * NB) for a in a_list]).astype(np.float32)
    b_all = np.stack([b[:, grades].reshape(1, c * NB) for b in b_list]).astype(np.float32)
    return dict(qm=jnp.asarray(qm, jnp.bfloat16), mask=jnp.asarray(mask),
                a_all=jnp.asarray(a_all), b_all=jnp.asarray(b_all))


def pad_cin(arr, c_new, axis):
    pad_width = [(0, 0)] * arr.ndim
    pad_width[axis] = (0, c_new - arr.shape[axis])
    return np.pad(arr, pad_width).astype(np.float32)


# ----------------------------------------------------------------------------
# Fused Pallas kernel
# ----------------------------------------------------------------------------
FC_KEYS = ("wr", "wrb", "qnb", "sab", "wgp", "wl", "bias")
SILU_KEYS = ("qm", "mask", "a_all", "b_all")


def _fcgp_compute(x, wr, wrb, qnb, sab, wgp, wl, bias):
    """FullyConnectedSteerableGeometricProductLayer on a [TB, Cin*8] f32 tile."""
    f_in = x.shape[1]
    x_bf = x.astype(jnp.bfloat16)

    xr = jnp.dot(x_bf, wr[...], preferred_element_type=jnp.float32)   # [TB, f_in]
    xr2 = (xr * xr).astype(jnp.bfloat16)
    # per-grade quadratic forms, broadcast over the 8 blades of each channel
    q_all = jnp.dot(xr2, qnb[...], preferred_element_type=jnp.float32)  # [TB, 4*f_in]
    den = sab[...] * (jnp.sqrt(jnp.abs(q_all)) - 1.0) + (1.0 + EPS)
    inv_den = pl.reciprocal(den, approx=True)                           # EUP slot
    # per-blade-k broadcast of xr (wr folded in):  [TB, 8*f_in]
    r_all = jnp.dot(x_bf, wrb[...], preferred_element_type=jnp.float32)

    chunks = []
    for k in range(NB):                                   # unrolled, static slices
        g = GRADE_OF_BLADE[k]
        r_k = r_all[:, k * f_in:(k + 1) * f_in]
        inv_k = inv_den[:, g * f_in:(g + 1) * f_in]
        chunks.append((x * r_k * inv_k).astype(jnp.bfloat16))
    x_big = jnp.concatenate(chunks, axis=1)               # [TB, 8*f_in] bf16
    gp = jnp.dot(x_big, wgp[...], preferred_element_type=jnp.float32)   # one wide matmul

    left = jnp.dot(x_bf, wl[...], preferred_element_type=jnp.float32) + bias[...]
    return left + gp                                       # 1/sqrt(2) folded offline


def _make_fused_kernel(num_silu):
    def kernel(x_ref, *refs):
        o_ref = refs[-1]
        w = refs[:-1]
        f1 = w[0:7]
        qm, mask, a_all, b_all = w[7:11]
        f2 = w[11:18]

        h = _fcgp_compute(x_ref[...], *f1)                 # [TB, HID*8] f32

        # MVSiLU x num_silu — hoist invariant loads / compares out of the loop.
        qm_v = qm[...]
        mask_b = mask[...] > 0.5
        a_v = a_all[...]
        b_v = b_all[...]
        for li in range(num_silu):
            h2 = (h * h).astype(jnp.bfloat16)
            q = jnp.dot(h2, qm_v, preferred_element_type=jnp.float32)
            val = jnp.where(mask_b, h, q)                  # grade-0 lanes use raw scalar
            h = jax.nn.sigmoid(a_v[li] * val + b_v[li]) * h

        h = _fcgp_compute(h, *f2)                          # [TB, OUT*8]
        o_ref[...] = h.astype(o_ref.dtype)
    return kernel


def o3cgmlp_fused(x_flat, fc1_mats, silu_mats, fc2_mats, num_silu, block_b):
    b, f_in = x_flat.shape
    f_out = fc2_mats["wl"].shape[1]
    weights = ([fc1_mats[k] for k in FC_KEYS]
               + [silu_mats[k] for k in SILU_KEYS]
               + [fc2_mats[k] for k in FC_KEYS])

    in_specs = [pl.BlockSpec((block_b, f_in), lambda i: (i, 0))]
    in_specs += [pl.BlockSpec(w.shape, (lambda nd: (lambda i: (0,) * nd))(w.ndim))
                 for w in weights]

    # TODO(synk): when BLOCK_B is raised past ~64 move the layer activations /
    #             gp accumulator into an explicit pltpu.VMEM scratch to keep
    #             regalloc spills planned.
    return pl.pallas_call(
        _make_fused_kernel(num_silu),
        out_shape=jax.ShapeDtypeStruct((b, f_out), jnp.float32),
        grid=(b // block_b,),
        in_specs=in_specs,
        out_specs=pl.BlockSpec((block_b, f_out), lambda i: (i, 0)),
        compiler_params=pltpu.CompilerParams(
            # "arbitrary": at small batches splitting across v7x's two cores
            # would duplicate the (dominant) weight DMA; flip to "parallel"
            # once per-core batch is large enough to amortize it.
            dimension_semantics=("arbitrary",),
            vmem_limit_bytes=32 * 1024 * 1024),
    )(x_flat, *weights)


# ----------------------------------------------------------------------------
# Parameter construction (deterministic, glue)
# ----------------------------------------------------------------------------
def make_fcgp_params(key, c_in, c_out):
    k1, k2, k3 = jax.random.split(key, 3)
    std_lin = 1.0 / math.sqrt(c_in)
    std_gp = 1.0 / math.sqrt(c_in * NGRADES)
    wr = np.asarray(jax.random.normal(k1, (c_in, c_in, NGRADES)), np.float32) * std_lin
    wl = np.asarray(jax.random.normal(k2, (c_out, c_in, NGRADES)), np.float32) * std_lin
    wp = np.asarray(jax.random.normal(k3, (c_out, c_in, NGRADES, NGRADES, NGRADES)),
                    np.float32) * std_gp
    bias = np.zeros((c_out,), np.float32)                 # torch init: zeros
    a_norm = np.zeros((c_in, NGRADES), np.float32)        # NormalizationLayer init=0
    return dict(wr=wr, wl=wl, wp=wp, bias=bias, a_norm=a_norm)


# ----------------------------------------------------------------------------
# Pure-JAX reference (mirrors the PyTorch layer math, used only for checking;
# runs at HIGHEST precision — the kernel uses bf16 weights + f32 accumulation)
# ----------------------------------------------------------------------------
def _ref_mvlinear(x, w, bias, grades):
    y = jnp.einsum("bni,mni->bmi", x, w[:, :, grades], precision=HI)
    if bias is not None:
        y = y.at[:, :, 0].add(bias[None, :])
    return y


def _ref_qs(x, grades, blade_q):
    qb = blade_q[None, None, :] * x * x
    cols = [np.where(grades == g)[0] for g in range(NGRADES)]
    return jnp.stack([qb[..., c].sum(-1) for c in cols], axis=-1)


def _ref_fcgp(x, p, grades, blade_q, cayley):
    xr = _ref_mvlinear(x, p["wr"], None, grades)
    nrm = jnp.sqrt(jnp.abs(_ref_qs(xr, grades, blade_q)))
    nrm = jax.nn.sigmoid(p["a_norm"])[None] * (nrm - 1.0) + 1.0
    xr = xr / (nrm[..., grades] + EPS)
    w5 = p["wp"][:, :, grades][:, :, :, grades][:, :, :, :, grades]
    weight = cayley[None, None] * w5
    gp = jnp.einsum("bni,mnijk,bnk->bmj", x, weight, xr, precision=HI)
    left = _ref_mvlinear(x, p["wl"], p["bias"], grades)
    return (left + gp) / math.sqrt(2.0)


def _ref_mvsilu(x, p, grades, blade_q):
    q = _ref_qs(x, grades, blade_q)
    vals = q.at[..., 0].set(x[..., 0])
    t = p["a"][None] * vals + p["b"][None]
    return jax.nn.sigmoid(t[..., grades]) * x


# ----------------------------------------------------------------------------
# Main
# ----------------------------------------------------------------------------
if __name__ == "__main__":
    IN_F, HID_F, OUT_F, NUM_LAYERS = 3, 32, 1, 6      # module defaults
    NUM_SILU = NUM_LAYERS - 1
    IN_PAD = 16                                       # pad 3 -> 16 channels (128 lanes)
    B = 64
    BLOCK_B = 64                                      # full batch in one tile -> grid=(1,)

    key = jax.random.PRNGKey(0)
    k_metric, k_pts, k_prod, k_l1, k_l2 = jax.random.split(key, 5)

    # learnable metric:  0.5*diag(algebra.metric) + 1e-4*rand, then symmetrized
    metric_param = (0.5 * np.eye(3, dtype=np.float32)
                    + 1e-4 * np.asarray(jax.random.uniform(k_metric, (3, 3)), np.float32))
    metric_sym = metric_param + metric_param.T
    eigvals, P_np = np.linalg.eigh(metric_sym)          # symmetric -> real eigenbasis
    det_P = float(np.linalg.det(P_np))

    cayley_np, grades_np, blade_q_np = build_algebra(eigvals)
    assert tuple(int(g) for g in grades_np) == GRADE_OF_BLADE
    cayley = jnp.asarray(cayley_np)
    blade_q = jnp.asarray(blade_q_np)
    P = jnp.asarray(P_np, jnp.float32)

    # raw (unpadded) parameters — used by the pure-JAX reference
    fc1_raw = make_fcgp_params(k_l1, IN_F, HID_F)
    fc2_raw = make_fcgp_params(k_l2, HID_F, OUT_F)
    silu_raw = [dict(a=np.ones((HID_F, NGRADES), np.float32),
                     b=np.zeros((HID_F, NGRADES), np.float32))
                for _ in range(NUM_SILU)]

    # padded / densified operands for the fused kernel
    fc1_pad = dict(
        wr=pad_cin(pad_cin(fc1_raw["wr"], IN_PAD, 0), IN_PAD, 1),
        wl=pad_cin(fc1_raw["wl"], IN_PAD, 1),
        wp=pad_cin(fc1_raw["wp"], IN_PAD, 1),
        bias=fc1_raw["bias"],
        a_norm=pad_cin(fc1_raw["a_norm"], IN_PAD, 0),
    )
    fc1_mats = fcgp_dense(fc1_pad["wr"], fc1_pad["wl"], fc1_pad["wp"],
                          fc1_pad["bias"], fc1_pad["a_norm"],
                          grades_np, blade_q_np, cayley_np)
    fc2_mats = fcgp_dense(fc2_raw["wr"], fc2_raw["wl"], fc2_raw["wp"],
                          fc2_raw["bias"], fc2_raw["a_norm"],
                          grades_np, blade_q_np, cayley_np)
    silu_mats = mvsilu_dense(HID_F, grades_np, blade_q_np,
                             [p["a"] for p in silu_raw], [p["b"] for p in silu_raw])

    # batch = (points, products)
    points = jax.random.normal(k_pts, (B, IN_F, 3), jnp.float32)
    products = jax.random.normal(k_prod, (B,), jnp.float32)

    # ---------------- forward (single fused Pallas kernel) ----------------
    pts_rot = jnp.matmul(points, P, precision=HI)                       # [B, 3, 3]
    x3 = jnp.zeros((B, IN_F, NB), jnp.float32).at[..., 1:4].set(pts_rot)  # embed_grade(.,1)
    x_pad = jnp.zeros((B, IN_PAD, NB), jnp.float32).at[:, :IN_F].set(x3)
    x_flat = x_pad.reshape(B, IN_PAD * NB)                              # [B, 128]

    out = o3cgmlp_fused(x_flat, fc1_mats, silu_mats, fc2_mats, NUM_SILU, BLOCK_B)
    y = out[:, 7] / det_P               # pseudoscalar blade of (only) output channel
    loss_vec = (y - products) ** 2      # F.mse_loss(..., reduction='none')
    loss_mean = loss_vec.mean()
    jax.block_until_ready(loss_mean)

    # ---------------- pure-JAX reference check ----------------
    fc1_ref = {k: jnp.asarray(v) for k, v in fc1_raw.items()}
    fc2_ref = {k: jnp.asarray(v) for k, v in fc2_raw.items()}
    ref = _ref_fcgp(x3, fc1_ref, grades_np, blade_q, cayley)
    for p in silu_raw:
        ref = _ref_mvsilu(ref, {k: jnp.asarray(v) for k, v in p.items()},
                          grades_np, blade_q)
    ref = _ref_fcgp(ref, fc2_ref, grades_np, blade_q, cayley)
    y_ref = ref[:, 0, -1] / det_P
    loss_ref = ((y_ref - products) ** 2).mean()

    # Tolerance accounts for bf16 weight storage + single-pass MXU matmuls and
    # the approx EUP reciprocal accumulated over the 7-layer chain (the
    # reference runs at HIGHEST precision in f32).
    np.testing.assert_allclose(np.asarray(y), np.asarray(y_ref), rtol=1e-1, atol=1e-1)
    np.testing.assert_allclose(float(loss_mean), float(loss_ref), rtol=1e-1, atol=1e-1)

    result = (loss_mean, {"loss": loss_vec})            # matches module's return
    jax.block_until_ready(result[0])
    print("KERNEL_OK")
</pallas_src>

<mosaic_0001>
module attributes {stable_mosaic.version = 11 : i64} {
  func.func @kernel(%arg0: i32, %arg1: memref<64x128xf32, #tpu.memory_space<vmem>>, %arg2: memref<128x128xbf16, #tpu.memory_space<vmem>>, %arg3: memref<128x1024xbf16, #tpu.memory_space<vmem>>, %arg4: memref<128x512xbf16, #tpu.memory_space<vmem>>, %arg5: memref<1x512xf32, #tpu.memory_space<vmem>>, %arg6: memref<1024x256xbf16, #tpu.memory_space<vmem>>, %arg7: memref<128x256xbf16, #tpu.memory_space<vmem>>, %arg8: memref<1x256xf32, #tpu.memory_space<vmem>>, %arg9: memref<256x256xbf16, #tpu.memory_space<vmem>>, %arg10: memref<1x256xf32, #tpu.memory_space<vmem>>, %arg11: memref<5x1x256xf32, #tpu.memory_space<vmem>>, %arg12: memref<5x1x256xf32, #tpu.memory_space<vmem>>, %arg13: memref<256x256xbf16, #tpu.memory_space<vmem>>, %arg14: memref<256x2048xbf16, #tpu.memory_space<vmem>>, %arg15: memref<256x1024xbf16, #tpu.memory_space<vmem>>, %arg16: memref<1x1024xf32, #tpu.memory_space<vmem>>, %arg17: memref<2048x8xbf16, #tpu.memory_space<vmem>>, %arg18: memref<256x8xbf16, #tpu.memory_space<vmem>>, %arg19: memref<1x8xf32, #tpu.memory_space<vmem>>, %arg20: memref<64x8xf32, #tpu.memory_space<vmem>>) attributes {dimension_semantics = [#tpu.dimension_semantics<arbitrary>], iteration_bounds = array<i64: 1>, scalar_prefetch = 0 : i64, scratch_operands = 0 : i64, tpu.core_type = #tpu.core_type<tc>, window_params = [{transform_indices = @transform_0, window_bounds = array<i64: 64, 128>}, {pipeline_mode = #tpu.pipeline_mode<synchronous>, transform_indices = @transform_1, window_bounds = array<i64: 128, 128>}, {pipeline_mode = #tpu.pipeline_mode<synchronous>, transform_indices = @transform_2, window_bounds = array<i64: 128, 1024>}, {pipeline_mode = #tpu.pipeline_mode<synchronous>, transform_indices = @transform_3, window_bounds = array<i64: 128, 512>}, {pipeline_mode = #tpu.pipeline_mode<synchronous>, transform_indices = @transform_4, window_bounds = array<i64: 1, 512>}, {pipeline_mode = #tpu.pipeline_mode<synchronous>, transform_indices = @transform_5, window_bounds = array<i64: 1024, 256>}, {pipeline_mode = #tpu.pipeline_mode<synchronous>, transform_indices = @transform_6, window_bounds = array<i64: 128, 256>}, {pipeline_mode = #tpu.pipeline_mode<synchronous>, transform_indices = @transform_7, window_bounds = array<i64: 1, 256>}, {pipeline_mode = #tpu.pipeline_mode<synchronous>, transform_indices = @transform_8, window_bounds = array<i64: 256, 256>}, {pipeline_mode = #tpu.pipeline_mode<synchronous>, transform_indices = @transform_9, window_bounds = array<i64: 1, 256>}, {pipeline_mode = #tpu.pipeline_mode<synchronous>, transform_indices = @transform_10, window_bounds = array<i64: 5, 1, 256>}, {pipeline_mode = #tpu.pipeline_mode<synchronous>, transform_indices = @transform_11, window_bounds = array<i64: 5, 1, 256>}, {pipeline_mode = #tpu.pipeline_mode<synchronous>, transform_indices = @transform_12, window_bounds = array<i64: 256, 256>}, {pipeline_mode = #tpu.pipeline_mode<synchronous>, transform_indices = @transform_13, window_bounds = array<i64: 256, 2048>}, {pipeline_mode = #tpu.pipeline_mode<synchronous>, transform_indices = @transform_14, window_bounds = array<i64: 256, 1024>}, {pipeline_mode = #tpu.pipeline_mode<synchronous>, transform_indices = @transform_15, window_bounds = array<i64: 1, 1024>}, {pipeline_mode = #tpu.pipeline_mode<synchronous>, transform_indices = @transform_16, window_bounds = array<i64: 2048, 8>}, {pipeline_mode = #tpu.pipeline_mode<synchronous>, transform_indices = @transform_17, window_bounds = array<i64: 256, 8>}, {pipeline_mode = #tpu.pipeline_mode<synchronous>, transform_indices = @transform_18, window_bounds = array<i64: 1, 8>}, {transform_indices = @transform_19, window_bounds = array<i64: 64, 8>}]} {
    %c0 = arith.constant 0 : index
    %c0_0 = arith.constant 0 : index
    %0 = vector.load %arg1[%c0, %c0_0] : memref<64x128xf32, #tpu.memory_space<vmem>>, vector<64x128xf32>
    %1 = arith.truncf %0 : vector<64x128xf32> to vector<64x128xbf16>
    %c0_1 = arith.constant 0 : index
    %c0_2 = arith.constant 0 : index
    %2 = vector.load %arg2[%c0_1, %c0_2] : memref<128x128xbf16, #tpu.memory_space<vmem>>, vector<128x128xbf16>
    %cst = arith.constant dense<0.000000e+00> : vector<64x128xf32>
    %3 = tpu.matmul %1, %2, %cst {dimension_numbers = #tpu.dot_dimension_numbers<[1], [0], [0], [1], [0, 0, 1, 1], [], []>} : vector<64x128xbf16>, vector<128x128xbf16>, vector<64x128xf32> -> vector<64x128xf32>
    %4 = arith.mulf %3, %3 : vector<64x128xf32>
    %5 = arith.truncf %4 : vector<64x128xf32> to vector<64x128xbf16>
    %c0_3 = arith.constant 0 : index
    %c0_4 = arith.constant 0 : index
    %6 = vector.load %arg4[%c0_3, %c0_4] : memref<128x512xbf16, #tpu.memory_space<vmem>>, vector<128x512xbf16>
    %cst_5 = arith.constant dense<0.000000e+00> : vector<64x512xf32>
    %7 = tpu.matmul %5, %6, %cst_5 {dimension_numbers = #tpu.dot_dimension_numbers<[1], [0], [0], [1], [0, 0, 1, 1], [], []>} : vector<64x128xbf16>, vector<128x512xbf16>, vector<64x512xf32> -> vector<64x512xf32>
    %c0_6 = arith.constant 0 : index
    %c0_7 = arith.constant 0 : index
    %8 = vector.load %arg5[%c0_6, %c0_7] : memref<1x512xf32, #tpu.memory_space<vmem>>, vector<1x512xf32>
    %9 = math.absf %7 : vector<64x512xf32>
    %10 = math.sqrt %9 : vector<64x512xf32>
    %cst_8 = arith.constant 1.000000e+00 : f32
    %11 = vector.broadcast %cst_8 : f32 to vector<64x512xf32>
    %12 = arith.subf %10, %11 : vector<64x512xf32>
    %13 = vector.broadcast %8 : vector<1x512xf32> to vector<64x512xf32>
    %14 = arith.mulf %13, %12 : vector<64x512xf32>
    %cst_9 = arith.constant 1.00000095 : f32
    %15 = vector.broadcast %cst_9 : f32 to vector<64x512xf32>
    %16 = arith.addf %14, %15 : vector<64x512xf32>
    %17 = tpu.reciprocal %16 {approx = true} : vector<64x512xf32> -> vector<64x512xf32>
    %c0_10 = arith.constant 0 : index
    %c0_11 = arith.constant 0 : index
    %18 = vector.load %arg3[%c0_10, %c0_11] : memref<128x1024xbf16, #tpu.memory_space<vmem>>, vector<128x1024xbf16>
    %cst_12 = arith.constant dense<0.000000e+00> : vector<64x1024xf32>
    %19 = tpu.matmul %1, %18, %cst_12 {dimension_numbers = #tpu.dot_dimension_numbers<[1], [0], [0], [1], [0, 0, 1, 1], [], []>} : vector<64x128xbf16>, vector<128x1024xbf16>, vector<64x1024xf32> -> vector<64x1024xf32>
    %20 = vector.extract_strided_slice %19 {offsets = [0, 0], sizes = [64, 128], strides = [1, 1]} : vector<64x1024xf32> to vector<64x128xf32>
    %21 = vector.extract_strided_slice %17 {offsets = [0, 0], sizes = [64, 128], strides = [1, 1]} : vector<64x512xf32> to vector<64x128xf32>
    %22 = arith.mulf %0, %20 : vector<64x128xf32>
    %23 = arith.mulf %22, %21 : vector<64x128xf32>
    %24 = arith.truncf %23 : vector<64x128xf32> to vector<64x128xbf16>
    %25 = vector.extract_strided_slice %19 {offsets = [0, 128], sizes = [64, 128], strides = [1, 1]} : vector<64x1024xf32> to vector<64x128xf32>
    %26 = vector.extract_strided_slice %17 {offsets = [0, 128], sizes = [64, 128], strides = [1, 1]} : vector<64x512xf32> to vector<64x128xf32>
    %27 = arith.mulf %0, %25 : vector<64x128xf32>
    %28 = arith.mulf %27, %26 : vector<64x128xf32>
    %29 = arith.truncf %28 : vector<64x128xf32> to vector<64x128xbf16>
    %30 = vector.extract_strided_slice %19 {offsets = [0, 256], sizes = [64, 128], strides = [1, 1]} : vector<64x1024xf32> to vector<64x128xf32>
    %31 = vector.extract_strided_slice %17 {offsets = [0, 128], sizes = [64, 128], strides = [1, 1]} : vector<64x512xf32> to vector<64x128xf32>
    %32 = arith.mulf %0, %30 : vector<64x128xf32>
    %33 = arith.mulf %32, %31 : vector<64x128xf32>
    %34 = arith.truncf %33 : vector<64x128xf32> to vector<64x128xbf16>
    %35 = vector.extract_strided_slice %19 {offsets = [0, 384], sizes = [64, 128], strides = [1, 1]} : vector<64x1024xf32> to vector<64x128xf32>
    %36 = vector.extract_strided_slice %17 {offsets = [0, 128], sizes = [64, 128], strides = [1, 1]} : vector<64x512xf32> to vector<64x128xf32>
    %37 = arith.mulf %0, %35 : vector<64x128xf32>
    %38 = arith.mulf %37, %36 : vector<64x128xf32>
    %39 = arith.truncf %38 : vector<64x128xf32> to vector<64x128xbf16>
    %40 = vector.extract_strided_slice %19 {offsets = [0, 512], sizes = [64, 128], strides = [1, 1]} : vector<64x1024xf32> to vector<64x128xf32>
    %41 = vector.extract_strided_slice %17 {offsets = [0, 256], sizes = [64, 128], strides = [1, 1]} : vector<64x512xf32> to vector<64x128xf32>
    %42 = arith.mulf %0, %40 : vector<64x128xf32>
    %43 = arith.mulf %42, %41 : vector<64x128xf32>
    %44 = arith.truncf %43 : vector<64x128xf32> to vector<64x128xbf16>
    %45 = vector.extract_strided_slice %19 {offsets = [0, 640], sizes = [64, 128], strides = [1, 1]} : vector<64x1024xf32> to vector<64x128xf32>
    %46 = vector.extract_strided_slice %17 {offsets = [0, 256], sizes = [64, 128], strides = [1, 1]} : vector<64x512xf32> to vector<64x128xf32>
    %47 = arith.mulf %0, %45 : vector<64x128xf32>
    %48 = arith.mulf %47, %46 : vector<64x128xf32>
    %49 = arith.truncf %48 : vector<64x128xf32> to vector<64x128xbf16>
    %50 = vector.extract_strided_slice %19 {offsets = [0, 768], sizes = [64, 128], strides = [1, 1]} : vector<64x1024xf32> to vector<64x128xf32>
    %51 = vector.extract_strided_slice %17 {offsets = [0, 256], sizes = [64, 128], strides = [1, 1]} : vector<64x512xf32> to vector<64x128xf32>
    %52 = arith.mulf %0, %50 : vector<64x128xf32>
    %53 = arith.mulf %52, %51 : vector<64x128xf32>
    %54 = arith.truncf %53 : vector<64x128xf32> to vector<64x128xbf16>
    %55 = vector.extract_strided_slice %19 {offsets = [0, 896], sizes = [64, 128], strides = [1, 1]} : vector<64x1024xf32> to vector<64x128xf32>
    %56 = vector.extract_strided_slice %17 {offsets = [0, 384], sizes = [64, 128], strides = [1, 1]} : vector<64x512xf32> to vector<64x128xf32>
    %57 = arith.mulf %0, %55 : vector<64x128xf32>
    %58 = arith.mulf %57, %56 : vector<64x128xf32>
    %59 = arith.truncf %58 : vector<64x128xf32> to vector<64x128xbf16>
    %60 = tpu.concatenate %24, %29, %34, %39, %44, %49, %54, %59 in 1 : vector<64x128xbf16>, vector<64x128xbf16>, vector<64x128xbf16>, vector<64x128xbf16>, vector<64x128xbf16>, vector<64x128xbf16>, vector<64x128xbf16>, vector<64x128xbf16> -> vector<64x1024xbf16>
    %c0_13 = arith.constant 0 : index
    %c0_14 = arith.constant 0 : index
    %61 = vector.load %arg6[%c0_13, %c0_14] : memref<1024x256xbf16, #tpu.memory_space<vmem>>, vector<1024x256xbf16>
    %cst_15 = arith.constant dense<0.000000e+00> : vector<64x256xf32>
    %62 = tpu.matmul %60, %61, %cst_15 {dimension_numbers = #tpu.dot_dimension_numbers<[1], [0], [0], [1], [0, 0, 1, 1], [], []>} : vector<64x1024xbf16>, vector<1024x256xbf16>, vector<64x256xf32> -> vector<64x256xf32>
    %c0_16 = arith.constant 0 : index
    %c0_17 = arith.constant 0 : index
    %63 = vector.load %arg7[%c0_16, %c0_17] : memref<128x256xbf16, #tpu.memory_space<vmem>>, vector<128x256xbf16>
    %cst_18 = arith.constant dense<0.000000e+00> : vector<64x256xf32>
    %64 = tpu.matmul %1, %63, %cst_18 {dimension_numbers = #tpu.dot_dimension_numbers<[1], [0], [0], [1], [0, 0, 1, 1], [], []>} : vector<64x128xbf16>, vector<128x256xbf16>, vector<64x256xf32> -> vector<64x256xf32>
    %c0_19 = arith.constant 0 : index
    %c0_20 = arith.constant 0 : index
    %65 = vector.load %arg8[%c0_19, %c0_20] : memref<1x256xf32, #tpu.memory_space<vmem>>, vector<1x256xf32>
    %66 = vector.broadcast %65 : vector<1x256xf32> to vector<64x256xf32>
    %67 = arith.addf %64, %66 : vector<64x256xf32>
    %68 = arith.addf %67, %62 : vector<64x256xf32>
    %c0_21 = arith.constant 0 : index
    %c0_22 = arith.constant 0 : index
    %69 = vector.load %arg9[%c0_21, %c0_22] : memref<256x256xbf16, #tpu.memory_space<vmem>>, vector<256x256xbf16>
    %c0_23 = arith.constant 0 : index
    %c0_24 = arith.constant 0 : index
    %70 = vector.load %arg10[%c0_23, %c0_24] : memref<1x256xf32, #tpu.memory_space<vmem>>, vector<1x256xf32>
    %cst_25 = arith.constant 5.000000e-01 : f32
    %71 = vector.broadcast %cst_25 : f32 to vector<1x256xf32>
    %72 = arith.cmpf ogt, %70, %71 : vector<1x256xf32>
    %c0_26 = arith.constant 0 : index
    %c0_27 = arith.constant 0 : index
    %c0_28 = arith.constant 0 : index
    %73 = vector.load %arg11[%c0_26, %c0_27, %c0_28] : memref<5x1x256xf32, #tpu.memory_space<vmem>>, vector<5x1x256xf32>
    %c0_29 = arith.constant 0 : index
    %c0_30 = arith.constant 0 : index
    %c0_31 = arith.constant 0 : index
    %74 = vector.load %arg12[%c0_29, %c0_30, %c0_31] : memref<5x1x256xf32, #tpu.memory_space<vmem>>, vector<5x1x256xf32>
    %75 = arith.mulf %68, %68 : vector<64x256xf32>
    %76 = arith.truncf %75 : vector<64x256xf32> to vector<64x256xbf16>
    %cst_32 = arith.constant dense<0.000000e+00> : vector<64x256xf32>
    %77 = tpu.matmul %76, %69, %cst_32 {dimension_numbers = #tpu.dot_dimension_numbers<[1], [0], [0], [1], [0, 0, 1, 1], [], []>} : vector<64x256xbf16>, vector<256x256xbf16>, vector<64x256xf32> -> vector<64x256xf32>
    %78 = vector.shape_cast %72 : vector<1x256xi1> to vector<1x256xi1>
    %79 = vector.broadcast %78 : vector<1x256xi1> to vector<64x256xi1>
    %80 = arith.select %79, %68, %77 : vector<64x256xi1>, vector<64x256xf32>
    %81 = vector.extract_strided_slice %73 {offsets = [0, 0, 0], sizes = [1, 1, 256], strides = [1, 1, 1]} : vector<5x1x256xf32> to vector<1x1x256xf32>
    %82 = vector.shape_cast %81 : vector<1x1x256xf32> to vector<1x256xf32>
    %83 = vector.broadcast %82 : vector<1x256xf32> to vector<64x256xf32>
    %84 = arith.mulf %83, %80 : vector<64x256xf32>
    %85 = vector.extract_strided_slice %74 {offsets = [0, 0, 0], sizes = [1, 1, 256], strides = [1, 1, 1]} : vector<5x1x256xf32> to vector<1x1x256xf32>
    %86 = vector.shape_cast %85 : vector<1x1x256xf32> to vector<1x256xf32>
    %87 = vector.broadcast %86 : vector<1x256xf32> to vector<64x256xf32>
    %88 = arith.addf %84, %87 : vector<64x256xf32>
    %89 = arith.negf %88 : vector<64x256xf32>
    %90 = math.exp %89 : vector<64x256xf32>
    %cst_33 = arith.constant 1.000000e+00 : f32
    %91 = vector.broadcast %cst_33 : f32 to vector<64x256xf32>
    %92 = arith.addf %91, %90 : vector<64x256xf32>
    %93 = arith.divf %91, %92 : vector<64x256xf32>
    %94 = arith.mulf %93, %68 : vector<64x256xf32>
    %95 = arith.mulf %94, %94 : vector<64x256xf32>
    %96 = arith.truncf %95 : vector<64x256xf32> to vector<64x256xbf16>
    %cst_34 = arith.constant dense<0.000000e+00> : vector<64x256xf32>
    %97 = tpu.matmul %96, %69, %cst_34 {dimension_numbers = #tpu.dot_dimension_numbers<[1], [0], [0], [1], [0, 0, 1, 1], [], []>} : vector<64x256xbf16>, vector<256x256xbf16>, vector<64x256xf32> -> vector<64x256xf32>
    %98 = vector.shape_cast %72 : vector<1x256xi1> to vector<1x256xi1>
    %99 = vector.broadcast %98 : vector<1x256xi1> to vector<64x256xi1>
    %100 = arith.select %99, %94, %97 : vector<64x256xi1>, vector<64x256xf32>
    %101 = vector.extract_strided_slice %73 {offsets = [1, 0, 0], sizes = [1, 1, 256], strides = [1, 1, 1]} : vector<5x1x256xf32> to vector<1x1x256xf32>
    %102 = vector.shape_cast %101 : vector<1x1x256xf32> to vector<1x256xf32>
    %103 = vector.broadcast %102 : vector<1x256xf32> to vector<64x256xf32>
    %104 = arith.mulf %103, %100 : vector<64x256xf32>
    %105 = vector.extract_strided_slice %74 {offsets = [1, 0, 0], sizes = [1, 1, 256], strides = [1, 1, 1]} : vector<5x1x256xf32> to vector<1x1x256xf32>
    %106 = vector.shape_cast %105 : vector<1x1x256xf32> to vector<1x256xf32>
    %107 = vector.broadcast %106 : vector<1x256xf32> to vector<64x256xf32>
    %108 = arith.addf %104, %107 : vector<64x256xf32>
    %109 = arith.negf %108 : vector<64x256xf32>
    %110 = math.exp %109 : vector<64x256xf32>
    %cst_35 = arith.constant 1.000000e+00 : f32
    %111 = vector.broadcast %cst_35 : f32 to vector<64x256xf32>
    %112 = arith.addf %111, %110 : vector<64x256xf32>
    %113 = arith.divf %111, %112 : vector<64x256xf32>
    %114 = arith.mulf %113, %94 : vector<64x256xf32>
    %115 = arith.mulf %114, %114 : vector<64x256xf32>
    %116 = arith.truncf %115 : vector<64x256xf32> to vector<64x256xbf16>
    %cst_36 = arith.constant dense<0.000000e+00> : vector<64x256xf32>
    %117 = tpu.matmul %116, %69, %cst_36 {dimension_numbers = #tpu.dot_dimension_numbers<[1], [0], [0], [1], [0, 0, 1, 1], [], []>} : vector<64x256xbf16>, vector<256x256xbf16>, vector<64x256xf32> -> vector<64x256xf32>
    %118 = vector.shape_cast %72 : vector<1x256xi1> to vector<1x256xi1>
    %119 = vector.broadcast %118 : vector<1x256xi1> to vector<64x256xi1>
    %120 = arith.select %119, %114, %117 : vector<64x256xi1>, vector<64x256xf32>
    %121 = vector.extract_strided_slice %73 {offsets = [2, 0, 0], sizes = [1, 1, 256], strides = [1, 1, 1]} : vector<5x1x256xf32> to vector<1x1x256xf32>
    %122 = vector.shape_cast %121 : vector<1x1x256xf32> to vector<1x256xf32>
    %123 = vector.broadcast %122 : vector<1x256xf32> to vector<64x256xf32>
    %124 = arith.mulf %123, %120 : vector<64x256xf32>
    %125 = vector.extract_strided_slice %74 {offsets = [2, 0, 0], sizes = [1, 1, 256], strides = [1, 1, 1]} : vector<5x1x256xf32> to vector<1x1x256xf32>
    %126 = vector.shape_cast %125 : vector<1x1x256xf32> to vector<1x256xf32>
    %127 = vector.broadcast %126 : vector<1x256xf32> to vector<64x256xf32>
    %128 = arith.addf %124, %127 : vector<64x256xf32>
    %129 = arith.negf %128 : vector<64x256xf32>
    %130 = math.exp %129 : vector<64x256xf32>
    %cst_37 = arith.constant 1.000000e+00 : f32
    %131 = vector.broadcast %cst_37 : f32 to vector<64x256xf32>
    %132 = arith.addf %131, %130 : vector<64x256xf32>
    %133 = arith.divf %131, %132 : vector<64x256xf32>
    %134 = arith.mulf %133, %114 : vector<64x256xf32>
    %135 = arith.mulf %134, %134 : vector<64x256xf32>
    %136 = arith.truncf %135 : vector<64x256xf32> to vector<64x256xbf16>
    %cst_38 = arith.constant dense<0.000000e+00> : vector<64x256xf32>
    %137 = tpu.matmul %136, %69, %cst_38 {dimension_numbers = #tpu.dot_dimension_numbers<[1], [0], [0], [1], [0, 0, 1, 1], [], []>} : vector<64x256xbf16>, vector<256x256xbf16>, vector<64x256xf32> -> vector<64x256xf32>
    %138 = vector.shape_cast %72 : vector<1x256xi1> to vector<1x256xi1>
    %139 = vector.broadcast %138 : vector<1x256xi1> to vector<64x256xi1>
    %140 = arith.select %139, %134, %137 : vector<64x256xi1>, vector<64x256xf32>
    %141 = vector.extract_strided_slice %73 {offsets = [3, 0, 0], sizes = [1, 1, 256], strides = [1, 1, 1]} : vector<5x1x256xf32> to vector<1x1x256xf32>
    %142 = vector.shape_cast %141 : vector<1x1x256xf32> to vector<1x256xf32>
    %143 = vector.broadcast %142 : vector<1x256xf32> to vector<64x256xf32>
    %144 = arith.mulf %143, %140 : vector<64x256xf32>
    %145 = vector.extract_strided_slice %74 {offsets = [3, 0, 0], sizes = [1, 1, 256], strides = [1, 1, 1]} : vector<5x1x256xf32> to vector<1x1x256xf32>
    %146 = vector.shape_cast %145 : vector<1x1x256xf32> to vector<1x256xf32>
    %147 = vector.broadcast %146 : vector<1x256xf32> to vector<64x256xf32>
    %148 = arith.addf %144, %147 : vector<64x256xf32>
    %149 = arith.negf %148 : vector<64x256xf32>
    %150 = math.exp %149 : vector<64x256xf32>
    %cst_39 = arith.constant 1.000000e+00 : f32
    %151 = vector.broadcast %cst_39 : f32 to vector<64x256xf32>
    %152 = arith.addf %151, %150 : vector<64x256xf32>
    %153 = arith.divf %151, %152 : vector<64x256xf32>
    %154 = arith.mulf %153, %134 : vector<64x256xf32>
    %155 = arith.mulf %154, %154 : vector<64x256xf32>
    %156 = arith.truncf %155 : vector<64x256xf32> to vector<64x256xbf16>
    %cst_40 = arith.constant dense<0.000000e+00> : vector<64x256xf32>
    %157 = tpu.matmul %156, %69, %cst_40 {dimension_numbers = #tpu.dot_dimension_numbers<[1], [0], [0], [1], [0, 0, 1, 1], [], []>} : vector<64x256xbf16>, vector<256x256xbf16>, vector<64x256xf32> -> vector<64x256xf32>
    %158 = vector.shape_cast %72 : vector<1x256xi1> to vector<1x256xi1>
    %159 = vector.broadcast %158 : vector<1x256xi1> to vector<64x256xi1>
    %160 = arith.select %159, %154, %157 : vector<64x256xi1>, vector<64x256xf32>
    %161 = vector.extract_strided_slice %73 {offsets = [4, 0, 0], sizes = [1, 1, 256], strides = [1, 1, 1]} : vector<5x1x256xf32> to vector<1x1x256xf32>
    %162 = vector.shape_cast %161 : vector<1x1x256xf32> to vector<1x256xf32>
    %163 = vector.broadcast %162 : vector<1x256xf32> to vector<64x256xf32>
    %164 = arith.mulf %163, %160 : vector<64x256xf32>
    %165 = vector.extract_strided_slice %74 {offsets = [4, 0, 0], sizes = [1, 1, 256], strides = [1, 1, 1]} : vector<5x1x256xf32> to vector<1x1x256xf32>
    %166 = vector.shape_cast %165 : vector<1x1x256xf32> to vector<1x256xf32>
    %167 = vector.broadcast %166 : vector<1x256xf32> to vector<64x256xf32>
    %168 = arith.addf %164, %167 : vector<64x256xf32>
    %169 = arith.negf %168 : vector<64x256xf32>
    %170 = math.exp %169 : vector<64x256xf32>
    %cst_41 = arith.constant 1.000000e+00 : f32
    %171 = vector.broadcast %cst_41 : f32 to vector<64x256xf32>
    %172 = arith.addf %171, %170 : vector<64x256xf32>
    %173 = arith.divf %171, %172 : vector<64x256xf32>
    %174 = arith.mulf %173, %154 : vector<64x256xf32>
    %175 = arith.truncf %174 : vector<64x256xf32> to vector<64x256xbf16>
    %c0_42 = arith.constant 0 : index
    %c0_43 = arith.constant 0 : index
    %176 = vector.load %arg13[%c0_42, %c0_43] : memref<256x256xbf16, #tpu.memory_space<vmem>>, vector<256x256xbf16>
    %cst_44 = arith.constant dense<0.000000e+00> : vector<64x256xf32>
    %177 = tpu.matmul %175, %176, %cst_44 {dimension_numbers = #tpu.dot_dimension_numbers<[1], [0], [0], [1], [0, 0, 1, 1], [], []>} : vector<64x256xbf16>, vector<256x256xbf16>, vector<64x256xf32> -> vector<64x256xf32>
    %178 = arith.mulf %177, %177 : vector<64x256xf32>
    %179 = arith.truncf %178 : vector<64x256xf32> to vector<64x256xbf16>
    %c0_45 = arith.constant 0 : index
    %c0_46 = arith.constant 0 : index
    %180 = vector.load %arg15[%c0_45, %c0_46] : memref<256x1024xbf16, #tpu.memory_space<vmem>>, vector<256x1024xbf16>
    %cst_47 = arith.constant dense<0.000000e+00> : vector<64x1024xf32>
    %181 = tpu.matmul %179, %180, %cst_47 {dimension_numbers = #tpu.dot_dimension_numbers<[1], [0], [0], [1], [0, 0, 1, 1], [], []>} : vector<64x256xbf16>, vector<256x1024xbf16>, vector<64x1024xf32> -> vector<64x1024xf32>
    %c0_48 = arith.constant 0 : index
    %c0_49 = arith.constant 0 : index
    %182 = vector.load %arg16[%c0_48, %c0_49] : memref<1x1024xf32, #tpu.memory_space<vmem>>, vector<1x1024xf32>
    %183 = math.absf %181 : vector<64x1024xf32>
    %184 = math.sqrt %183 : vector<64x1024xf32>
    %cst_50 = arith.constant 1.000000e+00 : f32
    %185 = vector.broadcast %cst_50 : f32 to vector<64x1024xf32>
    %186 = arith.subf %184, %185 : vector<64x1024xf32>
    %187 = vector.broadcast %182 : vector<1x1024xf32> to vector<64x1024xf32>
    %188 = arith.mulf %187, %186 : vector<64x1024xf32>
    %cst_51 = arith.constant 1.00000095 : f32
    %189 = vector.broadcast %cst_51 : f32 to vector<64x1024xf32>
    %190 = arith.addf %188, %189 : vector<64x1024xf32>
    %191 = tpu.reciprocal %190 {approx = true} : vector<64x1024xf32> -> vector<64x1024xf32>
    %c0_52 = arith.constant 0 : index
    %c0_53 = arith.constant 0 : index
    %192 = vector.load %arg14[%c0_52, %c0_53] : memref<256x2048xbf16, #tpu.memory_space<vmem>>, vector<256x2048xbf16>
    %cst_54 = arith.constant dense<0.000000e+00> : vector<64x2048xf32>
    %193 = tpu.matmul %175, %192, %cst_54 {dimension_numbers = #tpu.dot_dimension_numbers<[1], [0], [0], [1], [0, 0, 1, 1], [], []>} : vector<64x256xbf16>, vector<256x2048xbf16>, vector<64x2048xf32> -> vector<64x2048xf32>
    %194 = vector.extract_strided_slice %193 {offsets = [0, 0], sizes = [64, 256], strides = [1, 1]} : vector<64x2048xf32> to vector<64x256xf32>
    %195 = vector.extract_strided_slice %191 {offsets = [0, 0], sizes = [64, 256], strides = [1, 1]} : vector<64x1024xf32> to vector<64x256xf32>
    %196 = arith.mulf %174, %194 : vector<64x256xf32>
    %197 = arith.mulf %196, %195 : vector<64x256xf32>
    %198 = arith.truncf %197 : vector<64x256xf32> to vector<64x256xbf16>
    %199 = vector.extract_strided_slice %193 {offsets = [0, 256], sizes = [64, 256], strides = [1, 1]} : vector<64x2048xf32> to vector<64x256xf32>
    %200 = vector.extract_strided_slice %191 {offsets = [0, 256], sizes = [64, 256], strides = [1, 1]} : vector<64x1024xf32> to vector<64x256xf32>
    %201 = arith.mulf %174, %199 : vector<64x256xf32>
    %202 = arith.mulf %201, %200 : vector<64x256xf32>
    %203 = arith.truncf %202 : vector<64x256xf32> to vector<64x256xbf16>
    %204 = vector.extract_strided_slice %193 {offsets = [0, 512], sizes = [64, 256], strides = [1, 1]} : vector<64x2048xf32> to vector<64x256xf32>
    %205 = vector.extract_strided_slice %191 {offsets = [0, 256], sizes = [64, 256], strides = [1, 1]} : vector<64x1024xf32> to vector<64x256xf32>
    %206 = arith.mulf %174, %204 : vector<64x256xf32>
    %207 = arith.mulf %206, %205 : vector<64x256xf32>
    %208 = arith.truncf %207 : vector<64x256xf32> to vector<64x256xbf16>
    %209 = vector.extract_strided_slice %193 {offsets = [0, 768], sizes = [64, 256], strides = [1, 1]} : vector<64x2048xf32> to vector<64x256xf32>
    %210 = vector.extract_strided_slice %191 {offsets = [0, 256], sizes = [64, 256], strides = [1, 1]} : vector<64x1024xf32> to vector<64x256xf32>
    %211 = arith.mulf %174, %209 : vector<64x256xf32>
    %212 = arith.mulf %211, %210 : vector<64x256xf32>
    %213 = arith.truncf %212 : vector<64x256xf32> to vector<64x256xbf16>
    %214 = vector.extract_strided_slice %193 {offsets = [0, 1024], sizes = [64, 256], strides = [1, 1]} : vector<64x2048xf32> to vector<64x256xf32>
    %215 = vector.extract_strided_slice %191 {offsets = [0, 512], sizes = [64, 256], strides = [1, 1]} : vector<64x1024xf32> to vector<64x256xf32>
    %216 = arith.mulf %174, %214 : vector<64x256xf32>
    %217 = arith.mulf %216, %215 : vector<64x256xf32>
    %218 = arith.truncf %217 : vector<64x256xf32> to vector<64x256xbf16>
    %219 = vector.extract_strided_slice %193 {offsets = [0, 1280], sizes = [64, 256], strides = [1, 1]} : vector<64x2048xf32> to vector<64x256xf32>
    %220 = vector.extract_strided_slice %191 {offsets = [0, 512], sizes = [64, 256], strides = [1, 1]} : vector<64x1024xf32> to vector<64x256xf32>
    %221 = arith.mulf %174, %219 : vector<64x256xf32>
    %222 = arith.mulf %221, %220 : vector<64x256xf32>
    %223 = arith.truncf %222 : vector<64x256xf32> to vector<64x256xbf16>
    %224 = vector.extract_strided_slice %193 {offsets = [0, 1536], sizes = [64, 256], strides = [1, 1]} : vector<64x2048xf32> to vector<64x256xf32>
    %225 = vector.extract_strided_slice %191 {offsets = [0, 512], sizes = [64, 256], strides = [1, 1]} : vector<64x1024xf32> to vector<64x256xf32>
    %226 = arith.mulf %174, %224 : vector<64x256xf32>
    %227 = arith.mulf %226, %225 : vector<64x256xf32>
    %228 = arith.truncf %227 : vector<64x256xf32> to vector<64x256xbf16>
    %229 = vector.extract_strided_slice %193 {offsets = [0, 1792], sizes = [64, 256], strides = [1, 1]} : vector<64x2048xf32> to vector<64x256xf32>
    %230 = vector.extract_strided_slice %191 {offsets = [0, 768], sizes = [64, 256], strides = [1, 1]} : vector<64x1024xf32> to vector<64x256xf32>
    %231 = arith.mulf %174, %229 : vector<64x256xf32>
    %232 = arith.mulf %231, %230 : vector<64x256xf32>
    %233 = arith.truncf %232 : vector<64x256xf32> to vector<64x256xbf16>
    %234 = tpu.concatenate %198, %203, %208, %213, %218, %223, %228, %233 in 1 : vector<64x256xbf16>, vector<64x256xbf16>, vector<64x256xbf16>, vector<64x256xbf16>, vector<64x256xbf16>, vector<64x256xbf16>, vector<64x256xbf16>, vector<64x256xbf16> -> vector<64x2048xbf16>
    %c0_55 = arith.constant 0 : index
    %c0_56 = arith.constant 0 : index
    %235 = vector.load %arg17[%c0_55, %c0_56] : memref<2048x8xbf16, #tpu.memory_space<vmem>>, vector<2048x8xbf16>
    %cst_57 = arith.constant dense<0.000000e+00> : vector<64x8xf32>
    %236 = tpu.matmul %234, %235, %cst_57 {dimension_numbers = #tpu.dot_dimension_numbers<[1], [0], [0], [1], [0, 0, 1, 1], [], []>} : vector<64x2048xbf16>, vector<2048x8xbf16>, vector<64x8xf32> -> vector<64x8xf32>
    %c0_58 = arith.constant 0 : index
    %c0_59 = arith.constant 0 : index
    %237 = vector.load %arg18[%c0_58, %c0_59] : memref<256x8xbf16, #tpu.memory_space<vmem>>, vector<256x8xbf16>
    %cst_60 = arith.constant dense<0.000000e+00> : vector<64x8xf32>
    %238 = tpu.matmul %175, %237, %cst_60 {dimension_numbers = #tpu.dot_dimension_numbers<[1], [0], [0], [1], [0, 0, 1, 1], [], []>} : vector<64x256xbf16>, vector<256x8xbf16>, vector<64x8xf32> -> vector<64x8xf32>
    %c0_61 = arith.constant 0 : index
    %c0_62 = arith.constant 0 : index
    %239 = vector.load %arg19[%c0_61, %c0_62] : memref<1x8xf32, #tpu.memory_space<vmem>>, vector<1x8xf32>
    %240 = vector.broadcast %239 : vector<1x8xf32> to vector<64x8xf32>
    %241 = arith.addf %238, %240 : vector<64x8xf32>
    %242 = arith.addf %241, %236 : vector<64x8xf32>
    %c0_63 = arith.constant 0 : index
    %c0_64 = arith.constant 0 : index
    %243 = vector.load %arg20[%c0_63, %c0_64] : memref<64x8xf32, #tpu.memory_space<vmem>>, vector<64x8xf32>
    tpu.vector_store %arg20[%c0_63, %c0_64], %242 {strides = array<i32>} : memref<64x8xf32, #tpu.memory_space<vmem>>, vector<64x8xf32>,
    return
  }
  func.func @transform_0(%arg0: i32) -> (i32, i32) {
    %c0_i32 = arith.constant 0 : i32
    %c0_i32_0 = arith.constant 0 : i32
    return %arg0, %c0_i32 : i32, i32
  }
  func.func @transform_1(%arg0: i32) -> (i32, i32) {
    %c0_i32 = arith.constant 0 : i32
    %c0_i32_0 = arith.constant 0 : i32
    %c0_i32_1 = arith.constant 0 : i32
    return %c0_i32, %c0_i32_0 : i32, i32
  }
  func.func @transform_2(%arg0: i32) -> (i32, i32) {
    %c0_i32 = arith.constant 0 : i32
    %c0_i32_0 = arith.constant 0 : i32
    %c0_i32_1 = arith.constant 0 : i32
    return %c0_i32, %c0_i32_0 : i32, i32
  }
  func.func @transform_3(%arg0: i32) -> (i32, i32) {
    %c0_i32 = arith.constant 0 : i32
    %c0_i32_0 = arith.constant 0 : i32
    %c0_i32_1 = arith.constant 0 : i32
    return %c0_i32, %c0_i32_0 : i32, i32
  }
  func.func @transform_4(%arg0: i32) -> (i32, i32) {
    %c0_i32 = arith.constant 0 : i32
    %c0_i32_0 = arith.constant 0 : i32
    %c0_i32_1 = arith.constant 0 : i32
    return %c0_i32, %c0_i32_0 : i32, i32
  }
  func.func @transform_5(%arg0: i32) -> (i32, i32) {
    %c0_i32 = arith.constant 0 : i32
    %c0_i32_0 = arith.constant 0 : i32
    %c0_i32_1 = arith.constant 0 : i32
    return %c0_i32, %c0_i32_0 : i32, i32
  }
  func.func @transform_6(%arg0: i32) -> (i32, i32) {
    %c0_i32 = arith.constant 0 : i32
    %c0_i32_0 = arith.constant 0 : i32
    %c0_i32_1 = arith.constant 0 : i32
    return %c0_i32, %c0_i32_0 : i32, i32
  }
  func.func @transform_7(%arg0: i32) -> (i32, i32) {
    %c0_i32 = arith.constant 0 : i32
    %c0_i32_0 = arith.constant 0 : i32
    %c0_i32_1 = arith.constant 0 : i32
    return %c0_i32, %c0_i32_0 : i32, i32
  }
  func.func @transform_8(%arg0: i32) -> (i32, i32) {
    %c0_i32 = arith.constant 0 : i32
    %c0_i32_0 = arith.constant 0 : i32
    %c0_i32_1 = arith.constant 0 : i32
    return %c0_i32, %c0_i32_0 : i32, i32
  }
  func.func @transform_9(%arg0: i32) -> (i32, i32) {
    %c0_i32 = arith.constant 0 : i32
    %c0_i32_0 = arith.constant 0 : i32
    %c0_i32_1 = arith.constant 0 : i32
    return %c0_i32, %c0_i32_0 : i32, i32
  }
  func.func @transform_10(%arg0: i32) -> (i32, i32, i32) {
    %c0_i32 = arith.constant 0 : i32
    %c0_i32_0 = arith.constant 0 : i32
    %c0_i32_1 = arith.constant 0 : i32
    %c0_i32_2 = arith.constant 0 : i32
    return %c0_i32, %c0_i32_0, %c0_i32_1 : i32, i32, i32
  }
  func.func @transform_11(%arg0: i32) -> (i32, i32, i32) {
    %c0_i32 = arith.constant 0 : i32
    %c0_i32_0 = arith.constant 0 : i32
    %c0_i32_1 = arith.constant 0 : i32
    %c0_i32_2 = arith.constant 0 : i32
    return %c0_i32, %c0_i32_0, %c0_i32_1 : i32, i32, i32
  }
  func.func @transform_12(%arg0: i32) -> (i32, i32) {
    %c0_i32 = arith.constant 0 : i32
    %c0_i32_0 = arith.constant 0 : i32
    %c0_i32_1 = arith.constant 0 : i32
    return %c0_i32, %c0_i32_0 : i32, i32
  }
  func.func @transform_13(%arg0: i32) -> (i32, i32) {
    %c0_i32 = arith.constant 0 : i32
    %c0_i32_0 = arith.constant 0 : i32
    %c0_i32_1 = arith.constant 0 : i32
    return %c0_i32, %c0_i32_0 : i32, i32
  }
  func.func @transform_14(%arg0: i32) -> (i32, i32) {
    %c0_i32 = arith.constant 0 : i32
    %c0_i32_0 = arith.constant 0 : i32
    %c0_i32_1 = arith.constant 0 : i32
    return %c0_i32, %c0_i32_0 : i32, i32
  }
  func.func @transform_15(%arg0: i32) -> (i32, i32) {
    %c0_i32 = arith.constant 0 : i32
    %c0_i32_0 = arith.constant 0 : i32
    %c0_i32_1 = arith.constant 0 : i32
    return %c0_i32, %c0_i32_0 : i32, i32
  }
  func.func @transform_16(%arg0: i32) -> (i32, i32) {
    %c0_i32 = arith.constant 0 : i32
    %c0_i32_0 = arith.constant 0 : i32
    %c0_i32_1 = arith.constant 0 : i32
    return %c0_i32, %c0_i32_0 : i32, i32
  }
  func.func @transform_17(%arg0: i32) -> (i32, i32) {
    %c0_i32 = arith.constant 0 : i32
    %c0_i32_0 = arith.constant 0 : i32
    %c0_i32_1 = arith.constant 0 : i32
    return %c0_i32, %c0_i32_0 : i32, i32
  }
  func.func @transform_18(%arg0: i32) -> (i32, i32) {
    %c0_i32 = arith.constant 0 : i32
    %c0_i32_0 = arith.constant 0 : i32
    %c0_i32_1 = arith.constant 0 : i32
    return %c0_i32, %c0_i32_0 : i32, i32
  }
  func.func @transform_19(%arg0: i32) -> (i32, i32) {
    %c0_i32 = arith.constant 0 : i32
    %c0_i32_0 = arith.constant 0 : i32
    return %arg0, %c0_i32 : i32, i32
  }
}

</mosaic_0001>

<llo_original>
// kernel: tpu_custom_call.1
$region0: #{tpu_custom_call.1}
  #allocation0 [shape = 'u32[]', space=smem, size = 0x4, offset = 0x4, fixed_abs, tag = 'smem constant byte address 0x4 - core index']
  #allocation1 [shape = 'u32[144,128]{1,0:T(1,128)}', space=vmem, size = 0x12000, scoped, tag = 'internal scratch']
  %s0 = inlined_call_operand.vmem [shape: f32[64,128], index: 0, kind: input, shape index: {}]
  %s1 = inlined_call_operand.hbm [shape: bf16[128,128], index: 1, kind: input, shape index: {}]
  %s2 = inlined_call_operand.hbm [shape: bf16[128,1024], index: 2, kind: input, shape index: {}]
  %s3 = inlined_call_operand.hbm [shape: bf16[128,512], index: 3, kind: input, shape index: {}]
  %s4 = inlined_call_operand.hbm [shape: f32[1,512], index: 4, kind: input, shape index: {}]
  %s5 = inlined_call_operand.vmem [shape: bf16[1024,256], index: 5, kind: input, shape index: {}]
  %s6 = inlined_call_operand.vmem [shape: bf16[128,256], index: 6, kind: input, shape index: {}]
  %s7 = inlined_call_operand.hbm [shape: f32[1,256], index: 7, kind: input, shape index: {}]
  %s8 = inlined_call_operand.hbm [shape: bf16[256,256], index: 8, kind: input, shape index: {}]
  %s9 = inlined_call_operand.hbm [shape: f32[1,256], index: 9, kind: input, shape index: {}]
  %s10 = inlined_call_operand.hbm [shape: f32[5,1,256], index: 10, kind: input, shape index: {}]
  %s11 = inlined_call_operand.hbm [shape: f32[5,1,256], index: 11, kind: input, shape index: {}]
  %s12 = inlined_call_operand.hbm [shape: bf16[256,256], index: 12, kind: input, shape index: {}]
  %s13 = inlined_call_operand.hbm [shape: bf16[256,2048], index: 13, kind: input, shape index: {}]
  %s14 = inlined_call_operand.hbm [shape: bf16[256,1024], index: 14, kind: input, shape index: {}]
  %s15 = inlined_call_operand.hbm [shape: f32[1,1024], index: 15, kind: input, shape index: {}]
  %s16 = inlined_call_operand.vmem [shape: bf16[2048,8], index: 16, kind: input, shape index: {}]
  %s17 = inlined_call_operand.vmem [shape: bf16[256,8], index: 17, kind: input, shape index: {}]
  %s18 = inlined_call_operand.hbm [shape: f32[1,8], index: 18, kind: input, shape index: {}]
  %s19 = inlined_call_operand.vmem [shape: f32[64,8], index: 19, kind: output, shape index: {}]
  %s20 = sld [smem:[#allocation0]]
  $region142: #{tpu_custom_call.1} parent=0
    _
  %s22 = ssub.s32 1, %s20
  %s23 = scalar_select 0, %s22, %s20
  $region1: #{tpu_custom_call.1} parent=0
    #allocation2 [shape = 'u8[32768]{0}', space=vmem, size = 0x8000, scoped, tag = 'input window, operand 1, single buffered']
    #allocation3 [shape = 's32[1]{0}', space=sflag, size = 0x4, scoped, tag = 'scoped memory for tpu_custom_call.1']
    #allocation4 [shape = 'u8[262144]{0}', space=vmem, size = 0x40000, scoped, tag = 'input window, operand 2, single buffered']
    #allocation5 [shape = 's32[1]{0}', space=sflag, size = 0x4, scoped, tag = 'scoped memory for tpu_custom_call.1']
    #allocation6 [shape = 'u8[131072]{0}', space=vmem, size = 0x20000, scoped, tag = 'input window, operand 3, single buffered']
    #allocation7 [shape = 'u8[2048]{0}', space=vmem, size = 0x800, scoped, tag = 'input window, operand 4, single buffered']
    #allocation8 [shape = 's32[1]{0}', space=sflag, size = 0x4, scoped, tag = 'scoped memory for tpu_custom_call.1']
    #allocation9 [shape = 'u8[1024]{0}', space=vmem, size = 0x400, scoped, tag = 'input window, operand 7, single buffered']
    #allocation10 [shape = 'u8[131072]{0}', space=vmem, size = 0x20000, scoped, tag = 'input window, operand 8, single buffered']
    #allocation11 [shape = 's32[1]{0}', space=sflag, size = 0x4, scoped, tag = 'scoped memory for tpu_custom_call.1']
    #allocation12 [shape = 'u8[1024]{0}', space=vmem, size = 0x400, scoped, tag = 'input window, operand 9, single buffered']
    #allocation13 [shape = 'u8[5120]{0}', space=vmem, size = 0x1400, scoped, tag = 'input window, operand 10, single buffered']
    #allocation14 [shape = 's32[1]{0}', space=sflag, size = 0x4, scoped, tag = 'scoped memory for tpu_custom_call.1']
    #allocation15 [shape = 'u8[5120]{0}', space=vmem, size = 0x1400, scoped, tag = 'input window, operand 11, single buffered']
    #allocation16 [shape = 'u8[131072]{0}', space=vmem, size = 0x20000, scoped, tag = 'input window, operand 12, single buffered']
    #allocation17 [shape = 's32[1]{0}', space=sflag, size = 0x4, scoped, tag = 'scoped memory for tpu_custom_call.1']
    #allocation18 [shape = 'u8[1048576]{0}', space=vmem, size = 0x100000, scoped, tag = 'input window, operand 13, single buffered']
    #allocation19 [shape = 'u8[524288]{0}', space=vmem, size = 0x80000, scoped, tag = 'input window, operand 14, single buffered']
    #allocation20 [shape = 's32[1]{0}', space=sflag, size = 0x4, scoped, tag = 'scoped memory for tpu_custom_call.1']
    #allocation21 [shape = 'u8[4096]{0}', space=vmem, size = 0x1000, scoped, tag = 'input window, operand 15, single buffered']
    #allocation22 [shape = 'u8[512]{0}', space=vmem, size = 0x400, scoped, tag = 'input window, operand 18, single buffered']
    #allocation23 [shape = 's32[1]{0}', space=sflag, size = 0x4, scoped, tag = 'scoped memory for tpu_custom_call.1']
    %24 = vsyncpa [#allocation3], 0
    %25 = vsyncpa [#allocation5], 0
    %26 = vsyncpa [#allocation8], 0
    %27 = vsyncpa [#allocation11], 0
    %28 = vsyncpa [#allocation14], 0
    %29 = vsyncpa [#allocation17], 0
    %30 = vsyncpa [#allocation20], 0
    %31 = vsyncpa [#allocation23], 0
    // Predicated region
    $region2: #{tpu_custom_call.1} parent=1 // pred_check
      _
    $region3: #{tpu_custom_call.1} parent=1 // pred_check_branch
      %33 = sbr.rel (0) target = $region5
    $region4: #{tpu_custom_call.1} parent=1 // pred_region
      _
    $region5: #{tpu_custom_call.1} parent=1 // pred_fallthru
      _
    // Predicated region
    $region6: #{tpu_custom_call.1} parent=1 // pred_check
      _
    $region7: #{tpu_custom_call.1} parent=1 // pred_check_branch
      %35 = sbr.rel (0) target = $region9
    $region8: #{tpu_custom_call.1} parent=1 // pred_region
      %s37 = ssub.s32 1024, 1024
      %38 = vsyncadd [#allocation3], %s37
      %s39 = sshll.u32 [#allocation2], 4
      %s40 = int_to_ptr.vmem [resolvable:$true] %s39
      %45 = dma.hbm_to_vmem [thread:$0]  %s1, 1024, %s40, [#allocation3], 64, 64, 4
    $region9: #{tpu_custom_call.1} parent=1 // pred_fallthru
      _
    // Predicated region
    $region10: #{tpu_custom_call.1} parent=1 // pred_check
      _
    $region11: #{tpu_custom_call.1} parent=1 // pred_check_branch
      %47 = sbr.rel (0) target = $region13
    $region12: #{tpu_custom_call.1} parent=1 // pred_region
      %s49 = ssub.s32 8192, 8192
      %50 = vsyncadd [#allocation5], %s49
      %s51 = sshll.u32 [#allocation4], 4
      %s52 = int_to_ptr.vmem [resolvable:$true] %s51
      %57 = dma.hbm_to_vmem [thread:$0]  %s2, 8192, %s52, [#allocation5], 512, 512, 32
    $region13: #{tpu_custom_call.1} parent=1 // pred_fallthru
      _
    // Predicated region
    $region14: #{tpu_custom_call.1} parent=1 // pred_check
      _
    $region15: #{tpu_custom_call.1} parent=1 // pred_check_branch
      %59 = sbr.rel (0) target = $region17
    $region16: #{tpu_custom_call.1} parent=1 // pred_region
      %s61 = ssub.s32 4096, 4096
      %62 = vsyncadd [#allocation5], %s61
      %s63 = sshll.u32 [#allocation6], 4
      %s64 = int_to_ptr.vmem [resolvable:$true] %s63
      %69 = dma.hbm_to_vmem [thread:$0]  %s3, 4096, %s64, [#allocation5], 256, 256, 16
    $region17: #{tpu_custom_call.1} parent=1 // pred_fallthru
      _
    // Predicated region
    $region18: #{tpu_custom_call.1} parent=1 // pred_check
      _
    $region19: #{tpu_custom_call.1} parent=1 // pred_check_branch
      %71 = sbr.rel (0) target = $region21
    $region20: #{tpu_custom_call.1} parent=1 // pred_region
      %s73 = ssub.s32 64, 64
      %74 = vsyncadd [#allocation8], %s73
      %s76 = sshll.u32 [#allocation7], 4
      %s77 = int_to_ptr.vmem [resolvable:$true] %s76
      %79 = dma.hbm_to_vmem [thread:$0]  %s4, 64, %s77, [#allocation8]
    $region21: #{tpu_custom_call.1} parent=1 // pred_fallthru
      _
    // Predicated region
    $region22: #{tpu_custom_call.1} parent=1 // pred_check
      _
    $region23: #{tpu_custom_call.1} parent=1 // pred_check_branch
      %81 = sbr.rel (0) target = $region25
    $region24: #{tpu_custom_call.1} parent=1 // pred_region
      _
    $region25: #{tpu_custom_call.1} parent=1 // pred_fallthru
      _
    // Predicated region
    $region26: #{tpu_custom_call.1} parent=1 // pred_check
      _
    $region27: #{tpu_custom_call.1} parent=1 // pred_check_branch
      %83 = sbr.rel (0) target = $region29
    $region28: #{tpu_custom_call.1} parent=1 // pred_region
      _
    $region29: #{tpu_custom_call.1} parent=1 // pred_fallthru
      _
    // Predicated region
    $region30: #{tpu_custom_call.1} parent=1 // pred_check
      _
    $region31: #{tpu_custom_call.1} parent=1 // pred_check_branch
      %85 = sbr.rel (0) target = $region33
    $region32: #{tpu_custom_call.1} parent=1 // pred_region
      %s87 = ssub.s32 32, 32
      %88 = vsyncadd [#allocation8], %s87
      %s90 = sshll.u32 [#allocation9], 4
      %s91 = int_to_ptr.vmem [resolvable:$true] %s90
      %93 = dma.hbm_to_vmem [thread:$0]  %s7, 32, %s91, [#allocation8]
    $region33: #{tpu_custom_call.1} parent=1 // pred_fallthru
      _
    // Predicated region
    $region34: #{tpu_custom_call.1} parent=1 // pred_check
      _
    $region35: #{tpu_custom_call.1} parent=1 // pred_check_branch
      %95 = sbr.rel (0) target = $region37
    $region36: #{tpu_custom_call.1} parent=1 // pred_region
      %s97 = ssub.s32 4096, 4096
      %98 = vsyncadd [#allocation11], %s97
      %s99 = sshll.u32 [#allocation10], 4
      %s100 = int_to_ptr.vmem [resolvable:$true] %s99
      %105 = dma.hbm_to_vmem [thread:$0]  %s8, 4096, %s100, [#allocation11], 128, 128, 8
    $region37: #{tpu_custom_call.1} parent=1 // pred_fallthru
      _
    // Predicated region
    $region38: #{tpu_custom_call.1} parent=1 // pred_check
      _
    $region39: #{tpu_custom_call.1} parent=1 // pred_check_branch
      %107 = sbr.rel (0) target = $region41
    $region40: #{tpu_custom_call.1} parent=1 // pred_region
      %s109 = ssub.s32 32, 32
      %110 = vsyncadd [#allocation11], %s109
      %s112 = sshll.u32 [#allocation12], 4
      %s113 = int_to_ptr.vmem [resolvable:$true] %s112
      %115 = dma.hbm_to_vmem [thread:$0]  %s9, 32, %s113, [#allocation11]
    $region41: #{tpu_custom_call.1} parent=1 // pred_fallthru
      _
    // Predicated region
    $region42: #{tpu_custom_call.1} parent=1 // pred_check
      _
    $region43: #{tpu_custom_call.1} parent=1 // pred_check_branch
      %117 = sbr.rel (0) target = $region45
    $region44: #{tpu_custom_call.1} parent=1 // pred_region
      %s119 = ssub.s32 160, 160
      %120 = vsyncadd [#allocation14], %s119
      %s121 = sshll.u32 [#allocation13], 4
      %s122 = int_to_ptr.vmem [resolvable:$true] %s121
      %127 = dma.hbm_to_vmem [thread:$0]  %s10, 160, %s122, [#allocation14], 32, 32, 2
    $region45: #{tpu_custom_call.1} parent=1 // pred_fallthru
      _
    // Predicated region
    $region46: #{tpu_custom_call.1} parent=1 // pred_check
      _
    $region47: #{tpu_custom_call.1} parent=1 // pred_check_branch
      %129 = sbr.rel (0) target = $region49
    $region48: #{tpu_custom_call.1} parent=1 // pred_region
      %s131 = ssub.s32 160, 160
      %132 = vsyncadd [#allocation14], %s131
      %s133 = sshll.u32 [#allocation15], 4
      %s134 = int_to_ptr.vmem [resolvable:$true] %s133
      %139 = dma.hbm_to_vmem [thread:$0]  %s11, 160, %s134, [#allocation14], 32, 32, 2
    $region49: #{tpu_custom_call.1} parent=1 // pred_fallthru
      _
    // Predicated region
    $region50: #{tpu_custom_call.1} parent=1 // pred_check
      _
    $region51: #{tpu_custom_call.1} parent=1 // pred_check_branch
      %141 = sbr.rel (0) target = $region53
    $region52: #{tpu_custom_call.1} parent=1 // pred_region
      %s143 = ssub.s32 4096, 4096
      %144 = vsyncadd [#allocation17], %s143
      %s145 = sshll.u32 [#allocation16], 4
      %s146 = int_to_ptr.vmem [resolvable:$true] %s145
      %151 = dma.hbm_to_vmem [thread:$0]  %s12, 4096, %s146, [#allocation17], 128, 128, 8
    $region53: #{tpu_custom_call.1} parent=1 // pred_fallthru
      _
    // Predicated region
    $region54: #{tpu_custom_call.1} parent=1 // pred_check
      _
    $region55: #{tpu_custom_call.1} parent=1 // pred_check_branch
      %153 = sbr.rel (0) target = $region57
    $region56: #{tpu_custom_call.1} parent=1 // pred_region
      %s155 = ssub.s32 32768, 32768
      %156 = vsyncadd [#allocation17], %s155
      %s157 = sshll.u32 [#allocation18], 4
      %s158 = int_to_ptr.vmem [resolvable:$true] %s157
      %163 = dma.hbm_to_vmem [thread:$0]  %s13, 32768, %s158, [#allocation17], 1024, 1024, 64
    $region57: #{tpu_custom_call.1} parent=1 // pred_fallthru
      _
    // Predicated region
    $region58: #{tpu_custom_call.1} parent=1 // pred_check
      _
    $region59: #{tpu_custom_call.1} parent=1 // pred_check_branch
      %165 = sbr.rel (0) target = $region61
    $region60: #{tpu_custom_call.1} parent=1 // pred_region
      %s167 = ssub.s32 16384, 16384
      %168 = vsyncadd [#allocation20], %s167
      %s169 = sshll.u32 [#allocation19], 4
      %s170 = int_to_ptr.vmem [resolvable:$true] %s169
      %175 = dma.hbm_to_vmem [thread:$0]  %s14, 16384, %s170, [#allocation20], 512, 512, 32
    $region61: #{tpu_custom_call.1} parent=1 // pred_fallthru
      _
    // Predicated region
    $region62: #{tpu_custom_call.1} parent=1 // pred_check
      _
    $region63: #{tpu_custom_call.1} parent=1 // pred_check_branch
      %177 = sbr.rel (0) target = $region65
    $region64: #{tpu_custom_call.1} parent=1 // pred_region
      %s179 = ssub.s32 128, 128
      %180 = vsyncadd [#allocation20], %s179
      %s182 = sshll.u32 [#allocation21], 4
      %s183 = int_to_ptr.vmem [resolvable:$true] %s182
      %185 = dma.hbm_to_vmem [thread:$0]  %s15, 128, %s183, [#allocation20]
    $region65: #{tpu_custom_call.1} parent=1 // pred_fallthru
      _
    // Predicated region
    $region66: #{tpu_custom_call.1} parent=1 // pred_check
      _
    $region67: #{tpu_custom_call.1} parent=1 // pred_check_branch
      %187 = sbr.rel (0) target = $region69
    $region68: #{tpu_custom_call.1} parent=1 // pred_region
      _
    $region69: #{tpu_custom_call.1} parent=1 // pred_fallthru
      _
    // Predicated region
    $region70: #{tpu_custom_call.1} parent=1 // pred_check
      _
    $region71: #{tpu_custom_call.1} parent=1 // pred_check_branch
      %189 = sbr.rel (0) target = $region73
    $region72: #{tpu_custom_call.1} parent=1 // pred_region
      _
    $region73: #{tpu_custom_call.1} parent=1 // pred_fallthru
      _
    // Predicated region
    $region74: #{tpu_custom_call.1} parent=1 // pred_check
      _
    $region75: #{tpu_custom_call.1} parent=1 // pred_check_branch
      %191 = sbr.rel (0) target = $region77
    $region76: #{tpu_custom_call.1} parent=1 // pred_region
      %s193 = ssub.s32 16, 16
      %194 = vsyncadd [#allocation23], %s193
      %s196 = sshll.u32 [#allocation22], 4
      %s197 = int_to_ptr.vmem [resolvable:$true] %s196
      %199 = dma.hbm_to_vmem [thread:$0]  %s18, 16, %s197, [#allocation23]
    $region77: #{tpu_custom_call.1} parent=1 // pred_fallthru
      _
    // Predicated region
    $region78: #{tpu_custom_call.1} parent=1 // pred_check
      _
    $region79: #{tpu_custom_call.1} parent=1 // pred_check_branch
      %201 = sbr.rel (0) target = $region81
    $region80: #{tpu_custom_call.1} parent=1 // pred_region
      %202 = dma.done [#allocation3], 1024
    $region81: #{tpu_custom_call.1} parent=1 // pred_fallthru
      _
    // Predicated region
    $region82: #{tpu_custom_call.1} parent=1 // pred_check
      _
    $region83: #{tpu_custom_call.1} parent=1 // pred_check_branch
      %204 = sbr.rel (0) target = $region85
    $region84: #{tpu_custom_call.1} parent=1 // pred_region
      %205 = dma.done [#allocation5], 8192
    $region85: #{tpu_custom_call.1} parent=1 // pred_fallthru
      _
    // Predicated region
    $region86: #{tpu_custom_call.1} parent=1 // pred_check
      _
    $region87: #{tpu_custom_call.1} parent=1 // pred_check_branch
      %207 = sbr.rel (0) target = $region89
    $region88: #{tpu_custom_call.1} parent=1 // pred_region
      %208 = dma.done [#allocation5], 4096
    $region89: #{tpu_custom_call.1} parent=1 // pred_fallthru
      _
    // Predicated region
    $region90: #{tpu_custom_call.1} parent=1 // pred_check
      _
    $region91: #{tpu_custom_call.1} parent=1 // pred_check_branch
      %210 = sbr.rel (0) target = $region93
    $region92: #{tpu_custom_call.1} parent=1 // pred_region
      %211 = dma.done [#allocation8], 64
    $region93: #{tpu_custom_call.1} parent=1 // pred_fallthru
      _
    // Predicated region
    $region94: #{tpu_custom_call.1} parent=1 // pred_check
      _
    $region95: #{tpu_custom_call.1} parent=1 // pred_check_branch
      %213 = sbr.rel (0) target = $region97
    $region96: #{tpu_custom_call.1} parent=1 // pred_region
      %214 = dma.done [#allocation8], 32
    $region97: #{tpu_custom_call.1} parent=1 // pred_fallthru
      _
    // Predicated region
    $region98: #{tpu_custom_call.1} parent=1 // pred_check
      _
    $region99: #{tpu_custom_call.1} parent=1 // pred_check_branch
      %216 = sbr.rel (0) target = $region101
    $region100: #{tpu_custom_call.1} parent=1 // pred_region
      %217 = dma.done [#allocation11], 4096
    $region101: #{tpu_custom_call.1} parent=1 // pred_fallthru
      _
    // Predicated region
    $region102: #{tpu_custom_call.1} parent=1 // pred_check
      _
    $region103: #{tpu_custom_call.1} parent=1 // pred_check_branch
      %219 = sbr.rel (0) target = $region105
    $region104: #{tpu_custom_call.1} parent=1 // pred_region
      %220 = dma.done [#allocation11], 32
    $region105: #{tpu_custom_call.1} parent=1 // pred_fallthru
      _
    // Predicated region
    $region106: #{tpu_custom_call.1} parent=1 // pred_check
      _
    $region107: #{tpu_custom_call.1} parent=1 // pred_check_branch
      %222 = sbr.rel (0) target = $region109
    $region108: #{tpu_custom_call.1} parent=1 // pred_region
      %223 = dma.done [#allocation14], 160
    $region109: #{tpu_custom_call.1} parent=1 // pred_fallthru
      _
    // Predicated region
    $region110: #{tpu_custom_call.1} parent=1 // pred_check
      _
    $region111: #{tpu_custom_call.1} parent=1 // pred_check_branch
      %225 = sbr.rel (0) target = $region113
    $region112: #{tpu_custom_call.1} parent=1 // pred_region
      %226 = dma.done [#allocation14], 160
    $region113: #{tpu_custom_call.1} parent=1 // pred_fallthru
      _
    // Predicated region
    $region114: #{tpu_custom_call.1} parent=1 // pred_check
      _
    $region115: #{tpu_custom_call.1} parent=1 // pred_check_branch
      %228 = sbr.rel (0) target = $region117
    $region116: #{tpu_custom_call.1} parent=1 // pred_region
      %229 = dma.done [#allocation17], 4096
    $region117: #{tpu_custom_call.1} parent=1 // pred_fallthru
      _
    // Predicated region
    $region118: #{tpu_custom_call.1} parent=1 // pred_check
      _
    $region119: #{tpu_custom_call.1} parent=1 // pred_check_branch
      %231 = sbr.rel (0) target = $region121
    $region120: #{tpu_custom_call.1} parent=1 // pred_region
      %232 = dma.done [#allocation17], 32768
    $region121: #{tpu_custom_call.1} parent=1 // pred_fallthru
      _
    // Predicated region
    $region122: #{tpu_custom_call.1} parent=1 // pred_check
      _
    $region123: #{tpu_custom_call.1} parent=1 // pred_check_branch
      %234 = sbr.rel (0) target = $region125
    $region124: #{tpu_custom_call.1} parent=1 // pred_region
      %235 = dma.done [#allocation20], 16384
    $region125: #{tpu_custom_call.1} parent=1 // pred_fallthru
      _
    // Predicated region
    $region126: #{tpu_custom_call.1} parent=1 // pred_check
      _
    $region127: #{tpu_custom_call.1} parent=1 // pred_check_branch
      %237 = sbr.rel (0) target = $region129
    $region128: #{tpu_custom_call.1} parent=1 // pred_region
      %238 = dma.done [#allocation20], 128
    $region129: #{tpu_custom_call.1} parent=1 // pred_fallthru
      _
    // Predicated region
    $region130: #{tpu_custom_call.1} parent=1 // pred_check
      _
    $region131: #{tpu_custom_call.1} parent=1 // pred_check_branch
      %240 = sbr.rel (0) target = $region133
    $region132: #{tpu_custom_call.1} parent=1 // pred_region
      %241 = dma.done [#allocation23], 16
    $region133: #{tpu_custom_call.1} parent=1 // pred_fallthru
      _
    %v243 = vld [vmem:[%s0] sm:$0xff]
    %v244 = vld [vmem:[%s0 + $0x8] sm:$0xff]
    %v245 = vld [vmem:[%s0 + $0x10] sm:$0xff]
    %v246 = vld [vmem:[%s0 + $0x18] sm:$0xff]
    %v247 = vld [vmem:[%s0 + $0x20] sm:$0xff]
    %v248 = vld [vmem:[%s0 + $0x28] sm:$0xff]
    %v249 = vld [vmem:[%s0 + $0x30] sm:$0xff]
    %v250 = vld [vmem:[%s0 + $0x38] sm:$0xff]
    %v251 = vpack.c.bf16 %v244, %v243
    %v252 = vpack.c.bf16 %v246, %v245
    %v253 = vpack.c.bf16 %v248, %v247
    %v254 = vpack.c.bf16 %v250, %v249
    %v255 = vld [vmem:[#allocation2] sm:$0xf]
    %v256 = vld [vmem:[#allocation2 + $0x4] sm:$0xf]
    %v257 = vld [vmem:[#allocation2 + $0x8] sm:$0xf]
    %v258 = vld [vmem:[#allocation2 + $0xc] sm:$0xf]
    %v259 = vld [vmem:[#allocation2 + $0x10] sm:$0xf]
    %v260 = vld [vmem:[#allocation2 + $0x14] sm:$0xf]
    %v261 = vld [vmem:[#allocation2 + $0x18] sm:$0xf]
    %v262 = vld [vmem:[#allocation2 + $0x1c] sm:$0xf]
    %v263 = vld [vmem:[#allocation2 + $0x20] sm:$0xf]
    %v264 = vld [vmem:[#allocation2 + $0x24] sm:$0xf]
    %v265 = vld [vmem:[#allocation2 + $0x28] sm:$0xf]
    %v266 = vld [vmem:[#allocation2 + $0x2c] sm:$0xf]
    %v267 = vld [vmem:[#allocation2 + $0x30] sm:$0xf]
    %v268 = vld [vmem:[#allocation2 + $0x34] sm:$0xf]
    %v269 = vld [vmem:[#allocation2 + $0x38] sm:$0xf]
    %v270 = vld [vmem:[#allocation2 + $0x3c] sm:$0xf]
    %v287 = vunpack.c.l.b16 %v255
    %v288 = vunpack.c.l.b16 %v256
    %v289 = vunpack.c.l.b16 %v257
    %v290 = vunpack.c.l.b16 %v258
    %v291 = vunpack.c.l.b16 %v259
    %v292 = vunpack.c.l.b16 %v260
    %v293 = vunpack.c.l.b16 %v261
    %v294 = vunpack.c.l.b16 %v262
    %v295 = vunpack.c.l.b16 %v263
    %v296 = vunpack.c.l.b16 %v264
    %v297 = vunpack.c.l.b16 %v265
    %v298 = vunpack.c.l.b16 %v266
    %v299 = vunpack.c.l.b16 %v267
    %v300 = vunpack.c.l.b16 %v268
    %v301 = vunpack.c.l.b16 %v269
    %v302 = vunpack.c.l.b16 %v270
    %v303 = vpack.c.b16 %v288, %v287
    %v304 = vpack.c.b16 %v290, %v289
    %v305 = vpack.c.b16 %v292, %v291
    %v306 = vpack.c.b16 %v294, %v293
    %v307 = vpack.c.b16 %v296, %v295
    %v308 = vpack.c.b16 %v298, %v297
    %v309 = vpack.c.b16 %v300, %v299
    %v310 = vpack.c.b16 %v302, %v301
    %319 = vmatprep.subr.bf16.mxu0 0
    %320 = vmatpush1.bf16.msra.mxu0 %v303
    %321 = vmatprep.subr.bf16.mxu0 0
    %322 = vmatpush1.bf16.msra.mxu0 %v304
    %323 = vmatprep.subr.bf16.mxu0 0
    %324 = vmatpush1.bf16.msra.mxu0 %v305
    %325 = vmatprep.subr.bf16.mxu0 0
    %326 = vmatpush1.bf16.msra.mxu0 %v306
    %327 = vmatprep.subr.bf16.mxu0 0
    %328 = vmatpush1.bf16.msra.mxu0 %v307
    %329 = vmatprep.subr.bf16.mxu0 0
    %330 = vmatpush1.bf16.msra.mxu0 %v308
    %331 = vmatprep.subr.bf16.mxu0 0
    %332 = vmatpush1.bf16.msra.mxu0 %v309
    %333 = vmatprep.subr.bf16.mxu0 0
    %334 = vmatpush1.bf16.msra.mxu0 %v310
    %335 = vmatprep.subr.bf16.mxu0 0
    %336 = vmatpush1.bf16.msra.mxu0 0
    %337 = vmatprep.subr.bf16.mxu0 0
    %338 = vmatpush1.bf16.msra.mxu0 0
    %339 = vmatprep.subr.bf16.mxu0 0
    %340 = vmatpush1.bf16.msra.mxu0 0
    %341 = vmatprep.subr.bf16.mxu0 0
    %342 = vmatpush1.bf16.msra.mxu0 0
    %343 = vmatprep.subr.bf16.mxu0 0
    %344 = vmatpush1.bf16.msra.mxu0 0
    %345 = vmatprep.subr.bf16.mxu0 0
    %346 = vmatpush1.bf16.msra.mxu0 0
    %347 = vmatprep.subr.bf16.mxu0 0
    %348 = vmatpush1.bf16.msra.mxu0 0
    %349 = vmatprep.subr.bf16.mxu0 0
    %350 = vmatpush1.bf16.msra.mxu0 0
    %351 = vmatprep.mubr.bf16.mxu0 0
    %352 = vmatmul.mubr.bf16.gmra.mrb[0].mxu0 %v251
    %v353 = vpop.f32.mrb[0].mxu0
    %v354 = vadd.f32 0.0, %v353
    %v355 = vpop.f32.mrb[0].mxu0
    %v356 = vpop.f32.mrb[0].mxu0
    %v357 = vadd.f32 0.0, %v356
    %v358 = vpop.f32.mrb[0].mxu0
    %359 = vmatprep.mubr.bf16.mxu0 0
    %360 = vmatmul.mubr.bf16.gmra.mrb[0].mxu0 %v252
    %v361 = vpop.f32.mrb[0].mxu0
    %v362 = vadd.f32 0.0, %v361
    %v363 = vpop.f32.mrb[0].mxu0
    %v364 = vpop.f32.mrb[0].mxu0
    %v365 = vadd.f32 0.0, %v364
    %v366 = vpop.f32.mrb[0].mxu0
    %367 = vmatprep.mubr.bf16.mxu0 0
    %368 = vmatmul.mubr.bf16.gmra.mrb[0].mxu0 %v253
    %v369 = vpop.f32.mrb[0].mxu0
    %v370 = vadd.f32 0.0, %v369
    %v371 = vpop.f32.mrb[0].mxu0
    %v372 = vpop.f32.mrb[0].mxu0
    %v373 = vadd.f32 0.0, %v372
    %v374 = vpop.f32.mrb[0].mxu0
    %375 = vmatprep.mubr.bf16.mxu0 0
    %376 = vmatmul.mubr.bf16.gmra.mrb[0].mxu0 %v254
    %v377 = vpop.f32.mrb[0].mxu0
    %v378 = vadd.f32 0.0, %v377
    %v379 = vpop.f32.mrb[0].mxu0
    %v380 = vpop.f32.mrb[0].mxu0
    %v381 = vadd.f32 0.0, %v380
    %v382 = vpop.f32.mrb[0].mxu0
    %383 = vdwg.mxu0
    %v384 = vmul.f32 %v354, %v354
    %v385 = vmul.f32 %v357, %v357
    %v386 = vmul.f32 %v362, %v362
    %v387 = vmul.f32 %v365, %v365
    %v388 = vmul.f32 %v370, %v370
    %v389 = vmul.f32 %v373, %v373
    %v390 = vmul.f32 %v378, %v378
    %v391 = vmul.f32 %v381, %v381
    %v392 = vpack.c.bf16 %v385, %v384
    %v393 = vpack.c.bf16 %v387, %v386
    %v394 = vpack.c.bf16 %v389, %v388
    %v395 = vpack.c.bf16 %v391, %v390
    %v396 = vld [vmem:[#allocation6] sm:$0xff]
    %v397 = vld [vmem:[#allocation6 + $0x8] sm:$0xff]
    %v398 = vld [vmem:[#allocation6 + $0x10] sm:$0xff]
    %v399 = vld [vmem:[#allocation6 + $0x18] sm:$0xff]
    %v400 = vld [vmem:[#allocation6 + $0x20] sm:$0xff]
    %v401 = vld [vmem:[#allocation6 + $0x28] sm:$0xff]
    %v402 = vld [vmem:[#allocation6 + $0x30] sm:$0xff]
    %v403 = vld [vmem:[#allocation6 + $0x38] sm:$0xff]
    %v404 = vld [vmem:[#allocation6 + $0x40] sm:$0xff]
    %v405 = vld [vmem:[#allocation6 + $0x48] sm:$0xff]
    %v406 = vld [vmem:[#allocation6 + $0x50] sm:$0xff]
    %v407 = vld [vmem:[#allocation6 + $0x58] sm:$0xff]
    %v408 = vld [vmem:[#allocation6 + $0x60] sm:$0xff]
    %v409 = vld [vmem:[#allocation6 + $0x68] sm:$0xff]
    %v410 = vld [vmem:[#allocation6 + $0x70] sm:$0xff]
    %v411 = vld [vmem:[#allocation6 + $0x78] sm:$0xff]
    %v412 = vld [vmem:[#allocation6 + $0x80] sm:$0xff]
    %v413 = vld [vmem:[#allocation6 + $0x88] sm:$0xff]
    %v414 = vld [vmem:[#allocation6 + $0x90] sm:$0xff]
    %v415 = vld [vmem:[#allocation6 + $0x98] sm:$0xff]
    %v416 = vld [vmem:[#allocation6 + $0xa0] sm:$0xff]
    %v417 = vld [vmem:[#allocation6 + $0xa8] sm:$0xff]
    %v418 = vld [vmem:[#allocation6 + $0xb0] sm:$0xff]
    %v419 = vld [vmem:[#allocation6 + $0xb8] sm:$0xff]
    %v420 = vld [vmem:[#allocation6 + $0xc0] sm:$0xff]
    %v421 = vld [vmem:[#allocation6 + $0xc8] sm:$0xff]
    %v422 = vld [vmem:[#allocation6 + $0xd0] sm:$0xff]
    %v423 = vld [vmem:[#allocation6 + $0xd8] sm:$0xff]
    %v424 = vld [vmem:[#allocation6 + $0xe0] sm:$0xff]
    %v425 = vld [vmem:[#allocation6 + $0xe8] sm:$0xff]
    %v426 = vld [vmem:[#allocation6 + $0xf0] sm:$0xff]
    %v427 = vld [vmem:[#allocation6 + $0xf8] sm:$0xff]
    %v460 = vunpack.c.l.b16 %v396
    %v461 = vunpack.c.h.b16 %v396
    %v462 = vunpack.c.l.b16 %v397
    %v463 = vunpack.c.h.b16 %v397
    %v464 = vunpack.c.l.b16 %v398
    %v465 = vunpack.c.h.b16 %v398
    %v466 = vunpack.c.l.b16 %v399
    %v467 = vunpack.c.h.b16 %v399
    %v468 = vunpack.c.l.b16 %v400
    %v469 = vunpack.c.h.b16 %v400
    %v470 = vunpack.c.l.b16 %v401
    %v471 = vunpack.c.h.b16 %v401
    %v472 = vunpack.c.l.b16 %v402
    %v473 = vunpack.c.h.b16 %v402
    %v474 = vunpack.c.l.b16 %v403
    %v475 = vunpack.c.h.b16 %v403
    %v476 = vunpack.c.l.b16 %v404
    %v477 = vunpack.c.h.b16 %v404
    %v478 = vunpack.c.l.b16 %v405
    %v479 = vunpack.c.h.b16 %v405
    %v480 = vunpack.c.l.b16 %v406
    %v481 = vunpack.c.h.b16 %v406
    %v482 = vunpack.c.l.b16 %v407
    %v483 = vunpack.c.h.b16 %v407
    %v484 = vunpack.c.l.b16 %v408
    %v485 = vunpack.c.h.b16 %v408
    %v486 = vunpack.c.l.b16 %v409
    %v487 = vunpack.c.h.b16 %v409
    %v488 = vunpack.c.l.b16 %v410
    %v489 = vunpack.c.h.b16 %v410
    %v490 = vunpack.c.l.b16 %v411
    %v491 = vunpack.c.h.b16 %v411
    %v492 = vunpack.c.l.b16 %v412
    %v493 = vunpack.c.h.b16 %v412
    %v494 = vunpack.c.l.b16 %v413
    %v495 = vunpack.c.h.b16 %v413
    %v496 = vunpack.c.l.b16 %v414
    %v497 = vunpack.c.h.b16 %v414
    %v498 = vunpack.c.l.b16 %v415
    %v499 = vunpack.c.h.b16 %v415
    %v500 = vunpack.c.l.b16 %v416
    %v501 = vunpack.c.h.b16 %v416
    %v502 = vunpack.c.l.b16 %v417
    %v503 = vunpack.c.h.b16 %v417
    %v504 = vunpack.c.l.b16 %v418
    %v505 = vunpack.c.h.b16 %v418
    %v506 = vunpack.c.l.b16 %v419
    %v507 = vunpack.c.h.b16 %v419
    %v508 = vunpack.c.l.b16 %v420
    %v509 = vunpack.c.h.b16 %v420
    %v510 = vunpack.c.l.b16 %v421
    %v511 = vunpack.c.h.b16 %v421
    %v512 = vunpack.c.l.b16 %v422
    %v513 = vunpack.c.h.b16 %v422
    %v514 = vunpack.c.l.b16 %v423
    %v515 = vunpack.c.h.b16 %v423
    %v516 = vunpack.c.l.b16 %v424
    %v517 = vunpack.c.h.b16 %v424
    %v518 = vunpack.c.l.b16 %v425
    %v519 = vunpack.c.h.b16 %v425
    %v520 = vunpack.c.l.b16 %v426
    %v521 = vunpack.c.h.b16 %v426
    %v522 = vunpack.c.l.b16 %v427
    %v523 = vunpack.c.h.b16 %v427
    %v524 = vpack.c.b16 %v464, %v460
    %v525 = vpack.c.b16 %v465, %v461
    %v526 = vpack.c.b16 %v466, %v462
    %v527 = vpack.c.b16 %v467, %v463
    %v528 = vpack.c.b16 %v472, %v468
    %v529 = vpack.c.b16 %v473, %v469
    %v530 = vpack.c.b16 %v474, %v470
    %v531 = vpack.c.b16 %v475, %v471
    %v532 = vpack.c.b16 %v480, %v476
    %v533 = vpack.c.b16 %v481, %v477
    %v534 = vpack.c.b16 %v482, %v478
    %v535 = vpack.c.b16 %v483, %v479
    %v536 = vpack.c.b16 %v488, %v484
    %v537 = vpack.c.b16 %v489, %v485
    %v538 = vpack.c.b16 %v490, %v486
    %v539 = vpack.c.b16 %v491, %v487
    %v540 = vpack.c.b16 %v496, %v492
    %v541 = vpack.c.b16 %v497, %v493
    %v542 = vpack.c.b16 %v498, %v494
    %v543 = vpack.c.b16 %v499, %v495
    %v544 = vpack.c.b16 %v504, %v500
    %v545 = vpack.c.b16 %v505, %v501
    %v546 = vpack.c.b16 %v506, %v502
    %v547 = vpack.c.b16 %v507, %v503
    %v548 = vpack.c.b16 %v512, %v508
    %v549 = vpack.c.b16 %v513, %v509
    %v550 = vpack.c.b16 %v514, %v510
    %v551 = vpack.c.b16 %v515, %v511
    %v552 = vpack.c.b16 %v520, %v516
    %v553 = vpack.c.b16 %v521, %v517
    %v554 = vpack.c.b16 %v522, %v518
    %v555 = vpack.c.b16 %v523, %v519
    %588 = vmatprep.subr.bf16.mxu0 %v525
    %589 = vmatpush1.bf16.msra.mxu0 %v524
    %590 = vmatprep.subr.bf16.mxu0 %v529
    %591 = vmatpush1.bf16.msra.mxu0 %v528
    %592 = vmatprep.subr.bf16.mxu0 %v533
    %593 = vmatpush1.bf16.msra.mxu0 %v532
    %594 = vmatprep.subr.bf16.mxu0 %v537
    %595 = vmatpush1.bf16.msra.mxu0 %v536
    %596 = vmatprep.subr.bf16.mxu0 %v541
    %597 = vmatpush1.bf16.msra.mxu0 %v540
    %598 = vmatprep.subr.bf16.mxu0 %v545
    %599 = vmatpush1.bf16.msra.mxu0 %v544
    %600 = vmatprep.subr.bf16.mxu0 %v549
    %601 = vmatpush1.bf16.msra.mxu0 %v548
    %602 = vmatprep.subr.bf16.mxu0 %v553
    %603 = vmatpush1.bf16.msra.mxu0 %v552
    %604 = vmatprep.subr.bf16.mxu0 0
    %605 = vmatpush1.bf16.msra.mxu0 0
    %606 = vmatprep.subr.bf16.mxu0 0
    %607 = vmatpush1.bf16.msra.mxu0 0
    %608 = vmatprep.subr.bf16.mxu0 0
    %609 = vmatpush1.bf16.msra.mxu0 0
    %610 = vmatprep.subr.bf16.mxu0 0
    %611 = vmatpush1.bf16.msra.mxu0 0
    %612 = vmatprep.subr.bf16.mxu0 0
    %613 = vmatpush1.bf16.msra.mxu0 0
    %614 = vmatprep.subr.bf16.mxu0 0
    %615 = vmatpush1.bf16.msra.mxu0 0
    %616 = vmatprep.subr.bf16.mxu0 0
    %617 = vmatpush1.bf16.msra.mxu0 0
    %618 = vmatprep.subr.bf16.mxu0 0
    %619 = vmatpush1.bf16.msra.mxu0 0
    %620 = vmatprep.mubr.bf16.mxu0 0
    %621 = vmatmul.mubr.bf16.gmra.mrb[0].mxu0 %v392
    %v622 = vpop.f32.mrb[0].mxu0
    %v623 = vadd.f32 0.0, %v622
    %v624 = vpop.f32.mrb[0].mxu0
    %v625 = vadd.f32 0.0, %v624
    %v626 = vpop.f32.mrb[0].mxu0
    %v627 = vadd.f32 0.0, %v626
    %v628 = vpop.f32.mrb[0].mxu0
    %v629 = vadd.f32 0.0, %v628
    %630 = vmatprep.mubr.bf16.mxu0 0
    %631 = vmatmul.mubr.bf16.gmra.mrb[0].mxu0 %v393
    %v632 = vpop.f32.mrb[0].mxu0
    %v633 = vadd.f32 0.0, %v632
    %v634 = vpop.f32.mrb[0].mxu0
    %v635 = vadd.f32 0.0, %v634
    %v636 = vpop.f32.mrb[0].mxu0
    %v637 = vadd.f32 0.0, %v636
    %v638 = vpop.f32.mrb[0].mxu0
    %v639 = vadd.f32 0.0, %v638
    %640 = vmatprep.mubr.bf16.mxu0 0
    %641 = vmatmul.mubr.bf16.gmra.mrb[0].mxu0 %v394
    %v642 = vpop.f32.mrb[0].mxu0
    %v643 = vadd.f32 0.0, %v642
    %v644 = vpop.f32.mrb[0].mxu0
    %v645 = vadd.f32 0.0, %v644
    %v646 = vpop.f32.mrb[0].mxu0
    %v647 = vadd.f32 0.0, %v646
    %v648 = vpop.f32.mrb[0].mxu0
    %v649 = vadd.f32 0.0, %v648
    %650 = vmatprep.mubr.bf16.mxu0 0
    %651 = vmatmul.mubr.bf16.gmra.mrb[0].mxu0 %v395
    %v652 = vpop.f32.mrb[0].mxu0
    %v653 = vadd.f32 0.0, %v652
    %v654 = vpop.f32.mrb[0].mxu0
    %v655 = vadd.f32 0.0, %v654
    %v656 = vpop.f32.mrb[0].mxu0
    %v657 = vadd.f32 0.0, %v656
    %v658 = vpop.f32.mrb[0].mxu0
    %v659 = vadd.f32 0.0, %v658
    %660 = vdwg.mxu0
    %661 = vmatprep.subr.bf16.mxu0 %v527
    %662 = vmatpush1.bf16.msra.mxu0 %v526
    %663 = vmatprep.subr.bf16.mxu0 %v531
    %664 = vmatpush1.bf16.msra.mxu0 %v530
    %665 = vmatprep.subr.bf16.mxu0 %v535
    %666 = vmatpush1.bf16.msra.mxu0 %v534
    %667 = vmatprep.subr.bf16.mxu0 %v539
    %668 = vmatpush1.bf16.msra.mxu0 %v538
    %669 = vmatprep.subr.bf16.mxu0 %v543
    %670 = vmatpush1.bf16.msra.mxu0 %v542
    %671 = vmatprep.subr.bf16.mxu0 %v547
    %672 = vmatpush1.bf16.msra.mxu0 %v546
    %673 = vmatprep.subr.bf16.mxu0 %v551
    %674 = vmatpush1.bf16.msra.mxu0 %v550
    %675 = vmatprep.subr.bf16.mxu0 %v555
    %676 = vmatpush1.bf16.msra.mxu0 %v554
    %677 = vmatprep.subr.bf16.mxu0 0
    %678 = vmatpush1.bf16.msra.mxu0 0
    %679 = vmatprep.subr.bf16.mxu0 0
    %680 = vmatpush1.bf16.msra.mxu0 0
    %681 = vmatprep.subr.bf16.mxu0 0
    %682 = vmatpush1.bf16.msra.mxu0 0
    %683 = vmatprep.subr.bf16.mxu0 0
    %684 = vmatpush1.bf16.msra.mxu0 0
    %685 = vmatprep.subr.bf16.mxu0 0
    %686 = vmatpush1.bf16.msra.mxu0 0
    %687 = vmatprep.subr.bf16.mxu0 0
    %688 = vmatpush1.bf16.msra.mxu0 0
    %689 = vmatprep.subr.bf16.mxu0 0
    %690 = vmatpush1.bf16.msra.mxu0 0
    %691 = vmatprep.subr.bf16.mxu0 0
    %692 = vmatpush1.bf16.msra.mxu0 0
    %693 = vmatprep.mubr.bf16.mxu0 0
    %694 = vmatmul.mubr.bf16.gmra.mrb[0].mxu0 %v392
    %v695 = vpop.f32.mrb[0].mxu0
    %v696 = vadd.f32 0.0, %v695
    %v697 = vpop.f32.mrb[0].mxu0
    %v698 = vadd.f32 0.0, %v697
    %v699 = vpop.f32.mrb[0].mxu0
    %v700 = vadd.f32 0.0, %v699
    %v701 = vpop.f32.mrb[0].mxu0
    %v702 = vadd.f32 0.0, %v701
    %703 = vmatprep.mubr.bf16.mxu0 0
    %704 = vmatmul.mubr.bf16.gmra.mrb[0].mxu0 %v393
    %v705 = vpop.f32.mrb[0].mxu0
    %v706 = vadd.f32 0.0, %v705
    %v707 = vpop.f32.mrb[0].mxu0
    %v708 = vadd.f32 0.0, %v707
    %v709 = vpop.f32.mrb[0].mxu0
    %v710 = vadd.f32 0.0, %v709
    %v711 = vpop.f32.mrb[0].mxu0
    %v712 = vadd.f32 0.0, %v711
    %713 = vmatprep.mubr.bf16.mxu0 0
    %714 = vmatmul.mubr.bf16.gmra.mrb[0].mxu0 %v394
    %v715 = vpop.f32.mrb[0].mxu0
    %v716 = vadd.f32 0.0, %v715
    %v717 = vpop.f32.mrb[0].mxu0
    %v718 = vadd.f32 0.0, %v717
    %v719 = vpop.f32.mrb[0].mxu0
    %v720 = vadd.f32 0.0, %v719
    %v721 = vpop.f32.mrb[0].mxu0
    %v722 = vadd.f32 0.0, %v721
    %723 = vmatprep.mubr.bf16.mxu0 0
    %724 = vmatmul.mubr.bf16.gmra.mrb[0].mxu0 %v395
    %v725 = vpop.f32.mrb[0].mxu0
    %v726 = vadd.f32 0.0, %v725
    %v727 = vpop.f32.mrb[0].mxu0
    %v728 = vadd.f32 0.0, %v727
    %v729 = vpop.f32.mrb[0].mxu0
    %v730 = vadd.f32 0.0, %v729
    %v731 = vpop.f32.mrb[0].mxu0
    %v732 = vadd.f32 0.0, %v731
    %733 = vdwg.mxu0
    %v734 = vld [vmem:[#allocation7] sm:$0xf]
    %v735 = vand.u32 2147483647, %v623
    %v736 = vand.u32 2147483647, %v625
    %v737 = vand.u32 2147483647, %v696
    %v738 = vand.u32 2147483647, %v698
    %v739 = vand.u32 2147483647, %v627
    %v740 = vand.u32 2147483647, %v629
    %v741 = vand.u32 2147483647, %v700
    %v742 = vand.u32 2147483647, %v702
    %v743 = vand.u32 2147483647, %v633
    %v744 = vand.u32 2147483647, %v635
    %v745 = vand.u32 2147483647, %v706
    %v746 = vand.u32 2147483647, %v708
    %v747 = vand.u32 2147483647, %v637
    %v748 = vand.u32 2147483647, %v639
    %v749 = vand.u32 2147483647, %v710
    %v750 = vand.u32 2147483647, %v712
    %v751 = vand.u32 2147483647, %v643
    %v752 = vand.u32 2147483647, %v645
    %v753 = vand.u32 2147483647, %v716
    %v754 = vand.u32 2147483647, %v718
    %v755 = vand.u32 2147483647, %v647
    %v756 = vand.u32 2147483647, %v649
    %v757 = vand.u32 2147483647, %v720
    %v758 = vand.u32 2147483647, %v722
    %v759 = vand.u32 2147483647, %v653
    %v760 = vand.u32 2147483647, %v655
    %v761 = vand.u32 2147483647, %v726
    %v762 = vand.u32 2147483647, %v728
    %v763 = vand.u32 2147483647, %v657
    %v764 = vand.u32 2147483647, %v659
    %v765 = vand.u32 2147483647, %v730
    %v766 = vand.u32 2147483647, %v732
    %v767 = vrsqrt.pop %v735
    %v768 = vmul.f32 %v735, %v767
    %vm769 = vcmp.eq.f32.partialorder %v735, inf
    %v770 = vsel %vm769, %v735, %v768
    %vm771 = vcmp.eq.f32.partialorder %v735, 0.0
    %v772 = vand.u32 %v735, 2147483648
    %v773 = vsel %vm771, %v772, %v770
    %v774 = vrsqrt.pop %v736
    %v775 = vmul.f32 %v736, %v774
    %vm776 = vcmp.eq.f32.partialorder %v736, inf
    %v777 = vsel %vm776, %v736, %v775
    %vm778 = vcmp.eq.f32.partialorder %v736, 0.0
    %v779 = vand.u32 %v736, 2147483648
    %v780 = vsel %vm778, %v779, %v777
    %v781 = vrsqrt.pop %v737
    %v782 = vmul.f32 %v737, %v781
    %vm783 = vcmp.eq.f32.partialorder %v737, inf
    %v784 = vsel %vm783, %v737, %v782
    %vm785 = vcmp.eq.f32.partialorder %v737, 0.0
    %v786 = vand.u32 %v737, 2147483648
    %v787 = vsel %vm785, %v786, %v784
    %v788 = vrsqrt.pop %v738
    %v789 = vmul.f32 %v738, %v788
    %vm790 = vcmp.eq.f32.partialorder %v738, inf
    %v791 = vsel %vm790, %v738, %v789
    %vm792 = vcmp.eq.f32.partialorder %v738, 0.0
    %v793 = vand.u32 %v738, 2147483648
    %v794 = vsel %vm792, %v793, %v791
    %v795 = vrsqrt.pop %v739
    %v796 = vmul.f32 %v739, %v795
    %vm797 = vcmp.eq.f32.partialorder %v739, inf
    %v798 = vsel %vm797, %v739, %v796
    %vm799 = vcmp.eq.f32.partialorder %v739, 0.0
    %v800 = vand.u32 %v739, 2147483648
    %v801 = vsel %vm799, %v800, %v798
    %v802 = vrsqrt.pop %v740
    %v803 = vmul.f32 %v740, %v802
    %vm804 = vcmp.eq.f32.partialorder %v740, inf
    %v805 = vsel %vm804, %v740, %v803
    %vm806 = vcmp.eq.f32.partialorder %v740, 0.0
    %v807 = vand.u32 %v740, 2147483648
    %v808 = vsel %vm806, %v807, %v805
    %v809 = vrsqrt.pop %v741
    %v810 = vmul.f32 %v741, %v809
    %vm811 = vcmp.eq.f32.partialorder %v741, inf
    %v812 = vsel %vm811, %v741, %v810
    %vm813 = vcmp.eq.f32.partialorder %v741, 0.0
    %v814 = vand.u32 %v741, 2147483648
    %v815 = vsel %vm813, %v814, %v812
    %v816 = vrsqrt.pop %v742
    %v817 = vmul.f32 %v742, %v816
    %vm818 = vcmp.eq.f32.partialorder %v742, inf
    %v819 = vsel %vm818, %v742, %v817
    %vm820 = vcmp.eq.f32.partialorder %v742, 0.0
    %v821 = vand.u32 %v742, 2147483648
    %v822 = vsel %vm820, %v821, %v819
    %v823 = vrsqrt.pop %v743
    %v824 = vmul.f32 %v743, %v823
    %vm825 = vcmp.eq.f32.partialorder %v743, inf
    %v826 = vsel %vm825, %v743, %v824
    %vm827 = vcmp.eq.f32.partialorder %v743, 0.0
    %v828 = vand.u32 %v743, 2147483648
    %v829 = vsel %vm827, %v828, %v826
    %v830 = vrsqrt.pop %v744
    %v831 = vmul.f32 %v744, %v830
    %vm832 = vcmp.eq.f32.partialorder %v744, inf
    %v833 = vsel %vm832, %v744, %v831
    %vm834 = vcmp.eq.f32.partialorder %v744, 0.0
    %v835 = vand.u32 %v744, 2147483648
    %v836 = vsel %vm834, %v835, %v833
    %v837 = vrsqrt.pop %v745
    %v838 = vmul.f32 %v745, %v837
    %vm839 = vcmp.eq.f32.partialorder %v745, inf
    %v840 = vsel %vm839, %v745, %v838
    %vm841 = vcmp.eq.f32.partialorder %v745, 0.0
    %v842 = vand.u32 %v745, 2147483648
    %v843 = vsel %vm841, %v842, %v840
    %v844 = vrsqrt.pop %v746
    %v845 = vmul.f32 %v746, %v844
    %vm846 = vcmp.eq.f32.partialorder %v746, inf
    %v847 = vsel %vm846, %v746, %v845
    %vm848 = vcmp.eq.f32.partialorder %v746, 0.0
    %v849 = vand.u32 %v746, 2147483648
    %v850 = vsel %vm848, %v849, %v847
    %v851 = vrsqrt.pop %v747
    %v852 = vmul.f32 %v747, %v851
    %vm853 = vcmp.eq.f32.partialorder %v747, inf
    %v854 = vsel %vm853, %v747, %v852
    %vm855 = vcmp.eq.f32.partialorder %v747, 0.0
    %v856 = vand.u32 %v747, 2147483648
    %v857 = vsel %vm855, %v856, %v854
    %v858 = vrsqrt.pop %v748
    %v859 = vmul.f32 %v748, %v858
    %vm860 = vcmp.eq.f32.partialorder %v748, inf
    %v861 = vsel %vm860, %v748, %v859
    %vm862 = vcmp.eq.f32.partialorder %v748, 0.0
    %v863 = vand.u32 %v748, 2147483648
    %v864 = vsel %vm862, %v863, %v861
    %v865 = vrsqrt.pop %v749
    %v866 = vmul.f32 %v749, %v865
    %vm867 = vcmp.eq.f32.partialorder %v749, inf
    %v868 = vsel %vm867, %v749, %v866
    %vm869 = vcmp.eq.f32.partialorder %v749, 0.0
    %v870 = vand.u32 %v749, 2147483648
    %v871 = vsel %vm869, %v870, %v868
    %v872 = vrsqrt.pop %v750
    %v873 = vmul.f32 %v750, %v872
    %vm874 = vcmp.eq.f32.partialorder %v750, inf
    %v875 = vsel %vm874, %v750, %v873
    %vm876 = vcmp.eq.f32.partialorder %v750, 0.0
    %v877 = vand.u32 %v750, 2147483648
    %v878 = vsel %vm876, %v877, %v875
    %v879 = vrsqrt.pop %v751
    %v880 = vmul.f32 %v751, %v879
    %vm881 = vcmp.eq.f32.partialorder %v751, inf
    %v882 = vsel %vm881, %v751, %v880
    %vm883 = vcmp.eq.f32.partialorder %v751, 0.0
    %v884 = vand.u32 %v751, 2147483648
    %v885 = vsel %vm883, %v884, %v882
    %v886 = vrsqrt.pop %v752
    %v887 = vmul.f32 %v752, %v886
    %vm888 = vcmp.eq.f32.partialorder %v752, inf
    %v889 = vsel %vm888, %v752, %v887
    %vm890 = vcmp.eq.f32.partialorder %v752, 0.0
    %v891 = vand.u32 %v752, 2147483648
    %v892 = vsel %vm890, %v891, %v889
    %v893 = vrsqrt.pop %v753
    %v894 = vmul.f32 %v753, %v893
    %vm895 = vcmp.eq.f32.partialorder %v753, inf
    %v896 = vsel %vm895, %v753, %v894
    %vm897 = vcmp.eq.f32.partialorder %v753, 0.0
    %v898 = vand.u32 %v753, 2147483648
    %v899 = vsel %vm897, %v898, %v896
    %v900 = vrsqrt.pop %v754
    %v901 = vmul.f32 %v754, %v900
    %vm902 = vcmp.eq.f32.partialorder %v754, inf
    %v903 = vsel %vm902, %v754, %v901
    %vm904 = vcmp.eq.f32.partialorder %v754, 0.0
    %v905 = vand.u32 %v754, 2147483648
    %v906 = vsel %vm904, %v905, %v903
    %v907 = vrsqrt.pop %v755
    %v908 = vmul.f32 %v755, %v907
    %vm909 = vcmp.eq.f32.partialorder %v755, inf
    %v910 = vsel %vm909, %v755, %v908
    %vm911 = vcmp.eq.f32.partialorder %v755, 0.0
    %v912 = vand.u32 %v755, 2147483648
    %v913 = vsel %vm911, %v912, %v910
    %v914 = vrsqrt.pop %v756
    %v915 = vmul.f32 %v756, %v914
    %vm916 = vcmp.eq.f32.partialorder %v756, inf
    %v917 = vsel %vm916, %v756, %v915
    %vm918 = vcmp.eq.f32.partialorder %v756, 0.0
    %v919 = vand.u32 %v756, 2147483648
    %v920 = vsel %vm918, %v919, %v917
    %v921 = vrsqrt.pop %v757
    %v922 = vmul.f32 %v757, %v921
    %vm923 = vcmp.eq.f32.partialorder %v757, inf
    %v924 = vsel %vm923, %v757, %v922
    %vm925 = vcmp.eq.f32.partialorder %v757, 0.0
    %v926 = vand.u32 %v757, 2147483648
    %v927 = vsel %vm925, %v926, %v924
    %v928 = vrsqrt.pop %v758
    %v929 = vmul.f32 %v758, %v928
    %vm930 = vcmp.eq.f32.partialorder %v758, inf
    %v931 = vsel %vm930, %v758, %v929
    %vm932 = vcmp.eq.f32.partialorder %v758, 0.0
    %v933 = vand.u32 %v758, 2147483648
    %v934 = vsel %vm932, %v933, %v931
    %v935 = vrsqrt.pop %v759
    %v936 = vmul.f32 %v759, %v935
    %vm937 = vcmp.eq.f32.partialorder %v759, inf
    %v938 = vsel %vm937, %v759, %v936
    %vm939 = vcmp.eq.f32.partialorder %v759, 0.0
    %v940 = vand.u32 %v759, 2147483648
    %v941 = vsel %vm939, %v940, %v938
    %v942 = vrsqrt.pop %v760
    %v943 = vmul.f32 %v760, %v942
    %vm944 = vcmp.eq.f32.partialorder %v760, inf
    %v945 = vsel %vm944, %v760, %v943
    %vm946 = vcmp.eq.f32.partialorder %v760, 0.0
    %v947 = vand.u32 %v760, 2147483648
    %v948 = vsel %vm946, %v947, %v945
    %v949 = vrsqrt.pop %v761
    %v950 = vmul.f32 %v761, %v949
    %vm951 = vcmp.eq.f32.partialorder %v761, inf
    %v952 = vsel %vm951, %v761, %v950
    %vm953 = vcmp.eq.f32.partialorder %v761, 0.0
    %v954 = vand.u32 %v761, 2147483648
    %v955 = vsel %vm953, %v954, %v952
    %v956 = vrsqrt.pop %v762
    %v957 = vmul.f32 %v762, %v956
    %vm958 = vcmp.eq.f32.partialorder %v762, inf
    %v959 = vsel %vm958, %v762, %v957
    %vm960 = vcmp.eq.f32.partialorder %v762, 0.0
    %v961 = vand.u32 %v762, 2147483648
    %v962 = vsel %vm960, %v961, %v959
    %v963 = vrsqrt.pop %v763
    %v964 = vmul.f32 %v763, %v963
    %vm965 = vcmp.eq.f32.partialorder %v763, inf
    %v966 = vsel %vm965, %v763, %v964
    %vm967 = vcmp.eq.f32.partialorder %v763, 0.0
    %v968 = vand.u32 %v763, 2147483648
    %v969 = vsel %vm967, %v968, %v966
    %v970 = vrsqrt.pop %v764
    %v971 = vmul.f32 %v764, %v970
    %vm972 = vcmp.eq.f32.partialorder %v764, inf
    %v973 = vsel %vm972, %v764, %v971
    %vm974 = vcmp.eq.f32.partialorder %v764, 0.0
    %v975 = vand.u32 %v764, 2147483648
    %v976 = vsel %vm974, %v975, %v973
    %v977 = vrsqrt.pop %v765
    %v978 = vmul.f32 %v765, %v977
    %vm979 = vcmp.eq.f32.partialorder %v765, inf
    %v980 = vsel %vm979, %v765, %v978
    %vm981 = vcmp.eq.f32.partialorder %v765, 0.0
    %v982 = vand.u32 %v765, 2147483648
    %v983 = vsel %vm981, %v982, %v980
    %v984 = vrsqrt.pop %v766
    %v985 = vmul.f32 %v766, %v984
    %vm986 = vcmp.eq.f32.partialorder %v766, inf
    %v987 = vsel %vm986, %v766, %v985
    %vm988 = vcmp.eq.f32.partialorder %v766, 0.0
    %v989 = vand.u32 %v766, 2147483648
    %v990 = vsel %vm988, %v989, %v987
    %v991 = vsub.f32 %v773, 1.0
    %v992 = vsub.f32 %v780, 1.0
    %v993 = vsub.f32 %v787, 1.0
    %v994 = vsub.f32 %v794, 1.0
    %v995 = vsub.f32 %v801, 1.0
    %v996 = vsub.f32 %v808, 1.0
    %v997 = vsub.f32 %v815, 1.0
    %v998 = vsub.f32 %v822, 1.0
    %v999 = vsub.f32 %v829, 1.0
    %v1000 = vsub.f32 %v836, 1.0
    %v1001 = vsub.f32 %v843, 1.0
    %v1002 = vsub.f32 %v850, 1.0
    %v1003 = vsub.f32 %v857, 1.0
    %v1004 = vsub.f32 %v864, 1.0
    %v1005 = vsub.f32 %v871, 1.0
    %v1006 = vsub.f32 %v878, 1.0
    %v1007 = vsub.f32 %v885, 1.0
    %v1008 = vsub.f32 %v892, 1.0
    %v1009 = vsub.f32 %v899, 1.0
    %v1010 = vsub.f32 %v906, 1.0
    %v1011 = vsub.f32 %v913, 1.0
    %v1012 = vsub.f32 %v920, 1.0
    %v1013 = vsub.f32 %v927, 1.0
    %v1014 = vsub.f32 %v934, 1.0
    %v1015 = vsub.f32 %v941, 1.0
    %v1016 = vsub.f32 %v948, 1.0
    %v1017 = vsub.f32 %v955, 1.0
    %v1018 = vsub.f32 %v962, 1.0
    %v1019 = vsub.f32 %v969, 1.0
    %v1020 = vsub.f32 %v976, 1.0
    %v1021 = vsub.f32 %v983, 1.0
    %v1022 = vsub.f32 %v990, 1.0
    %v1024 = vlaneseq
    %v1025 = vshrl.u32 %v1024, 7
    %v1026 = vsub.s32 0, %v1025
    %v1027 = vrot.slane %v734, %v1026
    %v1028 = vlaneseq
    %v1029 = vshrl.u32 %v1028, 7
    %v1030 = vsub.s32 1, %v1029
    %v1031 = vrot.slane %v734, %v1030
    %v1032 = vlaneseq
    %v1033 = vshrl.u32 %v1032, 7
    %v1034 = vsub.s32 2, %v1033
    %v1035 = vrot.slane %v734, %v1034
    %v1036 = vlaneseq
    %v1037 = vshrl.u32 %v1036, 7
    %v1038 = vsub.s32 3, %v1037
    %v1039 = vrot.slane %v734, %v1038
    %v1044 = vmul.f32 %v1027, %v991
    %v1045 = vmul.f32 %v1031, %v992
    %v1046 = vmul.f32 %v1035, %v993
    %v1047 = vmul.f32 %v1039, %v994
    %v1048 = vmul.f32 %v1027, %v995
    %v1049 = vmul.f32 %v1031, %v996
    %v1050 = vmul.f32 %v1035, %v997
    %v1051 = vmul.f32 %v1039, %v998
    %v1052 = vmul.f32 %v1027, %v999
    %v1053 = vmul.f32 %v1031, %v1000
    %v1054 = vmul.f32 %v1035, %v1001
    %v1055 = vmul.f32 %v1039, %v1002
    %v1056 = vmul.f32 %v1027, %v1003
    %v1057 = vmul.f32 %v1031, %v1004
    %v1058 = vmul.f32 %v1035, %v1005
    %v1059 = vmul.f32 %v1039, %v1006
    %v1060 = vmul.f32 %v1027, %v1007
    %v1061 = vmul.f32 %v1031, %v1008
    %v1062 = vmul.f32 %v1035, %v1009
    %v1063 = vmul.f32 %v1039, %v1010
    %v1064 = vmul.f32 %v1027, %v1011
    %v1065 = vmul.f32 %v1031, %v1012
    %v1066 = vmul.f32 %v1035, %v1013
    %v1067 = vmul.f32 %v1039, %v1014
    %v1068 = vmul.f32 %v1027, %v1015
    %v1069 = vmul.f32 %v1031, %v1016
    %v1070 = vmul.f32 %v1035, %v1017
    %v1071 = vmul.f32 %v1039, %v1018
    %v1072 = vmul.f32 %v1027, %v1019
    %v1073 = vmul.f32 %v1031, %v1020
    %v1074 = vmul.f32 %v1035, %v1021
    %v1075 = vmul.f32 %v1039, %v1022
    %v1076 = vadd.f32 %v1044, 1.000001
    %v1077 = vadd.f32 %v1045, 1.000001
    %v1078 = vadd.f32 %v1046, 1.000001
    %v1079 = vadd.f32 %v1047, 1.000001
    %v1080 = vadd.f32 %v1048, 1.000001
    %v1081 = vadd.f32 %v1049, 1.000001
    %v1082 = vadd.f32 %v1050, 1.000001
    %v1083 = vadd.f32 %v1051, 1.000001
    %v1084 = vadd.f32 %v1052, 1.000001
    %v1085 = vadd.f32 %v1053, 1.000001
    %v1086 = vadd.f32 %v1054, 1.000001
    %v1087 = vadd.f32 %v1055, 1.000001
    %v1088 = vadd.f32 %v1056, 1.000001
    %v1089 = vadd.f32 %v1057, 1.000001
    %v1090 = vadd.f32 %v1058, 1.000001
    %v1091 = vadd.f32 %v1059, 1.000001
    %v1092 = vadd.f32 %v1060, 1.000001
    %v1093 = vadd.f32 %v1061, 1.000001
    %v1094 = vadd.f32 %v1062, 1.000001
    %v1095 = vadd.f32 %v1063, 1.000001
    %v1096 = vadd.f32 %v1064, 1.000001
    %v1097 = vadd.f32 %v1065, 1.000001
    %v1098 = vadd.f32 %v1066, 1.000001
    %v1099 = vadd.f32 %v1067, 1.000001
    %v1100 = vadd.f32 %v1068, 1.000001
    %v1101 = vadd.f32 %v1069, 1.000001
    %v1102 = vadd.f32 %v1070, 1.000001
    %v1103 = vadd.f32 %v1071, 1.000001
    %v1104 = vadd.f32 %v1072, 1.000001
    %v1105 = vadd.f32 %v1073, 1.000001
    %v1106 = vadd.f32 %v1074, 1.000001
    %v1107 = vadd.f32 %v1075, 1.000001
    %v1108 = vrcp.pop %v1076
    %v1109 = vrcp.pop %v1077
    %v1110 = vrcp.pop %v1078
    %v1111 = vrcp.pop %v1079
    %v1112 = vrcp.pop %v1080
    %v1113 = vrcp.pop %v1081
    %v1114 = vrcp.pop %v1082
    %v1115 = vrcp.pop %v1083
    %v1116 = vrcp.pop %v1084
    %v1117 = vrcp.pop %v1085
    %v1118 = vrcp.pop %v1086
    %v1119 = vrcp.pop %v1087
    %v1120 = vrcp.pop %v1088
    %v1121 = vrcp.pop %v1089
    %v1122 = vrcp.pop %v1090
    %v1123 = vrcp.pop %v1091
    %v1124 = vrcp.pop %v1092
    %v1125 = vrcp.pop %v1093
    %v1126 = vrcp.pop %v1094
    %v1127 = vrcp.pop %v1095
    %v1128 = vrcp.pop %v1096
    %v1129 = vrcp.pop %v1097
    %v1130 = vrcp.pop %v1098
    %v1131 = vrcp.pop %v1099
    %v1132 = vrcp.pop %v1100
    %v1133 = vrcp.pop %v1101
    %v1134 = vrcp.pop %v1102
    %v1135 = vrcp.pop %v1103
    %v1136 = vrcp.pop %v1104
    %v1137 = vrcp.pop %v1105
    %v1138 = vrcp.pop %v1106
    %v1139 = vrcp.pop %v1107
    %v1140 = vld [vmem:[#allocation4] sm:$0xff]
    %v1141 = vld [vmem:[#allocation4 + $0x8] sm:$0xff]
    %v1142 = vld [vmem:[#allocation4 + $0x10] sm:$0xff]
    %v1143 = vld [vmem:[#allocation4 + $0x18] sm:$0xff]
    %v1144 = vld [vmem:[#allocation4 + $0x20] sm:$0xff]
    %v1145 = vld [vmem:[#allocation4 + $0x28] sm:$0xff]
    %v1146 = vld [vmem:[#allocation4 + $0x30] sm:$0xff]
    %v1147 = vld [vmem:[#allocation4 + $0x38] sm:$0xff]
    %v1148 = vld [vmem:[#allocation4 + $0x40] sm:$0xff]
    %v1149 = vld [vmem:[#allocation4 + $0x48] sm:$0xff]
    %v1150 = vld [vmem:[#allocation4 + $0x50] sm:$0xff]
    %v1151 = vld [vmem:[#allocation4 + $0x58] sm:$0xff]
    %v1152 = vld [vmem:[#allocation4 + $0x60] sm:$0xff]
    %v1153 = vld [vmem:[#allocation4 + $0x68] sm:$0xff]
    %v1154 = vld [vmem:[#allocation4 + $0x70] sm:$0xff]
    %v1155 = vld [vmem:[#allocation4 + $0x78] sm:$0xff]
    %v1156 = vld [vmem:[#allocation4 + $0x80] sm:$0xff]
    %v1157 = vld [vmem:[#allocation4 + $0x88] sm:$0xff]
    %v1158 = vld [vmem:[#allocation4 + $0x90] sm:$0xff]
    %v1159 = vld [vmem:[#allocation4 + $0x98] sm:$0xff]
    %v1160 = vld [vmem:[#allocation4 + $0xa0] sm:$0xff]
    %v1161 = vld [vmem:[#allocation4 + $0xa8] sm:$0xff]
    %v1162 = vld [vmem:[#allocation4 + $0xb0] sm:$0xff]
    %v1163 = vld [vmem:[#allocation4 + $0xb8] sm:$0xff]
    %v1164 = vld [vmem:[#allocation4 + $0xc0] sm:$0xff]
    %v1165 = vld [vmem:[#allocation4 + $0xc8] sm:$0xff]
    %v1166 = vld [vmem:[#allocation4 + $0xd0] sm:$0xff]
    %v1167 = vld [vmem:[#allocation4 + $0xd8] sm:$0xff]
    %v1168 = vld [vmem:[#allocation4 + $0xe0] sm:$0xff]
    %v1169 = vld [vmem:[#allocation4 + $0xe8] sm:$0xff]
    %v1170 = vld [vmem:[#allocation4 + $0xf0] sm:$0xff]
    %v1171 = vld [vmem:[#allocation4 + $0xf8] sm:$0xff]
    %v1172 = vld [vmem:[#allocation4 + $0x100] sm:$0xff]
    %v1173 = vld [vmem:[#allocation4 + $0x108] sm:$0xff]
    %v1174 = vld [vmem:[#allocation4 + $0x110] sm:$0xff]
    %v1175 = vld [vmem:[#allocation4 + $0x118] sm:$0xff]
    %v1176 = vld [vmem:[#allocation4 + $0x120] sm:$0xff]
    %v1177 = vld [vmem:[#allocation4 + $0x128] sm:$0xff]
    %v1178 = vld [vmem:[#allocation4 + $0x130] sm:$0xff]
    %v1179 = vld [vmem:[#allocation4 + $0x138] sm:$0xff]
    %v1180 = vld [vmem:[#allocation4 + $0x140] sm:$0xff]
    %v1181 = vld [vmem:[#allocation4 + $0x148] sm:$0xff]
    %v1182 = vld [vmem:[#allocation4 + $0x150] sm:$0xff]
    %v1183 = vld [vmem:[#allocation4 + $0x158] sm:$0xff]
    %v1184 = vld [vmem:[#allocation4 + $0x160] sm:$0xff]
    %v1185 = vld [vmem:[#allocation4 + $0x168] sm:$0xff]
    %v1186 = vld [vmem:[#allocation4 + $0x170] sm:$0xff]
    %v1187 = vld [vmem:[#allocation4 + $0x178] sm:$0xff]
    %v1188 = vld [vmem:[#allocation4 + $0x180] sm:$0xff]
    %v1189 = vld [vmem:[#allocation4 + $0x188] sm:$0xff]
    %v1190 = vld [vmem:[#allocation4 + $0x190] sm:$0xff]
    %v1191 = vld [vmem:[#allocation4 + $0x198] sm:$0xff]
    %v1192 = vld [vmem:[#allocation4 + $0x1a0] sm:$0xff]
    %v1193 = vld [vmem:[#allocation4 + $0x1a8] sm:$0xff]
    %v1194 = vld [vmem:[#allocation4 + $0x1b0] sm:$0xff]
    %v1195 = vld [vmem:[#allocation4 + $0x1b8] sm:$0xff]
    %v1196 = vld [vmem:[#allocation4 + $0x1c0] sm:$0xff]
    %v1197 = vld [vmem:[#allocation4 + $0x1c8] sm:$0xff]
    %v1198 = vld [vmem:[#allocation4 + $0x1d0] sm:$0xff]
    %v1199 = vld [vmem:[#allocation4 + $0x1d8] sm:$0xff]
    %v1200 = vld [vmem:[#allocation4 + $0x1e0] sm:$0xff]
    %v1201 = vld [vmem:[#allocation4 + $0x1e8] sm:$0xff]
    %v1202 = vld [vmem:[#allocation4 + $0x1f0] sm:$0xff]
    %v1203 = vld [vmem:[#allocation4 + $0x1f8] sm:$0xff]
    %v1268 = vunpack.c.l.b16 %v1140
    %v1269 = vunpack.c.h.b16 %v1140
    %v1270 = vunpack.c.l.b16 %v1141
    %v1271 = vunpack.c.h.b16 %v1141
    %v1272 = vunpack.c.l.b16 %v1142
    %v1273 = vunpack.c.h.b16 %v1142
    %v1274 = vunpack.c.l.b16 %v1143
    %v1275 = vunpack.c.h.b16 %v1143
    %v1276 = vunpack.c.l.b16 %v1144
    %v1277 = vunpack.c.h.b16 %v1144
    %v1278 = vunpack.c.l.b16 %v1145
    %v1279 = vunpack.c.h.b16 %v1145
    %v1280 = vunpack.c.l.b16 %v1146
    %v1281 = vunpack.c.h.b16 %v1146
    %v1282 = vunpack.c.l.b16 %v1147
    %v1283 = vunpack.c.h.b16 %v1147
    %v1284 = vunpack.c.l.b16 %v1148
    %v1285 = vunpack.c.h.b16 %v1148
    %v1286 = vunpack.c.l.b16 %v1149
    %v1287 = vunpack.c.h.b16 %v1149
    %v1288 = vunpack.c.l.b16 %v1150
    %v1289 = vunpack.c.h.b16 %v1150
    %v1290 = vunpack.c.l.b16 %v1151
    %v1291 = vunpack.c.h.b16 %v1151
    %v1292 = vunpack.c.l.b16 %v1152
    %v1293 = vunpack.c.h.b16 %v1152
    %v1294 = vunpack.c.l.b16 %v1153
    %v1295 = vunpack.c.h.b16 %v1153
    %v1296 = vunpack.c.l.b16 %v1154
    %v1297 = vunpack.c.h.b16 %v1154
    %v1298 = vunpack.c.l.b16 %v1155
    %v1299 = vunpack.c.h.b16 %v1155
    %v1300 = vunpack.c.l.b16 %v1156
    %v1301 = vunpack.c.h.b16 %v1156
    %v1302 = vunpack.c.l.b16 %v1157
    %v1303 = vunpack.c.h.b16 %v1157
    %v1304 = vunpack.c.l.b16 %v1158
    %v1305 = vunpack.c.h.b16 %v1158
    %v1306 = vunpack.c.l.b16 %v1159
    %v1307 = vunpack.c.h.b16 %v1159
    %v1308 = vunpack.c.l.b16 %v1160
    %v1309 = vunpack.c.h.b16 %v1160
    %v1310 = vunpack.c.l.b16 %v1161
    %v1311 = vunpack.c.h.b16 %v1161
    %v1312 = vunpack.c.l.b16 %v1162
    %v1313 = vunpack.c.h.b16 %v1162
    %v1314 = vunpack.c.l.b16 %v1163
    %v1315 = vunpack.c.h.b16 %v1163
    %v1316 = vunpack.c.l.b16 %v1164
    %v1317 = vunpack.c.h.b16 %v1164
    %v1318 = vunpack.c.l.b16 %v1165
    %v1319 = vunpack.c.h.b16 %v1165
    %v1320 = vunpack.c.l.b16 %v1166
    %v1321 = vunpack.c.h.b16 %v1166
    %v1322 = vunpack.c.l.b16 %v1167
    %v1323 = vunpack.c.h.b16 %v1167
    %v1324 = vunpack.c.l.b16 %v1168
    %v1325 = vunpack.c.h.b16 %v1168
    %v1326 = vunpack.c.l.b16 %v1169
    %v1327 = vunpack.c.h.b16 %v1169
    %v1328 = vunpack.c.l.b16 %v1170
    %v1329 = vunpack.c.h.b16 %v1170
    %v1330 = vunpack.c.l.b16 %v1171
    %v1331 = vunpack.c.h.b16 %v1171
    %v1332 = vunpack.c.l.b16 %v1172
    %v1333 = vunpack.c.h.b16 %v1172
    %v1334 = vunpack.c.l.b16 %v1173
    %v1335 = vunpack.c.h.b16 %v1173
    %v1336 = vunpack.c.l.b16 %v1174
    %v1337 = vunpack.c.h.b16 %v1174
    %v1338 = vunpack.c.l.b16 %v1175
    %v1339 = vunpack.c.h.b16 %v1175
    %v1340 = vunpack.c.l.b16 %v1176
    %v1341 = vunpack.c.h.b16 %v1176
    %v1342 = vunpack.c.l.b16 %v1177
    %v1343 = vunpack.c.h.b16 %v1177
    %v1344 = vunpack.c.l.b16 %v1178
    %v1345 = vunpack.c.h.b16 %v1178
    %v1346 = vunpack.c.l.b16 %v1179
    %v1347 = vunpack.c.h.b16 %v1179
    %v1348 = vunpack.c.l.b16 %v1180
    %v1349 = vunpack.c.h.b16 %v1180
    %v1350 = vunpack.c.l.b16 %v1181
    %v1351 = vunpack.c.h.b16 %v1181
    %v1352 = vunpack.c.l.b16 %v1182
    %v1353 = vunpack.c.h.b16 %v1182
    %v1354 = vunpack.c.l.b16 %v1183
    %v1355 = vunpack.c.h.b16 %v1183
    %v1356 = vunpack.c.l.b16 %v1184
    %v1357 = vunpack.c.h.b16 %v1184
    %v1358 = vunpack.c.l.b16 %v1185
    %v1359 = vunpack.c.h.b16 %v1185
    %v1360 = vunpack.c.l.b16 %v1186
    %v1361 = vunpack.c.h.b16 %v1186
    %v1362 = vunpack.c.l.b16 %v1187
    %v1363 = vunpack.c.h.b16 %v1187
    %v1364 = vunpack.c.l.b16 %v1188
    %v1365 = vunpack.c.h.b16 %v1188
    %v1366 = vunpack.c.l.b16 %v1189
    %v1367 = vunpack.c.h.b16 %v1189
    %v1368 = vunpack.c.l.b16 %v1190
    %v1369 = vunpack.c.h.b16 %v1190
    %v1370 = vunpack.c.l.b16 %v1191
    %v1371 = vunpack.c.h.b16 %v1191
    %v1372 = vunpack.c.l.b16 %v1192
    %v1373 = vunpack.c.h.b16 %v1192
    %v1374 = vunpack.c.l.b16 %v1193
    %v1375 = vunpack.c.h.b16 %v1193
    %v1376 = vunpack.c.l.b16 %v1194
    %v1377 = vunpack.c.h.b16 %v1194
    %v1378 = vunpack.c.l.b16 %v1195
    %v1379 = vunpack.c.h.b16 %v1195
    %v1380 = vunpack.c.l.b16 %v1196
    %v1381 = vunpack.c.h.b16 %v1196
    %v1382 = vunpack.c.l.b16 %v1197
    %v1383 = vunpack.c.h.b16 %v1197
    %v1384 = vunpack.c.l.b16 %v1198
    %v1385 = vunpack.c.h.b16 %v1198
    %v1386 = vunpack.c.l.b16 %v1199
    %v1387 = vunpack.c.h.b16 %v1199
    %v1388 = vunpack.c.l.b16 %v1200
    %v1389 = vunpack.c.h.b16 %v1200
    %v1390 = vunpack.c.l.b16 %v1201
    %v1391 = vunpack.c.h.b16 %v1201
    %v1392 = vunpack.c.l.b16 %v1202
    %v1393 = vunpack.c.h.b16 %v1202
    %v1394 = vunpack.c.l.b16 %v1203
    %v1395 = vunpack.c.h.b16 %v1203
    %v1396 = vpack.c.b16 %v1276, %v1268
    %v1397 = vpack.c.b16 %v1277, %v1269
    %v1398 = vpack.c.b16 %v1278, %v1270
    %v1399 = vpack.c.b16 %v1279, %v1271
    %v1400 = vpack.c.b16 %v1280, %v1272
    %v1401 = vpack.c.b16 %v1281, %v1273
    %v1402 = vpack.c.b16 %v1282, %v1274
    %v1403 = vpack.c.b16 %v1283, %v1275
    %v1404 = vpack.c.b16 %v1292, %v1284
    %v1405 = vpack.c.b16 %v1293, %v1285
    %v1406 = vpack.c.b16 %v1294, %v1286
    %v1407 = vpack.c.b16 %v1295, %v1287
    %v1408 = vpack.c.b16 %v1296, %v1288
    %v1409 = vpack.c.b16 %v1297, %v1289
    %v1410 = vpack.c.b16 %v1298, %v1290
    %v1411 = vpack.c.b16 %v1299, %v1291
    %v1412 = vpack.c.b16 %v1308, %v1300
    %v1413 = vpack.c.b16 %v1309, %v1301
    %v1414 = vpack.c.b16 %v1310, %v1302
    %v1415 = vpack.c.b16 %v1311, %v1303
    %v1416 = vpack.c.b16 %v1312, %v1304
    %v1417 = vpack.c.b16 %v1313, %v1305
    %v1418 = vpack.c.b16 %v1314, %v1306
    %v1419 = vpack.c.b16 %v1315, %v1307
    %v1420 = vpack.c.b16 %v1324, %v1316
    %v1421 = vpack.c.b16 %v1325, %v1317
    %v1422 = vpack.c.b16 %v1326, %v1318
    %v1423 = vpack.c.b16 %v1327, %v1319
    %v1424 = vpack.c.b16 %v1328, %v1320
    %v1425 = vpack.c.b16 %v1329, %v1321
    %v1426 = vpack.c.b16 %v1330, %v1322
    %v1427 = vpack.c.b16 %v1331, %v1323
    %v1428 = vpack.c.b16 %v1340, %v1332
    %v1429 = vpack.c.b16 %v1341, %v1333
    %v1430 = vpack.c.b16 %v1342, %v1334
    %v1431 = vpack.c.b16 %v1343, %v1335
    %v1432 = vpack.c.b16 %v1344, %v1336
    %v1433 = vpack.c.b16 %v1345, %v1337
    %v1434 = vpack.c.b16 %v1346, %v1338
    %v1435 = vpack.c.b16 %v1347, %v1339
    %v1436 = vpack.c.b16 %v1356, %v1348
    %v1437 = vpack.c.b16 %v1357, %v1349
    %v1438 = vpack.c.b16 %v1358, %v1350
    %v1439 = vpack.c.b16 %v1359, %v1351
    %v1440 = vpack.c.b16 %v1360, %v1352
    %v1441 = vpack.c.b16 %v1361, %v1353
    %v1442 = vpack.c.b16 %v1362, %v1354
    %v1443 = vpack.c.b16 %v1363, %v1355
    %v1444 = vpack.c.b16 %v1372, %v1364
    %v1445 = vpack.c.b16 %v1373, %v1365
    %v1446 = vpack.c.b16 %v1374, %v1366
    %v1447 = vpack.c.b16 %v1375, %v1367
    %v1448 = vpack.c.b16 %v1376, %v1368
    %v1449 = vpack.c.b16 %v1377, %v1369
    %v1450 = vpack.c.b16 %v1378, %v1370
    %v1451 = vpack.c.b16 %v1379, %v1371
    %v1452 = vpack.c.b16 %v1388, %v1380
    %v1453 = vpack.c.b16 %v1389, %v1381
    %v1454 = vpack.c.b16 %v1390, %v1382
    %v1455 = vpack.c.b16 %v1391, %v1383
    %v1456 = vpack.c.b16 %v1392, %v1384
    %v1457 = vpack.c.b16 %v1393, %v1385
    %v1458 = vpack.c.b16 %v1394, %v1386
    %v1459 = vpack.c.b16 %v1395, %v1387
    %1524 = vmatprep.subr.bf16.mxu0 %v1397
    %1525 = vmatpush1.bf16.msra.mxu0 %v1396
    %1526 = vmatprep.subr.bf16.mxu0 %v1405
    %1527 = vmatpush1.bf16.msra.mxu0 %v1404
    %1528 = vmatprep.subr.bf16.mxu0 %v1413
    %1529 = vmatpush1.bf16.msra.mxu0 %v1412
    %1530 = vmatprep.subr.bf16.mxu0 %v1421
    %1531 = vmatpush1.bf16.msra.mxu0 %v1420
    %1532 = vmatprep.subr.bf16.mxu0 %v1429
    %1533 = vmatpush1.bf16.msra.mxu0 %v1428
    %1534 = vmatprep.subr.bf16.mxu0 %v1437
    %1535 = vmatpush1.bf16.msra.mxu0 %v1436
    %1536 = vmatprep.subr.bf16.mxu0 %v1445
    %1537 = vmatpush1.bf16.msra.mxu0 %v1444
    %1538 = vmatprep.subr.bf16.mxu0 %v1453
    %1539 = vmatpush1.bf16.msra.mxu0 %v1452
    %1540 = vmatprep.subr.bf16.mxu0 0
    %1541 = vmatpush1.bf16.msra.mxu0 0
    %1542 = vmatprep.subr.bf16.mxu0 0
    %1543 = vmatpush1.bf16.msra.mxu0 0
    %1544 = vmatprep.subr.bf16.mxu0 0
    %1545 = vmatpush1.bf16.msra.mxu0 0
    %1546 = vmatprep.subr.bf16.mxu0 0
    %1547 = vmatpush1.bf16.msra.mxu0 0
    %1548 = vmatprep.subr.bf16.mxu0 0
    %1549 = vmatpush1.bf16.msra.mxu0 0
    %1550 = vmatprep.subr.bf16.mxu0 0
    %1551 = vmatpush1.bf16.msra.mxu0 0
    %1552 = vmatprep.subr.bf16.mxu0 0
    %1553 = vmatpush1.bf16.msra.mxu0 0
    %1554 = vmatprep.subr.bf16.mxu0 0
    %1555 = vmatpush1.bf16.msra.mxu0 0
    %1556 = vmatprep.mubr.bf16.mxu0 0
    %1557 = vmatmul.mubr.bf16.gmra.mrb[0].mxu0 %v251
    %v1558 = vpop.f32.mrb[0].mxu0
    %v1559 = vadd.f32 0.0, %v1558
    %v1560 = vpop.f32.mrb[0].mxu0
    %v1561 = vadd.f32 0.0, %v1560
    %v1562 = vpop.f32.mrb[0].mxu0
    %v1563 = vadd.f32 0.0, %v1562
    %v1564 = vpop.f32.mrb[0].mxu0
    %v1565 = vadd.f32 0.0, %v1564
    %1566 = vmatprep.mubr.bf16.mxu0 0
    %1567 = vmatmul.mubr.bf16.gmra.mrb[0].mxu0 %v252
    %v1568 = vpop.f32.mrb[0].mxu0
    %v1569 = vadd.f32 0.0, %v1568
    %v1570 = vpop.f32.mrb[0].mxu0
    %v1571 = vadd.f32 0.0, %v1570
    %v1572 = vpop.f32.mrb[0].mxu0
    %v1573 = vadd.f32 0.0, %v1572
    %v1574 = vpop.f32.mrb[0].mxu0
    %v1575 = vadd.f32 0.0, %v1574
    %1576 = vmatprep.mubr.bf16.mxu0 0
    %1577 = vmatmul.mubr.bf16.gmra.mrb[0].mxu0 %v253
    %v1578 = vpop.f32.mrb[0].mxu0
    %v1579 = vadd.f32 0.0, %v1578
    %v1580 = vpop.f32.mrb[0].mxu0
    %v1581 = vadd.f32 0.0, %v1580
    %v1582 = vpop.f32.mrb[0].mxu0
    %v1583 = vadd.f32 0.0, %v1582
    %v1584 = vpop.f32.mrb[0].mxu0
    %v1585 = vadd.f32 0.0, %v1584
    %1586 = vmatprep.mubr.bf16.mxu0 0
    %1587 = vmatmul.mubr.bf16.gmra.mrb[0].mxu0 %v254
    %v1588 = vpop.f32.mrb[0].mxu0
    %v1589 = vadd.f32 0.0, %v1588
    %v1590 = vpop.f32.mrb[0].mxu0
    %v1591 = vadd.f32 0.0, %v1590
    %v1592 = vpop.f32.mrb[0].mxu0
    %v1593 = vadd.f32 0.0, %v1592
    %v1594 = vpop.f32.mrb[0].mxu0
    %v1595 = vadd.f32 0.0, %v1594
    %1596 = vdwg.mxu0
    %1597 = vmatprep.subr.bf16.mxu0 %v1399
    %1598 = vmatpush1.bf16.msra.mxu0 %v1398
    %1599 = vmatprep.subr.bf16.mxu0 %v1407
    %1600 = vmatpush1.bf16.msra.mxu0 %v1406
    %1601 = vmatprep.subr.bf16.mxu0 %v1415
    %1602 = vmatpush1.bf16.msra.mxu0 %v1414
    %1603 = vmatprep.subr.bf16.mxu0 %v1423
    %1604 = vmatpush1.bf16.msra.mxu0 %v1422
    %1605 = vmatprep.subr.bf16.mxu0 %v1431
    %1606 = vmatpush1.bf16.msra.mxu0 %v1430
    %1607 = vmatprep.subr.bf16.mxu0 %v1439
    %1608 = vmatpush1.bf16.msra.mxu0 %v1438
    %1609 = vmatprep.subr.bf16.mxu0 %v1447
    %1610 = vmatpush1.bf16.msra.mxu0 %v1446
    %1611 = vmatprep.subr.bf16.mxu0 %v1455
    %1612 = vmatpush1.bf16.msra.mxu0 %v1454
    %1613 = vmatprep.subr.bf16.mxu0 0
    %1614 = vmatpush1.bf16.msra.mxu0 0
    %1615 = vmatprep.subr.bf16.mxu0 0
    %1616 = vmatpush1.bf16.msra.mxu0 0
    %1617 = vmatprep.subr.bf16.mxu0 0
    %1618 = vmatpush1.bf16.msra.mxu0 0
    %1619 = vmatprep.subr.bf16.mxu0 0
    %1620 = vmatpush1.bf16.msra.mxu0 0
    %1621 = vmatprep.subr.bf16.mxu0 0
    %1622 = vmatpush1.bf16.msra.mxu0 0
    %1623 = vmatprep.subr.bf16.mxu0 0
    %1624 = vmatpush1.bf16.msra.mxu0 0
    %1625 = vmatprep.subr.bf16.mxu0 0
    %1626 = vmatpush1.bf16.msra.mxu0 0
    %1627 = vmatprep.subr.bf16.mxu0 0
    %1628 = vmatpush1.bf16.msra.mxu0 0
    %1629 = vmatprep.mubr.bf16.mxu0 0
    %1630 = vmatmul.mubr.bf16.gmra.mrb[0].mxu0 %v251
    %v1631 = vpop.f32.mrb[0].mxu0
    %v1632 = vadd.f32 0.0, %v1631
    %v1633 = vpop.f32.mrb[0].mxu0
    %v1634 = vadd.f32 0.0, %v1633
    %v1635 = vpop.f32.mrb[0].mxu0
    %v1636 = vadd.f32 0.0, %v1635
    %v1637 = vpop.f32.mrb[0].mxu0
    %v1638 = vadd.f32 0.0, %v1637
    %1639 = vmatprep.mubr.bf16.mxu0 0
    %1640 = vmatmul.mubr.bf16.gmra.mrb[0].mxu0 %v252
    %v1641 = vpop.f32.mrb[0].mxu0
    %v1642 = vadd.f32 0.0, %v1641
    %v1643 = vpop.f32.mrb[0].mxu0
    %v1644 = vadd.f32 0.0, %v1643
    %v1645 = vpop.f32.mrb[0].mxu0
    %v1646 = vadd.f32 0.0, %v1645
    %v1647 = vpop.f32.mrb[0].mxu0
    %v1648 = vadd.f32 0.0, %v1647
    %1649 = vmatprep.mubr.bf16.mxu0 0
    %1650 = vmatmul.mubr.bf16.gmra.mrb[0].mxu0 %v253
    %v1651 = vpop.f32.mrb[0].mxu0
    %v1652 = vadd.f32 0.0, %v1651
    %v1653 = vpop.f32.mrb[0].mxu0
    %v1654 = vadd.f32 0.0, %v1653
    %v1655 = vpop.f32.mrb[0].mxu0
    %v1656 = vadd.f32 0.0, %v1655
    %v1657 = vpop.f32.mrb[0].mxu0
    %v1658 = vadd.f32 0.0, %v1657
    %1659 = vmatprep.mubr.bf16.mxu0 0
    %1660 = vmatmul.mubr.bf16.gmra.mrb[0].mxu0 %v254
    %v1661 = vpop.f32.mrb[0].mxu0
    %v1662 = vadd.f32 0.0, %v1661
    %v1663 = vpop.f32.mrb[0].mxu0
    %v1664 = vadd.f32 0.0, %v1663
    %v1665 = vpop.f32.mrb[0].mxu0
    %v1666 = vadd.f32 0.0, %v1665
    %v1667 = vpop.f32.mrb[0].mxu0
    %v1668 = vadd.f32 0.0, %v1667
    %1669 = vdwg.mxu0
    %1670 = vmatprep.subr.bf16.mxu0 %v1401
    %1671 = vmatpush1.bf16.msra.mxu0 %v1400
    %1672 = vmatprep.subr.bf16.mxu0 %v1409
    %1673 = vmatpush1.bf16.msra.mxu0 %v1408
    %1674 = vmatprep.subr.bf16.mxu0 %v1417
    %1675 = vmatpush1.bf16.msra.mxu0 %v1416
    %1676 = vmatprep.subr.bf16.mxu0 %v1425
    %1677 = vmatpush1.bf16.msra.mxu0 %v1424
    %1678 = vmatprep.subr.bf16.mxu0 %v1433
    %1679 = vmatpush1.bf16.msra.mxu0 %v1432
    %1680 = vmatprep.subr.bf16.mxu0 %v1441
    %1681 = vmatpush1.bf16.msra.mxu0 %v1440
    %1682 = vmatprep.subr.bf16.mxu0 %v1449
    %1683 = vmatpush1.bf16.msra.mxu0 %v1448
    %1684 = vmatprep.subr.bf16.mxu0 %v1457
    %1685 = vmatpush1.bf16.msra.mxu0 %v1456
    %1686 = vmatprep.subr.bf16.mxu0 0
    %1687 = vmatpush1.bf16.msra.mxu0 0
    %1688 = vmatprep.subr.bf16.mxu0 0
    %1689 = vmatpush1.bf16.msra.mxu0 0
    %1690 = vmatprep.subr.bf16.mxu0 0
    %1691 = vmatpush1.bf16.msra.mxu0 0
    %1692 = vmatprep.subr.bf16.mxu0 0
    %1693 = vmatpush1.bf16.msra.mxu0 0
    %1694 = vmatprep.subr.bf16.mxu0 0
    %1695 = vmatpush1.bf16.msra.mxu0 0
    %1696 = vmatprep.subr.bf16.mxu0 0
    %1697 = vmatpush1.bf16.msra.mxu0 0
    %1698 = vmatprep.subr.bf16.mxu0 0
    %1699 = vmatpush1.bf16.msra.mxu0 0
    %1700 = vmatprep.subr.bf16.mxu0 0
    %1701 = vmatpush1.bf16.msra.mxu0 0
    %1702 = vmatprep.mubr.bf16.mxu0 0
    %1703 = vmatmul.mubr.bf16.gmra.mrb[0].mxu0 %v251
    %v1704 = vpop.f32.mrb[0].mxu0
    %v1705 = vadd.f32 0.0, %v1704
    %v1706 = vpop.f32.mrb[0].mxu0
    %v1707 = vadd.f32 0.0, %v1706
    %v1708 = vpop.f32.mrb[0].mxu0
    %v1709 = vadd.f32 0.0, %v1708
    %v1710 = vpop.f32.mrb[0].mxu0
    %v1711 = vadd.f32 0.0, %v1710
    %1712 = vmatprep.mubr.bf16.mxu0 0
    %1713 = vmatmul.mubr.bf16.gmra.mrb[0].mxu0 %v252
    %v1714 = vpop.f32.mrb[0].mxu0
    %v1715 = vadd.f32 0.0, %v1714
    %v1716 = vpop.f32.mrb[0].mxu0
    %v1717 = vadd.f32 0.0, %v1716
    %v1718 = vpop.f32.mrb[0].mxu0
    %v1719 = vadd.f32 0.0, %v1718
    %v1720 = vpop.f32.mrb[0].mxu0
    %v1721 = vadd.f32 0.0, %v1720
    %1722 = vmatprep.mubr.bf16.mxu0 0
    %1723 = vmatmul.mubr.bf16.gmra.mrb[0].mxu0 %v253
    %v1724 = vpop.f32.mrb[0].mxu0
    %v1725 = vadd.f32 0.0, %v1724
    %v1726 = vpop.f32.mrb[0].mxu0
    %v1727 = vadd.f32 0.0, %v1726
    %v1728 = vpop.f32.mrb[0].mxu0
    %v1729 = vadd.f32 0.0, %v1728
    %v1730 = vpop.f32.mrb[0].mxu0
    %v1731 = vadd.f32 0.0, %v1730
    %1732 = vmatprep.mubr.bf16.mxu0 0
    %1733 = vmatmul.mubr.bf16.gmra.mrb[0].mxu0 %v254
    %v1734 = vpop.f32.mrb[0].mxu0
    %v1735 = vadd.f32 0.0, %v1734
    %v1736 = vpop.f32.mrb[0].mxu0
    %v1737 = vadd.f32 0.0, %v1736
    %v1738 = vpop.f32.mrb[0].mxu0
    %v1739 = vadd.f32 0.0, %v1738
    %v1740 = vpop.f32.mrb[0].mxu0
    %v1741 = vadd.f32 0.0, %v1740
    %1742 = vdwg.mxu0
    %1743 = vmatprep.subr.bf16.mxu0 %v1403
    %1744 = vmatpush1.bf16.msra.mxu0 %v1402
    %1745 = vmatprep.subr.bf16.mxu0 %v1411
    %1746 = vmatpush1.bf16.msra.mxu0 %v1410
    %1747 = vmatprep.subr.bf16.mxu0 %v1419
    %1748 = vmatpush1.bf16.msra.mxu0 %v1418
    %1749 = vmatprep.subr.bf16.mxu0 %v1427
    %1750 = vmatpush1.bf16.msra.mxu0 %v1426
    %1751 = vmatprep.subr.bf16.mxu0 %v1435
    %1752 = vmatpush1.bf16.msra.mxu0 %v1434
    %1753 = vmatprep.subr.bf16.mxu0 %v1443
    %1754 = vmatpush1.bf16.msra.mxu0 %v1442
    %1755 = vmatprep.subr.bf16.mxu0 %v1451
    %1756 = vmatpush1.bf16.msra.mxu0 %v1450
    %1757 = vmatprep.subr.bf16.mxu0 %v1459
    %1758 = vmatpush1.bf16.msra.mxu0 %v1458
    %1759 = vmatprep.subr.bf16.mxu0 0
    %1760 = vmatpush1.bf16.msra.mxu0 0
    %1761 = vmatprep.subr.bf16.mxu0 0
    %1762 = vmatpush1.bf16.msra.mxu0 0
    %1763 = vmatprep.subr.bf16.mxu0 0
    %1764 = vmatpush1.bf16.msra.mxu0 0
    %1765 = vmatprep.subr.bf16.mxu0 0
    %1766 = vmatpush1.bf16.msra.mxu0 0
    %1767 = vmatprep.subr.bf16.mxu0 0
    %1768 = vmatpush1.bf16.msra.mxu0 0
    %1769 = vmatprep.subr.bf16.mxu0 0
    %1770 = vmatpush1.bf16.msra.mxu0 0
    %1771 = vmatprep.subr.bf16.mxu0 0
    %1772 = vmatpush1.bf16.msra.mxu0 0
    %1773 = vmatprep.subr.bf16.mxu0 0
    %1774 = vmatpush1.bf16.msra.mxu0 0
    %1775 = vmatprep.mubr.bf16.mxu0 0
    %1776 = vmatmul.mubr.bf16.gmra.mrb[0].mxu0 %v251
    %v1777 = vpop.f32.mrb[0].mxu0
    %v1778 = vadd.f32 0.0, %v1777
    %v1779 = vpop.f32.mrb[0].mxu0
    %v1780 = vadd.f32 0.0, %v1779
    %v1781 = vpop.f32.mrb[0].mxu0
    %v1782 = vadd.f32 0.0, %v1781
    %v1783 = vpop.f32.mrb[0].mxu0
    %v1784 = vadd.f32 0.0, %v1783
    %1785 = vmatprep.mubr.bf16.mxu0 0
    %1786 = vmatmul.mubr.bf16.gmra.mrb[0].mxu0 %v252
    %v1787 = vpop.f32.mrb[0].mxu0
    %v1788 = vadd.f32 0.0, %v1787
    %v1789 = vpop.f32.mrb[0].mxu0
    %v1790 = vadd.f32 0.0, %v1789
    %v1791 = vpop.f32.mrb[0].mxu0
    %v1792 = vadd.f32 0.0, %v1791
    %v1793 = vpop.f32.mrb[0].mxu0
    %v1794 = vadd.f32 0.0, %v1793
    %1795 = vmatprep.mubr.bf16.mxu0 0
    %1796 = vmatmul.mubr.bf16.gmra.mrb[0].mxu0 %v253
    %v1797 = vpop.f32.mrb[0].mxu0
    %v1798 = vadd.f32 0.0, %v1797
    %v1799 = vpop.f32.mrb[0].mxu0
    %v1800 = vadd.f32 0.0, %v1799
    %v1801 = vpop.f32.mrb[0].mxu0
    %v1802 = vadd.f32 0.0, %v1801
    %v1803 = vpop.f32.mrb[0].mxu0
    %v1804 = vadd.f32 0.0, %v1803
    %1805 = vmatprep.mubr.bf16.mxu0 0
    %1806 = vmatmul.mubr.bf16.gmra.mrb[0].mxu0 %v254
    %v1807 = vpop.f32.mrb[0].mxu0
    %v1808 = vadd.f32 0.0, %v1807
    %v1809 = vpop.f32.mrb[0].mxu0
    %v1810 = vadd.f32 0.0, %v1809
    %v1811 = vpop.f32.mrb[0].mxu0
    %v1812 = vadd.f32 0.0, %v1811
    %v1813 = vpop.f32.mrb[0].mxu0
    %v1814 = vadd.f32 0.0, %v1813
    %1815 = vdwg.mxu0
    %v1816 = vmul.f32 %v243, %v1559
    %v1817 = vmul.f32 %v244, %v1563
    %v1818 = vmul.f32 %v245, %v1569
    %v1819 = vmul.f32 %v246, %v1573
    %v1820 = vmul.f32 %v247, %v1579
    %v1821 = vmul.f32 %v248, %v1583
    %v1822 = vmul.f32 %v249, %v1589
    %v1823 = vmul.f32 %v250, %v1593
    %v1824 = vmul.f32 %v1816, %v1108
    %v1825 = vmul.f32 %v1817, %v1112
    %v1826 = vmul.f32 %v1818, %v1116
    %v1827 = vmul.f32 %v1819, %v1120
    %v1828 = vmul.f32 %v1820, %v1124
    %v1829 = vmul.f32 %v1821, %v1128
    %v1830 = vmul.f32 %v1822, %v1132
    %v1831 = vmul.f32 %v1823, %v1136
    %v1832 = vpack.c.bf16 %v1825, %v1824
    %v1833 = vpack.c.bf16 %v1827, %v1826
    %v1834 = vpack.c.bf16 %v1829, %v1828
    %v1835 = vpack.c.bf16 %v1831, %v1830
    %v1836 = vmul.f32 %v243, %v1561
    %v1837 = vmul.f32 %v244, %v1565
    %v1838 = vmul.f32 %v245, %v1571
    %v1839 = vmul.f32 %v246, %v1575
    %v1840 = vmul.f32 %v247, %v1581
    %v1841 = vmul.f32 %v248, %v1585
    %v1842 = vmul.f32 %v249, %v1591
    %v1843 = vmul.f32 %v250, %v1595
    %v1844 = vmul.f32 %v1836, %v1109
    %v1845 = vmul.f32 %v1837, %v1113
    %v1846 = vmul.f32 %v1838, %v1117
    %v1847 = vmul.f32 %v1839, %v1121
    %v1848 = vmul.f32 %v1840, %v1125
    %v1849 = vmul.f32 %v1841, %v1129
    %v1850 = vmul.f32 %v1842, %v1133
    %v1851 = vmul.f32 %v1843, %v1137
    %v1852 = vpack.c.bf16 %v1845, %v1844
    %v1853 = vpack.c.bf16 %v1847, %v1846
    %v1854 = vpack.c.bf16 %v1849, %v1848
    %v1855 = vpack.c.bf16 %v1851, %v1850
    %v1856 = vmul.f32 %v243, %v1632
    %v1857 = vmul.f32 %v244, %v1636
    %v1858 = vmul.f32 %v245, %v1642
    %v1859 = vmul.f32 %v246, %v1646
    %v1860 = vmul.f32 %v247, %v1652
    %v1861 = vmul.f32 %v248, %v1656
    %v1862 = vmul.f32 %v249, %v1662
    %v1863 = vmul.f32 %v250, %v1666
    %v1864 = vmul.f32 %v1856, %v1109
    %v1865 = vmul.f32 %v1857, %v1113
    %v1866 = vmul.f32 %v1858, %v1117
    %v1867 = vmul.f32 %v1859, %v1121
    %v1868 = vmul.f32 %v1860, %v1125
    %v1869 = vmul.f32 %v1861, %v1129
    %v1870 = vmul.f32 %v1862, %v1133
    %v1871 = vmul.f32 %v1863, %v1137
    %v1872 = vpack.c.bf16 %v1865, %v1864
    %v1873 = vpack.c.bf16 %v1867, %v1866
    %v1874 = vpack.c.bf16 %v1869, %v1868
    %v1875 = vpack.c.bf16 %v1871, %v1870
    %v1876 = vmul.f32 %v243, %v1634
    %v1877 = vmul.f32 %v244, %v1638
    %v1878 = vmul.f32 %v245, %v1644
    %v1879 = vmul.f32 %v246, %v1648
    %v1880 = vmul.f32 %v247, %v1654
    %v1881 = vmul.f32 %v248, %v1658
    %v1882 = vmul.f32 %v249, %v1664
    %v1883 = vmul.f32 %v250, %v1668
    %v1884 = vmul.f32 %v1876, %v1109
    %v1885 = vmul.f32 %v1877, %v1113
    %v1886 = vmul.f32 %v1878, %v1117
    %v1887 = vmul.f32 %v1879, %v1121
    %v1888 = vmul.f32 %v1880, %v1125
    %v1889 = vmul.f32 %v1881, %v1129
    %v1890 = vmul.f32 %v1882, %v1133
    %v1891 = vmul.f32 %v1883, %v1137
    %v1892 = vpack.c.bf16 %v1885, %v1884
    %v1893 = vpack.c.bf16 %v1887, %v1886
    %v1894 = vpack.c.bf16 %v1889, %v1888
    %v1895 = vpack.c.bf16 %v1891, %v1890
    %v1896 = vmul.f32 %v243, %v1705
    %v1897 = vmul.f32 %v244, %v1709
    %v1898 = vmul.f32 %v245, %v1715
    %v1899 = vmul.f32 %v246, %v1719
    %v1900 = vmul.f32 %v247, %v1725
    %v1901 = vmul.f32 %v248, %v1729
    %v1902 = vmul.f32 %v249, %v1735
    %v1903 = vmul.f32 %v250, %v1739
    %v1904 = vmul.f32 %v1896, %v1110
    %v1905 = vmul.f32 %v1897, %v1114
    %v1906 = vmul.f32 %v1898, %v1118
    %v1907 = vmul.f32 %v1899, %v1122
    %v1908 = vmul.f32 %v1900, %v1126
    %v1909 = vmul.f32 %v1901, %v1130
    %v1910 = vmul.f32 %v1902, %v1134
    %v1911 = vmul.f32 %v1903, %v1138
    %v1912 = vpack.c.bf16 %v1905, %v1904
    %v1913 = vpack.c.bf16 %v1907, %v1906
    %v1914 = vpack.c.bf16 %v1909, %v1908
    %v1915 = vpack.c.bf16 %v1911, %v1910
    %v1916 = vmul.f32 %v243, %v1707
    %v1917 = vmul.f32 %v244, %v1711
    %v1918 = vmul.f32 %v245, %v1717
    %v1919 = vmul.f32 %v246, %v1721
    %v1920 = vmul.f32 %v247, %v1727
    %v1921 = vmul.f32 %v248, %v1731
    %v1922 = vmul.f32 %v249, %v1737
    %v1923 = vmul.f32 %v250, %v1741
    %v1924 = vmul.f32 %v1916, %v1110
    %v1925 = vmul.f32 %v1917, %v1114
    %v1926 = vmul.f32 %v1918, %v1118
    %v1927 = vmul.f32 %v1919, %v1122
    %v1928 = vmul.f32 %v1920, %v1126
    %v1929 = vmul.f32 %v1921, %v1130
    %v1930 = vmul.f32 %v1922, %v1134
    %v1931 = vmul.f32 %v1923, %v1138
    %v1932 = vpack.c.bf16 %v1925, %v1924
    %v1933 = vpack.c.bf16 %v1927, %v1926
    %v1934 = vpack.c.bf16 %v1929, %v1928
    %v1935 = vpack.c.bf16 %v1931, %v1930
    %v1936 = vmul.f32 %v243, %v1778
    %v1937 = vmul.f32 %v244, %v1782
    %v1938 = vmul.f32 %v245, %v1788
    %v1939 = vmul.f32 %v246, %v1792
    %v1940 = vmul.f32 %v247, %v1798
    %v1941 = vmul.f32 %v248, %v1802
    %v1942 = vmul.f32 %v249, %v1808
    %v1943 = vmul.f32 %v250, %v1812
    %v1944 = vmul.f32 %v1936, %v1110
    %v1945 = vmul.f32 %v1937, %v1114
    %v1946 = vmul.f32 %v1938, %v1118
    %v1947 = vmul.f32 %v1939, %v1122
    %v1948 = vmul.f32 %v1940, %v1126
    %v1949 = vmul.f32 %v1941, %v1130
    %v1950 = vmul.f32 %v1942, %v1134
    %v1951 = vmul.f32 %v1943, %v1138
    %v1952 = vpack.c.bf16 %v1945, %v1944
    %v1953 = vpack.c.bf16 %v1947, %v1946
    %v1954 = vpack.c.bf16 %v1949, %v1948
    %v1955 = vpack.c.bf16 %v1951, %v1950
    %v1956 = vmul.f32 %v243, %v1780
    %v1957 = vmul.f32 %v244, %v1784
    %v1958 = vmul.f32 %v245, %v1790
    %v1959 = vmul.f32 %v246, %v1794
    %v1960 = vmul.f32 %v247, %v1800
    %v1961 = vmul.f32 %v248, %v1804
    %v1962 = vmul.f32 %v249, %v1810
    %v1963 = vmul.f32 %v250, %v1814
    %v1964 = vmul.f32 %v1956, %v1111
    %v1965 = vmul.f32 %v1957, %v1115
    %v1966 = vmul.f32 %v1958, %v1119
    %v1967 = vmul.f32 %v1959, %v1123
    %v1968 = vmul.f32 %v1960, %v1127
    %v1969 = vmul.f32 %v1961, %v1131
    %v1970 = vmul.f32 %v1962, %v1135
    %v1971 = vmul.f32 %v1963, %v1139
    %v1972 = vpack.c.bf16 %v1965, %v1964
    %v1973 = vpack.c.bf16 %v1967, %v1966
    %v1974 = vpack.c.bf16 %v1969, %v1968
    %v1975 = vpack.c.bf16 %v1971, %v1970
    %v1976 = vld [vmem:[%s5] sm:$0xff]
    %v1977 = vld [vmem:[%s5 + $0x8] sm:$0xff]
    %v1978 = vld [vmem:[%s5 + $0x10] sm:$0xff]
    %v1979 = vld [vmem:[%s5 + $0x18] sm:$0xff]
    %v1980 = vld [vmem:[%s5 + $0x20] sm:$0xff]
    %v1981 = vld [vmem:[%s5 + $0x28] sm:$0xff]
    %v1982 = vld [vmem:[%s5 + $0x30] sm:$0xff]
    %v1983 = vld [vmem:[%s5 + $0x38] sm:$0xff]
    %v1984 = vld [vmem:[%s5 + $0x40] sm:$0xff]
    %v1985 = vld [vmem:[%s5 + $0x48] sm:$0xff]
    %v1986 = vld [vmem:[%s5 + $0x50] sm:$0xff]
    %v1987 = vld [vmem:[%s5 + $0x58] sm:$0xff]
    %v1988 = vld [vmem:[%s5 + $0x60] sm:$0xff]
    %v1989 = vld [vmem:[%s5 + $0x68] sm:$0xff]
    %v1990 = vld [vmem:[%s5 + $0x70] sm:$0xff]
    %v1991 = vld [vmem:[%s5 + $0x78] sm:$0xff]
    %v1992 = vld [vmem:[%s5 + $0x80] sm:$0xff]
    %v1993 = vld [vmem:[%s5 + $0x88] sm:$0xff]
    %v1994 = vld [vmem:[%s5 + $0x90] sm:$0xff]
    %v1995 = vld [vmem:[%s5 + $0x98] sm:$0xff]
    %v1996 = vld [vmem:[%s5 + $0xa0] sm:$0xff]
    %v1997 = vld [vmem:[%s5 + $0xa8] sm:$0xff]
    %v1998 = vld [vmem:[%s5 + $0xb0] sm:$0xff]
    %v1999 = vld [vmem:[%s5 + $0xb8] sm:$0xff]
    %v2000 = vld [vmem:[%s5 + $0xc0] sm:$0xff]
    %v2001 = vld [vmem:[%s5 + $0xc8] sm:$0xff]
    %v2002 = vld [vmem:[%s5 + $0xd0] sm:$0xff]
    %v2003 = vld [vmem:[%s5 + $0xd8] sm:$0xff]
    %v2004 = vld [vmem:[%s5 + $0xe0] sm:$0xff]
    %v2005 = vld [vmem:[%s5 + $0xe8] sm:$0xff]
    %v2006 = vld [vmem:[%s5 + $0xf0] sm:$0xff]
    %v2007 = vld [vmem:[%s5 + $0xf8] sm:$0xff]
    %v2008 = vld [vmem:[%s5 + $0x100] sm:$0xff]
    %v2009 = vld [vmem:[%s5 + $0x108] sm:$0xff]
    %v2010 = vld [vmem:[%s5 + $0x110] sm:$0xff]
    %v2011 = vld [vmem:[%s5 + $0x118] sm:$0xff]
    %v2012 = vld [vmem:[%s5 + $0x120] sm:$0xff]
    %v2013 = vld [vmem:[%s5 + $0x128] sm:$0xff]
    %v2014 = vld [vmem:[%s5 + $0x130] sm:$0xff]
    %v2015 = vld [vmem:[%s5 + $0x138] sm:$0xff]
    %v2016 = vld [vmem:[%s5 + $0x140] sm:$0xff]
    %v2017 = vld [vmem:[%s5 + $0x148] sm:$0xff]
    %v2018 = vld [vmem:[%s5 + $0x150] sm:$0xff]
    %v2019 = vld [vmem:[%s5 + $0x158] sm:$0xff]
    %v2020 = vld [vmem:[%s5 + $0x160] sm:$0xff]
    %v2021 = vld [vmem:[%s5 + $0x168] sm:$0xff]
    %v2022 = vld [vmem:[%s5 + $0x170] sm:$0xff]
    %v2023 = vld [vmem:[%s5 + $0x178] sm:$0xff]
    %v2024 = vld [vmem:[%s5 + $0x180] sm:$0xff]
    %v2025 = vld [vmem:[%s5 + $0x188] sm:$0xff]
    %v2026 = vld [vmem:[%s5 + $0x190] sm:$0xff]
    %v2027 = vld [vmem:[%s5 + $0x198] sm:$0xff]
    %v2028 = vld [vmem:[%s5 + $0x1a0] sm:$0xff]
    %v2029 = vld [vmem:[%s5 + $0x1a8] sm:$0xff]
    %v2030 = vld [vmem:[%s5 + $0x1b0] sm:$0xff]
    %v2031 = vld [vmem:[%s5 + $0x1b8] sm:$0xff]
    %v2032 = vld [vmem:[%s5 + $0x1c0] sm:$0xff]
    %v2033 = vld [vmem:[%s5 + $0x1c8] sm:$0xff]
    %v2034 = vld [vmem:[%s5 + $0x1d0] sm:$0xff]
    %v2035 = vld [vmem:[%s5 + $0x1d8] sm:$0xff]
    %v2036 = vld [vmem:[%s5 + $0x1e0] sm:$0xff]
    %v2037 = vld [vmem:[%s5 + $0x1e8] sm:$0xff]
    %v2038 = vld [vmem:[%s5 + $0x1f0] sm:$0xff]
    %v2039 = vld [vmem:[%s5 + $0x1f8] sm:$0xff]
    %v2040 = vld [vmem:[%s5 + $0x200] sm:$0xff]
    %v2041 = vld [vmem:[%s5 + $0x208] sm:$0xff]
    %v2042 = vld [vmem:[%s5 + $0x210] sm:$0xff]
    %v2043 = vld [vmem:[%s5 + $0x218] sm:$0xff]
    %v2044 = vld [vmem:[%s5 + $0x220] sm:$0xff]
    %v2045 = vld [vmem:[%s5 + $0x228] sm:$0xff]
    %v2046 = vld [vmem:[%s5 + $0x230] sm:$0xff]
    %v2047 = vld [vmem:[%s5 + $0x238] sm:$0xff]
    %v2048 = vld [vmem:[%s5 + $0x240] sm:$0xff]
    %v2049 = vld [vmem:[%s5 + $0x248] sm:$0xff]
    %v2050 = vld [vmem:[%s5 + $0x250] sm:$0xff]
    %v2051 = vld [vmem:[%s5 + $0x258] sm:$0xff]
    %v2052 = vld [vmem:[%s5 + $0x260] sm:$0xff]
    %v2053 = vld [vmem:[%s5 + $0x268] sm:$0xff]
    %v2054 = vld [vmem:[%s5 + $0x270] sm:$0xff]
    %v2055 = vld [vmem:[%s5 + $0x278] sm:$0xff]
    %v2056 = vld [vmem:[%s5 + $0x280] sm:$0xff]
    %v2057 = vld [vmem:[%s5 + $0x288] sm:$0xff]
    %v2058 = vld [vmem:[%s5 + $0x290] sm:$0xff]
    %v2059 = vld [vmem:[%s5 + $0x298] sm:$0xff]
    %v2060 = vld [vmem:[%s5 + $0x2a0] sm:$0xff]
    %v2061 = vld [vmem:[%s5 + $0x2a8] sm:$0xff]
    %v2062 = vld [vmem:[%s5 + $0x2b0] sm:$0xff]
    %v2063 = vld [vmem:[%s5 + $0x2b8] sm:$0xff]
    %v2064 = vld [vmem:[%s5 + $0x2c0] sm:$0xff]
    %v2065 = vld [vmem:[%s5 + $0x2c8] sm:$0xff]
    %v2066 = vld [vmem:[%s5 + $0x2d0] sm:$0xff]
    %v2067 = vld [vmem:[%s5 + $0x2d8] sm:$0xff]
    %v2068 = vld [vmem:[%s5 + $0x2e0] sm:$0xff]
    %v2069 = vld [vmem:[%s5 + $0x2e8] sm:$0xff]
    %v2070 = vld [vmem:[%s5 + $0x2f0] sm:$0xff]
    %v2071 = vld [vmem:[%s5 + $0x2f8] sm:$0xff]
    %v2072 = vld [vmem:[%s5 + $0x300] sm:$0xff]
    %v2073 = vld [vmem:[%s5 + $0x308] sm:$0xff]
    %v2074 = vld [vmem:[%s5 + $0x310] sm:$0xff]
    %v2075 = vld [vmem:[%s5 + $0x318] sm:$0xff]
    %v2076 = vld [vmem:[%s5 + $0x320] sm:$0xff]
    %v2077 = vld [vmem:[%s5 + $0x328] sm:$0xff]
    %v2078 = vld [vmem:[%s5 + $0x330] sm:$0xff]
    %v2079 = vld [vmem:[%s5 + $0x338] sm:$0xff]
    %v2080 = vld [vmem:[%s5 + $0x340] sm:$0xff]
    %v2081 = vld [vmem:[%s5 + $0x348] sm:$0xff]
    %v2082 = vld [vmem:[%s5 + $0x350] sm:$0xff]
    %v2083 = vld [vmem:[%s5 + $0x358] sm:$0xff]
    %v2084 = vld [vmem:[%s5 + $0x360] sm:$0xff]
    %v2085 = vld [vmem:[%s5 + $0x368] sm:$0xff]
    %v2086 = vld [vmem:[%s5 + $0x370] sm:$0xff]
    %v2087 = vld [vmem:[%s5 + $0x378] sm:$0xff]
    %v2088 = vld [vmem:[%s5 + $0x380] sm:$0xff]
    %v2089 = vld [vmem:[%s5 + $0x388] sm:$0xff]
    %v2090 = vld [vmem:[%s5 + $0x390] sm:$0xff]
    %v2091 = vld [vmem:[%s5 + $0x398] sm:$0xff]
    %v2092 = vld [vmem:[%s5 + $0x3a0] sm:$0xff]
    %v2093 = vld [vmem:[%s5 + $0x3a8] sm:$0xff]
    %v2094 = vld [vmem:[%s5 + $0x3b0] sm:$0xff]
    %v2095 = vld [vmem:[%s5 + $0x3b8] sm:$0xff]
    %v2096 = vld [vmem:[%s5 + $0x3c0] sm:$0xff]
    %v2097 = vld [vmem:[%s5 + $0x3c8] sm:$0xff]
    %v2098 = vld [vmem:[%s5 + $0x3d0] sm:$0xff]
    %v2099 = vld [vmem:[%s5 + $0x3d8] sm:$0xff]
    %v2100 = vld [vmem:[%s5 + $0x3e0] sm:$0xff]
    %v2101 = vld [vmem:[%s5 + $0x3e8] sm:$0xff]
    %v2102 = vld [vmem:[%s5 + $0x3f0] sm:$0xff]
    %v2103 = vld [vmem:[%s5 + $0x3f8] sm:$0xff]
    %v2232 = vunpack.c.l.b16 %v1976
    %v2233 = vunpack.c.h.b16 %v1976
    %v2234 = vunpack.c.l.b16 %v1977
    %v2235 = vunpack.c.h.b16 %v1977
    %v2236 = vunpack.c.l.b16 %v1978
    %v2237 = vunpack.c.h.b16 %v1978
    %v2238 = vunpack.c.l.b16 %v1979
    %v2239 = vunpack.c.h.b16 %v1979
    %v2240 = vunpack.c.l.b16 %v1980
    %v2241 = vunpack.c.h.b16 %v1980
    %v2242 = vunpack.c.l.b16 %v1981
    %v2243 = vunpack.c.h.b16 %v1981
    %v2244 = vunpack.c.l.b16 %v1982
    %v2245 = vunpack.c.h.b16 %v1982
    %v2246 = vunpack.c.l.b16 %v1983
    %v2247 = vunpack.c.h.b16 %v1983
    %v2248 = vunpack.c.l.b16 %v1984
    %v2249 = vunpack.c.h.b16 %v1984
    %v2250 = vunpack.c.l.b16 %v1985
    %v2251 = vunpack.c.h.b16 %v1985
    %v2252 = vunpack.c.l.b16 %v1986
    %v2253 = vunpack.c.h.b16 %v1986
    %v2254 = vunpack.c.l.b16 %v1987
    %v2255 = vunpack.c.h.b16 %v1987
    %v2256 = vunpack.c.l.b16 %v1988
    %v2257 = vunpack.c.h.b16 %v1988
    %v2258 = vunpack.c.l.b16 %v1989
    %v2259 = vunpack.c.h.b16 %v1989
    %v2260 = vunpack.c.l.b16 %v1990
    %v2261 = vunpack.c.h.b16 %v1990
    %v2262 = vunpack.c.l.b16 %v1991
    %v2263 = vunpack.c.h.b16 %v1991
    %v2264 = vunpack.c.l.b16 %v1992
    %v2265 = vunpack.c.h.b16 %v1992
    %v2266 = vunpack.c.l.b16 %v1993
    %v2267 = vunpack.c.h.b16 %v1993
    %v2268 = vunpack.c.l.b16 %v1994
    %v2269 = vunpack.c.h.b16 %v1994
    %v2270 = vunpack.c.l.b16 %v1995
    %v2271 = vunpack.c.h.b16 %v1995
    %v2272 = vunpack.c.l.b16 %v1996
    %v2273 = vunpack.c.h.b16 %v1996
    %v2274 = vunpack.c.l.b16 %v1997
    %v2275 = vunpack.c.h.b16 %v1997
    %v2276 = vunpack.c.l.b16 %v1998
    %v2277 = vunpack.c.h.b16 %v1998
    %v2278 = vunpack.c.l.b16 %v1999
    %v2279 = vunpack.c.h.b16 %v1999
    %v2280 = vunpack.c.l.b16 %v2000
    %v2281 = vunpack.c.h.b16 %v2000
    %v2282 = vunpack.c.l.b16 %v2001
    %v2283 = vunpack.c.h.b16 %v2001
    %v2284 = vunpack.c.l.b16 %v2002
    %v2285 = vunpack.c.h.b16 %v2002
    %v2286 = vunpack.c.l.b16 %v2003
    %v2287 = vunpack.c.h.b16 %v2003
    %v2288 = vunpack.c.l.b16 %v2004
    %v2289 = vunpack.c.h.b16 %v2004
    %v2290 = vunpack.c.l.b16 %v2005
    %v2291 = vunpack.c.h.b16 %v2005
    %v2292 = vunpack.c.l.b16 %v2006
    %v2293 = vunpack.c.h.b16 %v2006
    %v2294 = vunpack.c.l.b16 %v2007
    %v2295 = vunpack.c.h.b16 %v2007
    %v2296 = vunpack.c.l.b16 %v2008
    %v2297 = vunpack.c.h.b16 %v2008
    %v2298 = vunpack.c.l.b16 %v2009
    %v2299 = vunpack.c.h.b16 %v2009
    %v2300 = vunpack.c.l.b16 %v2010
    %v2301 = vunpack.c.h.b16 %v2010
    %v2302 = vunpack.c.l.b16 %v2011
    %v2303 = vunpack.c.h.b16 %v2011
    %v2304 = vunpack.c.l.b16 %v2012
    %v2305 = vunpack.c.h.b16 %v2012
    %v2306 = vunpack.c.l.b16 %v2013
    %v2307 = vunpack.c.h.b16 %v2013
    %v2308 = vunpack.c.l.b16 %v2014
    %v2309 = vunpack.c.h.b16 %v2014
    %v2310 = vunpack.c.l.b16 %v2015
    %v2311 = vunpack.c.h.b16 %v2015
    %v2312 = vunpack.c.l.b16 %v2016
    %v2313 = vunpack.c.h.b16 %v2016
    %v2314 = vunpack.c.l.b16 %v2017
    %v2315 = vunpack.c.h.b16 %v2017
    %v2316 = vunpack.c.l.b16 %v2018
    %v2317 = vunpack.c.h.b16 %v2018
    %v2318 = vunpack.c.l.b16 %v2019
    %v2319 = vunpack.c.h.b16 %v2019
    %v2320 = vunpack.c.l.b16 %v2020
    %v2321 = vunpack.c.h.b16 %v2020
    %v2322 = vunpack.c.l.b16 %v2021
    %v2323 = vunpack.c.h.b16 %v2021
    %v2324 = vunpack.c.l.b16 %v2022
    %v2325 = vunpack.c.h.b16 %v2022
    %v2326 = vunpack.c.l.b16 %v2023
    %v2327 = vunpack.c.h.b16 %v2023
    %v2328 = vunpack.c.l.b16 %v2024
    %v2329 = vunpack.c.h.b16 %v2024
    %v2330 = vunpack.c.l.b16 %v2025
    %v2331 = vunpack.c.h.b16 %v2025
    %v2332 = vunpack.c.l.b16 %v2026
    %v2333 = vunpack.c.h.b16 %v2026
    %v2334 = vunpack.c.l.b16 %v2027
    %v2335 = vunpack.c.h.b16 %v2027
    %v2336 = vunpack.c.l.b16 %v2028
    %v2337 = vunpack.c.h.b16 %v2028
    %v2338 = vunpack.c.l.b16 %v2029
    %v2339 = vunpack.c.h.b16 %v2029
    %v2340 = vunpack.c.l.b16 %v2030
    %v2341 = vunpack.c.h.b16 %v2030
    %v2342 = vunpack.c.l.b16 %v2031
    %v2343 = vunpack.c.h.b16 %v2031
    %v2344 = vunpack.c.l.b16 %v2032
    %v2345 = vunpack.c.h.b16 %v2032
    %v2346 = vunpack.c.l.b16 %v2033
    %v2347 = vunpack.c.h.b16 %v2033
    %v2348 = vunpack.c.l.b16 %v2034
    %v2349 = vunpack.c.h.b16 %v2034
    %v2350 = vunpack.c.l.b16 %v2035
    %v2351 = vunpack.c.h.b16 %v2035
    %v2352 = vunpack.c.l.b16 %v2036
    %v2353 = vunpack.c.h.b16 %v2036
    %v2354 = vunpack.c.l.b16 %v2037
    %v2355 = vunpack.c.h.b16 %v2037
    %v2356 = vunpack.c.l.b16 %v2038
    %v2357 = vunpack.c.h.b16 %v2038
    %v2358 = vunpack.c.l.b16 %v2039
    %v2359 = vunpack.c.h.b16 %v2039
    %v2360 = vunpack.c.l.b16 %v2040
    %v2361 = vunpack.c.h.b16 %v2040
    %v2362 = vunpack.c.l.b16 %v2041
    %v2363 = vunpack.c.h.b16 %v2041
    %v2364 = vunpack.c.l.b16 %v2042
    %v2365 = vunpack.c.h.b16 %v2042
    %v2366 = vunpack.c.l.b16 %v2043
    %v2367 = vunpack.c.h.b16 %v2043
    %v2368 = vunpack.c.l.b16 %v2044
    %v2369 = vunpack.c.h.b16 %v2044
    %v2370 = vunpack.c.l.b16 %v2045
    %v2371 = vunpack.c.h.b16 %v2045
    %v2372 = vunpack.c.l.b16 %v2046
    %v2373 = vunpack.c.h.b16 %v2046
    %v2374 = vunpack.c.l.b16 %v2047
    %v2375 = vunpack.c.h.b16 %v2047
    %v2376 = vunpack.c.l.b16 %v2048
    %v2377 = vunpack.c.h.b16 %v2048
    %v2378 = vunpack.c.l.b16 %v2049
    %v2379 = vunpack.c.h.b16 %v2049
    %v2380 = vunpack.c.l.b16 %v2050
    %v2381 = vunpack.c.h.b16 %v2050
    %v2382 = vunpack.c.l.b16 %v2051
    %v2383 = vunpack.c.h.b16 %v2051
    %v2384 = vunpack.c.l.b16 %v2052
    %v2385 = vunpack.c.h.b16 %v2052
    %v2386 = vunpack.c.l.b16 %v2053
    %v2387 = vunpack.c.h.b16 %v2053
    %v2388 = vunpack.c.l.b16 %v2054
    %v2389 = vunpack.c.h.b16 %v2054
    %v2390 = vunpack.c.l.b16 %v2055
    %v2391 = vunpack.c.h.b16 %v2055
    %v2392 = vunpack.c.l.b16 %v2056
    %v2393 = vunpack.c.h.b16 %v2056
    %v2394 = vunpack.c.l.b16 %v2057
    %v2395 = vunpack.c.h.b16 %v2057
    %v2396 = vunpack.c.l.b16 %v2058
    %v2397 = vunpack.c.h.b16 %v2058
    %v2398 = vunpack.c.l.b16 %v2059
    %v2399 = vunpack.c.h.b16 %v2059
    %v2400 = vunpack.c.l.b16 %v2060
    %v2401 = vunpack.c.h.b16 %v2060
    %v2402 = vunpack.c.l.b16 %v2061
    %v2403 = vunpack.c.h.b16 %v2061
    %v2404 = vunpack.c.l.b16 %v2062
    %v2405 = vunpack.c.h.b16 %v2062
    %v2406 = vunpack.c.l.b16 %v2063
    %v2407 = vunpack.c.h.b16 %v2063
    %v2408 = vunpack.c.l.b16 %v2064
    %v2409 = vunpack.c.h.b16 %v2064
    %v2410 = vunpack.c.l.b16 %v2065
    %v2411 = vunpack.c.h.b16 %v2065
    %v2412 = vunpack.c.l.b16 %v2066
    %v2413 = vunpack.c.h.b16 %v2066
    %v2414 = vunpack.c.l.b16 %v2067
    %v2415 = vunpack.c.h.b16 %v2067
    %v2416 = vunpack.c.l.b16 %v2068
    %v2417 = vunpack.c.h.b16 %v2068
    %v2418 = vunpack.c.l.b16 %v2069
    %v2419 = vunpack.c.h.b16 %v2069
    %v2420 = vunpack.c.l.b16 %v2070
    %v2421 = vunpack.c.h.b16 %v2070
    %v2422 = vunpack.c.l.b16 %v2071
    %v2423 = vunpack.c.h.b16 %v2071
    %v2424 = vunpack.c.l.b16 %v2072
    %v2425 = vunpack.c.h.b16 %v2072
    %v2426 = vunpack.c.l.b16 %v2073
    %v2427 = vunpack.c.h.b16 %v2073
    %v2428 = vunpack.c.l.b16 %v2074
    %v2429 = vunpack.c.h.b16 %v2074
    %v2430 = vunpack.c.l.b16 %v2075
    %v2431 = vunpack.c.h.b16 %v2075
    %v2432 = vunpack.c.l.b16 %v2076
    %v2433 = vunpack.c.h.b16 %v2076
    %v2434 = vunpack.c.l.b16 %v2077
    %v2435 = vunpack.c.h.b16 %v2077
    %v2436 = vunpack.c.l.b16 %v2078
    %v2437 = vunpack.c.h.b16 %v2078
    %v2438 = vunpack.c.l.b16 %v2079
    %v2439 = vunpack.c.h.b16 %v2079
    %v2440 = vunpack.c.l.b16 %v2080
    %v2441 = vunpack.c.h.b16 %v2080
    %v2442 = vunpack.c.l.b16 %v2081
    %v2443 = vunpack.c.h.b16 %v2081
    %v2444 = vunpack.c.l.b16 %v2082
    %v2445 = vunpack.c.h.b16 %v2082
    %v2446 = vunpack.c.l.b16 %v2083
    %v2447 = vunpack.c.h.b16 %v2083
    %v2448 = vunpack.c.l.b16 %v2084
    %v2449 = vunpack.c.h.b16 %v2084
    %v2450 = vunpack.c.l.b16 %v2085
    %v2451 = vunpack.c.h.b16 %v2085
    %v2452 = vunpack.c.l.b16 %v2086
    %v2453 = vunpack.c.h.b16 %v2086
    %v2454 = vunpack.c.l.b16 %v2087
    %v2455 = vunpack.c.h.b16 %v2087
    %v2456 = vunpack.c.l.b16 %v2088
    %v2457 = vunpack.c.h.b16 %v2088
    %v2458 = vunpack.c.l.b16 %v2089
    %v2459 = vunpack.c.h.b16 %v2089
    %v2460 = vunpack.c.l.b16 %v2090
    %v2461 = vunpack.c.h.b16 %v2090
    %v2462 = vunpack.c.l.b16 %v2091
    %v2463 = vunpack.c.h.b16 %v2091
    %v2464 = vunpack.c.l.b16 %v2092
    %v2465 = vunpack.c.h.b16 %v2092
    %v2466 = vunpack.c.l.b16 %v2093
    %v2467 = vunpack.c.h.b16 %v2093
    %v2468 = vunpack.c.l.b16 %v2094
    %v2469 = vunpack.c.h.b16 %v2094
    %v2470 = vunpack.c.l.b16 %v2095
    %v2471 = vunpack.c.h.b16 %v2095
    %v2472 = vunpack.c.l.b16 %v2096
    %v2473 = vunpack.c.h.b16 %v2096
    %v2474 = vunpack.c.l.b16 %v2097
    %v2475 = vunpack.c.h.b16 %v2097
    %v2476 = vunpack.c.l.b16 %v2098
    %v2477 = vunpack.c.h.b16 %v2098
    %v2478 = vunpack.c.l.b16 %v2099
    %v2479 = vunpack.c.h.b16 %v2099
    %v2480 = vunpack.c.l.b16 %v2100
    %v2481 = vunpack.c.h.b16 %v2100
    %v2482 = vunpack.c.l.b16 %v2101
    %v2483 = vunpack.c.h.b16 %v2101
    %v2484 = vunpack.c.l.b16 %v2102
    %v2485 = vunpack.c.h.b16 %v2102
    %v2486 = vunpack.c.l.b16 %v2103
    %v2487 = vunpack.c.h.b16 %v2103
    %v2488 = vpack.c.b16 %v2234, %v2232
    %v2489 = vpack.c.b16 %v2235, %v2233
    %v2490 = vpack.c.b16 %v2238, %v2236
    %v2491 = vpack.c.b16 %v2239, %v2237
    %v2492 = vpack.c.b16 %v2242, %v2240
    %v2493 = vpack.c.b16 %v2243, %v2241
    %v2494 = vpack.c.b16 %v2246, %v2244
    %v2495 = vpack.c.b16 %v2247, %v2245
    %v2496 = vpack.c.b16 %v2250, %v2248
    %v2497 = vpack.c.b16 %v2251, %v2249
    %v2498 = vpack.c.b16 %v2254, %v2252
    %v2499 = vpack.c.b16 %v2255, %v2253
    %v2500 = vpack.c.b16 %v2258, %v2256
    %v2501 = vpack.c.b16 %v2259, %v2257
    %v2502 = vpack.c.b16 %v2262, %v2260
    %v2503 = vpack.c.b16 %v2263, %v2261
    %v2504 = vpack.c.b16 %v2266, %v2264
    %v2505 = vpack.c.b16 %v2267, %v2265
    %v2506 = vpack.c.b16 %v2270, %v2268
    %v2507 = vpack.c.b16 %v2271, %v2269
    %v2508 = vpack.c.b16 %v2274, %v2272
    %v2509 = vpack.c.b16 %v2275, %v2273
    %v2510 = vpack.c.b16 %v2278, %v2276
    %v2511 = vpack.c.b16 %v2279, %v2277
    %v2512 = vpack.c.b16 %v2282, %v2280
    %v2513 = vpack.c.b16 %v2283, %v2281
    %v2514 = vpack.c.b16 %v2286, %v2284
    %v2515 = vpack.c.b16 %v2287, %v2285
    %v2516 = vpack.c.b16 %v2290, %v2288
    %v2517 = vpack.c.b16 %v2291, %v2289
    %v2518 = vpack.c.b16 %v2294, %v2292
    %v2519 = vpack.c.b16 %v2295, %v2293
    %v2520 = vpack.c.b16 %v2298, %v2296
    %v2521 = vpack.c.b16 %v2299, %v2297
    %v2522 = vpack.c.b16 %v2302, %v2300
    %v2523 = vpack.c.b16 %v2303, %v2301
    %v2524 = vpack.c.b16 %v2306, %v2304
    %v2525 = vpack.c.b16 %v2307, %v2305
    %v2526 = vpack.c.b16 %v2310, %v2308
    %v2527 = vpack.c.b16 %v2311, %v2309
    %v2528 = vpack.c.b16 %v2314, %v2312
    %v2529 = vpack.c.b16 %v2315, %v2313
    %v2530 = vpack.c.b16 %v2318, %v2316
    %v2531 = vpack.c.b16 %v2319, %v2317
    %v2532 = vpack.c.b16 %v2322, %v2320
    %v2533 = vpack.c.b16 %v2323, %v2321
    %v2534 = vpack.c.b16 %v2326, %v2324
    %v2535 = vpack.c.b16 %v2327, %v2325
    %v2536 = vpack.c.b16 %v2330, %v2328
    %v2537 = vpack.c.b16 %v2331, %v2329
    %v2538 = vpack.c.b16 %v2334, %v2332
    %v2539 = vpack.c.b16 %v2335, %v2333
    %v2540 = vpack.c.b16 %v2338, %v2336
    %v2541 = vpack.c.b16 %v2339, %v2337
    %v2542 = vpack.c.b16 %v2342, %v2340
    %v2543 = vpack.c.b16 %v2343, %v2341
    %v2544 = vpack.c.b16 %v2346, %v2344
    %v2545 = vpack.c.b16 %v2347, %v2345
    %v2546 = vpack.c.b16 %v2350, %v2348
    %v2547 = vpack.c.b16 %v2351, %v2349
    %v2548 = vpack.c.b16 %v2354, %v2352
    %v2549 = vpack.c.b16 %v2355, %v2353
    %v2550 = vpack.c.b16 %v2358, %v2356
    %v2551 = vpack.c.b16 %v2359, %v2357
    %v2552 = vpack.c.b16 %v2362, %v2360
    %v2553 = vpack.c.b16 %v2363, %v2361
    %v2554 = vpack.c.b16 %v2366, %v2364
    %v2555 = vpack.c.b16 %v2367, %v2365
    %v2556 = vpack.c.b16 %v2370, %v2368
    %v2557 = vpack.c.b16 %v2371, %v2369
    %v2558 = vpack.c.b16 %v2374, %v2372
    %v2559 = vpack.c.b16 %v2375, %v2373
    %v2560 = vpack.c.b16 %v2378, %v2376
    %v2561 = vpack.c.b16 %v2379, %v2377
    %v2562 = vpack.c.b16 %v2382, %v2380
    %v2563 = vpack.c.b16 %v2383, %v2381
    %v2564 = vpack.c.b16 %v2386, %v2384
    %v2565 = vpack.c.b16 %v2387, %v2385
    %v2566 = vpack.c.b16 %v2390, %v2388
    %v2567 = vpack.c.b16 %v2391, %v2389
    %v2568 = vpack.c.b16 %v2394, %v2392
    %v2569 = vpack.c.b16 %v2395, %v2393
    %v2570 = vpack.c.b16 %v2398, %v2396
    %v2571 = vpack.c.b16 %v2399, %v2397
    %v2572 = vpack.c.b16 %v2402, %v2400
    %v2573 = vpack.c.b16 %v2403, %v2401
    %v2574 = vpack.c.b16 %v2406, %v2404
    %v2575 = vpack.c.b16 %v2407, %v2405
    %v2576 = vpack.c.b16 %v2410, %v2408
    %v2577 = vpack.c.b16 %v2411, %v2409
    %v2578 = vpack.c.b16 %v2414, %v2412
    %v2579 = vpack.c.b16 %v2415, %v2413
    %v2580 = vpack.c.b16 %v2418, %v2416
    %v2581 = vpack.c.b16 %v2419, %v2417
    %v2582 = vpack.c.b16 %v2422, %v2420
    %v2583 = vpack.c.b16 %v2423, %v2421
    %v2584 = vpack.c.b16 %v2426, %v2424
    %v2585 = vpack.c.b16 %v2427, %v2425
    %v2586 = vpack.c.b16 %v2430, %v2428
    %v2587 = vpack.c.b16 %v2431, %v2429
    %v2588 = vpack.c.b16 %v2434, %v2432
    %v2589 = vpack.c.b16 %v2435, %v2433
    %v2590 = vpack.c.b16 %v2438, %v2436
    %v2591 = vpack.c.b16 %v2439, %v2437
    %v2592 = vpack.c.b16 %v2442, %v2440
    %v2593 = vpack.c.b16 %v2443, %v2441
    %v2594 = vpack.c.b16 %v2446, %v2444
    %v2595 = vpack.c.b16 %v2447, %v2445
    %v2596 = vpack.c.b16 %v2450, %v2448
    %v2597 = vpack.c.b16 %v2451, %v2449
    %v2598 = vpack.c.b16 %v2454, %v2452
    %v2599 = vpack.c.b16 %v2455, %v2453
    %v2600 = vpack.c.b16 %v2458, %v2456
    %v2601 = vpack.c.b16 %v2459, %v2457
    %v2602 = vpack.c.b16 %v2462, %v2460
    %v2603 = vpack.c.b16 %v2463, %v2461
    %v2604 = vpack.c.b16 %v2466, %v2464
    %v2605 = vpack.c.b16 %v2467, %v2465
    %v2606 = vpack.c.b16 %v2470, %v2468
    %v2607 = vpack.c.b16 %v2471, %v2469
    %v2608 = vpack.c.b16 %v2474, %v2472
    %v2609 = vpack.c.b16 %v2475, %v2473
    %v2610 = vpack.c.b16 %v2478, %v2476
    %v2611 = vpack.c.b16 %v2479, %v2477
    %v2612 = vpack.c.b16 %v2482, %v2480
    %v2613 = vpack.c.b16 %v2483, %v2481
    %v2614 = vpack.c.b16 %v2486, %v2484
    %v2615 = vpack.c.b16 %v2487, %v2485
    %2744 = vmatprep.subr.bf16.mxu0 %v2489
    %2745 = vmatpush1.bf16.msra.mxu0 %v2488
    %2746 = vmatprep.subr.bf16.mxu0 %v2491
    %2747 = vmatpush1.bf16.msra.mxu0 %v2490
    %2748 = vmatprep.subr.bf16.mxu0 %v2493
    %2749 = vmatpush1.bf16.msra.mxu0 %v2492
    %2750 = vmatprep.subr.bf16.mxu0 %v2495
    %2751 = vmatpush1.bf16.msra.mxu0 %v2494
    %2752 = vmatprep.subr.bf16.mxu0 %v2497
    %2753 = vmatpush1.bf16.msra.mxu0 %v2496
    %2754 = vmatprep.subr.bf16.mxu0 %v2499
    %2755 = vmatpush1.bf16.msra.mxu0 %v2498
    %2756 = vmatprep.subr.bf16.mxu0 %v2501
    %2757 = vmatpush1.bf16.msra.mxu0 %v2500
    %2758 = vmatprep.subr.bf16.mxu0 %v2503
    %2759 = vmatpush1.bf16.msra.mxu0 %v2502
    %2760 = vmatprep.subr.bf16.mxu0 %v2505
    %2761 = vmatpush1.bf16.msra.mxu0 %v2504
    %2762 = vmatprep.subr.bf16.mxu0 %v2507
    %2763 = vmatpush1.bf16.msra.mxu0 %v2506
    %2764 = vmatprep.subr.bf16.mxu0 %v2509
    %2765 = vmatpush1.bf16.msra.mxu0 %v2508
    %2766 = vmatprep.subr.bf16.mxu0 %v2511
    %2767 = vmatpush1.bf16.msra.mxu0 %v2510
    %2768 = vmatprep.subr.bf16.mxu0 %v2513
    %2769 = vmatpush1.bf16.msra.mxu0 %v2512
    %2770 = vmatprep.subr.bf16.mxu0 %v2515
    %2771 = vmatpush1.bf16.msra.mxu0 %v2514
    %2772 = vmatprep.subr.bf16.mxu0 %v2517
    %2773 = vmatpush1.bf16.msra.mxu0 %v2516
    %2774 = vmatprep.subr.bf16.mxu0 %v2519
    %2775 = vmatpush1.bf16.msra.mxu0 %v2518
    %2776 = vmatprep.mubr.bf16.mxu0 %v1852
    %2777 = vmatmul.mubr.bf16.gmra.mrb[0].mxu0 %v1832
    %v2778 = vpop.f32.mrb[0].mxu0
    %v2779 = vadd.f32 0.0, %v2778
    %v2780 = vpop.f32.mrb[0].mxu0
    %v2781 = vadd.f32 0.0, %v2780
    %v2782 = vpop.f32.mrb[0].mxu0
    %v2783 = vadd.f32 0.0, %v2782
    %v2784 = vpop.f32.mrb[0].mxu0
    %v2785 = vadd.f32 0.0, %v2784
    %2786 = vmatprep.mubr.bf16.mxu0 %v1853
    %2787 = vmatmul.mubr.bf16.gmra.mrb[0].mxu0 %v1833
    %v2788 = vpop.f32.mrb[0].mxu0
    %v2789 = vadd.f32 0.0, %v2788
    %v2790 = vpop.f32.mrb[0].mxu0
    %v2791 = vadd.f32 0.0, %v2790
    %v2792 = vpop.f32.mrb[0].mxu0
    %v2793 = vadd.f32 0.0, %v2792
    %v2794 = vpop.f32.mrb[0].mxu0
    %v2795 = vadd.f32 0.0, %v2794
    %2796 = vmatprep.mubr.bf16.mxu0 %v1854
    %2797 = vmatmul.mubr.bf16.gmra.mrb[0].mxu0 %v1834
    %v2798 = vpop.f32.mrb[0].mxu0
    %v2799 = vadd.f32 0.0, %v2798
    %v2800 = vpop.f32.mrb[0].mxu0
    %v2801 = vadd.f32 0.0, %v2800
    %v2802 = vpop.f32.mrb[0].mxu0
    %v2803 = vadd.f32 0.0, %v2802
    %v2804 = vpop.f32.mrb[0].mxu0
    %v2805 = vadd.f32 0.0, %v2804
    %2806 = vmatprep.mubr.bf16.mxu0 %v1855
    %2807 = vmatmul.mubr.bf16.gmra.mrb[0].mxu0 %v1835
    %v2808 = vpop.f32.mrb[0].mxu0
    %v2809 = vadd.f32 0.0, %v2808
    %v2810 = vpop.f32.mrb[0].mxu0
    %v2811 = vadd.f32 0.0, %v2810
    %v2812 = vpop.f32.mrb[0].mxu0
    %v2813 = vadd.f32 0.0, %v2812
    %v2814 = vpop.f32.mrb[0].mxu0
    %v2815 = vadd.f32 0.0, %v2814
    %2816 = vdwg.mxu0
    %2817 = vmatprep.subr.bf16.mxu0 %v2521
    %2818 = vmatpush1.bf16.msra.mxu0 %v2520
    %2819 = vmatprep.subr.bf16.mxu0 %v2523
    %2820 = vmatpush1.bf16.msra.mxu0 %v2522
    %2821 = vmatprep.subr.bf16.mxu0 %v2525
    %2822 = vmatpush1.bf16.msra.mxu0 %v2524
    %2823 = vmatprep.subr.bf16.mxu0 %v2527
    %2824 = vmatpush1.bf16.msra.mxu0 %v2526
    %2825 = vmatprep.subr.bf16.mxu0 %v2529
    %2826 = vmatpush1.bf16.msra.mxu0 %v2528
    %2827 = vmatprep.subr.bf16.mxu0 %v2531
    %2828 = vmatpush1.bf16.msra.mxu0 %v2530
    %2829 = vmatprep.subr.bf16.mxu0 %v2533
    %2830 = vmatpush1.bf16.msra.mxu0 %v2532
    %2831 = vmatprep.subr.bf16.mxu0 %v2535
    %2832 = vmatpush1.bf16.msra.mxu0 %v2534
    %2833 = vmatprep.subr.bf16.mxu0 %v2537
    %2834 = vmatpush1.bf16.msra.mxu0 %v2536
    %2835 = vmatprep.subr.bf16.mxu0 %v2539
    %2836 = vmatpush1.bf16.msra.mxu0 %v2538
    %2837 = vmatprep.subr.bf16.mxu0 %v2541
    %2838 = vmatpush1.bf16.msra.mxu0 %v2540
    %2839 = vmatprep.subr.bf16.mxu0 %v2543
    %2840 = vmatpush1.bf16.msra.mxu0 %v2542
    %2841 = vmatprep.subr.bf16.mxu0 %v2545
    %2842 = vmatpush1.bf16.msra.mxu0 %v2544
    %2843 = vmatprep.subr.bf16.mxu0 %v2547
    %2844 = vmatpush1.bf16.msra.mxu0 %v2546
    %2845 = vmatprep.subr.bf16.mxu0 %v2549
    %2846 = vmatpush1.bf16.msra.mxu0 %v2548
    %2847 = vmatprep.subr.bf16.mxu0 %v2551
    %2848 = vmatpush1.bf16.msra.mxu0 %v2550
    %2849 = vmatprep.mubr.bf16.mxu0 %v1892
    %2850 = vmatmul.mubr.bf16.gmra.mrb[0].mxu0 %v1872
    %v2851 = vpop.f32.mrb[0].mxu0
    %v2852 = vadd.f32 %v2779, %v2851
    %v2853 = vpop.f32.mrb[0].mxu0
    %v2854 = vadd.f32 %v2781, %v2853
    %v2855 = vpop.f32.mrb[0].mxu0
    %v2856 = vadd.f32 %v2783, %v2855
    %v2857 = vpop.f32.mrb[0].mxu0
    %v2858 = vadd.f32 %v2785, %v2857
    %2859 = vmatprep.mubr.bf16.mxu0 %v1893
    %2860 = vmatmul.mubr.bf16.gmra.mrb[0].mxu0 %v1873
    %v2861 = vpop.f32.mrb[0].mxu0
    %v2862 = vadd.f32 %v2789, %v2861
    %v2863 = vpop.f32.mrb[0].mxu0
    %v2864 = vadd.f32 %v2791, %v2863
    %v2865 = vpop.f32.mrb[0].mxu0
    %v2866 = vadd.f32 %v2793, %v2865
    %v2867 = vpop.f32.mrb[0].mxu0
    %v2868 = vadd.f32 %v2795, %v2867
    %2869 = vmatprep.mubr.bf16.mxu0 %v1894
    %2870 = vmatmul.mubr.bf16.gmra.mrb[0].mxu0 %v1874
    %v2871 = vpop.f32.mrb[0].mxu0
    %v2872 = vadd.f32 %v2799, %v2871
    %v2873 = vpop.f32.mrb[0].mxu0
    %v2874 = vadd.f32 %v2801, %v2873
    %v2875 = vpop.f32.mrb[0].mxu0
    %v2876 = vadd.f32 %v2803, %v2875
    %v2877 = vpop.f32.mrb[0].mxu0
    %v2878 = vadd.f32 %v2805, %v2877
    %2879 = vmatprep.mubr.bf16.mxu0 %v1895
    %2880 = vmatmul.mubr.bf16.gmra.mrb[0].mxu0 %v1875
    %v2881 = vpop.f32.mrb[0].mxu0
    %v2882 = vadd.f32 %v2809, %v2881
    %v2883 = vpop.f32.mrb[0].mxu0
    %v2884 = vadd.f32 %v2811, %v2883
    %v2885 = vpop.f32.mrb[0].mxu0
    %v2886 = vadd.f32 %v2813, %v2885
    %v2887 = vpop.f32.mrb[0].mxu0
    %v2888 = vadd.f32 %v2815, %v2887
    %2889 = vdwg.mxu0
    %2890 = vmatprep.subr.bf16.mxu0 %v2553
    %2891 = vmatpush1.bf16.msra.mxu0 %v2552
    %2892 = vmatprep.subr.bf16.mxu0 %v2555
    %2893 = vmatpush1.bf16.msra.mxu0 %v2554
    %2894 = vmatprep.subr.bf16.mxu0 %v2557
    %2895 = vmatpush1.bf16.msra.mxu0 %v2556
    %2896 = vmatprep.subr.bf16.mxu0 %v2559
    %2897 = vmatpush1.bf16.msra.mxu0 %v2558
    %2898 = vmatprep.subr.bf16.mxu0 %v2561
    %2899 = vmatpush1.bf16.msra.mxu0 %v2560
    %2900 = vmatprep.subr.bf16.mxu0 %v2563
    %2901 = vmatpush1.bf16.msra.mxu0 %v2562
    %2902 = vmatprep.subr.bf16.mxu0 %v2565
    %2903 = vmatpush1.bf16.msra.mxu0 %v2564
    %2904 = vmatprep.subr.bf16.mxu0 %v2567
    %2905 = vmatpush1.bf16.msra.mxu0 %v2566
    %2906 = vmatprep.subr.bf16.mxu0 %v2569
    %2907 = vmatpush1.bf16.msra.mxu0 %v2568
    %2908 = vmatprep.subr.bf16.mxu0 %v2571
    %2909 = vmatpush1.bf16.msra.mxu0 %v2570
    %2910 = vmatprep.subr.bf16.mxu0 %v2573
    %2911 = vmatpush1.bf16.msra.mxu0 %v2572
    %2912 = vmatprep.subr.bf16.mxu0 %v2575
    %2913 = vmatpush1.bf16.msra.mxu0 %v2574
    %2914 = vmatprep.subr.bf16.mxu0 %v2577
    %2915 = vmatpush1.bf16.msra.mxu0 %v2576
    %2916 = vmatprep.subr.bf16.mxu0 %v2579
    %2917 = vmatpush1.bf16.msra.mxu0 %v2578
    %2918 = vmatprep.subr.bf16.mxu0 %v2581
    %2919 = vmatpush1.bf16.msra.mxu0 %v2580
    %2920 = vmatprep.subr.bf16.mxu0 %v2583
    %2921 = vmatpush1.bf16.msra.mxu0 %v2582
    %2922 = vmatprep.mubr.bf16.mxu0 %v1932
    %2923 = vmatmul.mubr.bf16.gmra.mrb[0].mxu0 %v1912
    %v2924 = vpop.f32.mrb[0].mxu0
    %v2925 = vadd.f32 %v2852, %v2924
    %v2926 = vpop.f32.mrb[0].mxu0
    %v2927 = vadd.f32 %v2854, %v2926
    %v2928 = vpop.f32.mrb[0].mxu0
    %v2929 = vadd.f32 %v2856, %v2928
    %v2930 = vpop.f32.mrb[0].mxu0
    %v2931 = vadd.f32 %v2858, %v2930
    %2932 = vmatprep.mubr.bf16.mxu0 %v1933
    %2933 = vmatmul.mubr.bf16.gmra.mrb[0].mxu0 %v1913
    %v2934 = vpop.f32.mrb[0].mxu0
    %v2935 = vadd.f32 %v2862, %v2934
    %v2936 = vpop.f32.mrb[0].mxu0
    %v2937 = vadd.f32 %v2864, %v2936
    %v2938 = vpop.f32.mrb[0].mxu0
    %v2939 = vadd.f32 %v2866, %v2938
    %v2940 = vpop.f32.mrb[0].mxu0
    %v2941 = vadd.f32 %v2868, %v2940
    %2942 = vmatprep.mubr.bf16.mxu0 %v1934
    %2943 = vmatmul.mubr.bf16.gmra.mrb[0].mxu0 %v1914
    %v2944 = vpop.f32.mrb[0].mxu0
    %v2945 = vadd.f32 %v2872, %v2944
    %v2946 = vpop.f32.mrb[0].mxu0
    %v2947 = vadd.f32 %v2874, %v2946
    %v2948 = vpop.f32.mrb[0].mxu0
    %v2949 = vadd.f32 %v2876, %v2948
    %v2950 = vpop.f32.mrb[0].mxu0
    %v2951 = vadd.f32 %v2878, %v2950
    %2952 = vmatprep.mubr.bf16.mxu0 %v1935
    %2953 = vmatmul.mubr.bf16.gmra.mrb[0].mxu0 %v1915
    %v2954 = vpop.f32.mrb[0].mxu0
    %v2955 = vadd.f32 %v2882, %v2954
    %v2956 = vpop.f32.mrb[0].mxu0
    %v2957 = vadd.f32 %v2884, %v2956
    %v2958 = vpop.f32.mrb[0].mxu0
    %v2959 = vadd.f32 %v2886, %v2958
    %v2960 = vpop.f32.mrb[0].mxu0
    %v2961 = vadd.f32 %v2888, %v2960
    %2962 = vdwg.mxu0
    %2963 = vmatprep.subr.bf16.mxu0 %v2585
    %2964 = vmatpush1.bf16.msra.mxu0 %v2584
    %2965 = vmatprep.subr.bf16.mxu0 %v2587
    %2966 = vmatpush1.bf16.msra.mxu0 %v2586
    %2967 = vmatprep.subr.bf16.mxu0 %v2589
    %2968 = vmatpush1.bf16.msra.mxu0 %v2588
    %2969 = vmatprep.subr.bf16.mxu0 %v2591
    %2970 = vmatpush1.bf16.msra.mxu0 %v2590
    %2971 = vmatprep.subr.bf16.mxu0 %v2593
    %2972 = vmatpush1.bf16.msra.mxu0 %v2592
    %2973 = vmatprep.subr.bf16.mxu0 %v2595
    %2974 = vmatpush1.bf16.msra.mxu0 %v2594
    %2975 = vmatprep.subr.bf16.mxu0 %v2597
    %2976 = vmatpush1.bf16.msra.mxu0 %v2596
    %2977 = vmatprep.subr.bf16.mxu0 %v2599
    %2978 = vmatpush1.bf16.msra.mxu0 %v2598
    %2979 = vmatprep.subr.bf16.mxu0 %v2601
    %2980 = vmatpush1.bf16.msra.mxu0 %v2600
    %2981 = vmatprep.subr.bf16.mxu0 %v2603
    %2982 = vmatpush1.bf16.msra.mxu0 %v2602
    %2983 = vmatprep.subr.bf16.mxu0 %v2605
    %2984 = vmatpush1.bf16.msra.mxu0 %v2604
    %2985 = vmatprep.subr.bf16.mxu0 %v2607
    %2986 = vmatpush1.bf16.msra.mxu0 %v2606
    %2987 = vmatprep.subr.bf16.mxu0 %v2609
    %2988 = vmatpush1.bf16.msra.mxu0 %v2608
    %2989 = vmatprep.subr.bf16.mxu0 %v2611
    %2990 = vmatpush1.bf16.msra.mxu0 %v2610
    %2991 = vmatprep.subr.bf16.mxu0 %v2613
    %2992 = vmatpush1.bf16.msra.mxu0 %v2612
    %2993 = vmatprep.subr.bf16.mxu0 %v2615
    %2994 = vmatpush1.bf16.msra.mxu0 %v2614
    %2995 = vmatprep.mubr.bf16.mxu0 %v1972
    %2996 = vmatmul.mubr.bf16.gmra.mrb[0].mxu0 %v1952
    %v2997 = vpop.f32.mrb[0].mxu0
    %v2998 = vadd.f32 %v2925, %v2997
    %v2999 = vpop.f32.mrb[0].mxu0
    %v3000 = vadd.f32 %v2927, %v2999
    %v3001 = vpop.f32.mrb[0].mxu0
    %v3002 = vadd.f32 %v2929, %v3001
    %v3003 = vpop.f32.mrb[0].mxu0
    %v3004 = vadd.f32 %v2931, %v3003
    %3005 = vmatprep.mubr.bf16.mxu0 %v1973
    %3006 = vmatmul.mubr.bf16.gmra.mrb[0].mxu0 %v1953
    %v3007 = vpop.f32.mrb[0].mxu0
    %v3008 = vadd.f32 %v2935, %v3007
    %v3009 = vpop.f32.mrb[0].mxu0
    %v3010 = vadd.f32 %v2937, %v3009
    %v3011 = vpop.f32.mrb[0].mxu0
    %v3012 = vadd.f32 %v2939, %v3011
    %v3013 = vpop.f32.mrb[0].mxu0
    %v3014 = vadd.f32 %v2941, %v3013
    %3015 = vmatprep.mubr.bf16.mxu0 %v1974
    %3016 = vmatmul.mubr.bf16.gmra.mrb[0].mxu0 %v1954
    %v3017 = vpop.f32.mrb[0].mxu0
    %v3018 = vadd.f32 %v2945, %v3017
    %v3019 = vpop.f32.mrb[0].mxu0
    %v3020 = vadd.f32 %v2947, %v3019
    %v3021 = vpop.f32.mrb[0].mxu0
    %v3022 = vadd.f32 %v2949, %v3021
    %v3023 = vpop.f32.mrb[0].mxu0
    %v3024 = vadd.f32 %v2951, %v3023
    %3025 = vmatprep.mubr.bf16.mxu0 %v1975
    %3026 = vmatmul.mubr.bf16.gmra.mrb[0].mxu0 %v1955
    %v3027 = vpop.f32.mrb[0].mxu0
    %v3028 = vadd.f32 %v2955, %v3027
    %v3029 = vpop.f32.mrb[0].mxu0
    %v3030 = vadd.f32 %v2957, %v3029
    %v3031 = vpop.f32.mrb[0].mxu0
    %v3032 = vadd.f32 %v2959, %v3031
    %v3033 = vpop.f32.mrb[0].mxu0
    %v3034 = vadd.f32 %v2961, %v3033
    %3035 = vdwg.mxu0
    %v3036 = vld [vmem:[%s6] sm:$0xff]
    %v3037 = vld [vmem:[%s6 + $0x8] sm:$0xff]
    %v3038 = vld [vmem:[%s6 + $0x10] sm:$0xff]
    %v3039 = vld [vmem:[%s6 + $0x18] sm:$0xff]
    %v3040 = vld [vmem:[%s6 + $0x20] sm:$0xff]
    %v3041 = vld [vmem:[%s6 + $0x28] sm:$0xff]
    %v3042 = vld [vmem:[%s6 + $0x30] sm:$0xff]
    %v3043 = vld [vmem:[%s6 + $0x38] sm:$0xff]
    %v3044 = vld [vmem:[%s6 + $0x40] sm:$0xff]
    %v3045 = vld [vmem:[%s6 + $0x48] sm:$0xff]
    %v3046 = vld [vmem:[%s6 + $0x50] sm:$0xff]
    %v3047 = vld [vmem:[%s6 + $0x58] sm:$0xff]
    %v3048 = vld [vmem:[%s6 + $0x60] sm:$0xff]
    %v3049 = vld [vmem:[%s6 + $0x68] sm:$0xff]
    %v3050 = vld [vmem:[%s6 + $0x70] sm:$0xff]
    %v3051 = vld [vmem:[%s6 + $0x78] sm:$0xff]
    %v3052 = vld [vmem:[#allocation9] sm:$0x3]
    %v3054 = vlaneseq
    %v3055 = vshrl.u32 %v3054, 7
    %v3056 = vsub.s32 0, %v3055
    %v3057 = vrot.slane %v3052, %v3056
    %v3058 = vlaneseq
    %v3059 = vshrl.u32 %v3058, 7
    %v3060 = vsub.s32 1, %v3059
    %v3061 = vrot.slane %v3052, %v3060
    %v3080 = vunpack.c.l.b16 %v3036
    %v3081 = vunpack.c.h.b16 %v3036
    %v3082 = vunpack.c.l.b16 %v3037
    %v3083 = vunpack.c.h.b16 %v3037
    %v3084 = vunpack.c.l.b16 %v3038
    %v3085 = vunpack.c.h.b16 %v3038
    %v3086 = vunpack.c.l.b16 %v3039
    %v3087 = vunpack.c.h.b16 %v3039
    %v3088 = vunpack.c.l.b16 %v3040
    %v3089 = vunpack.c.h.b16 %v3040
    %v3090 = vunpack.c.l.b16 %v3041
    %v3091 = vunpack.c.h.b16 %v3041
    %v3092 = vunpack.c.l.b16 %v3042
    %v3093 = vunpack.c.h.b16 %v3042
    %v3094 = vunpack.c.l.b16 %v3043
    %v3095 = vunpack.c.h.b16 %v3043
    %v3096 = vunpack.c.l.b16 %v3044
    %v3097 = vunpack.c.h.b16 %v3044
    %v3098 = vunpack.c.l.b16 %v3045
    %v3099 = vunpack.c.h.b16 %v3045
    %v3100 = vunpack.c.l.b16 %v3046
    %v3101 = vunpack.c.h.b16 %v3046
    %v3102 = vunpack.c.l.b16 %v3047
    %v3103 = vunpack.c.h.b16 %v3047
    %v3104 = vunpack.c.l.b16 %v3048
    %v3105 = vunpack.c.h.b16 %v3048
    %v3106 = vunpack.c.l.b16 %v3049
    %v3107 = vunpack.c.h.b16 %v3049
    %v3108 = vunpack.c.l.b16 %v3050
    %v3109 = vunpack.c.h.b16 %v3050
    %v3110 = vunpack.c.l.b16 %v3051
    %v3111 = vunpack.c.h.b16 %v3051
    %v3112 = vpack.c.b16 %v3082, %v3080
    %v3113 = vpack.c.b16 %v3083, %v3081
    %v3114 = vpack.c.b16 %v3086, %v3084
    %v3115 = vpack.c.b16 %v3087, %v3085
    %v3116 = vpack.c.b16 %v3090, %v3088
    %v3117 = vpack.c.b16 %v3091, %v3089
    %v3118 = vpack.c.b16 %v3094, %v3092
    %v3119 = vpack.c.b16 %v3095, %v3093
    %v3120 = vpack.c.b16 %v3098, %v3096
    %v3121 = vpack.c.b16 %v3099, %v3097
    %v3122 = vpack.c.b16 %v3102, %v3100
    %v3123 = vpack.c.b16 %v3103, %v3101
    %v3124 = vpack.c.b16 %v3106, %v3104
    %v3125 = vpack.c.b16 %v3107, %v3105
    %v3126 = vpack.c.b16 %v3110, %v3108
    %v3127 = vpack.c.b16 %v3111, %v3109
    %3144 = vmatprep.subr.bf16.mxu0 %v3113
    %3145 = vmatpush1.bf16.msra.mxu0 %v3112
    %3146 = vmatprep.subr.bf16.mxu0 %v3115
    %3147 = vmatpush1.bf16.msra.mxu0 %v3114
    %3148 = vmatprep.subr.bf16.mxu0 %v3117
    %3149 = vmatpush1.bf16.msra.mxu0 %v3116
    %3150 = vmatprep.subr.bf16.mxu0 %v3119
    %3151 = vmatpush1.bf16.msra.mxu0 %v3118
    %3152 = vmatprep.subr.bf16.mxu0 %v3121
    %3153 = vmatpush1.bf16.msra.mxu0 %v3120
    %3154 = vmatprep.subr.bf16.mxu0 %v3123
    %3155 = vmatpush1.bf16.msra.mxu0 %v3122
    %3156 = vmatprep.subr.bf16.mxu0 %v3125
    %3157 = vmatpush1.bf16.msra.mxu0 %v3124
    %3158 = vmatprep.subr.bf16.mxu0 %v3127
    %3159 = vmatpush1.bf16.msra.mxu0 %v3126
    %3160 = vmatprep.subr.bf16.mxu0 0
    %3161 = vmatpush1.bf16.msra.mxu0 0
    %3162 = vmatprep.subr.bf16.mxu0 0
    %3163 = vmatpush1.bf16.msra.mxu0 0
    %3164 = vmatprep.subr.bf16.mxu0 0
    %3165 = vmatpush1.bf16.msra.mxu0 0
    %3166 = vmatprep.subr.bf16.mxu0 0
    %3167 = vmatpush1.bf16.msra.mxu0 0
    %3168 = vmatprep.subr.bf16.mxu0 0
    %3169 = vmatpush1.bf16.msra.mxu0 0
    %3170 = vmatprep.subr.bf16.mxu0 0
    %3171 = vmatpush1.bf16.msra.mxu0 0
    %3172 = vmatprep.subr.bf16.mxu0 0
    %3173 = vmatpush1.bf16.msra.mxu0 0
    %3174 = vmatprep.subr.bf16.mxu0 0
    %3175 = vmatpush1.bf16.msra.mxu0 0
    %3176 = vmatprep.mubr.bf16.mxu0 0
    %3177 = vmatmul.mubr.bf16.gmra.mrb[0].mxu0 %v251
    %v3178 = vpop.f32.mrb[0].mxu0
    %v3179 = vadd.f32 %v3057, %v3178
    %v3180 = vpop.f32.mrb[0].mxu0
    %v3181 = vadd.f32 %v3061, %v3180
    %v3182 = vpop.f32.mrb[0].mxu0
    %v3183 = vadd.f32 %v3057, %v3182
    %v3184 = vpop.f32.mrb[0].mxu0
    %v3185 = vadd.f32 %v3061, %v3184
    %3186 = vmatprep.mubr.bf16.mxu0 0
    %3187 = vmatmul.mubr.bf16.gmra.mrb[0].mxu0 %v252
    %v3188 = vpop.f32.mrb[0].mxu0
    %v3189 = vadd.f32 %v3057, %v3188
    %v3190 = vpop.f32.mrb[0].mxu0
    %v3191 = vadd.f32 %v3061, %v3190
    %v3192 = vpop.f32.mrb[0].mxu0
    %v3193 = vadd.f32 %v3057, %v3192
    %v3194 = vpop.f32.mrb[0].mxu0
    %v3195 = vadd.f32 %v3061, %v3194
    %3196 = vmatprep.mubr.bf16.mxu0 0
    %3197 = vmatmul.mubr.bf16.gmra.mrb[0].mxu0 %v253
    %v3198 = vpop.f32.mrb[0].mxu0
    %v3199 = vadd.f32 %v3057, %v3198
    %v3200 = vpop.f32.mrb[0].mxu0
    %v3201 = vadd.f32 %v3061, %v3200
    %v3202 = vpop.f32.mrb[0].mxu0
    %v3203 = vadd.f32 %v3057, %v3202
    %v3204 = vpop.f32.mrb[0].mxu0
    %v3205 = vadd.f32 %v3061, %v3204
    %3206 = vmatprep.mubr.bf16.mxu0 0
    %3207 = vmatmul.mubr.bf16.gmra.mrb[0].mxu0 %v254
    %v3208 = vpop.f32.mrb[0].mxu0
    %v3209 = vadd.f32 %v3057, %v3208
    %v3210 = vpop.f32.mrb[0].mxu0
    %v3211 = vadd.f32 %v3061, %v3210
    %v3212 = vpop.f32.mrb[0].mxu0
    %v3213 = vadd.f32 %v3057, %v3212
    %v3214 = vpop.f32.mrb[0].mxu0
    %v3215 = vadd.f32 %v3061, %v3214
    %3216 = vdwg.mxu0
    %v3217 = vadd.f32 %v3179, %v2998
    %v3218 = vadd.f32 %v3181, %v3000
    %v3219 = vadd.f32 %v3183, %v3002
    %v3220 = vadd.f32 %v3185, %v3004
    %v3221 = vadd.f32 %v3189, %v3008
    %v3222 = vadd.f32 %v3191, %v3010
    %v3223 = vadd.f32 %v3193, %v3012
    %v3224 = vadd.f32 %v3195, %v3014
    %v3225 = vadd.f32 %v3199, %v3018
    %v3226 = vadd.f32 %v3201, %v3020
    %v3227 = vadd.f32 %v3203, %v3022
    %v3228 = vadd.f32 %v3205, %v3024
    %v3229 = vadd.f32 %v3209, %v3028
    %v3230 = vadd.f32 %v3211, %v3030
    %v3231 = vadd.f32 %v3213, %v3032
    %v3232 = vadd.f32 %v3215, %v3034
    %v3233 = vld [vmem:[#allocation10] sm:$0xff]
    %v3234 = vld [vmem:[#allocation10 + $0x8] sm:$0xff]
    %v3235 = vld [vmem:[#allocation10 + $0x10] sm:$0xff]
    %v3236 = vld [vmem:[#allocation10 + $0x18] sm:$0xff]
    %v3237 = vld [vmem:[#allocation10 + $0x20] sm:$0xff]
    %v3238 = vld [vmem:[#allocation10 + $0x28] sm:$0xff]
    %v3239 = vld [vmem:[#allocation10 + $0x30] sm:$0xff]
    %v3240 = vld [vmem:[#allocation10 + $0x38] sm:$0xff]
    %v3241 = vld [vmem:[#allocation10 + $0x40] sm:$0xff]
    %v3242 = vld [vmem:[#allocation10 + $0x48] sm:$0xff]
    %v3243 = vld [vmem:[#allocation10 + $0x50] sm:$0xff]
    %v3244 = vld [vmem:[#allocation10 + $0x58] sm:$0xff]
    %v3245 = vld [vmem:[#allocation10 + $0x60] sm:$0xff]
    %v3246 = vld [vmem:[#allocation10 + $0x68] sm:$0xff]
    %v3247 = vld [vmem:[#allocation10 + $0x70] sm:$0xff]
    %v3248 = vld [vmem:[#allocation10 + $0x78] sm:$0xff]
    %v3249 = vld [vmem:[#allocation10 + $0x80] sm:$0xff]
    %v3250 = vld [vmem:[#allocation10 + $0x88] sm:$0xff]
    %v3251 = vld [vmem:[#allocation10 + $0x90] sm:$0xff]
    %v3252 = vld [vmem:[#allocation10 + $0x98] sm:$0xff]
    %v3253 = vld [vmem:[#allocation10 + $0xa0] sm:$0xff]
    %v3254 = vld [vmem:[#allocation10 + $0xa8] sm:$0xff]
    %v3255 = vld [vmem:[#allocation10 + $0xb0] sm:$0xff]
    %v3256 = vld [vmem:[#allocation10 + $0xb8] sm:$0xff]
    %v3257 = vld [vmem:[#allocation10 + $0xc0] sm:$0xff]
    %v3258 = vld [vmem:[#allocation10 + $0xc8] sm:$0xff]
    %v3259 = vld [vmem:[#allocation10 + $0xd0] sm:$0xff]
    %v3260 = vld [vmem:[#allocation10 + $0xd8] sm:$0xff]
    %v3261 = vld [vmem:[#allocation10 + $0xe0] sm:$0xff]
    %v3262 = vld [vmem:[#allocation10 + $0xe8] sm:$0xff]
    %v3263 = vld [vmem:[#allocation10 + $0xf0] sm:$0xff]
    %v3264 = vld [vmem:[#allocation10 + $0xf8] sm:$0xff]
    %v3265 = vld [vmem:[#allocation12] sm:$0x3]
    %vm3266 = vcmp.gt.f32.partialorder %v3265, 0.5
    %v3267 = vld [vmem:[#allocation13] sm:$0x3]
    %v3268 = vld [vmem:[#allocation13 + $0x2] sm:$0x3]
    %v3269 = vld [vmem:[#allocation13 + $0x4] sm:$0x3]
    %v3270 = vld [vmem:[#allocation13 + $0x6] sm:$0x3]
    %v3271 = vld [vmem:[#allocation13 + $0x8] sm:$0x3]
    %v3272 = vld [vmem:[#allocation15] sm:$0x3]
    %v3273 = vld [vmem:[#allocation15 + $0x2] sm:$0x3]
    %v3274 = vld [vmem:[#allocation15 + $0x4] sm:$0x3]
    %v3275 = vld [vmem:[#allocation15 + $0x6] sm:$0x3]
    %v3276 = vld [vmem:[#allocation15 + $0x8] sm:$0x3]
    %v3277 = vmul.f32 %v3217, %v3217
    %v3278 = vmul.f32 %v3218, %v3218
    %v3279 = vmul.f32 %v3219, %v3219
    %v3280 = vmul.f32 %v3220, %v3220
    %v3281 = vmul.f32 %v3221, %v3221
    %v3282 = vmul.f32 %v3222, %v3222
    %v3283 = vmul.f32 %v3223, %v3223
    %v3284 = vmul.f32 %v3224, %v3224
    %v3285 = vmul.f32 %v3225, %v3225
    %v3286 = vmul.f32 %v3226, %v3226
    %v3287 = vmul.f32 %v3227, %v3227
    %v3288 = vmul.f32 %v3228, %v3228
    %v3289 = vmul.f32 %v3229, %v3229
    %v3290 = vmul.f32 %v3230, %v3230
    %v3291 = vmul.f32 %v3231, %v3231
    %v3292 = vmul.f32 %v3232, %v3232
    %v3293 = vpack.c.bf16 %v3279, %v3277
    %v3294 = vpack.c.bf16 %v3280, %v3278
    %v3295 = vpack.c.bf16 %v3283, %v3281
    %v3296 = vpack.c.bf16 %v3284, %v3282
    %v3297 = vpack.c.bf16 %v3287, %v3285
    %v3298 = vpack.c.bf16 %v3288, %v3286
    %v3299 = vpack.c.bf16 %v3291, %v3289
    %v3300 = vpack.c.bf16 %v3292, %v3290
    %v3333 = vunpack.c.l.b16 %v3233
    %v3334 = vunpack.c.h.b16 %v3233
    %v3335 = vunpack.c.l.b16 %v3234
    %v3336 = vunpack.c.h.b16 %v3234
    %v3337 = vunpack.c.l.b16 %v3235
    %v3338 = vunpack.c.h.b16 %v3235
    %v3339 = vunpack.c.l.b16 %v3236
    %v3340 = vunpack.c.h.b16 %v3236
    %v3341 = vunpack.c.l.b16 %v3237
    %v3342 = vunpack.c.h.b16 %v3237
    %v3343 = vunpack.c.l.b16 %v3238
    %v3344 = vunpack.c.h.b16 %v3238
    %v3345 = vunpack.c.l.b16 %v3239
    %v3346 = vunpack.c.h.b16 %v3239
    %v3347 = vunpack.c.l.b16 %v3240
    %v3348 = vunpack.c.h.b16 %v3240
    %v3349 = vunpack.c.l.b16 %v3241
    %v3350 = vunpack.c.h.b16 %v3241
    %v3351 = vunpack.c.l.b16 %v3242
    %v3352 = vunpack.c.h.b16 %v3242
    %v3353 = vunpack.c.l.b16 %v3243
    %v3354 = vunpack.c.h.b16 %v3243
    %v3355 = vunpack.c.l.b16 %v3244
    %v3356 = vunpack.c.h.b16 %v3244
    %v3357 = vunpack.c.l.b16 %v3245
    %v3358 = vunpack.c.h.b16 %v3245
    %v3359 = vunpack.c.l.b16 %v3246
    %v3360 = vunpack.c.h.b16 %v3246
    %v3361 = vunpack.c.l.b16 %v3247
    %v3362 = vunpack.c.h.b16 %v3247
    %v3363 = vunpack.c.l.b16 %v3248
    %v3364 = vunpack.c.h.b16 %v3248
    %v3365 = vunpack.c.l.b16 %v3249
    %v3366 = vunpack.c.h.b16 %v3249
    %v3367 = vunpack.c.l.b16 %v3250
    %v3368 = vunpack.c.h.b16 %v3250
    %v3369 = vunpack.c.l.b16 %v3251
    %v3370 = vunpack.c.h.b16 %v3251
    %v3371 = vunpack.c.l.b16 %v3252
    %v3372 = vunpack.c.h.b16 %v3252
    %v3373 = vunpack.c.l.b16 %v3253
    %v3374 = vunpack.c.h.b16 %v3253
    %v3375 = vunpack.c.l.b16 %v3254
    %v3376 = vunpack.c.h.b16 %v3254
    %v3377 = vunpack.c.l.b16 %v3255
    %v3378 = vunpack.c.h.b16 %v3255
    %v3379 = vunpack.c.l.b16 %v3256
    %v3380 = vunpack.c.h.b16 %v3256
    %v3381 = vunpack.c.l.b16 %v3257
    %v3382 = vunpack.c.h.b16 %v3257
    %v3383 = vunpack.c.l.b16 %v3258
    %v3384 = vunpack.c.h.b16 %v3258
    %v3385 = vunpack.c.l.b16 %v3259
    %v3386 = vunpack.c.h.b16 %v3259
    %v3387 = vunpack.c.l.b16 %v3260
    %v3388 = vunpack.c.h.b16 %v3260
    %v3389 = vunpack.c.l.b16 %v3261
    %v3390 = vunpack.c.h.b16 %v3261
    %v3391 = vunpack.c.l.b16 %v3262
    %v3392 = vunpack.c.h.b16 %v3262
    %v3393 = vunpack.c.l.b16 %v3263
    %v3394 = vunpack.c.h.b16 %v3263
    %v3395 = vunpack.c.l.b16 %v3264
    %v3396 = vunpack.c.h.b16 %v3264
    %v3397 = vpack.c.b16 %v3335, %v3333
    %v3398 = vpack.c.b16 %v3336, %v3334
    %v3399 = vpack.c.b16 %v3339, %v3337
    %v3400 = vpack.c.b16 %v3340, %v3338
    %v3401 = vpack.c.b16 %v3343, %v3341
    %v3402 = vpack.c.b16 %v3344, %v3342
    %v3403 = vpack.c.b16 %v3347, %v3345
    %v3404 = vpack.c.b16 %v3348, %v3346
    %v3405 = vpack.c.b16 %v3351, %v3349
    %v3406 = vpack.c.b16 %v3352, %v3350
    %v3407 = vpack.c.b16 %v3355, %v3353
    %v3408 = vpack.c.b16 %v3356, %v3354
    %v3409 = vpack.c.b16 %v3359, %v3357
    %v3410 = vpack.c.b16 %v3360, %v3358
    %v3411 = vpack.c.b16 %v3363, %v3361
    %v3412 = vpack.c.b16 %v3364, %v3362
    %v3413 = vpack.c.b16 %v3367, %v3365
    %v3414 = vpack.c.b16 %v3368, %v3366
    %v3415 = vpack.c.b16 %v3371, %v3369
    %v3416 = vpack.c.b16 %v3372, %v3370
    %v3417 = vpack.c.b16 %v3375, %v3373
    %v3418 = vpack.c.b16 %v3376, %v3374
    %v3419 = vpack.c.b16 %v3379, %v3377
    %v3420 = vpack.c.b16 %v3380, %v3378
    %v3421 = vpack.c.b16 %v3383, %v3381
    %v3422 = vpack.c.b16 %v3384, %v3382
    %v3423 = vpack.c.b16 %v3387, %v3385
    %v3424 = vpack.c.b16 %v3388, %v3386
    %v3425 = vpack.c.b16 %v3391, %v3389
    %v3426 = vpack.c.b16 %v3392, %v3390
    %v3427 = vpack.c.b16 %v3395, %v3393
    %v3428 = vpack.c.b16 %v3396, %v3394
    %3461 = vmatprep.subr.bf16.mxu0 %v3398
    %3462 = vmatpush1.bf16.msra.mxu0 %v3397
    %3463 = vmatprep.subr.bf16.mxu0 %v3400
    %3464 = vmatpush1.bf16.msra.mxu0 %v3399
    %3465 = vmatprep.subr.bf16.mxu0 %v3402
    %3466 = vmatpush1.bf16.msra.mxu0 %v3401
    %3467 = vmatprep.subr.bf16.mxu0 %v3404
    %3468 = vmatpush1.bf16.msra.mxu0 %v3403
    %3469 = vmatprep.subr.bf16.mxu0 %v3406
    %3470 = vmatpush1.bf16.msra.mxu0 %v3405
    %3471 = vmatprep.subr.bf16.mxu0 %v3408
    %3472 = vmatpush1.bf16.msra.mxu0 %v3407
    %3473 = vmatprep.subr.bf16.mxu0 %v3410
    %3474 = vmatpush1.bf16.msra.mxu0 %v3409
    %3475 = vmatprep.subr.bf16.mxu0 %v3412
    %3476 = vmatpush1.bf16.msra.mxu0 %v3411
    %3477 = vmatprep.subr.bf16.mxu0 %v3414
    %3478 = vmatpush1.bf16.msra.mxu0 %v3413
    %3479 = vmatprep.subr.bf16.mxu0 %v3416
    %3480 = vmatpush1.bf16.msra.mxu0 %v3415
    %3481 = vmatprep.subr.bf16.mxu0 %v3418
    %3482 = vmatpush1.bf16.msra.mxu0 %v3417
    %3483 = vmatprep.subr.bf16.mxu0 %v3420
    %3484 = vmatpush1.bf16.msra.mxu0 %v3419
    %3485 = vmatprep.subr.bf16.mxu0 %v3422
    %3486 = vmatpush1.bf16.msra.mxu0 %v3421
    %3487 = vmatprep.subr.bf16.mxu0 %v3424
    %3488 = vmatpush1.bf16.msra.mxu0 %v3423
    %3489 = vmatprep.subr.bf16.mxu0 %v3426
    %3490 = vmatpush1.bf16.msra.mxu0 %v3425
    %3491 = vmatprep.subr.bf16.mxu0 %v3428
    %3492 = vmatpush1.bf16.msra.mxu0 %v3427
    %3493 = vmatprep.mubr.bf16.mxu0 %v3294
    %3494 = vmatmul.mubr.bf16.gmra.mrb[0].mxu0 %v3293
    %v3495 = vpop.f32.mrb[0].mxu0
    %v3496 = vadd.f32 0.0, %v3495
    %v3497 = vpop.f32.mrb[0].mxu0
    %v3498 = vadd.f32 0.0, %v3497
    %v3499 = vpop.f32.mrb[0].mxu0
    %v3500 = vadd.f32 0.0, %v3499
    %v3501 = vpop.f32.mrb[0].mxu0
    %v3502 = vadd.f32 0.0, %v3501
    %3503 = vmatprep.mubr.bf16.mxu0 %v3296
    %3504 = vmatmul.mubr.bf16.gmra.mrb[0].mxu0 %v3295
    %v3505 = vpop.f32.mrb[0].mxu0
    %v3506 = vadd.f32 0.0, %v3505
    %v3507 = vpop.f32.mrb[0].mxu0
    %v3508 = vadd.f32 0.0, %v3507
    %v3509 = vpop.f32.mrb[0].mxu0
    %v3510 = vadd.f32 0.0, %v3509
    %v3511 = vpop.f32.mrb[0].mxu0
    %v3512 = vadd.f32 0.0, %v3511
    %3513 = vmatprep.mubr.bf16.mxu0 %v3298
    %3514 = vmatmul.mubr.bf16.gmra.mrb[0].mxu0 %v3297
    %v3515 = vpop.f32.mrb[0].mxu0
    %v3516 = vadd.f32 0.0, %v3515
    %v3517 = vpop.f32.mrb[0].mxu0
    %v3518 = vadd.f32 0.0, %v3517
    %v3519 = vpop.f32.mrb[0].mxu0
    %v3520 = vadd.f32 0.0, %v3519
    %v3521 = vpop.f32.mrb[0].mxu0
    %v3522 = vadd.f32 0.0, %v3521
    %3523 = vmatprep.mubr.bf16.mxu0 %v3300
    %3524 = vmatmul.mubr.bf16.gmra.mrb[0].mxu0 %v3299
    %v3525 = vpop.f32.mrb[0].mxu0
    %v3526 = vadd.f32 0.0, %v3525
    %v3527 = vpop.f32.mrb[0].mxu0
    %v3528 = vadd.f32 0.0, %v3527
    %v3529 = vpop.f32.mrb[0].mxu0
    %v3530 = vadd.f32 0.0, %v3529
    %v3531 = vpop.f32.mrb[0].mxu0
    %v3532 = vadd.f32 0.0, %v3531
    %3533 = vdwg.mxu0
    %v3534 = vsel %vm3266, 1, 0
    %v3535 = vlaneseq
    %v3536 = vshrl.u32 %v3535, 7
    %v3537 = vsub.s32 0, %v3536
    %v3538 = vrot.slane %v3534, %v3537
    %v3539 = vlaneseq
    %v3540 = vshrl.u32 %v3539, 7
    %v3541 = vsub.s32 1, %v3540
    %v3542 = vrot.slane %v3534, %v3541
    %vm3543 = vcmp.eq.s32.totalorder %v3538, 1
    %vm3544 = vcmp.eq.s32.totalorder %v3542, 1
    %v3545 = vsel %vm3543, %v3217, %v3496
    %v3546 = vsel %vm3544, %v3218, %v3498
    %v3547 = vsel %vm3543, %v3219, %v3500
    %v3548 = vsel %vm3544, %v3220, %v3502
    %v3549 = vsel %vm3543, %v3221, %v3506
    %v3550 = vsel %vm3544, %v3222, %v3508
    %v3551 = vsel %vm3543, %v3223, %v3510
    %v3552 = vsel %vm3544, %v3224, %v3512
    %v3553 = vsel %vm3543, %v3225, %v3516
    %v3554 = vsel %vm3544, %v3226, %v3518
    %v3555 = vsel %vm3543, %v3227, %v3520
    %v3556 = vsel %vm3544, %v3228, %v3522
    %v3557 = vsel %vm3543, %v3229, %v3526
    %v3558 = vsel %vm3544, %v3230, %v3528
    %v3559 = vsel %vm3543, %v3231, %v3530
    %v3560 = vsel %vm3544, %v3232, %v3532
    %v3562 = vlaneseq
    %v3563 = vshrl.u32 %v3562, 7
    %v3564 = vsub.s32 0, %v3563
    %v3565 = vrot.slane %v3267, %v3564
    %v3566 = vlaneseq
    %v3567 = vshrl.u32 %v3566, 7
    %v3568 = vsub.s32 1, %v3567
    %v3569 = vrot.slane %v3267, %v3568
    %v3572 = vmul.f32 %v3565, %v3545
    %v3573 = vmul.f32 %v3569, %v3546
    %v3574 = vmul.f32 %v3565, %v3547
    %v3575 = vmul.f32 %v3569, %v3548
    %v3576 = vmul.f32 %v3565, %v3549
    %v3577 = vmul.f32 %v3569, %v3550
    %v3578 = vmul.f32 %v3565, %v3551
    %v3579 = vmul.f32 %v3569, %v3552
    %v3580 = vmul.f32 %v3565, %v3553
    %v3581 = vmul.f32 %v3569, %v3554
    %v3582 = vmul.f32 %v3565, %v3555
    %v3583 = vmul.f32 %v3569, %v3556
    %v3584 = vmul.f32 %v3565, %v3557
    %v3585 = vmul.f32 %v3569, %v3558
    %v3586 = vmul.f32 %v3565, %v3559
    %v3587 = vmul.f32 %v3569, %v3560
    %v3589 = vlaneseq
    %v3590 = vshrl.u32 %v3589, 7
    %v3591 = vsub.s32 0, %v3590
    %v3592 = vrot.slane %v3272, %v3591
    %v3593 = vlaneseq
    %v3594 = vshrl.u32 %v3593, 7
    %v3595 = vsub.s32 1, %v3594
    %v3596 = vrot.slane %v3272, %v3595
    %v3599 = vadd.f32 %v3572, %v3592
    %v3600 = vadd.f32 %v3573, %v3596
    %v3601 = vadd.f32 %v3574, %v3592
    %v3602 = vadd.f32 %v3575, %v3596
    %v3603 = vadd.f32 %v3576, %v3592
    %v3604 = vadd.f32 %v3577, %v3596
    %v3605 = vadd.f32 %v3578, %v3592
    %v3606 = vadd.f32 %v3579, %v3596
    %v3607 = vadd.f32 %v3580, %v3592
    %v3608 = vadd.f32 %v3581, %v3596
    %v3609 = vadd.f32 %v3582, %v3592
    %v3610 = vadd.f32 %v3583, %v3596
    %v3611 = vadd.f32 %v3584, %v3592
    %v3612 = vadd.f32 %v3585, %v3596
    %v3613 = vadd.f32 %v3586, %v3592
    %v3614 = vadd.f32 %v3587, %v3596
    %v3615 = vxor.u32 %v3599, 2147483648
    %v3616 = vxor.u32 %v3600, 2147483648
    %v3617 = vxor.u32 %v3601, 2147483648
    %v3618 = vxor.u32 %v3602, 2147483648
    %v3619 = vxor.u32 %v3603, 2147483648
    %v3620 = vxor.u32 %v3604, 2147483648
    %v3621 = vxor.u32 %v3605, 2147483648
    %v3622 = vxor.u32 %v3606, 2147483648
    %v3623 = vxor.u32 %v3607, 2147483648
    %v3624 = vxor.u32 %v3608, 2147483648
    %v3625 = vxor.u32 %v3609, 2147483648
    %v3626 = vxor.u32 %v3610, 2147483648
    %v3627 = vxor.u32 %v3611, 2147483648
    %v3628 = vxor.u32 %v3612, 2147483648
    %v3629 = vxor.u32 %v3613, 2147483648
    %v3630 = vxor.u32 %v3614, 2147483648
    %v3631 = vmul.f32 %v3615, 1.442695
    %v3632 = vpow.pop %v3631
    %v3633 = vmul.f32 %v3616, 1.442695
    %v3634 = vpow.pop %v3633
    %v3635 = vmul.f32 %v3617, 1.442695
    %v3636 = vpow.pop %v3635
    %v3637 = vmul.f32 %v3618, 1.442695
    %v3638 = vpow.pop %v3637
    %v3639 = vmul.f32 %v3619, 1.442695
    %v3640 = vpow.pop %v3639
    %v3641 = vmul.f32 %v3620, 1.442695
    %v3642 = vpow.pop %v3641
    %v3643 = vmul.f32 %v3621, 1.442695
    %v3644 = vpow.pop %v3643
    %v3645 = vmul.f32 %v3622, 1.442695
    %v3646 = vpow.pop %v3645
    %v3647 = vmul.f32 %v3623, 1.442695
    %v3648 = vpow.pop %v3647
    %v3649 = vmul.f32 %v3624, 1.442695
    %v3650 = vpow.pop %v3649
    %v3651 = vmul.f32 %v3625, 1.442695
    %v3652 = vpow.pop %v3651
    %v3653 = vmul.f32 %v3626, 1.442695
    %v3654 = vpow.pop %v3653
    %v3655 = vmul.f32 %v3627, 1.442695
    %v3656 = vpow.pop %v3655
    %v3657 = vmul.f32 %v3628, 1.442695
    %v3658 = vpow.pop %v3657
    %v3659 = vmul.f32 %v3629, 1.442695
    %v3660 = vpow.pop %v3659
    %v3661 = vmul.f32 %v3630, 1.442695
    %v3662 = vpow.pop %v3661
    %v3663 = vadd.f32 %v3632, 1.0
    %v3664 = vadd.f32 %v3634, 1.0
    %v3665 = vadd.f32 %v3636, 1.0
    %v3666 = vadd.f32 %v3638, 1.0
    %v3667 = vadd.f32 %v3640, 1.0
    %v3668 = vadd.f32 %v3642, 1.0
    %v3669 = vadd.f32 %v3644, 1.0
    %v3670 = vadd.f32 %v3646, 1.0
    %v3671 = vadd.f32 %v3648, 1.0
    %v3672 = vadd.f32 %v3650, 1.0
    %v3673 = vadd.f32 %v3652, 1.0
    %v3674 = vadd.f32 %v3654, 1.0
    %v3675 = vadd.f32 %v3656, 1.0
    %v3676 = vadd.f32 %v3658, 1.0
    %v3677 = vadd.f32 %v3660, 1.0
    %v3678 = vadd.f32 %v3662, 1.0
    %v3679 = vrcp.pop %v3663
    %v3680 = vmul.f32 1.0, %v3679
    %v3681 = vrcp.pop %v3664
    %v3682 = vmul.f32 1.0, %v3681
    %v3683 = vrcp.pop %v3665
    %v3684 = vmul.f32 1.0, %v3683
    %v3685 = vrcp.pop %v3666
    %v3686 = vmul.f32 1.0, %v3685
    %v3687 = vrcp.pop %v3667
    %v3688 = vmul.f32 1.0, %v3687
    %v3689 = vrcp.pop %v3668
    %v3690 = vmul.f32 1.0, %v3689
    %v3691 = vrcp.pop %v3669
    %v3692 = vmul.f32 1.0, %v3691
    %v3693 = vrcp.pop %v3670
    %v3694 = vmul.f32 1.0, %v3693
    %v3695 = vrcp.pop %v3671
    %v3696 = vmul.f32 1.0, %v3695
    %v3697 = vrcp.pop %v3672
    %v3698 = vmul.f32 1.0, %v3697
    %v3699 = vrcp.pop %v3673
    %v3700 = vmul.f32 1.0, %v3699
    %v3701 = vrcp.pop %v3674
    %v3702 = vmul.f32 1.0, %v3701
    %v3703 = vrcp.pop %v3675
    %v3704 = vmul.f32 1.0, %v3703
    %v3705 = vrcp.pop %v3676
    %v3706 = vmul.f32 1.0, %v3705
    %v3707 = vrcp.pop %v3677
    %v3708 = vmul.f32 1.0, %v3707
    %v3709 = vrcp.pop %v3678
    %v3710 = vmul.f32 1.0, %v3709
    %v3711 = vmul.f32 %v3680, %v3217
    %v3712 = vmul.f32 %v3682, %v3218
    %v3713 = vmul.f32 %v3684, %v3219
    %v3714 = vmul.f32 %v3686, %v3220
    %v3715 = vmul.f32 %v3688, %v3221
    %v3716 = vmul.f32 %v3690, %v3222
    %v3717 = vmul.f32 %v3692, %v3223
    %v3718 = vmul.f32 %v3694, %v3224
    %v3719 = vmul.f32 %v3696, %v3225
    %v3720 = vmul.f32 %v3698, %v3226
    %v3721 = vmul.f32 %v3700, %v3227
    %v3722 = vmul.f32 %v3702, %v3228
    %v3723 = vmul.f32 %v3704, %v3229
    %v3724 = vmul.f32 %v3706, %v3230
    %v3725 = vmul.f32 %v3708, %v3231
    %v3726 = vmul.f32 %v3710, %v3232
    %v3727 = vmul.f32 %v3711, %v3711
    %v3728 = vmul.f32 %v3712, %v3712
    %v3729 = vmul.f32 %v3713, %v3713
    %v3730 = vmul.f32 %v3714, %v3714
    %v3731 = vmul.f32 %v3715, %v3715
    %v3732 = vmul.f32 %v3716, %v3716
    %v3733 = vmul.f32 %v3717, %v3717
    %v3734 = vmul.f32 %v3718, %v3718
    %v3735 = vmul.f32 %v3719, %v3719
    %v3736 = vmul.f32 %v3720, %v3720
    %v3737 = vmul.f32 %v3721, %v3721
    %v3738 = vmul.f32 %v3722, %v3722
    %v3739 = vmul.f32 %v3723, %v3723
    %v3740 = vmul.f32 %v3724, %v3724
    %v3741 = vmul.f32 %v3725, %v3725
    %v3742 = vmul.f32 %v3726, %v3726
    %v3743 = vpack.c.bf16 %v3729, %v3727
    %v3744 = vpack.c.bf16 %v3730, %v3728
    %v3745 = vpack.c.bf16 %v3733, %v3731
    %v3746 = vpack.c.bf16 %v3734, %v3732
    %v3747 = vpack.c.bf16 %v3737, %v3735
    %v3748 = vpack.c.bf16 %v3738, %v3736
    %v3749 = vpack.c.bf16 %v3741, %v3739
    %v3750 = vpack.c.bf16 %v3742, %v3740
    %3751 = vmatprep.subr.bf16.mxu0 %v3398
    %3752 = vmatpush1.bf16.msra.mxu0 %v3397
    %3753 = vmatprep.subr.bf16.mxu0 %v3400
    %3754 = vmatpush1.bf16.msra.mxu0 %v3399
    %3755 = vmatprep.subr.bf16.mxu0 %v3402
    %3756 = vmatpush1.bf16.msra.mxu0 %v3401
    %3757 = vmatprep.subr.bf16.mxu0 %v3404
    %3758 = vmatpush1.bf16.msra.mxu0 %v3403
    %3759 = vmatprep.subr.bf16.mxu0 %v3406
    %3760 = vmatpush1.bf16.msra.mxu0 %v3405
    %3761 = vmatprep.subr.bf16.mxu0 %v3408
    %3762 = vmatpush1.bf16.msra.mxu0 %v3407
    %3763 = vmatprep.subr.bf16.mxu0 %v3410
    %3764 = vmatpush1.bf16.msra.mxu0 %v3409
    %3765 = vmatprep.subr.bf16.mxu0 %v3412
    %3766 = vmatpush1.bf16.msra.mxu0 %v3411
    %3767 = vmatprep.subr.bf16.mxu0 %v3414
    %3768 = vmatpush1.bf16.msra.mxu0 %v3413
    %3769 = vmatprep.subr.bf16.mxu0 %v3416
    %3770 = vmatpush1.bf16.msra.mxu0 %v3415
    %3771 = vmatprep.subr.bf16.mxu0 %v3418
    %3772 = vmatpush1.bf16.msra.mxu0 %v3417
    %3773 = vmatprep.subr.bf16.mxu0 %v3420
    %3774 = vmatpush1.bf16.msra.mxu0 %v3419
    %3775 = vmatprep.subr.bf16.mxu0 %v3422
    %3776 = vmatpush1.bf16.msra.mxu0 %v3421
    %3777 = vmatprep.subr.bf16.mxu0 %v3424
    %3778 = vmatpush1.bf16.msra.mxu0 %v3423
    %3779 = vmatprep.subr.bf16.mxu0 %v3426
    %3780 = vmatpush1.bf16.msra.mxu0 %v3425
    %3781 = vmatprep.subr.bf16.mxu0 %v3428
    %3782 = vmatpush1.bf16.msra.mxu0 %v3427
    %3783 = vmatprep.mubr.bf16.mxu0 %v3744
    %3784 = vmatmul.mubr.bf16.gmra.mrb[0].mxu0 %v3743
    %v3785 = vpop.f32.mrb[0].mxu0
    %v3786 = vadd.f32 0.0, %v3785
    %v3787 = vpop.f32.mrb[0].mxu0
    %v3788 = vadd.f32 0.0, %v3787
    %v3789 = vpop.f32.mrb[0].mxu0
    %v3790 = vadd.f32 0.0, %v3789
    %v3791 = vpop.f32.mrb[0].mxu0
    %v3792 = vadd.f32 0.0, %v3791
    %3793 = vmatprep.mubr.bf16.mxu0 %v3746
    %3794 = vmatmul.mubr.bf16.gmra.mrb[0].mxu0 %v3745
    %v3795 = vpop.f32.mrb[0].mxu0
    %v3796 = vadd.f32 0.0, %v3795
    %v3797 = vpop.f32.mrb[0].mxu0
    %v3798 = vadd.f32 0.0, %v3797
    %v3799 = vpop.f32.mrb[0].mxu0
    %v3800 = vadd.f32 0.0, %v3799
    %v3801 = vpop.f32.mrb[0].mxu0
    %v3802 = vadd.f32 0.0, %v3801
    %3803 = vmatprep.mubr.bf16.mxu0 %v3748
    %3804 = vmatmul.mubr.bf16.gmra.mrb[0].mxu0 %v3747
    %v3805 = vpop.f32.mrb[0].mxu0
    %v3806 = vadd.f32 0.0, %v3805
    %v3807 = vpop.f32.mrb[0].mxu0
    %v3808 = vadd.f32 0.0, %v3807
    %v3809 = vpop.f32.mrb[0].mxu0
    %v3810 = vadd.f32 0.0, %v3809
    %v3811 = vpop.f32.mrb[0].mxu0
    %v3812 = vadd.f32 0.0, %v3811
    %3813 = vmatprep.mubr.bf16.mxu0 %v3750
    %3814 = vmatmul.mubr.bf16.gmra.mrb[0].mxu0 %v3749
    %v3815 = vpop.f32.mrb[0].mxu0
    %v3816 = vadd.f32 0.0, %v3815
    %v3817 = vpop.f32.mrb[0].mxu0
    %v3818 = vadd.f32 0.0, %v3817
    %v3819 = vpop.f32.mrb[0].mxu0
    %v3820 = vadd.f32 0.0, %v3819
    %v3821 = vpop.f32.mrb[0].mxu0
    %v3822 = vadd.f32 0.0, %v3821
    %3823 = vdwg.mxu0
    %v3824 = vsel %vm3543, %v3711, %v3786
    %v3825 = vsel %vm3544, %v3712, %v3788
    %v3826 = vsel %vm3543, %v3713, %v3790
    %v3827 = vsel %vm3544, %v3714, %v3792
    %v3828 = vsel %vm3543, %v3715, %v3796
    %v3829 = vsel %vm3544, %v3716, %v3798
    %v3830 = vsel %vm3543, %v3717, %v3800
    %v3831 = vsel %vm3544, %v3718, %v3802
    %v3832 = vsel %vm3543, %v3719, %v3806
    %v3833 = vsel %vm3544, %v3720, %v3808
    %v3834 = vsel %vm3543, %v3721, %v3810
    %v3835 = vsel %vm3544, %v3722, %v3812
    %v3836 = vsel %vm3543, %v3723, %v3816
    %v3837 = vsel %vm3544, %v3724, %v3818
    %v3838 = vsel %vm3543, %v3725, %v3820
    %v3839 = vsel %vm3544, %v3726, %v3822
    %v3841 = vlaneseq
    %v3842 = vshrl.u32 %v3841, 7
    %v3843 = vsub.s32 0, %v3842
    %v3844 = vrot.slane %v3268, %v3843
    %v3845 = vlaneseq
    %v3846 = vshrl.u32 %v3845, 7
    %v3847 = vsub.s32 1, %v3846
    %v3848 = vrot.slane %v3268, %v3847
    %v3851 = vmul.f32 %v3844, %v3824
    %v3852 = vmul.f32 %v3848, %v3825
    %v3853 = vmul.f32 %v3844, %v3826
    %v3854 = vmul.f32 %v3848, %v3827
    %v3855 = vmul.f32 %v3844, %v3828
    %v3856 = vmul.f32 %v3848, %v3829
    %v3857 = vmul.f32 %v3844, %v3830
    %v3858 = vmul.f32 %v3848, %v3831
    %v3859 = vmul.f32 %v3844, %v3832
    %v3860 = vmul.f32 %v3848, %v3833
    %v3861 = vmul.f32 %v3844, %v3834
    %v3862 = vmul.f32 %v3848, %v3835
    %v3863 = vmul.f32 %v3844, %v3836
    %v3864 = vmul.f32 %v3848, %v3837
    %v3865 = vmul.f32 %v3844, %v3838
    %v3866 = vmul.f32 %v3848, %v3839
    %v3868 = vlaneseq
    %v3869 = vshrl.u32 %v3868, 7
    %v3870 = vsub.s32 0, %v3869
    %v3871 = vrot.slane %v3273, %v3870
    %v3872 = vlaneseq
    %v3873 = vshrl.u32 %v3872, 7
    %v3874 = vsub.s32 1, %v3873
    %v3875 = vrot.slane %v3273, %v3874
    %v3878 = vadd.f32 %v3851, %v3871
    %v3879 = vadd.f32 %v3852, %v3875
    %v3880 = vadd.f32 %v3853, %v3871
    %v3881 = vadd.f32 %v3854, %v3875
    %v3882 = vadd.f32 %v3855, %v3871
    %v3883 = vadd.f32 %v3856, %v3875
    %v3884 = vadd.f32 %v3857, %v3871
    %v3885 = vadd.f32 %v3858, %v3875
    %v3886 = vadd.f32 %v3859, %v3871
    %v3887 = vadd.f32 %v3860, %v3875
    %v3888 = vadd.f32 %v3861, %v3871
    %v3889 = vadd.f32 %v3862, %v3875
    %v3890 = vadd.f32 %v3863, %v3871
    %v3891 = vadd.f32 %v3864, %v3875
    %v3892 = vadd.f32 %v3865, %v3871
    %v3893 = vadd.f32 %v3866, %v3875
    %v3894 = vxor.u32 %v3878, 2147483648
    %v3895 = vxor.u32 %v3879, 2147483648
    %v3896 = vxor.u32 %v3880, 2147483648
    %v3897 = vxor.u32 %v3881, 2147483648
    %v3898 = vxor.u32 %v3882, 2147483648
    %v3899 = vxor.u32 %v3883, 2147483648
    %v3900 = vxor.u32 %v3884, 2147483648
    %v3901 = vxor.u32 %v3885, 2147483648
    %v3902 = vxor.u32 %v3886, 2147483648
    %v3903 = vxor.u32 %v3887, 2147483648
    %v3904 = vxor.u32 %v3888, 2147483648
    %v3905 = vxor.u32 %v3889, 2147483648
    %v3906 = vxor.u32 %v3890, 2147483648
    %v3907 = vxor.u32 %v3891, 2147483648
    %v3908 = vxor.u32 %v3892, 2147483648
    %v3909 = vxor.u32 %v3893, 2147483648
    %v3910 = vmul.f32 %v3894, 1.442695
    %v3911 = vpow.pop %v3910
    %v3912 = vmul.f32 %v3895, 1.442695
    %v3913 = vpow.pop %v3912
    %v3914 = vmul.f32 %v3896, 1.442695
    %v3915 = vpow.pop %v3914
    %v3916 = vmul.f32 %v3897, 1.442695
    %v3917 = vpow.pop %v3916
    %v3918 = vmul.f32 %v3898, 1.442695
    %v3919 = vpow.pop %v3918
    %v3920 = vmul.f32 %v3899, 1.442695
    %v3921 = vpow.pop %v3920
    %v3922 = vmul.f32 %v3900, 1.442695
    %v3923 = vpow.pop %v3922
    %v3924 = vmul.f32 %v3901, 1.442695
    %v3925 = vpow.pop %v3924
    %v3926 = vmul.f32 %v3902, 1.442695
    %v3927 = vpow.pop %v3926
    %v3928 = vmul.f32 %v3903, 1.442695
    %v3929 = vpow.pop %v3928
    %v3930 = vmul.f32 %v3904, 1.442695
    %v3931 = vpow.pop %v3930
    %v3932 = vmul.f32 %v3905, 1.442695
    %v3933 = vpow.pop %v3932
    %v3934 = vmul.f32 %v3906, 1.442695
    %v3935 = vpow.pop %v3934
    %v3936 = vmul.f32 %v3907, 1.442695
    %v3937 = vpow.pop %v3936
    %v3938 = vmul.f32 %v3908, 1.442695
    %v3939 = vpow.pop %v3938
    %v3940 = vmul.f32 %v3909, 1.442695
    %v3941 = vpow.pop %v3940
    %v3942 = vadd.f32 %v3911, 1.0
    %v3943 = vadd.f32 %v3913, 1.0
    %v3944 = vadd.f32 %v3915, 1.0
    %v3945 = vadd.f32 %v3917, 1.0
    %v3946 = vadd.f32 %v3919, 1.0
    %v3947 = vadd.f32 %v3921, 1.0
    %v3948 = vadd.f32 %v3923, 1.0
    %v3949 = vadd.f32 %v3925, 1.0
    %v3950 = vadd.f32 %v3927, 1.0
    %v3951 = vadd.f32 %v3929, 1.0
    %v3952 = vadd.f32 %v3931, 1.0
    %v3953 = vadd.f32 %v3933, 1.0
    %v3954 = vadd.f32 %v3935, 1.0
    %v3955 = vadd.f32 %v3937, 1.0
    %v3956 = vadd.f32 %v3939, 1.0
    %v3957 = vadd.f32 %v3941, 1.0
    %v3958 = vrcp.pop %v3942
    %v3959 = vmul.f32 1.0, %v3958
    %v3960 = vrcp.pop %v3943
    %v3961 = vmul.f32 1.0, %v3960
    %v3962 = vrcp.pop %v3944
    %v3963 = vmul.f32 1.0, %v3962
    %v3964 = vrcp.pop %v3945
    %v3965 = vmul.f32 1.0, %v3964
    %v3966 = vrcp.pop %v3946
    %v3967 = vmul.f32 1.0, %v3966
    %v3968 = vrcp.pop %v3947
    %v3969 = vmul.f32 1.0, %v3968
    %v3970 = vrcp.pop %v3948
    %v3971 = vmul.f32 1.0, %v3970
    %v3972 = vrcp.pop %v3949
    %v3973 = vmul.f32 1.0, %v3972
    %v3974 = vrcp.pop %v3950
    %v3975 = vmul.f32 1.0, %v3974
    %v3976 = vrcp.pop %v3951
    %v3977 = vmul.f32 1.0, %v3976
    %v3978 = vrcp.pop %v3952
    %v3979 = vmul.f32 1.0, %v3978
    %v3980 = vrcp.pop %v3953
    %v3981 = vmul.f32 1.0, %v3980
    %v3982 = vrcp.pop %v3954
    %v3983 = vmul.f32 1.0, %v3982
    %v3984 = vrcp.pop %v3955
    %v3985 = vmul.f32 1.0, %v3984
    %v3986 = vrcp.pop %v3956
    %v3987 = vmul.f32 1.0, %v3986
    %v3988 = vrcp.pop %v3957
    %v3989 = vmul.f32 1.0, %v3988
    %v3990 = vmul.f32 %v3959, %v3711
    %v3991 = vmul.f32 %v3961, %v3712
    %v3992 = vmul.f32 %v3963, %v3713
    %v3993 = vmul.f32 %v3965, %v3714
    %v3994 = vmul.f32 %v3967, %v3715
    %v3995 = vmul.f32 %v3969, %v3716
    %v3996 = vmul.f32 %v3971, %v3717
    %v3997 = vmul.f32 %v3973, %v3718
    %v3998 = vmul.f32 %v3975, %v3719
    %v3999 = vmul.f32 %v3977, %v3720
    %v4000 = vmul.f32 %v3979, %v3721
    %v4001 = vmul.f32 %v3981, %v3722
    %v4002 = vmul.f32 %v3983, %v3723
    %v4003 = vmul.f32 %v3985, %v3724
    %v4004 = vmul.f32 %v3987, %v3725
    %v4005 = vmul.f32 %v3989, %v3726
    %v4006 = vmul.f32 %v3990, %v3990
    %v4007 = vmul.f32 %v3991, %v3991
    %v4008 = vmul.f32 %v3992, %v3992
    %v4009 = vmul.f32 %v3993, %v3993
    %v4010 = vmul.f32 %v3994, %v3994
    %v4011 = vmul.f32 %v3995, %v3995
    %v4012 = vmul.f32 %v3996, %v3996
    %v4013 = vmul.f32 %v3997, %v3997
    %v4014 = vmul.f32 %v3998, %v3998
    %v4015 = vmul.f32 %v3999, %v3999
    %v4016 = vmul.f32 %v4000, %v4000
    %v4017 = vmul.f32 %v4001, %v4001
    %v4018 = vmul.f32 %v4002, %v4002
    %v4019 = vmul.f32 %v4003, %v4003
    %v4020 = vmul.f32 %v4004, %v4004
    %v4021 = vmul.f32 %v4005, %v4005
    %v4022 = vpack.c.bf16 %v4008, %v4006
    %v4023 = vpack.c.bf16 %v4009, %v4007
    %v4024 = vpack.c.bf16 %v4012, %v4010
    %v4025 = vpack.c.bf16 %v4013, %v4011
    %v4026 = vpack.c.bf16 %v4016, %v4014
    %v4027 = vpack.c.bf16 %v4017, %v4015
    %v4028 = vpack.c.bf16 %v4020, %v4018
    %v4029 = vpack.c.bf16 %v4021, %v4019
    %4030 = vmatprep.subr.bf16.mxu0 %v3398
    %4031 = vmatpush1.bf16.msra.mxu0 %v3397
    %4032 = vmatprep.subr.bf16.mxu0 %v3400
    %4033 = vmatpush1.bf16.msra.mxu0 %v3399
    %4034 = vmatprep.subr.bf16.mxu0 %v3402
    %4035 = vmatpush1.bf16.msra.mxu0 %v3401
    %4036 = vmatprep.subr.bf16.mxu0 %v3404
    %4037 = vmatpush1.bf16.msra.mxu0 %v3403
    %4038 = vmatprep.subr.bf16.mxu0 %v3406
    %4039 = vmatpush1.bf16.msra.mxu0 %v3405
    %4040 = vmatprep.subr.bf16.mxu0 %v3408
    %4041 = vmatpush1.bf16.msra.mxu0 %v3407
    %4042 = vmatprep.subr.bf16.mxu0 %v3410
    %4043 = vmatpush1.bf16.msra.mxu0 %v3409
    %4044 = vmatprep.subr.bf16.mxu0 %v3412
    %4045 = vmatpush1.bf16.msra.mxu0 %v3411
    %4046 = vmatprep.subr.bf16.mxu0 %v3414
    %4047 = vmatpush1.bf16.msra.mxu0 %v3413
    %4048 = vmatprep.subr.bf16.mxu0 %v3416
    %4049 = vmatpush1.bf16.msra.mxu0 %v3415
    %4050 = vmatprep.subr.bf16.mxu0 %v3418
    %4051 = vmatpush1.bf16.msra.mxu0 %v3417
    %4052 = vmatprep.subr.bf16.mxu0 %v3420
    %4053 = vmatpush1.bf16.msra.mxu0 %v3419
    %4054 = vmatprep.subr.bf16.mxu0 %v3422
    %4055 = vmatpush1.bf16.msra.mxu0 %v3421
    %4056 = vmatprep.subr.bf16.mxu0 %v3424
    %4057 = vmatpush1.bf16.msra.mxu0 %v3423
    %4058 = vmatprep.subr.bf16.mxu0 %v3426
    %4059 = vmatpush1.bf16.msra.mxu0 %v3425
    %4060 = vmatprep.subr.bf16.mxu0 %v3428
    %4061 = vmatpush1.bf16.msra.mxu0 %v3427
    %4062 = vmatprep.mubr.bf16.mxu0 %v4023
    %4063 = vmatmul.mubr.bf16.gmra.mrb[0].mxu0 %v4022
    %v4064 = vpop.f32.mrb[0].mxu0
    %v4065 = vadd.f32 0.0, %v4064
    %v4066 = vpop.f32.mrb[0].mxu0
    %v4067 = vadd.f32 0.0, %v4066
    %v4068 = vpop.f32.mrb[0].mxu0
    %v4069 = vadd.f32 0.0, %v4068
    %v4070 = vpop.f32.mrb[0].mxu0
    %v4071 = vadd.f32 0.0, %v4070
    %4072 = vmatprep.mubr.bf16.mxu0 %v4025
    %4073 = vmatmul.mubr.bf16.gmra.mrb[0].mxu0 %v4024
    %v4074 = vpop.f32.mrb[0].mxu0
    %v4075 = vadd.f32 0.0, %v4074
    %v4076 = vpop.f32.mrb[0].mxu0
    %v4077 = vadd.f32 0.0, %v4076
    %v4078 = vpop.f32.mrb[0].mxu0
    %v4079 = vadd.f32 0.0, %v4078
    %v4080 = vpop.f32.mrb[0].mxu0
    %v4081 = vadd.f32 0.0, %v4080
    %4082 = vmatprep.mubr.bf16.mxu0 %v4027
    %4083 = vmatmul.mubr.bf16.gmra.mrb[0].mxu0 %v4026
    %v4084 = vpop.f32.mrb[0].mxu0
    %v4085 = vadd.f32 0.0, %v4084
    %v4086 = vpop.f32.mrb[0].mxu0
    %v4087 = vadd.f32 0.0, %v4086
    %v4088 = vpop.f32.mrb[0].mxu0
    %v4089 = vadd.f32 0.0, %v4088
    %v4090 = vpop.f32.mrb[0].mxu0
    %v4091 = vadd.f32 0.0, %v4090
    %4092 = vmatprep.mubr.bf16.mxu0 %v4029
    %4093 = vmatmul.mubr.bf16.gmra.mrb[0].mxu0 %v4028
    %v4094 = vpop.f32.mrb[0].mxu0
    %v4095 = vadd.f32 0.0, %v4094
    %v4096 = vpop.f32.mrb[0].mxu0
    %v4097 = vadd.f32 0.0, %v4096
    %v4098 = vpop.f32.mrb[0].mxu0
    %v4099 = vadd.f32 0.0, %v4098
    %v4100 = vpop.f32.mrb[0].mxu0
    %v4101 = vadd.f32 0.0, %v4100
    %4102 = vdwg.mxu0
    %v4103 = vsel %vm3543, %v3990, %v4065
    %v4104 = vsel %vm3544, %v3991, %v4067
    %v4105 = vsel %vm3543, %v3992, %v4069
    %v4106 = vsel %vm3544, %v3993, %v4071
    %v4107 = vsel %vm3543, %v3994, %v4075
    %v4108 = vsel %vm3544, %v3995, %v4077
    %v4109 = vsel %vm3543, %v3996, %v4079
    %v4110 = vsel %vm3544, %v3997, %v4081
    %v4111 = vsel %vm3543, %v3998, %v4085
    %v4112 = vsel %vm3544, %v3999, %v4087
    %v4113 = vsel %vm3543, %v4000, %v4089
    %v4114 = vsel %vm3544, %v4001, %v4091
    %v4115 = vsel %vm3543, %v4002, %v4095
    %v4116 = vsel %vm3544, %v4003, %v4097
    %v4117 = vsel %vm3543, %v4004, %v4099
    %v4118 = vsel %vm3544, %v4005, %v4101
    %v4120 = vlaneseq
    %v4121 = vshrl.u32 %v4120, 7
    %v4122 = vsub.s32 0, %v4121
    %v4123 = vrot.slane %v3269, %v4122
    %v4124 = vlaneseq
    %v4125 = vshrl.u32 %v4124, 7
    %v4126 = vsub.s32 1, %v4125
    %v4127 = vrot.slane %v3269, %v4126
    %v4130 = vmul.f32 %v4123, %v4103
    %v4131 = vmul.f32 %v4127, %v4104
    %v4132 = vmul.f32 %v4123, %v4105
    %v4133 = vmul.f32 %v4127, %v4106
    %v4134 = vmul.f32 %v4123, %v4107
    %v4135 = vmul.f32 %v4127, %v4108
    %v4136 = vmul.f32 %v4123, %v4109
    %v4137 = vmul.f32 %v4127, %v4110
    %v4138 = vmul.f32 %v4123, %v4111
    %v4139 = vmul.f32 %v4127, %v4112
    %v4140 = vmul.f32 %v4123, %v4113
    %v4141 = vmul.f32 %v4127, %v4114
    %v4142 = vmul.f32 %v4123, %v4115
    %v4143 = vmul.f32 %v4127, %v4116
    %v4144 = vmul.f32 %v4123, %v4117
    %v4145 = vmul.f32 %v4127, %v4118
    %v4147 = vlaneseq
    %v4148 = vshrl.u32 %v4147, 7
    %v4149 = vsub.s32 0, %v4148
    %v4150 = vrot.slane %v3274, %v4149
    %v4151 = vlaneseq
    %v4152 = vshrl.u32 %v4151, 7
    %v4153 = vsub.s32 1, %v4152
    %v4154 = vrot.slane %v3274, %v4153
    %v4157 = vadd.f32 %v4130, %v4150
    %v4158 = vadd.f32 %v4131, %v4154
    %v4159 = vadd.f32 %v4132, %v4150
    %v4160 = vadd.f32 %v4133, %v4154
    %v4161 = vadd.f32 %v4134, %v4150
    %v4162 = vadd.f32 %v4135, %v4154
    %v4163 = vadd.f32 %v4136, %v4150
    %v4164 = vadd.f32 %v4137, %v4154
    %v4165 = vadd.f32 %v4138, %v4150
    %v4166 = vadd.f32 %v4139, %v4154
    %v4167 = vadd.f32 %v4140, %v4150
    %v4168 = vadd.f32 %v4141, %v4154
    %v4169 = vadd.f32 %v4142, %v4150
    %v4170 = vadd.f32 %v4143, %v4154
    %v4171 = vadd.f32 %v4144, %v4150
    %v4172 = vadd.f32 %v4145, %v4154
    %v4173 = vxor.u32 %v4157, 2147483648
    %v4174 = vxor.u32 %v4158, 2147483648
    %v4175 = vxor.u32 %v4159, 2147483648
    %v4176 = vxor.u32 %v4160, 2147483648
    %v4177 = vxor.u32 %v4161, 2147483648
    %v4178 = vxor.u32 %v4162, 2147483648
    %v4179 = vxor.u32 %v4163, 2147483648
    %v4180 = vxor.u32 %v4164, 2147483648
    %v4181 = vxor.u32 %v4165, 2147483648
    %v4182 = vxor.u32 %v4166, 2147483648
    %v4183 = vxor.u32 %v4167, 2147483648
    %v4184 = vxor.u32 %v4168, 2147483648
    %v4185 = vxor.u32 %v4169, 2147483648
    %v4186 = vxor.u32 %v4170, 2147483648
    %v4187 = vxor.u32 %v4171, 2147483648
    %v4188 = vxor.u32 %v4172, 2147483648
    %v4189 = vmul.f32 %v4173, 1.442695
    %v4190 = vpow.pop %v4189
    %v4191 = vmul.f32 %v4174, 1.442695
    %v4192 = vpow.pop %v4191
    %v4193 = vmul.f32 %v4175, 1.442695
    %v4194 = vpow.pop %v4193
    %v4195 = vmul.f32 %v4176, 1.442695
    %v4196 = vpow.pop %v4195
    %v4197 = vmul.f32 %v4177, 1.442695
    %v4198 = vpow.pop %v4197
    %v4199 = vmul.f32 %v4178, 1.442695
    %v4200 = vpow.pop %v4199
    %v4201 = vmul.f32 %v4179, 1.442695
    %v4202 = vpow.pop %v4201
    %v4203 = vmul.f32 %v4180, 1.442695
    %v4204 = vpow.pop %v4203
    %v4205 = vmul.f32 %v4181, 1.442695
    %v4206 = vpow.pop %v4205
    %v4207 = vmul.f32 %v4182, 1.442695
    %v4208 = vpow.pop %v4207
    %v4209 = vmul.f32 %v4183, 1.442695
    %v4210 = vpow.pop %v4209
    %v4211 = vmul.f32 %v4184, 1.442695
    %v4212 = vpow.pop %v4211
    %v4213 = vmul.f32 %v4185, 1.442695
    %v4214 = vpow.pop %v4213
    %v4215 = vmul.f32 %v4186, 1.442695
    %v4216 = vpow.pop %v4215
    %v4217 = vmul.f32 %v4187, 1.442695
    %v4218 = vpow.pop %v4217
    %v4219 = vmul.f32 %v4188, 1.442695
    %v4220 = vpow.pop %v4219
    %v4221 = vadd.f32 %v4190, 1.0
    %v4222 = vadd.f32 %v4192, 1.0
    %v4223 = vadd.f32 %v4194, 1.0
    %v4224 = vadd.f32 %v4196, 1.0
    %v4225 = vadd.f32 %v4198, 1.0
    %v4226 = vadd.f32 %v4200, 1.0
    %v4227 = vadd.f32 %v4202, 1.0
    %v4228 = vadd.f32 %v4204, 1.0
    %v4229 = vadd.f32 %v4206, 1.0
    %v4230 = vadd.f32 %v4208, 1.0
    %v4231 = vadd.f32 %v4210, 1.0
    %v4232 = vadd.f32 %v4212, 1.0
    %v4233 = vadd.f32 %v4214, 1.0
    %v4234 = vadd.f32 %v4216, 1.0
    %v4235 = vadd.f32 %v4218, 1.0
    %v4236 = vadd.f32 %v4220, 1.0
    %v4237 = vrcp.pop %v4221
    %v4238 = vmul.f32 1.0, %v4237
    %v4239 = vrcp.pop %v4222
    %v4240 = vmul.f32 1.0, %v4239
    %v4241 = vrcp.pop %v4223
    %v4242 = vmul.f32 1.0, %v4241
    %v4243 = vrcp.pop %v4224
    %v4244 = vmul.f32 1.0, %v4243
    %v4245 = vrcp.pop %v4225
    %v4246 = vmul.f32 1.0, %v4245
    %v4247 = vrcp.pop %v4226
    %v4248 = vmul.f32 1.0, %v4247
    %v4249 = vrcp.pop %v4227
    %v4250 = vmul.f32 1.0, %v4249
    %v4251 = vrcp.pop %v4228
    %v4252 = vmul.f32 1.0, %v4251
    %v4253 = vrcp.pop %v4229
    %v4254 = vmul.f32 1.0, %v4253
    %v4255 = vrcp.pop %v4230
    %v4256 = vmul.f32 1.0, %v4255
    %v4257 = vrcp.pop %v4231
    %v4258 = vmul.f32 1.0, %v4257
    %v4259 = vrcp.pop %v4232
    %v4260 = vmul.f32 1.0, %v4259
    %v4261 = vrcp.pop %v4233
    %v4262 = vmul.f32 1.0, %v4261
    %v4263 = vrcp.pop %v4234
    %v4264 = vmul.f32 1.0, %v4263
    %v4265 = vrcp.pop %v4235
    %v4266 = vmul.f32 1.0, %v4265
    %v4267 = vrcp.pop %v4236
    %v4268 = vmul.f32 1.0, %v4267
    %v4269 = vmul.f32 %v4238, %v3990
    %v4270 = vmul.f32 %v4240, %v3991
    %v4271 = vmul.f32 %v4242, %v3992
    %v4272 = vmul.f32 %v4244, %v3993
    %v4273 = vmul.f32 %v4246, %v3994
    %v4274 = vmul.f32 %v4248, %v3995
    %v4275 = vmul.f32 %v4250, %v3996
    %v4276 = vmul.f32 %v4252, %v3997
    %v4277 = vmul.f32 %v4254, %v3998
    %v4278 = vmul.f32 %v4256, %v3999
    %v4279 = vmul.f32 %v4258, %v4000
    %v4280 = vmul.f32 %v4260, %v4001
    %v4281 = vmul.f32 %v4262, %v4002
    %v4282 = vmul.f32 %v4264, %v4003
    %v4283 = vmul.f32 %v4266, %v4004
    %v4284 = vmul.f32 %v4268, %v4005
    %v4285 = vmul.f32 %v4269, %v4269
    %v4286 = vmul.f32 %v4270, %v4270
    %v4287 = vmul.f32 %v4271, %v4271
    %v4288 = vmul.f32 %v4272, %v4272
    %v4289 = vmul.f32 %v4273, %v4273
    %v4290 = vmul.f32 %v4274, %v4274
    %v4291 = vmul.f32 %v4275, %v4275
    %v4292 = vmul.f32 %v4276, %v4276
    %v4293 = vmul.f32 %v4277, %v4277
    %v4294 = vmul.f32 %v4278, %v4278
    %v4295 = vmul.f32 %v4279, %v4279
    %v4296 = vmul.f32 %v4280, %v4280
    %v4297 = vmul.f32 %v4281, %v4281
    %v4298 = vmul.f32 %v4282, %v4282
    %v4299 = vmul.f32 %v4283, %v4283
    %v4300 = vmul.f32 %v4284, %v4284
    %v4301 = vpack.c.bf16 %v4287, %v4285
    %v4302 = vpack.c.bf16 %v4288, %v4286
    %v4303 = vpack.c.bf16 %v4291, %v4289
    %v4304 = vpack.c.bf16 %v4292, %v4290
    %v4305 = vpack.c.bf16 %v4295, %v4293
    %v4306 = vpack.c.bf16 %v4296, %v4294
    %v4307 = vpack.c.bf16 %v4299, %v4297
    %v4308 = vpack.c.bf16 %v4300, %v4298
    %4309 = vmatprep.subr.bf16.mxu0 %v3398
    %4310 = vmatpush1.bf16.msra.mxu0 %v3397
    %4311 = vmatprep.subr.bf16.mxu0 %v3400
    %4312 = vmatpush1.bf16.msra.mxu0 %v3399
    %4313 = vmatprep.subr.bf16.mxu0 %v3402
    %4314 = vmatpush1.bf16.msra.mxu0 %v3401
    %4315 = vmatprep.subr.bf16.mxu0 %v3404
    %4316 = vmatpush1.bf16.msra.mxu0 %v3403
    %4317 = vmatprep.subr.bf16.mxu0 %v3406
    %4318 = vmatpush1.bf16.msra.mxu0 %v3405
    %4319 = vmatprep.subr.bf16.mxu0 %v3408
    %4320 = vmatpush1.bf16.msra.mxu0 %v3407
    %4321 = vmatprep.subr.bf16.mxu0 %v3410
    %4322 = vmatpush1.bf16.msra.mxu0 %v3409
    %4323 = vmatprep.subr.bf16.mxu0 %v3412
    %4324 = vmatpush1.bf16.msra.mxu0 %v3411
    %4325 = vmatprep.subr.bf16.mxu0 %v3414
    %4326 = vmatpush1.bf16.msra.mxu0 %v3413
    %4327 = vmatprep.subr.bf16.mxu0 %v3416
    %4328 = vmatpush1.bf16.msra.mxu0 %v3415
    %4329 = vmatprep.subr.bf16.mxu0 %v3418
    %4330 = vmatpush1.bf16.msra.mxu0 %v3417
    %4331 = vmatprep.subr.bf16.mxu0 %v3420
    %4332 = vmatpush1.bf16.msra.mxu0 %v3419
    %4333 = vmatprep.subr.bf16.mxu0 %v3422
    %4334 = vmatpush1.bf16.msra.mxu0 %v3421
    %4335 = vmatprep.subr.bf16.mxu0 %v3424
    %4336 = vmatpush1.bf16.msra.mxu0 %v3423
    %4337 = vmatprep.subr.bf16.mxu0 %v3426
    %4338 = vmatpush1.bf16.msra.mxu0 %v3425
    %4339 = vmatprep.subr.bf16.mxu0 %v3428
    %4340 = vmatpush1.bf16.msra.mxu0 %v3427
    %4341 = vmatprep.mubr.bf16.mxu0 %v4302
    %4342 = vmatmul.mubr.bf16.gmra.mrb[0].mxu0 %v4301
    %v4343 = vpop.f32.mrb[0].mxu0
    %v4344 = vadd.f32 0.0, %v4343
    %v4345 = vpop.f32.mrb[0].mxu0
    %v4346 = vadd.f32 0.0, %v4345
    %v4347 = vpop.f32.mrb[0].mxu0
    %v4348 = vadd.f32 0.0, %v4347
    %v4349 = vpop.f32.mrb[0].mxu0
    %v4350 = vadd.f32 0.0, %v4349
    %4351 = vmatprep.mubr.bf16.mxu0 %v4304
    %4352 = vmatmul.mubr.bf16.gmra.mrb[0].mxu0 %v4303
    %v4353 = vpop.f32.mrb[0].mxu0
    %v4354 = vadd.f32 0.0, %v4353
    %v4355 = vpop.f32.mrb[0].mxu0
    %v4356 = vadd.f32 0.0, %v4355
    %v4357 = vpop.f32.mrb[0].mxu0
    %v4358 = vadd.f32 0.0, %v4357
    %v4359 = vpop.f32.mrb[0].mxu0
    %v4360 = vadd.f32 0.0, %v4359
    %4361 = vmatprep.mubr.bf16.mxu0 %v4306
    %4362 = vmatmul.mubr.bf16.gmra.mrb[0].mxu0 %v4305
    %v4363 = vpop.f32.mrb[0].mxu0
    %v4364 = vadd.f32 0.0, %v4363
    %v4365 = vpop.f32.mrb[0].mxu0
    %v4366 = vadd.f32 0.0, %v4365
    %v4367 = vpop.f32.mrb[0].mxu0
    %v4368 = vadd.f32 0.0, %v4367
    %v4369 = vpop.f32.mrb[0].mxu0
    %v4370 = vadd.f32 0.0, %v4369
    %4371 = vmatprep.mubr.bf16.mxu0 %v4308
    %4372 = vmatmul.mubr.bf16.gmra.mrb[0].mxu0 %v4307
    %v4373 = vpop.f32.mrb[0].mxu0
    %v4374 = vadd.f32 0.0, %v4373
    %v4375 = vpop.f32.mrb[0].mxu0
    %v4376 = vadd.f32 0.0, %v4375
    %v4377 = vpop.f32.mrb[0].mxu0
    %v4378 = vadd.f32 0.0, %v4377
    %v4379 = vpop.f32.mrb[0].mxu0
    %v4380 = vadd.f32 0.0, %v4379
    %4381 = vdwg.mxu0
    %v4382 = vsel %vm3543, %v4269, %v4344
    %v4383 = vsel %vm3544, %v4270, %v4346
    %v4384 = vsel %vm3543, %v4271, %v4348
    %v4385 = vsel %vm3544, %v4272, %v4350
    %v4386 = vsel %vm3543, %v4273, %v4354
    %v4387 = vsel %vm3544, %v4274, %v4356
    %v4388 = vsel %vm3543, %v4275, %v4358
    %v4389 = vsel %vm3544, %v4276, %v4360
    %v4390 = vsel %vm3543, %v4277, %v4364
    %v4391 = vsel %vm3544, %v4278, %v4366
    %v4392 = vsel %vm3543, %v4279, %v4368
    %v4393 = vsel %vm3544, %v4280, %v4370
    %v4394 = vsel %vm3543, %v4281, %v4374
    %v4395 = vsel %vm3544, %v4282, %v4376
    %v4396 = vsel %vm3543, %v4283, %v4378
    %v4397 = vsel %vm3544, %v4284, %v4380
    %v4399 = vlaneseq
    %v4400 = vshrl.u32 %v4399, 7
    %v4401 = vsub.s32 0, %v4400
    %v4402 = vrot.slane %v3270, %v4401
    %v4403 = vlaneseq
    %v4404 = vshrl.u32 %v4403, 7
    %v4405 = vsub.s32 1, %v4404
    %v4406 = vrot.slane %v3270, %v4405
    %v4409 = vmul.f32 %v4402, %v4382
    %v4410 = vmul.f32 %v4406, %v4383
    %v4411 = vmul.f32 %v4402, %v4384
    %v4412 = vmul.f32 %v4406, %v4385
    %v4413 = vmul.f32 %v4402, %v4386
    %v4414 = vmul.f32 %v4406, %v4387
    %v4415 = vmul.f32 %v4402, %v4388
    %v4416 = vmul.f32 %v4406, %v4389
    %v4417 = vmul.f32 %v4402, %v4390
    %v4418 = vmul.f32 %v4406, %v4391
    %v4419 = vmul.f32 %v4402, %v4392
    %v4420 = vmul.f32 %v4406, %v4393
    %v4421 = vmul.f32 %v4402, %v4394
    %v4422 = vmul.f32 %v4406, %v4395
    %v4423 = vmul.f32 %v4402, %v4396
    %v4424 = vmul.f32 %v4406, %v4397
    %v4426 = vlaneseq
    %v4427 = vshrl.u32 %v4426, 7
    %v4428 = vsub.s32 0, %v4427
    %v4429 = vrot.slane %v3275, %v4428
    %v4430 = vlaneseq
    %v4431 = vshrl.u32 %v4430, 7
    %v4432 = vsub.s32 1, %v4431
    %v4433 = vrot.slane %v3275, %v4432
    %v4436 = vadd.f32 %v4409, %v4429
    %v4437 = vadd.f32 %v4410, %v4433
    %v4438 = vadd.f32 %v4411, %v4429
    %v4439 = vadd.f32 %v4412, %v4433
    %v4440 = vadd.f32 %v4413, %v4429
    %v4441 = vadd.f32 %v4414, %v4433
    %v4442 = vadd.f32 %v4415, %v4429
    %v4443 = vadd.f32 %v4416, %v4433
    %v4444 = vadd.f32 %v4417, %v4429
    %v4445 = vadd.f32 %v4418, %v4433
    %v4446 = vadd.f32 %v4419, %v4429
    %v4447 = vadd.f32 %v4420, %v4433
    %v4448 = vadd.f32 %v4421, %v4429
    %v4449 = vadd.f32 %v4422, %v4433
    %v4450 = vadd.f32 %v4423, %v4429
    %v4451 = vadd.f32 %v4424, %v4433
    %v4452 = vxor.u32 %v4436, 2147483648
    %v4453 = vxor.u32 %v4437, 2147483648
    %v4454 = vxor.u32 %v4438, 2147483648
    %v4455 = vxor.u32 %v4439, 2147483648
    %v4456 = vxor.u32 %v4440, 2147483648
    %v4457 = vxor.u32 %v4441, 2147483648
    %v4458 = vxor.u32 %v4442, 2147483648
    %v4459 = vxor.u32 %v4443, 2147483648
    %v4460 = vxor.u32 %v4444, 2147483648
    %v4461 = vxor.u32 %v4445, 2147483648
    %v4462 = vxor.u32 %v4446, 2147483648
    %v4463 = vxor.u32 %v4447, 2147483648
    %v4464 = vxor.u32 %v4448, 2147483648
    %v4465 = vxor.u32 %v4449, 2147483648
    %v4466 = vxor.u32 %v4450, 2147483648
    %v4467 = vxor.u32 %v4451, 2147483648
    %v4468 = vmul.f32 %v4452, 1.442695
    %v4469 = vpow.pop %v4468
    %v4470 = vmul.f32 %v4453, 1.442695
    %v4471 = vpow.pop %v4470
    %v4472 = vmul.f32 %v4454, 1.442695
    %v4473 = vpow.pop %v4472
    %v4474 = vmul.f32 %v4455, 1.442695
    %v4475 = vpow.pop %v4474
    %v4476 = vmul.f32 %v4456, 1.442695
    %v4477 = vpow.pop %v4476
    %v4478 = vmul.f32 %v4457, 1.442695
    %v4479 = vpow.pop %v4478
    %v4480 = vmul.f32 %v4458, 1.442695
    %v4481 = vpow.pop %v4480
    %v4482 = vmul.f32 %v4459, 1.442695
    %v4483 = vpow.pop %v4482
    %v4484 = vmul.f32 %v4460, 1.442695
    %v4485 = vpow.pop %v4484
    %v4486 = vmul.f32 %v4461, 1.442695
    %v4487 = vpow.pop %v4486
    %v4488 = vmul.f32 %v4462, 1.442695
    %v4489 = vpow.pop %v4488
    %v4490 = vmul.f32 %v4463, 1.442695
    %v4491 = vpow.pop %v4490
    %v4492 = vmul.f32 %v4464, 1.442695
    %v4493 = vpow.pop %v4492
    %v4494 = vmul.f32 %v4465, 1.442695
    %v4495 = vpow.pop %v4494
    %v4496 = vmul.f32 %v4466, 1.442695
    %v4497 = vpow.pop %v4496
    %v4498 = vmul.f32 %v4467, 1.442695
    %v4499 = vpow.pop %v4498
    %v4500 = vadd.f32 %v4469, 1.0
    %v4501 = vadd.f32 %v4471, 1.0
    %v4502 = vadd.f32 %v4473, 1.0
    %v4503 = vadd.f32 %v4475, 1.0
    %v4504 = vadd.f32 %v4477, 1.0
    %v4505 = vadd.f32 %v4479, 1.0
    %v4506 = vadd.f32 %v4481, 1.0
    %v4507 = vadd.f32 %v4483, 1.0
    %v4508 = vadd.f32 %v4485, 1.0
    %v4509 = vadd.f32 %v4487, 1.0
    %v4510 = vadd.f32 %v4489, 1.0
    %v4511 = vadd.f32 %v4491, 1.0
    %v4512 = vadd.f32 %v4493, 1.0
    %v4513 = vadd.f32 %v4495, 1.0
    %v4514 = vadd.f32 %v4497, 1.0
    %v4515 = vadd.f32 %v4499, 1.0
    %v4516 = vrcp.pop %v4500
    %v4517 = vmul.f32 1.0, %v4516
    %v4518 = vrcp.pop %v4501
    %v4519 = vmul.f32 1.0, %v4518
    %v4520 = vrcp.pop %v4502
    %v4521 = vmul.f32 1.0, %v4520
    %v4522 = vrcp.pop %v4503
    %v4523 = vmul.f32 1.0, %v4522
    %v4524 = vrcp.pop %v4504
    %v4525 = vmul.f32 1.0, %v4524
    %v4526 = vrcp.pop %v4505
    %v4527 = vmul.f32 1.0, %v4526
    %v4528 = vrcp.pop %v4506
    %v4529 = vmul.f32 1.0, %v4528
    %v4530 = vrcp.pop %v4507
    %v4531 = vmul.f32 1.0, %v4530
    %v4532 = vrcp.pop %v4508
    %v4533 = vmul.f32 1.0, %v4532
    %v4534 = vrcp.pop %v4509
    %v4535 = vmul.f32 1.0, %v4534
    %v4536 = vrcp.pop %v4510
    %v4537 = vmul.f32 1.0, %v4536
    %v4538 = vrcp.pop %v4511
    %v4539 = vmul.f32 1.0, %v4538
    %v4540 = vrcp.pop %v4512
    %v4541 = vmul.f32 1.0, %v4540
    %v4542 = vrcp.pop %v4513
    %v4543 = vmul.f32 1.0, %v4542
    %v4544 = vrcp.pop %v4514
    %v4545 = vmul.f32 1.0, %v4544
    %v4546 = vrcp.pop %v4515
    %v4547 = vmul.f32 1.0, %v4546
    %v4548 = vmul.f32 %v4517, %v4269
    %v4549 = vmul.f32 %v4519, %v4270
    %v4550 = vmul.f32 %v4521, %v4271
    %v4551 = vmul.f32 %v4523, %v4272
    %v4552 = vmul.f32 %v4525, %v4273
    %v4553 = vmul.f32 %v4527, %v4274
    %v4554 = vmul.f32 %v4529, %v4275
    %v4555 = vmul.f32 %v4531, %v4276
    %v4556 = vmul.f32 %v4533, %v4277
    %v4557 = vmul.f32 %v4535, %v4278
    %v4558 = vmul.f32 %v4537, %v4279
    %v4559 = vmul.f32 %v4539, %v4280
    %v4560 = vmul.f32 %v4541, %v4281
    %v4561 = vmul.f32 %v4543, %v4282
    %v4562 = vmul.f32 %v4545, %v4283
    %v4563 = vmul.f32 %v4547, %v4284
    %v4564 = vmul.f32 %v4548, %v4548
    %v4565 = vmul.f32 %v4549, %v4549
    %v4566 = vmul.f32 %v4550, %v4550
    %v4567 = vmul.f32 %v4551, %v4551
    %v4568 = vmul.f32 %v4552, %v4552
    %v4569 = vmul.f32 %v4553, %v4553
    %v4570 = vmul.f32 %v4554, %v4554
    %v4571 = vmul.f32 %v4555, %v4555
    %v4572 = vmul.f32 %v4556, %v4556
    %v4573 = vmul.f32 %v4557, %v4557
    %v4574 = vmul.f32 %v4558, %v4558
    %v4575 = vmul.f32 %v4559, %v4559
    %v4576 = vmul.f32 %v4560, %v4560
    %v4577 = vmul.f32 %v4561, %v4561
    %v4578 = vmul.f32 %v4562, %v4562
    %v4579 = vmul.f32 %v4563, %v4563
    %v4580 = vpack.c.bf16 %v4566, %v4564
    %v4581 = vpack.c.bf16 %v4567, %v4565
    %v4582 = vpack.c.bf16 %v4570, %v4568
    %v4583 = vpack.c.bf16 %v4571, %v4569
    %v4584 = vpack.c.bf16 %v4574, %v4572
    %v4585 = vpack.c.bf16 %v4575, %v4573
    %v4586 = vpack.c.bf16 %v4578, %v4576
    %v4587 = vpack.c.bf16 %v4579, %v4577
    %4588 = vmatprep.subr.bf16.mxu0 %v3398
    %4589 = vmatpush1.bf16.msra.mxu0 %v3397
    %4590 = vmatprep.subr.bf16.mxu0 %v3400
    %4591 = vmatpush1.bf16.msra.mxu0 %v3399
    %4592 = vmatprep.subr.bf16.mxu0 %v3402
    %4593 = vmatpush1.bf16.msra.mxu0 %v3401
    %4594 = vmatprep.subr.bf16.mxu0 %v3404
    %4595 = vmatpush1.bf16.msra.mxu0 %v3403
    %4596 = vmatprep.subr.bf16.mxu0 %v3406
    %4597 = vmatpush1.bf16.msra.mxu0 %v3405
    %4598 = vmatprep.subr.bf16.mxu0 %v3408
    %4599 = vmatpush1.bf16.msra.mxu0 %v3407
    %4600 = vmatprep.subr.bf16.mxu0 %v3410
    %4601 = vmatpush1.bf16.msra.mxu0 %v3409
    %4602 = vmatprep.subr.bf16.mxu0 %v3412
    %4603 = vmatpush1.bf16.msra.mxu0 %v3411
    %4604 = vmatprep.subr.bf16.mxu0 %v3414
    %4605 = vmatpush1.bf16.msra.mxu0 %v3413
    %4606 = vmatprep.subr.bf16.mxu0 %v3416
    %4607 = vmatpush1.bf16.msra.mxu0 %v3415
    %4608 = vmatprep.subr.bf16.mxu0 %v3418
    %4609 = vmatpush1.bf16.msra.mxu0 %v3417
    %4610 = vmatprep.subr.bf16.mxu0 %v3420
    %4611 = vmatpush1.bf16.msra.mxu0 %v3419
    %4612 = vmatprep.subr.bf16.mxu0 %v3422
    %4613 = vmatpush1.bf16.msra.mxu0 %v3421
    %4614 = vmatprep.subr.bf16.mxu0 %v3424
    %4615 = vmatpush1.bf16.msra.mxu0 %v3423
    %4616 = vmatprep.subr.bf16.mxu0 %v3426
    %4617 = vmatpush1.bf16.msra.mxu0 %v3425
    %4618 = vmatprep.subr.bf16.mxu0 %v3428
    %4619 = vmatpush1.bf16.msra.mxu0 %v3427
    %4620 = vmatprep.mubr.bf16.mxu0 %v4581
    %4621 = vmatmul.mubr.bf16.gmra.mrb[0].mxu0 %v4580
    %v4622 = vpop.f32.mrb[0].mxu0
    %v4623 = vadd.f32 0.0, %v4622
    %v4624 = vpop.f32.mrb[0].mxu0
    %v4625 = vadd.f32 0.0, %v4624
    %v4626 = vpop.f32.mrb[0].mxu0
    %v4627 = vadd.f32 0.0, %v4626
    %v4628 = vpop.f32.mrb[0].mxu0
    %v4629 = vadd.f32 0.0, %v4628
    %4630 = vmatprep.mubr.bf16.mxu0 %v4583
    %4631 = vmatmul.mubr.bf16.gmra.mrb[0].mxu0 %v4582
    %v4632 = vpop.f32.mrb[0].mxu0
    %v4633 = vadd.f32 0.0, %v4632
    %v4634 = vpop.f32.mrb[0].mxu0
    %v4635 = vadd.f32 0.0, %v4634
    %v4636 = vpop.f32.mrb[0].mxu0
    %v4637 = vadd.f32 0.0, %v4636
    %v4638 = vpop.f32.mrb[0].mxu0
    %v4639 = vadd.f32 0.0, %v4638
    %4640 = vmatprep.mubr.bf16.mxu0 %v4585
    %4641 = vmatmul.mubr.bf16.gmra.mrb[0].mxu0 %v4584
    %v4642 = vpop.f32.mrb[0].mxu0
    %v4643 = vadd.f32 0.0, %v4642
    %v4644 = vpop.f32.mrb[0].mxu0
    %v4645 = vadd.f32 0.0, %v4644
    %v4646 = vpop.f32.mrb[0].mxu0
    %v4647 = vadd.f32 0.0, %v4646
    %v4648 = vpop.f32.mrb[0].mxu0
    %v4649 = vadd.f32 0.0, %v4648
    %4650 = vmatprep.mubr.bf16.mxu0 %v4587
    %4651 = vmatmul.mubr.bf16.gmra.mrb[0].mxu0 %v4586
    %v4652 = vpop.f32.mrb[0].mxu0
    %v4653 = vadd.f32 0.0, %v4652
    %v4654 = vpop.f32.mrb[0].mxu0
    %v4655 = vadd.f32 0.0, %v4654
    %v4656 = vpop.f32.mrb[0].mxu0
    %v4657 = vadd.f32 0.0, %v4656
    %v4658 = vpop.f32.mrb[0].mxu0
    %v4659 = vadd.f32 0.0, %v4658
    %4660 = vdwg.mxu0
    %v4661 = vsel %vm3543, %v4548, %v4623
    %v4662 = vsel %vm3544, %v4549, %v4625
    %v4663 = vsel %vm3543, %v4550, %v4627
    %v4664 = vsel %vm3544, %v4551, %v4629
    %v4665 = vsel %vm3543, %v4552, %v4633
    %v4666 = vsel %vm3544, %v4553, %v4635
    %v4667 = vsel %vm3543, %v4554, %v4637
    %v4668 = vsel %vm3544, %v4555, %v4639
    %v4669 = vsel %vm3543, %v4556, %v4643
    %v4670 = vsel %vm3544, %v4557, %v4645
    %v4671 = vsel %vm3543, %v4558, %v4647
    %v4672 = vsel %vm3544, %v4559, %v4649
    %v4673 = vsel %vm3543, %v4560, %v4653
    %v4674 = vsel %vm3544, %v4561, %v4655
    %v4675 = vsel %vm3543, %v4562, %v4657
    %v4676 = vsel %vm3544, %v4563, %v4659
    %v4678 = vlaneseq
    %v4679 = vshrl.u32 %v4678, 7
    %v4680 = vsub.s32 0, %v4679
    %v4681 = vrot.slane %v3271, %v4680
    %v4682 = vlaneseq
    %v4683 = vshrl.u32 %v4682, 7
    %v4684 = vsub.s32 1, %v4683
    %v4685 = vrot.slane %v3271, %v4684
    %v4688 = vmul.f32 %v4681, %v4661
    %v4689 = vmul.f32 %v4685, %v4662
    %v4690 = vmul.f32 %v4681, %v4663
    %v4691 = vmul.f32 %v4685, %v4664
    %v4692 = vmul.f32 %v4681, %v4665
    %v4693 = vmul.f32 %v4685, %v4666
    %v4694 = vmul.f32 %v4681, %v4667
    %v4695 = vmul.f32 %v4685, %v4668
    %v4696 = vmul.f32 %v4681, %v4669
    %v4697 = vmul.f32 %v4685, %v4670
    %v4698 = vmul.f32 %v4681, %v4671
    %v4699 = vmul.f32 %v4685, %v4672
    %v4700 = vmul.f32 %v4681, %v4673
    %v4701 = vmul.f32 %v4685, %v4674
    %v4702 = vmul.f32 %v4681, %v4675
    %v4703 = vmul.f32 %v4685, %v4676
    %v4705 = vlaneseq
    %v4706 = vshrl.u32 %v4705, 7
    %v4707 = vsub.s32 0, %v4706
    %v4708 = vrot.slane %v3276, %v4707
    %v4709 = vlaneseq
    %v4710 = vshrl.u32 %v4709, 7
    %v4711 = vsub.s32 1, %v4710
    %v4712 = vrot.slane %v3276, %v4711
    %v4715 = vadd.f32 %v4688, %v4708
    %v4716 = vadd.f32 %v4689, %v4712
    %v4717 = vadd.f32 %v4690, %v4708
    %v4718 = vadd.f32 %v4691, %v4712
    %v4719 = vadd.f32 %v4692, %v4708
    %v4720 = vadd.f32 %v4693, %v4712
    %v4721 = vadd.f32 %v4694, %v4708
    %v4722 = vadd.f32 %v4695, %v4712
    %v4723 = vadd.f32 %v4696, %v4708
    %v4724 = vadd.f32 %v4697, %v4712
    %v4725 = vadd.f32 %v4698, %v4708
    %v4726 = vadd.f32 %v4699, %v4712
    %v4727 = vadd.f32 %v4700, %v4708
    %v4728 = vadd.f32 %v4701, %v4712
    %v4729 = vadd.f32 %v4702, %v4708
    %v4730 = vadd.f32 %v4703, %v4712
    %v4731 = vxor.u32 %v4715, 2147483648
    %v4732 = vxor.u32 %v4716, 2147483648
    %v4733 = vxor.u32 %v4717, 2147483648
    %v4734 = vxor.u32 %v4718, 2147483648
    %v4735 = vxor.u32 %v4719, 2147483648
    %v4736 = vxor.u32 %v4720, 2147483648
    %v4737 = vxor.u32 %v4721, 2147483648
    %v4738 = vxor.u32 %v4722, 2147483648
    %v4739 = vxor.u32 %v4723, 2147483648
    %v4740 = vxor.u32 %v4724, 2147483648
    %v4741 = vxor.u32 %v4725, 2147483648
    %v4742 = vxor.u32 %v4726, 2147483648
    %v4743 = vxor.u32 %v4727, 2147483648
    %v4744 = vxor.u32 %v4728, 2147483648
    %v4745 = vxor.u32 %v4729, 2147483648
    %v4746 = vxor.u32 %v4730, 2147483648
    %v4747 = vmul.f32 %v4731, 1.442695
    %v4748 = vpow.pop %v4747
    %v4749 = vmul.f32 %v4732, 1.442695
    %v4750 = vpow.pop %v4749
    %v4751 = vmul.f32 %v4733, 1.442695
    %v4752 = vpow.pop %v4751
    %v4753 = vmul.f32 %v4734, 1.442695
    %v4754 = vpow.pop %v4753
    %v4755 = vmul.f32 %v4735, 1.442695
    %v4756 = vpow.pop %v4755
    %v4757 = vmul.f32 %v4736, 1.442695
    %v4758 = vpow.pop %v4757
    %v4759 = vmul.f32 %v4737, 1.442695
    %v4760 = vpow.pop %v4759
    %v4761 = vmul.f32 %v4738, 1.442695
    %v4762 = vpow.pop %v4761
    %v4763 = vmul.f32 %v4739, 1.442695
    %v4764 = vpow.pop %v4763
    %v4765 = vmul.f32 %v4740, 1.442695
    %v4766 = vpow.pop %v4765
    %v4767 = vmul.f32 %v4741, 1.442695
    %v4768 = vpow.pop %v4767
    %v4769 = vmul.f32 %v4742, 1.442695
    %v4770 = vpow.pop %v4769
    %v4771 = vmul.f32 %v4743, 1.442695
    %v4772 = vpow.pop %v4771
    %v4773 = vmul.f32 %v4744, 1.442695
    %v4774 = vpow.pop %v4773
    %v4775 = vmul.f32 %v4745, 1.442695
    %v4776 = vpow.pop %v4775
    %v4777 = vmul.f32 %v4746, 1.442695
    %v4778 = vpow.pop %v4777
    %v4779 = vadd.f32 %v4748, 1.0
    %v4780 = vadd.f32 %v4750, 1.0
    %v4781 = vadd.f32 %v4752, 1.0
    %v4782 = vadd.f32 %v4754, 1.0
    %v4783 = vadd.f32 %v4756, 1.0
    %v4784 = vadd.f32 %v4758, 1.0
    %v4785 = vadd.f32 %v4760, 1.0
    %v4786 = vadd.f32 %v4762, 1.0
    %v4787 = vadd.f32 %v4764, 1.0
    %v4788 = vadd.f32 %v4766, 1.0
    %v4789 = vadd.f32 %v4768, 1.0
    %v4790 = vadd.f32 %v4770, 1.0
    %v4791 = vadd.f32 %v4772, 1.0
    %v4792 = vadd.f32 %v4774, 1.0
    %v4793 = vadd.f32 %v4776, 1.0
    %v4794 = vadd.f32 %v4778, 1.0
    %v4795 = vrcp.pop %v4779
    %v4796 = vmul.f32 1.0, %v4795
    %v4797 = vrcp.pop %v4780
    %v4798 = vmul.f32 1.0, %v4797
    %v4799 = vrcp.pop %v4781
    %v4800 = vmul.f32 1.0, %v4799
    %v4801 = vrcp.pop %v4782
    %v4802 = vmul.f32 1.0, %v4801
    %v4803 = vrcp.pop %v4783
    %v4804 = vmul.f32 1.0, %v4803
    %v4805 = vrcp.pop %v4784
    %v4806 = vmul.f32 1.0, %v4805
    %v4807 = vrcp.pop %v4785
    %v4808 = vmul.f32 1.0, %v4807
    %v4809 = vrcp.pop %v4786
    %v4810 = vmul.f32 1.0, %v4809
    %v4811 = vrcp.pop %v4787
    %v4812 = vmul.f32 1.0, %v4811
    %v4813 = vrcp.pop %v4788
    %v4814 = vmul.f32 1.0, %v4813
    %v4815 = vrcp.pop %v4789
    %v4816 = vmul.f32 1.0, %v4815
    %v4817 = vrcp.pop %v4790
    %v4818 = vmul.f32 1.0, %v4817
    %v4819 = vrcp.pop %v4791
    %v4820 = vmul.f32 1.0, %v4819
    %v4821 = vrcp.pop %v4792
    %v4822 = vmul.f32 1.0, %v4821
    %v4823 = vrcp.pop %v4793
    %v4824 = vmul.f32 1.0, %v4823
    %v4825 = vrcp.pop %v4794
    %v4826 = vmul.f32 1.0, %v4825
    %v4827 = vmul.f32 %v4796, %v4548
    %v4828 = vmul.f32 %v4798, %v4549
    %v4829 = vmul.f32 %v4800, %v4550
    %v4830 = vmul.f32 %v4802, %v4551
    %v4831 = vmul.f32 %v4804, %v4552
    %v4832 = vmul.f32 %v4806, %v4553
    %v4833 = vmul.f32 %v4808, %v4554
    %v4834 = vmul.f32 %v4810, %v4555
    %v4835 = vmul.f32 %v4812, %v4556
    %v4836 = vmul.f32 %v4814, %v4557
    %v4837 = vmul.f32 %v4816, %v4558
    %v4838 = vmul.f32 %v4818, %v4559
    %v4839 = vmul.f32 %v4820, %v4560
    %v4840 = vmul.f32 %v4822, %v4561
    %v4841 = vmul.f32 %v4824, %v4562
    %v4842 = vmul.f32 %v4826, %v4563
    %v4843 = vpack.c.bf16 %v4829, %v4827
    %v4844 = vpack.c.bf16 %v4830, %v4828
    %v4845 = vpack.c.bf16 %v4833, %v4831
    %v4846 = vpack.c.bf16 %v4834, %v4832
    %v4847 = vpack.c.bf16 %v4837, %v4835
    %v4848 = vpack.c.bf16 %v4838, %v4836
    %v4849 = vpack.c.bf16 %v4841, %v4839
    %v4850 = vpack.c.bf16 %v4842, %v4840
    %v4851 = vld [vmem:[#allocation16] sm:$0xff]
    %v4852 = vld [vmem:[#allocation16 + $0x8] sm:$0xff]
    %v4853 = vld [vmem:[#allocation16 + $0x10] sm:$0xff]
    %v4854 = vld [vmem:[#allocation16 + $0x18] sm:$0xff]
    %v4855 = vld [vmem:[#allocation16 + $0x20] sm:$0xff]
    %v4856 = vld [vmem:[#allocation16 + $0x28] sm:$0xff]
    %v4857 = vld [vmem:[#allocation16 + $0x30] sm:$0xff]
    %v4858 = vld [vmem:[#allocation16 + $0x38] sm:$0xff]
    %v4859 = vld [vmem:[#allocation16 + $0x40] sm:$0xff]
    %v4860 = vld [vmem:[#allocation16 + $0x48] sm:$0xff]
    %v4861 = vld [vmem:[#allocation16 + $0x50] sm:$0xff]
    %v4862 = vld [vmem:[#allocation16 + $0x58] sm:$0xff]
    %v4863 = vld [vmem:[#allocation16 + $0x60] sm:$0xff]
    %v4864 = vld [vmem:[#allocation16 + $0x68] sm:$0xff]
    %v4865 = vld [vmem:[#allocation16 + $0x70] sm:$0xff]
    %v4866 = vld [vmem:[#allocation16 + $0x78] sm:$0xff]
    %v4867 = vld [vmem:[#allocation16 + $0x80] sm:$0xff]
    %v4868 = vld [vmem:[#allocation16 + $0x88] sm:$0xff]
    %v4869 = vld [vmem:[#allocation16 + $0x90] sm:$0xff]
    %v4870 = vld [vmem:[#allocation16 + $0x98] sm:$0xff]
    %v4871 = vld [vmem:[#allocation16 + $0xa0] sm:$0xff]
    %v4872 = vld [vmem:[#allocation16 + $0xa8] sm:$0xff]
    %v4873 = vld [vmem:[#allocation16 + $0xb0] sm:$0xff]
    %v4874 = vld [vmem:[#allocation16 + $0xb8] sm:$0xff]
    %v4875 = vld [vmem:[#allocation16 + $0xc0] sm:$0xff]
    %v4876 = vld [vmem:[#allocation16 + $0xc8] sm:$0xff]
    %v4877 = vld [vmem:[#allocation16 + $0xd0] sm:$0xff]
    %v4878 = vld [vmem:[#allocation16 + $0xd8] sm:$0xff]
    %v4879 = vld [vmem:[#allocation16 + $0xe0] sm:$0xff]
    %v4880 = vld [vmem:[#allocation16 + $0xe8] sm:$0xff]
    %v4881 = vld [vmem:[#allocation16 + $0xf0] sm:$0xff]
    %v4882 = vld [vmem:[#allocation16 + $0xf8] sm:$0xff]
    %v4915 = vunpack.c.l.b16 %v4851
    %v4916 = vunpack.c.h.b16 %v4851
    %v4917 = vunpack.c.l.b16 %v4852
    %v4918 = vunpack.c.h.b16 %v4852
    %v4919 = vunpack.c.l.b16 %v4853
    %v4920 = vunpack.c.h.b16 %v4853
    %v4921 = vunpack.c.l.b16 %v4854
    %v4922 = vunpack.c.h.b16 %v4854
    %v4923 = vunpack.c.l.b16 %v4855
    %v4924 = vunpack.c.h.b16 %v4855
    %v4925 = vunpack.c.l.b16 %v4856
    %v4926 = vunpack.c.h.b16 %v4856
    %v4927 = vunpack.c.l.b16 %v4857
    %v4928 = vunpack.c.h.b16 %v4857
    %v4929 = vunpack.c.l.b16 %v4858
    %v4930 = vunpack.c.h.b16 %v4858
    %v4931 = vunpack.c.l.b16 %v4859
    %v4932 = vunpack.c.h.b16 %v4859
    %v4933 = vunpack.c.l.b16 %v4860
    %v4934 = vunpack.c.h.b16 %v4860
    %v4935 = vunpack.c.l.b16 %v4861
    %v4936 = vunpack.c.h.b16 %v4861
    %v4937 = vunpack.c.l.b16 %v4862
    %v4938 = vunpack.c.h.b16 %v4862
    %v4939 = vunpack.c.l.b16 %v4863
    %v4940 = vunpack.c.h.b16 %v4863
    %v4941 = vunpack.c.l.b16 %v4864
    %v4942 = vunpack.c.h.b16 %v4864
    %v4943 = vunpack.c.l.b16 %v4865
    %v4944 = vunpack.c.h.b16 %v4865
    %v4945 = vunpack.c.l.b16 %v4866
    %v4946 = vunpack.c.h.b16 %v4866
    %v4947 = vunpack.c.l.b16 %v4867
    %v4948 = vunpack.c.h.b16 %v4867
    %v4949 = vunpack.c.l.b16 %v4868
    %v4950 = vunpack.c.h.b16 %v4868
    %v4951 = vunpack.c.l.b16 %v4869
    %v4952 = vunpack.c.h.b16 %v4869
    %v4953 = vunpack.c.l.b16 %v4870
    %v4954 = vunpack.c.h.b16 %v4870
    %v4955 = vunpack.c.l.b16 %v4871
    %v4956 = vunpack.c.h.b16 %v4871
    %v4957 = vunpack.c.l.b16 %v4872
    %v4958 = vunpack.c.h.b16 %v4872
    %v4959 = vunpack.c.l.b16 %v4873
    %v4960 = vunpack.c.h.b16 %v4873
    %v4961 = vunpack.c.l.b16 %v4874
    %v4962 = vunpack.c.h.b16 %v4874
    %v4963 = vunpack.c.l.b16 %v4875
    %v4964 = vunpack.c.h.b16 %v4875
    %v4965 = vunpack.c.l.b16 %v4876
    %v4966 = vunpack.c.h.b16 %v4876
    %v4967 = vunpack.c.l.b16 %v4877
    %v4968 = vunpack.c.h.b16 %v4877
    %v4969 = vunpack.c.l.b16 %v4878
    %v4970 = vunpack.c.h.b16 %v4878
    %v4971 = vunpack.c.l.b16 %v4879
    %v4972 = vunpack.c.h.b16 %v4879
    %v4973 = vunpack.c.l.b16 %v4880
    %v4974 = vunpack.c.h.b16 %v4880
    %v4975 = vunpack.c.l.b16 %v4881
    %v4976 = vunpack.c.h.b16 %v4881
    %v4977 = vunpack.c.l.b16 %v4882
    %v4978 = vunpack.c.h.b16 %v4882
    %v4979 = vpack.c.b16 %v4917, %v4915
    %v4980 = vpack.c.b16 %v4918, %v4916
    %v4981 = vpack.c.b16 %v4921, %v4919
    %v4982 = vpack.c.b16 %v4922, %v4920
    %v4983 = vpack.c.b16 %v4925, %v4923
    %v4984 = vpack.c.b16 %v4926, %v4924
    %v4985 = vpack.c.b16 %v4929, %v4927
    %v4986 = vpack.c.b16 %v4930, %v4928
    %v4987 = vpack.c.b16 %v4933, %v4931
    %v4988 = vpack.c.b16 %v4934, %v4932
    %v4989 = vpack.c.b16 %v4937, %v4935
    %v4990 = vpack.c.b16 %v4938, %v4936
    %v4991 = vpack.c.b16 %v4941, %v4939
    %v4992 = vpack.c.b16 %v4942, %v4940
    %v4993 = vpack.c.b16 %v4945, %v4943
    %v4994 = vpack.c.b16 %v4946, %v4944
    %v4995 = vpack.c.b16 %v4949, %v4947
    %v4996 = vpack.c.b16 %v4950, %v4948
    %v4997 = vpack.c.b16 %v4953, %v4951
    %v4998 = vpack.c.b16 %v4954, %v4952
    %v4999 = vpack.c.b16 %v4957, %v4955
    %v5000 = vpack.c.b16 %v4958, %v4956
    %v5001 = vpack.c.b16 %v4961, %v4959
    %v5002 = vpack.c.b16 %v4962, %v4960
    %v5003 = vpack.c.b16 %v4965, %v4963
    %v5004 = vpack.c.b16 %v4966, %v4964
    %v5005 = vpack.c.b16 %v4969, %v4967
    %v5006 = vpack.c.b16 %v4970, %v4968
    %v5007 = vpack.c.b16 %v4973, %v4971
    %v5008 = vpack.c.b16 %v4974, %v4972
    %v5009 = vpack.c.b16 %v4977, %v4975
    %v5010 = vpack.c.b16 %v4978, %v4976
    %5043 = vmatprep.subr.bf16.mxu0 %v4980
    %5044 = vmatpush1.bf16.msra.mxu0 %v4979
    %5045 = vmatprep.subr.bf16.mxu0 %v4982
    %5046 = vmatpush1.bf16.msra.mxu0 %v4981
    %5047 = vmatprep.subr.bf16.mxu0 %v4984
    %5048 = vmatpush1.bf16.msra.mxu0 %v4983
    %5049 = vmatprep.subr.bf16.mxu0 %v4986
    %5050 = vmatpush1.bf16.msra.mxu0 %v4985
    %5051 = vmatprep.subr.bf16.mxu0 %v4988
    %5052 = vmatpush1.bf16.msra.mxu0 %v4987
    %5053 = vmatprep.subr.bf16.mxu0 %v4990
    %5054 = vmatpush1.bf16.msra.mxu0 %v4989
    %5055 = vmatprep.subr.bf16.mxu0 %v4992
    %5056 = vmatpush1.bf16.msra.mxu0 %v4991
    %5057 = vmatprep.subr.bf16.mxu0 %v4994
    %5058 = vmatpush1.bf16.msra.mxu0 %v4993
    %5059 = vmatprep.subr.bf16.mxu0 %v4996
    %5060 = vmatpush1.bf16.msra.mxu0 %v4995
    %5061 = vmatprep.subr.bf16.mxu0 %v4998
    %5062 = vmatpush1.bf16.msra.mxu0 %v4997
    %5063 = vmatprep.subr.bf16.mxu0 %v5000
    %5064 = vmatpush1.bf16.msra.mxu0 %v4999
    %5065 = vmatprep.subr.bf16.mxu0 %v5002
    %5066 = vmatpush1.bf16.msra.mxu0 %v5001
    %5067 = vmatprep.subr.bf16.mxu0 %v5004
    %5068 = vmatpush1.bf16.msra.mxu0 %v5003
    %5069 = vmatprep.subr.bf16.mxu0 %v5006
    %5070 = vmatpush1.bf16.msra.mxu0 %v5005
    %5071 = vmatprep.subr.bf16.mxu0 %v5008
    %5072 = vmatpush1.bf16.msra.mxu0 %v5007
    %5073 = vmatprep.subr.bf16.mxu0 %v5010
    %5074 = vmatpush1.bf16.msra.mxu0 %v5009
    %5075 = vmatprep.mubr.bf16.mxu0 %v4844
    %5076 = vmatmul.mubr.bf16.gmra.mrb[0].mxu0 %v4843
    %v5077 = vpop.f32.mrb[0].mxu0
    %v5078 = vadd.f32 0.0, %v5077
    %v5079 = vpop.f32.mrb[0].mxu0
    %v5080 = vadd.f32 0.0, %v5079
    %v5081 = vpop.f32.mrb[0].mxu0
    %v5082 = vadd.f32 0.0, %v5081
    %v5083 = vpop.f32.mrb[0].mxu0
    %v5084 = vadd.f32 0.0, %v5083
    %5085 = vmatprep.mubr.bf16.mxu0 %v4846
    %5086 = vmatmul.mubr.bf16.gmra.mrb[0].mxu0 %v4845
    %v5087 = vpop.f32.mrb[0].mxu0
    %v5088 = vadd.f32 0.0, %v5087
    %v5089 = vpop.f32.mrb[0].mxu0
    %v5090 = vadd.f32 0.0, %v5089
    %v5091 = vpop.f32.mrb[0].mxu0
    %v5092 = vadd.f32 0.0, %v5091
    %v5093 = vpop.f32.mrb[0].mxu0
    %v5094 = vadd.f32 0.0, %v5093
    %5095 = vmatprep.mubr.bf16.mxu0 %v4848
    %5096 = vmatmul.mubr.bf16.gmra.mrb[0].mxu0 %v4847
    %v5097 = vpop.f32.mrb[0].mxu0
    %v5098 = vadd.f32 0.0, %v5097
    %v5099 = vpop.f32.mrb[0].mxu0
    %v5100 = vadd.f32 0.0, %v5099
    %v5101 = vpop.f32.mrb[0].mxu0
    %v5102 = vadd.f32 0.0, %v5101
    %v5103 = vpop.f32.mrb[0].mxu0
    %v5104 = vadd.f32 0.0, %v5103
    %5105 = vmatprep.mubr.bf16.mxu0 %v4850
    %5106 = vmatmul.mubr.bf16.gmra.mrb[0].mxu0 %v4849
    %v5107 = vpop.f32.mrb[0].mxu0
    %v5108 = vadd.f32 0.0, %v5107
    %v5109 = vpop.f32.mrb[0].mxu0
    %v5110 = vadd.f32 0.0, %v5109
    %v5111 = vpop.f32.mrb[0].mxu0
    %v5112 = vadd.f32 0.0, %v5111
    %v5113 = vpop.f32.mrb[0].mxu0
    %v5114 = vadd.f32 0.0, %v5113
    %5115 = vdwg.mxu0
    %v5116 = vmul.f32 %v5078, %v5078
    %v5117 = vmul.f32 %v5080, %v5080
    %v5118 = vmul.f32 %v5082, %v5082
    %v5119 = vmul.f32 %v5084, %v5084
    %v5120 = vmul.f32 %v5088, %v5088
    %v5121 = vmul.f32 %v5090, %v5090
    %v5122 = vmul.f32 %v5092, %v5092
    %v5123 = vmul.f32 %v5094, %v5094
    %v5124 = vmul.f32 %v5098, %v5098
    %v5125 = vmul.f32 %v5100, %v5100
    %v5126 = vmul.f32 %v5102, %v5102
    %v5127 = vmul.f32 %v5104, %v5104
    %v5128 = vmul.f32 %v5108, %v5108
    %v5129 = vmul.f32 %v5110, %v5110
    %v5130 = vmul.f32 %v5112, %v5112
    %v5131 = vmul.f32 %v5114, %v5114
    %v5132 = vpack.c.bf16 %v5118, %v5116
    %v5133 = vpack.c.bf16 %v5119, %v5117
    %v5134 = vpack.c.bf16 %v5122, %v5120
    %v5135 = vpack.c.bf16 %v5123, %v5121
    %v5136 = vpack.c.bf16 %v5126, %v5124
    %v5137 = vpack.c.bf16 %v5127, %v5125
    %v5138 = vpack.c.bf16 %v5130, %v5128
    %v5139 = vpack.c.bf16 %v5131, %v5129
    %v5140 = vld [vmem:[#allocation19] sm:$0xff]
    %v5141 = vld [vmem:[#allocation19 + $0x8] sm:$0xff]
    %v5142 = vld [vmem:[#allocation19 + $0x10] sm:$0xff]
    %v5143 = vld [vmem:[#allocation19 + $0x18] sm:$0xff]
    %v5144 = vld [vmem:[#allocation19 + $0x20] sm:$0xff]
    %v5145 = vld [vmem:[#allocation19 + $0x28] sm:$0xff]
    %v5146 = vld [vmem:[#allocation19 + $0x30] sm:$0xff]
    %v5147 = vld [vmem:[#allocation19 + $0x38] sm:$0xff]
    %v5148 = vld [vmem:[#allocation19 + $0x40] sm:$0xff]
    %v5149 = vld [vmem:[#allocation19 + $0x48] sm:$0xff]
    %v5150 = vld [vmem:[#allocation19 + $0x50] sm:$0xff]
    %v5151 = vld [vmem:[#allocation19 + $0x58] sm:$0xff]
    %v5152 = vld [vmem:[#allocation19 + $0x60] sm:$0xff]
    %v5153 = vld [vmem:[#allocation19 + $0x68] sm:$0xff]
    %v5154 = vld [vmem:[#allocation19 + $0x70] sm:$0xff]
    %v5155 = vld [vmem:[#allocation19 + $0x78] sm:$0xff]
    %v5156 = vld [vmem:[#allocation19 + $0x80] sm:$0xff]
    %v5157 = vld [vmem:[#allocation19 + $0x88] sm:$0xff]
    %v5158 = vld [vmem:[#allocation19 + $0x90] sm:$0xff]
    %v5159 = vld [vmem:[#allocation19 + $0x98] sm:$0xff]
    %v5160 = vld [vmem:[#allocation19 + $0xa0] sm:$0xff]
    %v5161 = vld [vmem:[#allocation19 + $0xa8] sm:$0xff]
    %v5162 = vld [vmem:[#allocation19 + $0xb0] sm:$0xff]
    %v5163 = vld [vmem:[#allocation19 + $0xb8] sm:$0xff]
    %v5164 = vld [vmem:[#allocation19 + $0xc0] sm:$0xff]
    %v5165 = vld [vmem:[#allocation19 + $0xc8] sm:$0xff]
    %v5166 = vld [vmem:[#allocation19 + $0xd0] sm:$0xff]
    %v5167 = vld [vmem:[#allocation19 + $0xd8] sm:$0xff]
    %v5168 = vld [vmem:[#allocation19 + $0xe0] sm:$0xff]
    %v5169 = vld [vmem:[#allocation19 + $0xe8] sm:$0xff]
    %v5170 = vld [vmem:[#allocation19 + $0xf0] sm:$0xff]
    %v5171 = vld [vmem:[#allocation19 + $0xf8] sm:$0xff]
    %v5172 = vld [vmem:[#allocation19 + $0x100] sm:$0xff]
    %v5173 = vld [vmem:[#allocation19 + $0x108] sm:$0xff]
    %v5174 = vld [vmem:[#allocation19 + $0x110] sm:$0xff]
    %v5175 = vld [vmem:[#allocation19 + $0x118] sm:$0xff]
    %v5176 = vld [vmem:[#allocation19 + $0x120] sm:$0xff]
    %v5177 = vld [vmem:[#allocation19 + $0x128] sm:$0xff]
    %v5178 = vld [vmem:[#allocation19 + $0x130] sm:$0xff]
    %v5179 = vld [vmem:[#allocation19 + $0x138] sm:$0xff]
    %v5180 = vld [vmem:[#allocation19 + $0x140] sm:$0xff]
    %v5181 = vld [vmem:[#allocation19 + $0x148] sm:$0xff]
    %v5182 = vld [vmem:[#allocation19 + $0x150] sm:$0xff]
    %v5183 = vld [vmem:[#allocation19 + $0x158] sm:$0xff]
    %v5184 = vld [vmem:[#allocation19 + $0x160] sm:$0xff]
    %v5185 = vld [vmem:[#allocation19 + $0x168] sm:$0xff]
    %v5186 = vld [vmem:[#allocation19 + $0x170] sm:$0xff]
    %v5187 = vld [vmem:[#allocation19 + $0x178] sm:$0xff]
    %v5188 = vld [vmem:[#allocation19 + $0x180] sm:$0xff]
    %v5189 = vld [vmem:[#allocation19 + $0x188] sm:$0xff]
    %v5190 = vld [vmem:[#allocation19 + $0x190] sm:$0xff]
    %v5191 = vld [vmem:[#allocation19 + $0x198] sm:$0xff]
    %v5192 = vld [vmem:[#allocation19 + $0x1a0] sm:$0xff]
    %v5193 = vld [vmem:[#allocation19 + $0x1a8] sm:$0xff]
    %v5194 = vld [vmem:[#allocation19 + $0x1b0] sm:$0xff]
    %v5195 = vld [vmem:[#allocation19 + $0x1b8] sm:$0xff]
    %v5196 = vld [vmem:[#allocation19 + $0x1c0] sm:$0xff]
    %v5197 = vld [vmem:[#allocation19 + $0x1c8] sm:$0xff]
    %v5198 = vld [vmem:[#allocation19 + $0x1d0] sm:$0xff]
    %v5199 = vld [vmem:[#allocation19 + $0x1d8] sm:$0xff]
    %v5200 = vld [vmem:[#allocation19 + $0x1e0] sm:$0xff]
    %v5201 = vld [vmem:[#allocation19 + $0x1e8] sm:$0xff]
    %v5202 = vld [vmem:[#allocation19 + $0x1f0] sm:$0xff]
    %v5203 = vld [vmem:[#allocation19 + $0x1f8] sm:$0xff]
    %v5204 = vld [vmem:[#allocation19 + $0x200] sm:$0xff]
    %v5205 = vld [vmem:[#allocation19 + $0x208] sm:$0xff]
    %v5206 = vld [vmem:[#allocation19 + $0x210] sm:$0xff]
    %v5207 = vld [vmem:[#allocation19 + $0x218] sm:$0xff]
    %v5208 = vld [vmem:[#allocation19 + $0x220] sm:$0xff]
    %v5209 = vld [vmem:[#allocation19 + $0x228] sm:$0xff]
    %v5210 = vld [vmem:[#allocation19 + $0x230] sm:$0xff]
    %v5211 = vld [vmem:[#allocation19 + $0x238] sm:$0xff]
    %v5212 = vld [vmem:[#allocation19 + $0x240] sm:$0xff]
    %v5213 = vld [vmem:[#allocation19 + $0x248] sm:$0xff]
    %v5214 = vld [vmem:[#allocation19 + $0x250] sm:$0xff]
    %v5215 = vld [vmem:[#allocation19 + $0x258] sm:$0xff]
    %v5216 = vld [vmem:[#allocation19 + $0x260] sm:$0xff]
    %v5217 = vld [vmem:[#allocation19 + $0x268] sm:$0xff]
    %v5218 = vld [vmem:[#allocation19 + $0x270] sm:$0xff]
    %v5219 = vld [vmem:[#allocation19 + $0x278] sm:$0xff]
    %v5220 = vld [vmem:[#allocation19 + $0x280] sm:$0xff]
    %v5221 = vld [vmem:[#allocation19 + $0x288] sm:$0xff]
    %v5222 = vld [vmem:[#allocation19 + $0x290] sm:$0xff]
    %v5223 = vld [vmem:[#allocation19 + $0x298] sm:$0xff]
    %v5224 = vld [vmem:[#allocation19 + $0x2a0] sm:$0xff]
    %v5225 = vld [vmem:[#allocation19 + $0x2a8] sm:$0xff]
    %v5226 = vld [vmem:[#allocation19 + $0x2b0] sm:$0xff]
    %v5227 = vld [vmem:[#allocation19 + $0x2b8] sm:$0xff]
    %v5228 = vld [vmem:[#allocation19 + $0x2c0] sm:$0xff]
    %v5229 = vld [vmem:[#allocation19 + $0x2c8] sm:$0xff]
    %v5230 = vld [vmem:[#allocation19 + $0x2d0] sm:$0xff]
    %v5231 = vld [vmem:[#allocation19 + $0x2d8] sm:$0xff]
    %v5232 = vld [vmem:[#allocation19 + $0x2e0] sm:$0xff]
    %v5233 = vld [vmem:[#allocation19 + $0x2e8] sm:$0xff]
    %v5234 = vld [vmem:[#allocation19 + $0x2f0] sm:$0xff]
    %v5235 = vld [vmem:[#allocation19 + $0x2f8] sm:$0xff]
    %v5236 = vld [vmem:[#allocation19 + $0x300] sm:$0xff]
    %v5237 = vld [vmem:[#allocation19 + $0x308] sm:$0xff]
    %v5238 = vld [vmem:[#allocation19 + $0x310] sm:$0xff]
    %v5239 = vld [vmem:[#allocation19 + $0x318] sm:$0xff]
    %v5240 = vld [vmem:[#allocation19 + $0x320] sm:$0xff]
    %v5241 = vld [vmem:[#allocation19 + $0x328] sm:$0xff]
    %v5242 = vld [vmem:[#allocation19 + $0x330] sm:$0xff]
    %v5243 = vld [vmem:[#allocation19 + $0x338] sm:$0xff]
    %v5244 = vld [vmem:[#allocation19 + $0x340] sm:$0xff]
    %v5245 = vld [vmem:[#allocation19 + $0x348] sm:$0xff]
    %v5246 = vld [vmem:[#allocation19 + $0x350] sm:$0xff]
    %v5247 = vld [vmem:[#allocation19 + $0x358] sm:$0xff]
    %v5248 = vld [vmem:[#allocation19 + $0x360] sm:$0xff]
    %v5249 = vld [vmem:[#allocation19 + $0x368] sm:$0xff]
    %v5250 = vld [vmem:[#allocation19 + $0x370] sm:$0xff]
    %v5251 = vld [vmem:[#allocation19 + $0x378] sm:$0xff]
    %v5252 = vld [vmem:[#allocation19 + $0x380] sm:$0xff]
    %v5253 = vld [vmem:[#allocation19 + $0x388] sm:$0xff]
    %v5254 = vld [vmem:[#allocation19 + $0x390] sm:$0xff]
    %v5255 = vld [vmem:[#allocation19 + $0x398] sm:$0xff]
    %v5256 = vld [vmem:[#allocation19 + $0x3a0] sm:$0xff]
    %v5257 = vld [vmem:[#allocation19 + $0x3a8] sm:$0xff]
    %v5258 = vld [vmem:[#allocation19 + $0x3b0] sm:$0xff]
    %v5259 = vld [vmem:[#allocation19 + $0x3b8] sm:$0xff]
    %v5260 = vld [vmem:[#allocation19 + $0x3c0] sm:$0xff]
    %v5261 = vld [vmem:[#allocation19 + $0x3c8] sm:$0xff]
    %v5262 = vld [vmem:[#allocation19 + $0x3d0] sm:$0xff]
    %v5263 = vld [vmem:[#allocation19 + $0x3d8] sm:$0xff]
    %v5264 = vld [vmem:[#allocation19 + $0x3e0] sm:$0xff]
    %v5265 = vld [vmem:[#allocation19 + $0x3e8] sm:$0xff]
    %v5266 = vld [vmem:[#allocation19 + $0x3f0] sm:$0xff]
    %v5267 = vld [vmem:[#allocation19 + $0x3f8] sm:$0xff]
    %v5396 = vunpack.c.l.b16 %v5140
    %v5397 = vunpack.c.h.b16 %v5140
    %v5398 = vunpack.c.l.b16 %v5141
    %v5399 = vunpack.c.h.b16 %v5141
    %v5400 = vunpack.c.l.b16 %v5142
    %v5401 = vunpack.c.h.b16 %v5142
    %v5402 = vunpack.c.l.b16 %v5143
    %v5403 = vunpack.c.h.b16 %v5143
    %v5404 = vunpack.c.l.b16 %v5144
    %v5405 = vunpack.c.h.b16 %v5144
    %v5406 = vunpack.c.l.b16 %v5145
    %v5407 = vunpack.c.h.b16 %v5145
    %v5408 = vunpack.c.l.b16 %v5146
    %v5409 = vunpack.c.h.b16 %v5146
    %v5410 = vunpack.c.l.b16 %v5147
    %v5411 = vunpack.c.h.b16 %v5147
    %v5412 = vunpack.c.l.b16 %v5148
    %v5413 = vunpack.c.h.b16 %v5148
    %v5414 = vunpack.c.l.b16 %v5149
    %v5415 = vunpack.c.h.b16 %v5149
    %v5416 = vunpack.c.l.b16 %v5150
    %v5417 = vunpack.c.h.b16 %v5150
    %v5418 = vunpack.c.l.b16 %v5151
    %v5419 = vunpack.c.h.b16 %v5151
    %v5420 = vunpack.c.l.b16 %v5152
    %v5421 = vunpack.c.h.b16 %v5152
    %v5422 = vunpack.c.l.b16 %v5153
    %v5423 = vunpack.c.h.b16 %v5153
    %v5424 = vunpack.c.l.b16 %v5154
    %v5425 = vunpack.c.h.b16 %v5154
    %v5426 = vunpack.c.l.b16 %v5155
    %v5427 = vunpack.c.h.b16 %v5155
    %v5428 = vunpack.c.l.b16 %v5156
    %v5429 = vunpack.c.h.b16 %v5156
    %v5430 = vunpack.c.l.b16 %v5157
    %v5431 = vunpack.c.h.b16 %v5157
    %v5432 = vunpack.c.l.b16 %v5158
    %v5433 = vunpack.c.h.b16 %v5158
    %v5434 = vunpack.c.l.b16 %v5159
    %v5435 = vunpack.c.h.b16 %v5159
    %v5436 = vunpack.c.l.b16 %v5160
    %v5437 = vunpack.c.h.b16 %v5160
    %v5438 = vunpack.c.l.b16 %v5161
    %v5439 = vunpack.c.h.b16 %v5161
    %v5440 = vunpack.c.l.b16 %v5162
    %v5441 = vunpack.c.h.b16 %v5162
    %v5442 = vunpack.c.l.b16 %v5163
    %v5443 = vunpack.c.h.b16 %v5163
    %v5444 = vunpack.c.l.b16 %v5164
    %v5445 = vunpack.c.h.b16 %v5164
    %v5446 = vunpack.c.l.b16 %v5165
    %v5447 = vunpack.c.h.b16 %v5165
    %v5448 = vunpack.c.l.b16 %v5166
    %v5449 = vunpack.c.h.b16 %v5166
    %v5450 = vunpack.c.l.b16 %v5167
    %v5451 = vunpack.c.h.b16 %v5167
    %v5452 = vunpack.c.l.b16 %v5168
    %v5453 = vunpack.c.h.b16 %v5168
    %v5454 = vunpack.c.l.b16 %v5169
    %v5455 = vunpack.c.h.b16 %v5169
    %v5456 = vunpack.c.l.b16 %v5170
    %v5457 = vunpack.c.h.b16 %v5170
    %v5458 = vunpack.c.l.b16 %v5171
    %v5459 = vunpack.c.h.b16 %v5171
    %v5460 = vunpack.c.l.b16 %v5172
    %v5461 = vunpack.c.h.b16 %v5172
    %v5462 = vunpack.c.l.b16 %v5173
    %v5463 = vunpack.c.h.b16 %v5173
    %v5464 = vunpack.c.l.b16 %v5174
    %v5465 = vunpack.c.h.b16 %v5174
    %v5466 = vunpack.c.l.b16 %v5175
    %v5467 = vunpack.c.h.b16 %v5175
    %v5468 = vunpack.c.l.b16 %v5176
    %v5469 = vunpack.c.h.b16 %v5176
    %v5470 = vunpack.c.l.b16 %v5177
    %v5471 = vunpack.c.h.b16 %v5177
    %v5472 = vunpack.c.l.b16 %v5178
    %v5473 = vunpack.c.h.b16 %v5178
    %v5474 = vunpack.c.l.b16 %v5179
    %v5475 = vunpack.c.h.b16 %v5179
    %v5476 = vunpack.c.l.b16 %v5180
    %v5477 = vunpack.c.h.b16 %v5180
    %v5478 = vunpack.c.l.b16 %v5181
    %v5479 = vunpack.c.h.b16 %v5181
    %v5480 = vunpack.c.l.b16 %v5182
    %v5481 = vunpack.c.h.b16 %v5182
    %v5482 = vunpack.c.l.b16 %v5183
    %v5483 = vunpack.c.h.b16 %v5183
    %v5484 = vunpack.c.l.b16 %v5184
    %v5485 = vunpack.c.h.b16 %v5184
    %v5486 = vunpack.c.l.b16 %v5185
    %v5487 = vunpack.c.h.b16 %v5185
    %v5488 = vunpack.c.l.b16 %v5186
    %v5489 = vunpack.c.h.b16 %v5186
    %v5490 = vunpack.c.l.b16 %v5187
    %v5491 = vunpack.c.h.b16 %v5187
    %v5492 = vunpack.c.l.b16 %v5188
    %v5493 = vunpack.c.h.b16 %v5188
    %v5494 = vunpack.c.l.b16 %v5189
    %v5495 = vunpack.c.h.b16 %v5189
    %v5496 = vunpack.c.l.b16 %v5190
    %v5497 = vunpack.c.h.b16 %v5190
    %v5498 = vunpack.c.l.b16 %v5191
    %v5499 = vunpack.c.h.b16 %v5191
    %v5500 = vunpack.c.l.b16 %v5192
    %v5501 = vunpack.c.h.b16 %v5192
    %v5502 = vunpack.c.l.b16 %v5193
    %v5503 = vunpack.c.h.b16 %v5193
    %v5504 = vunpack.c.l.b16 %v5194
    %v5505 = vunpack.c.h.b16 %v5194
    %v5506 = vunpack.c.l.b16 %v5195
    %v5507 = vunpack.c.h.b16 %v5195
    %v5508 = vunpack.c.l.b16 %v5196
    %v5509 = vunpack.c.h.b16 %v5196
    %v5510 = vunpack.c.l.b16 %v5197
    %v5511 = vunpack.c.h.b16 %v5197
    %v5512 = vunpack.c.l.b16 %v5198
    %v5513 = vunpack.c.h.b16 %v5198
    %v5514 = vunpack.c.l.b16 %v5199
    %v5515 = vunpack.c.h.b16 %v5199
    %v5516 = vunpack.c.l.b16 %v5200
    %v5517 = vunpack.c.h.b16 %v5200
    %v5518 = vunpack.c.l.b16 %v5201
    %v5519 = vunpack.c.h.b16 %v5201
    %v5520 = vunpack.c.l.b16 %v5202
    %v5521 = vunpack.c.h.b16 %v5202
    %v5522 = vunpack.c.l.b16 %v5203
    %v5523 = vunpack.c.h.b16 %v5203
    %v5524 = vunpack.c.l.b16 %v5204
    %v5525 = vunpack.c.h.b16 %v5204
    %v5526 = vunpack.c.l.b16 %v5205
    %v5527 = vunpack.c.h.b16 %v5205
    %v5528 = vunpack.c.l.b16 %v5206
    %v5529 = vunpack.c.h.b16 %v5206
    %v5530 = vunpack.c.l.b16 %v5207
    %v5531 = vunpack.c.h.b16 %v5207
    %v5532 = vunpack.c.l.b16 %v5208
    %v5533 = vunpack.c.h.b16 %v5208
    %v5534 = vunpack.c.l.b16 %v5209
    %v5535 = vunpack.c.h.b16 %v5209
    %v5536 = vunpack.c.l.b16 %v5210
    %v5537 = vunpack.c.h.b16 %v5210
    %v5538 = vunpack.c.l.b16 %v5211
    %v5539 = vunpack.c.h.b16 %v5211
    %v5540 = vunpack.c.l.b16 %v5212
    %v5541 = vunpack.c.h.b16 %v5212
    %v5542 = vunpack.c.l.b16 %v5213
    %v5543 = vunpack.c.h.b16 %v5213
    %v5544 = vunpack.c.l.b16 %v5214
    %v5545 = vunpack.c.h.b16 %v5214
    %v5546 = vunpack.c.l.b16 %v5215
    %v5547 = vunpack.c.h.b16 %v5215
    %v5548 = vunpack.c.l.b16 %v5216
    %v5549 = vunpack.c.h.b16 %v5216
    %v5550 = vunpack.c.l.b16 %v5217
    %v5551 = vunpack.c.h.b16 %v5217
    %v5552 = vunpack.c.l.b16 %v5218
    %v5553 = vunpack.c.h.b16 %v5218
    %v5554 = vunpack.c.l.b16 %v5219
    %v5555 = vunpack.c.h.b16 %v5219
    %v5556 = vunpack.c.l.b16 %v5220
    %v5557 = vunpack.c.h.b16 %v5220
    %v5558 = vunpack.c.l.b16 %v5221
    %v5559 = vunpack.c.h.b16 %v5221
    %v5560 = vunpack.c.l.b16 %v5222
    %v5561 = vunpack.c.h.b16 %v5222
    %v5562 = vunpack.c.l.b16 %v5223
    %v5563 = vunpack.c.h.b16 %v5223
    %v5564 = vunpack.c.l.b16 %v5224
    %v5565 = vunpack.c.h.b16 %v5224
    %v5566 = vunpack.c.l.b16 %v5225
    %v5567 = vunpack.c.h.b16 %v5225
    %v5568 = vunpack.c.l.b16 %v5226
    %v5569 = vunpack.c.h.b16 %v5226
    %v5570 = vunpack.c.l.b16 %v5227
    %v5571 = vunpack.c.h.b16 %v5227
    %v5572 = vunpack.c.l.b16 %v5228
    %v5573 = vunpack.c.h.b16 %v5228
    %v5574 = vunpack.c.l.b16 %v5229
    %v5575 = vunpack.c.h.b16 %v5229
    %v5576 = vunpack.c.l.b16 %v5230
    %v5577 = vunpack.c.h.b16 %v5230
    %v5578 = vunpack.c.l.b16 %v5231
    %v5579 = vunpack.c.h.b16 %v5231
    %v5580 = vunpack.c.l.b16 %v5232
    %v5581 = vunpack.c.h.b16 %v5232
    %v5582 = vunpack.c.l.b16 %v5233
    %v5583 = vunpack.c.h.b16 %v5233
    %v5584 = vunpack.c.l.b16 %v5234
    %v5585 = vunpack.c.h.b16 %v5234
    %v5586 = vunpack.c.l.b16 %v5235
    %v5587 = vunpack.c.h.b16 %v5235
    %v5588 = vunpack.c.l.b16 %v5236
    %v5589 = vunpack.c.h.b16 %v5236
    %v5590 = vunpack.c.l.b16 %v5237
    %v5591 = vunpack.c.h.b16 %v5237
    %v5592 = vunpack.c.l.b16 %v5238
    %v5593 = vunpack.c.h.b16 %v5238
    %v5594 = vunpack.c.l.b16 %v5239
    %v5595 = vunpack.c.h.b16 %v5239
    %v5596 = vunpack.c.l.b16 %v5240
    %v5597 = vunpack.c.h.b16 %v5240
    %v5598 = vunpack.c.l.b16 %v5241
    %v5599 = vunpack.c.h.b16 %v5241
    %v5600 = vunpack.c.l.b16 %v5242
    %v5601 = vunpack.c.h.b16 %v5242
    %v5602 = vunpack.c.l.b16 %v5243
    %v5603 = vunpack.c.h.b16 %v5243
    %v5604 = vunpack.c.l.b16 %v5244
    %v5605 = vunpack.c.h.b16 %v5244
    %v5606 = vunpack.c.l.b16 %v5245
    %v5607 = vunpack.c.h.b16 %v5245
    %v5608 = vunpack.c.l.b16 %v5246
    %v5609 = vunpack.c.h.b16 %v5246
    %v5610 = vunpack.c.l.b16 %v5247
    %v5611 = vunpack.c.h.b16 %v5247
    %v5612 = vunpack.c.l.b16 %v5248
    %v5613 = vunpack.c.h.b16 %v5248
    %v5614 = vunpack.c.l.b16 %v5249
    %v5615 = vunpack.c.h.b16 %v5249
    %v5616 = vunpack.c.l.b16 %v5250
    %v5617 = vunpack.c.h.b16 %v5250
    %v5618 = vunpack.c.l.b16 %v5251
    %v5619 = vunpack.c.h.b16 %v5251
    %v5620 = vunpack.c.l.b16 %v5252
    %v5621 = vunpack.c.h.b16 %v5252
    %v5622 = vunpack.c.l.b16 %v5253
    %v5623 = vunpack.c.h.b16 %v5253
    %v5624 = vunpack.c.l.b16 %v5254
    %v5625 = vunpack.c.h.b16 %v5254
    %v5626 = vunpack.c.l.b16 %v5255
    %v5627 = vunpack.c.h.b16 %v5255
    %v5628 = vunpack.c.l.b16 %v5256
    %v5629 = vunpack.c.h.b16 %v5256
    %v5630 = vunpack.c.l.b16 %v5257
    %v5631 = vunpack.c.h.b16 %v5257
    %v5632 = vunpack.c.l.b16 %v5258
    %v5633 = vunpack.c.h.b16 %v5258
    %v5634 = vunpack.c.l.b16 %v5259
    %v5635 = vunpack.c.h.b16 %v5259
    %v5636 = vunpack.c.l.b16 %v5260
    %v5637 = vunpack.c.h.b16 %v5260
    %v5638 = vunpack.c.l.b16 %v5261
    %v5639 = vunpack.c.h.b16 %v5261
    %v5640 = vunpack.c.l.b16 %v5262
    %v5641 = vunpack.c.h.b16 %v5262
    %v5642 = vunpack.c.l.b16 %v5263
    %v5643 = vunpack.c.h.b16 %v5263
    %v5644 = vunpack.c.l.b16 %v5264
    %v5645 = vunpack.c.h.b16 %v5264
    %v5646 = vunpack.c.l.b16 %v5265
    %v5647 = vunpack.c.h.b16 %v5265
    %v5648 = vunpack.c.l.b16 %v5266
    %v5649 = vunpack.c.h.b16 %v5266
    %v5650 = vunpack.c.l.b16 %v5267
    %v5651 = vunpack.c.h.b16 %v5267
    %v5652 = vpack.c.b16 %v5404, %v5396
    %v5653 = vpack.c.b16 %v5405, %v5397
    %v5654 = vpack.c.b16 %v5406, %v5398
    %v5655 = vpack.c.b16 %v5407, %v5399
    %v5656 = vpack.c.b16 %v5408, %v5400
    %v5657 = vpack.c.b16 %v5409, %v5401
    %v5658 = vpack.c.b16 %v5410, %v5402
    %v5659 = vpack.c.b16 %v5411, %v5403
    %v5660 = vpack.c.b16 %v5420, %v5412
    %v5661 = vpack.c.b16 %v5421, %v5413
    %v5662 = vpack.c.b16 %v5422, %v5414
    %v5663 = vpack.c.b16 %v5423, %v5415
    %v5664 = vpack.c.b16 %v5424, %v5416
    %v5665 = vpack.c.b16 %v5425, %v5417
    %v5666 = vpack.c.b16 %v5426, %v5418
    %v5667 = vpack.c.b16 %v5427, %v5419
    %v5668 = vpack.c.b16 %v5436, %v5428
    %v5669 = vpack.c.b16 %v5437, %v5429
    %v5670 = vpack.c.b16 %v5438, %v5430
    %v5671 = vpack.c.b16 %v5439, %v5431
    %v5672 = vpack.c.b16 %v5440, %v5432
    %v5673 = vpack.c.b16 %v5441, %v5433
    %v5674 = vpack.c.b16 %v5442, %v5434
    %v5675 = vpack.c.b16 %v5443, %v5435
    %v5676 = vpack.c.b16 %v5452, %v5444
    %v5677 = vpack.c.b16 %v5453, %v5445
    %v5678 = vpack.c.b16 %v5454, %v5446
    %v5679 = vpack.c.b16 %v5455, %v5447
    %v5680 = vpack.c.b16 %v5456, %v5448
    %v5681 = vpack.c.b16 %v5457, %v5449
    %v5682 = vpack.c.b16 %v5458, %v5450
    %v5683 = vpack.c.b16 %v5459, %v5451
    %v5684 = vpack.c.b16 %v5468, %v5460
    %v5685 = vpack.c.b16 %v5469, %v5461
    %v5686 = vpack.c.b16 %v5470, %v5462
    %v5687 = vpack.c.b16 %v5471, %v5463
    %v5688 = vpack.c.b16 %v5472, %v5464
    %v5689 = vpack.c.b16 %v5473, %v5465
    %v5690 = vpack.c.b16 %v5474, %v5466
    %v5691 = vpack.c.b16 %v5475, %v5467
    %v5692 = vpack.c.b16 %v5484, %v5476
    %v5693 = vpack.c.b16 %v5485, %v5477
    %v5694 = vpack.c.b16 %v5486, %v5478
    %v5695 = vpack.c.b16 %v5487, %v5479
    %v5696 = vpack.c.b16 %v5488, %v5480
    %v5697 = vpack.c.b16 %v5489, %v5481
    %v5698 = vpack.c.b16 %v5490, %v5482
    %v5699 = vpack.c.b16 %v5491, %v5483
    %v5700 = vpack.c.b16 %v5500, %v5492
    %v5701 = vpack.c.b16 %v5501, %v5493
    %v5702 = vpack.c.b16 %v5502, %v5494
    %v5703 = vpack.c.b16 %v5503, %v5495
    %v5704 = vpack.c.b16 %v5504, %v5496
    %v5705 = vpack.c.b16 %v5505, %v5497
    %v5706 = vpack.c.b16 %v5506, %v5498
    %v5707 = vpack.c.b16 %v5507, %v5499
    %v5708 = vpack.c.b16 %v5516, %v5508
    %v5709 = vpack.c.b16 %v5517, %v5509
    %v5710 = vpack.c.b16 %v5518, %v5510
    %v5711 = vpack.c.b16 %v5519, %v5511
    %v5712 = vpack.c.b16 %v5520, %v5512
    %v5713 = vpack.c.b16 %v5521, %v5513
    %v5714 = vpack.c.b16 %v5522, %v5514
    %v5715 = vpack.c.b16 %v5523, %v5515
    %v5716 = vpack.c.b16 %v5532, %v5524
    %v5717 = vpack.c.b16 %v5533, %v5525
    %v5718 = vpack.c.b16 %v5534, %v5526
    %v5719 = vpack.c.b16 %v5535, %v5527
    %v5720 = vpack.c.b16 %v5536, %v5528
    %v5721 = vpack.c.b16 %v5537, %v5529
    %v5722 = vpack.c.b16 %v5538, %v5530
    %v5723 = vpack.c.b16 %v5539, %v5531
    %v5724 = vpack.c.b16 %v5548, %v5540
    %v5725 = vpack.c.b16 %v5549, %v5541
    %v5726 = vpack.c.b16 %v5550, %v5542
    %v5727 = vpack.c.b16 %v5551, %v5543
    %v5728 = vpack.c.b16 %v5552, %v5544
    %v5729 = vpack.c.b16 %v5553, %v5545
    %v5730 = vpack.c.b16 %v5554, %v5546
    %v5731 = vpack.c.b16 %v5555, %v5547
    %v5732 = vpack.c.b16 %v5564, %v5556
    %v5733 = vpack.c.b16 %v5565, %v5557
    %v5734 = vpack.c.b16 %v5566, %v5558
    %v5735 = vpack.c.b16 %v5567, %v5559
    %v5736 = vpack.c.b16 %v5568, %v5560
    %v5737 = vpack.c.b16 %v5569, %v5561
    %v5738 = vpack.c.b16 %v5570, %v5562
    %v5739 = vpack.c.b16 %v5571, %v5563
    %v5740 = vpack.c.b16 %v5580, %v5572
    %v5741 = vpack.c.b16 %v5581, %v5573
    %v5742 = vpack.c.b16 %v5582, %v5574
    %v5743 = vpack.c.b16 %v5583, %v5575
    %v5744 = vpack.c.b16 %v5584, %v5576
    %v5745 = vpack.c.b16 %v5585, %v5577
    %v5746 = vpack.c.b16 %v5586, %v5578
    %v5747 = vpack.c.b16 %v5587, %v5579
    %v5748 = vpack.c.b16 %v5596, %v5588
    %v5749 = vpack.c.b16 %v5597, %v5589
    %v5750 = vpack.c.b16 %v5598, %v5590
    %v5751 = vpack.c.b16 %v5599, %v5591
    %v5752 = vpack.c.b16 %v5600, %v5592
    %v5753 = vpack.c.b16 %v5601, %v5593
    %v5754 = vpack.c.b16 %v5602, %v5594
    %v5755 = vpack.c.b16 %v5603, %v5595
    %v5756 = vpack.c.b16 %v5612, %v5604
    %v5757 = vpack.c.b16 %v5613, %v5605
    %v5758 = vpack.c.b16 %v5614, %v5606
    %v5759 = vpack.c.b16 %v5615, %v5607
    %v5760 = vpack.c.b16 %v5616, %v5608
    %v5761 = vpack.c.b16 %v5617, %v5609
    %v5762 = vpack.c.b16 %v5618, %v5610
    %v5763 = vpack.c.b16 %v5619, %v5611
    %v5764 = vpack.c.b16 %v5628, %v5620
    %v5765 = vpack.c.b16 %v5629, %v5621
    %v5766 = vpack.c.b16 %v5630, %v5622
    %v5767 = vpack.c.b16 %v5631, %v5623
    %v5768 = vpack.c.b16 %v5632, %v5624
    %v5769 = vpack.c.b16 %v5633, %v5625
    %v5770 = vpack.c.b16 %v5634, %v5626
    %v5771 = vpack.c.b16 %v5635, %v5627
    %v5772 = vpack.c.b16 %v5644, %v5636
    %v5773 = vpack.c.b16 %v5645, %v5637
    %v5774 = vpack.c.b16 %v5646, %v5638
    %v5775 = vpack.c.b16 %v5647, %v5639
    %v5776 = vpack.c.b16 %v5648, %v5640
    %v5777 = vpack.c.b16 %v5649, %v5641
    %v5778 = vpack.c.b16 %v5650, %v5642
    %v5779 = vpack.c.b16 %v5651, %v5643
    %5908 = vmatprep.subr.bf16.mxu0 %v5653
    %5909 = vmatpush1.bf16.msra.mxu0 %v5652
    %5910 = vmatprep.subr.bf16.mxu0 %v5661
    %5911 = vmatpush1.bf16.msra.mxu0 %v5660
    %5912 = vmatprep.subr.bf16.mxu0 %v5669
    %5913 = vmatpush1.bf16.msra.mxu0 %v5668
    %5914 = vmatprep.subr.bf16.mxu0 %v5677
    %5915 = vmatpush1.bf16.msra.mxu0 %v5676
    %5916 = vmatprep.subr.bf16.mxu0 %v5685
    %5917 = vmatpush1.bf16.msra.mxu0 %v5684
    %5918 = vmatprep.subr.bf16.mxu0 %v5693
    %5919 = vmatpush1.bf16.msra.mxu0 %v5692
    %5920 = vmatprep.subr.bf16.mxu0 %v5701
    %5921 = vmatpush1.bf16.msra.mxu0 %v5700
    %5922 = vmatprep.subr.bf16.mxu0 %v5709
    %5923 = vmatpush1.bf16.msra.mxu0 %v5708
    %5924 = vmatprep.subr.bf16.mxu0 %v5717
    %5925 = vmatpush1.bf16.msra.mxu0 %v5716
    %5926 = vmatprep.subr.bf16.mxu0 %v5725
    %5927 = vmatpush1.bf16.msra.mxu0 %v5724
    %5928 = vmatprep.subr.bf16.mxu0 %v5733
    %5929 = vmatpush1.bf16.msra.mxu0 %v5732
    %5930 = vmatprep.subr.bf16.mxu0 %v5741
    %5931 = vmatpush1.bf16.msra.mxu0 %v5740
    %5932 = vmatprep.subr.bf16.mxu0 %v5749
    %5933 = vmatpush1.bf16.msra.mxu0 %v5748
    %5934 = vmatprep.subr.bf16.mxu0 %v5757
    %5935 = vmatpush1.bf16.msra.mxu0 %v5756
    %5936 = vmatprep.subr.bf16.mxu0 %v5765
    %5937 = vmatpush1.bf16.msra.mxu0 %v5764
    %5938 = vmatprep.subr.bf16.mxu0 %v5773
    %5939 = vmatpush1.bf16.msra.mxu0 %v5772
    %5940 = vmatprep.mubr.bf16.mxu0 %v5133
    %5941 = vmatmul.mubr.bf16.gmra.mrb[0].mxu0 %v5132
    %v5942 = vpop.f32.mrb[0].mxu0
    %v5943 = vadd.f32 0.0, %v5942
    %v5944 = vpop.f32.mrb[0].mxu0
    %v5945 = vadd.f32 0.0, %v5944
    %v5946 = vpop.f32.mrb[0].mxu0
    %v5947 = vadd.f32 0.0, %v5946
    %v5948 = vpop.f32.mrb[0].mxu0
    %v5949 = vadd.f32 0.0, %v5948
    %5950 = vmatprep.mubr.bf16.mxu0 %v5135
    %5951 = vmatmul.mubr.bf16.gmra.mrb[0].mxu0 %v5134
    %v5952 = vpop.f32.mrb[0].mxu0
    %v5953 = vadd.f32 0.0, %v5952
    %v5954 = vpop.f32.mrb[0].mxu0
    %v5955 = vadd.f32 0.0, %v5954
    %v5956 = vpop.f32.mrb[0].mxu0
    %v5957 = vadd.f32 0.0, %v5956
    %v5958 = vpop.f32.mrb[0].mxu0
    %v5959 = vadd.f32 0.0, %v5958
    %5960 = vmatprep.mubr.bf16.mxu0 %v5137
    %5961 = vmatmul.mubr.bf16.gmra.mrb[0].mxu0 %v5136
    %v5962 = vpop.f32.mrb[0].mxu0
    %v5963 = vadd.f32 0.0, %v5962
    %v5964 = vpop.f32.mrb[0].mxu0
    %v5965 = vadd.f32 0.0, %v5964
    %v5966 = vpop.f32.mrb[0].mxu0
    %v5967 = vadd.f32 0.0, %v5966
    %v5968 = vpop.f32.mrb[0].mxu0
    %v5969 = vadd.f32 0.0, %v5968
    %5970 = vmatprep.mubr.bf16.mxu0 %v5139
    %5971 = vmatmul.mubr.bf16.gmra.mrb[0].mxu0 %v5138
    %v5972 = vpop.f32.mrb[0].mxu0
    %v5973 = vadd.f32 0.0, %v5972
    %v5974 = vpop.f32.mrb[0].mxu0
    %v5975 = vadd.f32 0.0, %v5974
    %v5976 = vpop.f32.mrb[0].mxu0
    %v5977 = vadd.f32 0.0, %v5976
    %v5978 = vpop.f32.mrb[0].mxu0
    %v5979 = vadd.f32 0.0, %v5978
    %5980 = vdwg.mxu0
    %5981 = vmatprep.subr.bf16.mxu0 %v5655
    %5982 = vmatpush1.bf16.msra.mxu0 %v5654
    %5983 = vmatprep.subr.bf16.mxu0 %v5663
    %5984 = vmatpush1.bf16.msra.mxu0 %v5662
    %5985 = vmatprep.subr.bf16.mxu0 %v5671
    %5986 = vmatpush1.bf16.msra.mxu0 %v5670
    %5987 = vmatprep.subr.bf16.mxu0 %v5679
    %5988 = vmatpush1.bf16.msra.mxu0 %v5678
    %5989 = vmatprep.subr.bf16.mxu0 %v5687
    %5990 = vmatpush1.bf16.msra.mxu0 %v5686
    %5991 = vmatprep.subr.bf16.mxu0 %v5695
    %5992 = vmatpush1.bf16.msra.mxu0 %v5694
    %5993 = vmatprep.subr.bf16.mxu0 %v5703
    %5994 = vmatpush1.bf16.msra.mxu0 %v5702
    %5995 = vmatprep.subr.bf16.mxu0 %v5711
    %5996 = vmatpush1.bf16.msra.mxu0 %v5710
    %5997 = vmatprep.subr.bf16.mxu0 %v5719
    %5998 = vmatpush1.bf16.msra.mxu0 %v5718
    %5999 = vmatprep.subr.bf16.mxu0 %v5727
    %6000 = vmatpush1.bf16.msra.mxu0 %v5726
    %6001 = vmatprep.subr.bf16.mxu0 %v5735
    %6002 = vmatpush1.bf16.msra.mxu0 %v5734
    %6003 = vmatprep.subr.bf16.mxu0 %v5743
    %6004 = vmatpush1.bf16.msra.mxu0 %v5742
    %6005 = vmatprep.subr.bf16.mxu0 %v5751
    %6006 = vmatpush1.bf16.msra.mxu0 %v5750
    %6007 = vmatprep.subr.bf16.mxu0 %v5759
    %6008 = vmatpush1.bf16.msra.mxu0 %v5758
    %6009 = vmatprep.subr.bf16.mxu0 %v5767
    %6010 = vmatpush1.bf16.msra.mxu0 %v5766
    %6011 = vmatprep.subr.bf16.mxu0 %v5775
    %6012 = vmatpush1.bf16.msra.mxu0 %v5774
    %6013 = vmatprep.mubr.bf16.mxu0 %v5133
    %6014 = vmatmul.mubr.bf16.gmra.mrb[0].mxu0 %v5132
    %v6015 = vpop.f32.mrb[0].mxu0
    %v6016 = vadd.f32 0.0, %v6015
    %v6017 = vpop.f32.mrb[0].mxu0
    %v6018 = vadd.f32 0.0, %v6017
    %v6019 = vpop.f32.mrb[0].mxu0
    %v6020 = vadd.f32 0.0, %v6019
    %v6021 = vpop.f32.mrb[0].mxu0
    %v6022 = vadd.f32 0.0, %v6021
    %6023 = vmatprep.mubr.bf16.mxu0 %v5135
    %6024 = vmatmul.mubr.bf16.gmra.mrb[0].mxu0 %v5134
    %v6025 = vpop.f32.mrb[0].mxu0
    %v6026 = vadd.f32 0.0, %v6025
    %v6027 = vpop.f32.mrb[0].mxu0
    %v6028 = vadd.f32 0.0, %v6027
    %v6029 = vpop.f32.mrb[0].mxu0
    %v6030 = vadd.f32 0.0, %v6029
    %v6031 = vpop.f32.mrb[0].mxu0
    %v6032 = vadd.f32 0.0, %v6031
    %6033 = vmatprep.mubr.bf16.mxu0 %v5137
    %6034 = vmatmul.mubr.bf16.gmra.mrb[0].mxu0 %v5136
    %v6035 = vpop.f32.mrb[0].mxu0
    %v6036 = vadd.f32 0.0, %v6035
    %v6037 = vpop.f32.mrb[0].mxu0
    %v6038 = vadd.f32 0.0, %v6037
    %v6039 = vpop.f32.mrb[0].mxu0
    %v6040 = vadd.f32 0.0, %v6039
    %v6041 = vpop.f32.mrb[0].mxu0
    %v6042 = vadd.f32 0.0, %v6041
    %6043 = vmatprep.mubr.bf16.mxu0 %v5139
    %6044 = vmatmul.mubr.bf16.gmra.mrb[0].mxu0 %v5138
    %v6045 = vpop.f32.mrb[0].mxu0
    %v6046 = vadd.f32 0.0, %v6045
    %v6047 = vpop.f32.mrb[0].mxu0
    %v6048 = vadd.f32 0.0, %v6047
    %v6049 = vpop.f32.mrb[0].mxu0
    %v6050 = vadd.f32 0.0, %v6049
    %v6051 = vpop.f32.mrb[0].mxu0
    %v6052 = vadd.f32 0.0, %v6051
    %6053 = vdwg.mxu0
    %6054 = vmatprep.subr.bf16.mxu0 %v5657
    %6055 = vmatpush1.bf16.msra.mxu0 %v5656
    %6056 = vmatprep.subr.bf16.mxu0 %v5665
    %6057 = vmatpush1.bf16.msra.mxu0 %v5664
    %6058 = vmatprep.subr.bf16.mxu0 %v5673
    %6059 = vmatpush1.bf16.msra.mxu0 %v5672
    %6060 = vmatprep.subr.bf16.mxu0 %v5681
    %6061 = vmatpush1.bf16.msra.mxu0 %v5680
    %6062 = vmatprep.subr.bf16.mxu0 %v5689
    %6063 = vmatpush1.bf16.msra.mxu0 %v5688
    %6064 = vmatprep.subr.bf16.mxu0 %v5697
    %6065 = vmatpush1.bf16.msra.mxu0 %v5696
    %6066 = vmatprep.subr.bf16.mxu0 %v5705
    %6067 = vmatpush1.bf16.msra.mxu0 %v5704
    %6068 = vmatprep.subr.bf16.mxu0 %v5713
    %6069 = vmatpush1.bf16.msra.mxu0 %v5712
    %6070 = vmatprep.subr.bf16.mxu0 %v5721
    %6071 = vmatpush1.bf16.msra.mxu0 %v5720
    %6072 = vmatprep.subr.bf16.mxu0 %v5729
    %6073 = vmatpush1.bf16.msra.mxu0 %v5728
    %6074 = vmatprep.subr.bf16.mxu0 %v5737
    %6075 = vmatpush1.bf16.msra.mxu0 %v5736
    %6076 = vmatprep.subr.bf16.mxu0 %v5745
    %6077 = vmatpush1.bf16.msra.mxu0 %v5744
    %6078 = vmatprep.subr.bf16.mxu0 %v5753
    %6079 = vmatpush1.bf16.msra.mxu0 %v5752
    %6080 = vmatprep.subr.bf16.mxu0 %v5761
    %6081 = vmatpush1.bf16.msra.mxu0 %v5760
    %6082 = vmatprep.subr.bf16.mxu0 %v5769
    %6083 = vmatpush1.bf16.msra.mxu0 %v5768
    %6084 = vmatprep.subr.bf16.mxu0 %v5777
    %6085 = vmatpush1.bf16.msra.mxu0 %v5776
    %6086 = vmatprep.mubr.bf16.mxu0 %v5133
    %6087 = vmatmul.mubr.bf16.gmra.mrb[0].mxu0 %v5132
    %v6088 = vpop.f32.mrb[0].mxu0
    %v6089 = vadd.f32 0.0, %v6088
    %v6090 = vpop.f32.mrb[0].mxu0
    %v6091 = vadd.f32 0.0, %v6090
    %v6092 = vpop.f32.mrb[0].mxu0
    %v6093 = vadd.f32 0.0, %v6092
    %v6094 = vpop.f32.mrb[0].mxu0
    %v6095 = vadd.f32 0.0, %v6094
    %6096 = vmatprep.mubr.bf16.mxu0 %v5135
    %6097 = vmatmul.mubr.bf16.gmra.mrb[0].mxu0 %v5134
    %v6098 = vpop.f32.mrb[0].mxu0
    %v6099 = vadd.f32 0.0, %v6098
    %v6100 = vpop.f32.mrb[0].mxu0
    %v6101 = vadd.f32 0.0, %v6100
    %v6102 = vpop.f32.mrb[0].mxu0
    %v6103 = vadd.f32 0.0, %v6102
    %v6104 = vpop.f32.mrb[0].mxu0
    %v6105 = vadd.f32 0.0, %v6104
    %6106 = vmatprep.mubr.bf16.mxu0 %v5137
    %6107 = vmatmul.mubr.bf16.gmra.mrb[0].mxu0 %v5136
    %v6108 = vpop.f32.mrb[0].mxu0
    %v6109 = vadd.f32 0.0, %v6108
    %v6110 = vpop.f32.mrb[0].mxu0
    %v6111 = vadd.f32 0.0, %v6110
    %v6112 = vpop.f32.mrb[0].mxu0
    %v6113 = vadd.f32 0.0, %v6112
    %v6114 = vpop.f32.mrb[0].mxu0
    %v6115 = vadd.f32 0.0, %v6114
    %6116 = vmatprep.mubr.bf16.mxu0 %v5139
    %6117 = vmatmul.mubr.bf16.gmra.mrb[0].mxu0 %v5138
    %v6118 = vpop.f32.mrb[0].mxu0
    %v6119 = vadd.f32 0.0, %v6118
    %v6120 = vpop.f32.mrb[0].mxu0
    %v6121 = vadd.f32 0.0, %v6120
    %v6122 = vpop.f32.mrb[0].mxu0
    %v6123 = vadd.f32 0.0, %v6122
    %v6124 = vpop.f32.mrb[0].mxu0
    %v6125 = vadd.f32 0.0, %v6124
    %6126 = vdwg.mxu0
    %6127 = vmatprep.subr.bf16.mxu0 %v5659
    %6128 = vmatpush1.bf16.msra.mxu0 %v5658
    %6129 = vmatprep.subr.bf16.mxu0 %v5667
    %6130 = vmatpush1.bf16.msra.mxu0 %v5666
    %6131 = vmatprep.subr.bf16.mxu0 %v5675
    %6132 = vmatpush1.bf16.msra.mxu0 %v5674
    %6133 = vmatprep.subr.bf16.mxu0 %v5683
    %6134 = vmatpush1.bf16.msra.mxu0 %v5682
    %6135 = vmatprep.subr.bf16.mxu0 %v5691
    %6136 = vmatpush1.bf16.msra.mxu0 %v5690
    %6137 = vmatprep.subr.bf16.mxu0 %v5699
    %6138 = vmatpush1.bf16.msra.mxu0 %v5698
    %6139 = vmatprep.subr.bf16.mxu0 %v5707
    %6140 = vmatpush1.bf16.msra.mxu0 %v5706
    %6141 = vmatprep.subr.bf16.mxu0 %v5715
    %6142 = vmatpush1.bf16.msra.mxu0 %v5714
    %6143 = vmatprep.subr.bf16.mxu0 %v5723
    %6144 = vmatpush1.bf16.msra.mxu0 %v5722
    %6145 = vmatprep.subr.bf16.mxu0 %v5731
    %6146 = vmatpush1.bf16.msra.mxu0 %v5730
    %6147 = vmatprep.subr.bf16.mxu0 %v5739
    %6148 = vmatpush1.bf16.msra.mxu0 %v5738
    %6149 = vmatprep.subr.bf16.mxu0 %v5747
    %6150 = vmatpush1.bf16.msra.mxu0 %v5746
    %6151 = vmatprep.subr.bf16.mxu0 %v5755
    %6152 = vmatpush1.bf16.msra.mxu0 %v5754
    %6153 = vmatprep.subr.bf16.mxu0 %v5763
    %6154 = vmatpush1.bf16.msra.mxu0 %v5762
    %6155 = vmatprep.subr.bf16.mxu0 %v5771
    %6156 = vmatpush1.bf16.msra.mxu0 %v5770
    %6157 = vmatprep.subr.bf16.mxu0 %v5779
    %6158 = vmatpush1.bf16.msra.mxu0 %v5778
    %6159 = vmatprep.mubr.bf16.mxu0 %v5133
    %6160 = vmatmul.mubr.bf16.gmra.mrb[0].mxu0 %v5132
    %v6161 = vpop.f32.mrb[0].mxu0
    %v6162 = vadd.f32 0.0, %v6161
    %v6163 = vpop.f32.mrb[0].mxu0
    %v6164 = vadd.f32 0.0, %v6163
    %v6165 = vpop.f32.mrb[0].mxu0
    %v6166 = vadd.f32 0.0, %v6165
    %v6167 = vpop.f32.mrb[0].mxu0
    %v6168 = vadd.f32 0.0, %v6167
    %6169 = vmatprep.mubr.bf16.mxu0 %v5135
    %6170 = vmatmul.mubr.bf16.gmra.mrb[0].mxu0 %v5134
    %v6171 = vpop.f32.mrb[0].mxu0
    %v6172 = vadd.f32 0.0, %v6171
    %v6173 = vpop.f32.mrb[0].mxu0
    %v6174 = vadd.f32 0.0, %v6173
    %v6175 = vpop.f32.mrb[0].mxu0
    %v6176 = vadd.f32 0.0, %v6175
    %v6177 = vpop.f32.mrb[0].mxu0
    %v6178 = vadd.f32 0.0, %v6177
    %6179 = vmatprep.mubr.bf16.mxu0 %v5137
    %6180 = vmatmul.mubr.bf16.gmra.mrb[0].mxu0 %v5136
    %v6181 = vpop.f32.mrb[0].mxu0
    %v6182 = vadd.f32 0.0, %v6181
    %v6183 = vpop.f32.mrb[0].mxu0
    %v6184 = vadd.f32 0.0, %v6183
    %v6185 = vpop.f32.mrb[0].mxu0
    %v6186 = vadd.f32 0.0, %v6185
    %v6187 = vpop.f32.mrb[0].mxu0
    %v6188 = vadd.f32 0.0, %v6187
    %6189 = vmatprep.mubr.bf16.mxu0 %v5139
    %6190 = vmatmul.mubr.bf16.gmra.mrb[0].mxu0 %v5138
    %v6191 = vpop.f32.mrb[0].mxu0
    %v6192 = vadd.f32 0.0, %v6191
    %v6193 = vpop.f32.mrb[0].mxu0
    %v6194 = vadd.f32 0.0, %v6193
    %v6195 = vpop.f32.mrb[0].mxu0
    %v6196 = vadd.f32 0.0, %v6195
    %v6197 = vpop.f32.mrb[0].mxu0
    %v6198 = vadd.f32 0.0, %v6197
    %6199 = vdwg.mxu0
    %v6200 = vld [vmem:[#allocation21] sm:$0xff]
    %v6201 = vand.u32 2147483647, %v5943
    %v6202 = vand.u32 2147483647, %v5945
    %v6203 = vand.u32 2147483647, %v6016
    %v6204 = vand.u32 2147483647, %v6018
    %v6205 = vand.u32 2147483647, %v6089
    %v6206 = vand.u32 2147483647, %v6091
    %v6207 = vand.u32 2147483647, %v6162
    %v6208 = vand.u32 2147483647, %v6164
    %v6209 = vand.u32 2147483647, %v5947
    %v6210 = vand.u32 2147483647, %v5949
    %v6211 = vand.u32 2147483647, %v6020
    %v6212 = vand.u32 2147483647, %v6022
    %v6213 = vand.u32 2147483647, %v6093
    %v6214 = vand.u32 2147483647, %v6095
    %v6215 = vand.u32 2147483647, %v6166
    %v6216 = vand.u32 2147483647, %v6168
    %v6217 = vand.u32 2147483647, %v5953
    %v6218 = vand.u32 2147483647, %v5955
    %v6219 = vand.u32 2147483647, %v6026
    %v6220 = vand.u32 2147483647, %v6028
    %v6221 = vand.u32 2147483647, %v6099
    %v6222 = vand.u32 2147483647, %v6101
    %v6223 = vand.u32 2147483647, %v6172
    %v6224 = vand.u32 2147483647, %v6174
    %v6225 = vand.u32 2147483647, %v5957
    %v6226 = vand.u32 2147483647, %v5959
    %v6227 = vand.u32 2147483647, %v6030
    %v6228 = vand.u32 2147483647, %v6032
    %v6229 = vand.u32 2147483647, %v6103
    %v6230 = vand.u32 2147483647, %v6105
    %v6231 = vand.u32 2147483647, %v6176
    %v6232 = vand.u32 2147483647, %v6178
    %v6233 = vand.u32 2147483647, %v5963
    %v6234 = vand.u32 2147483647, %v5965
    %v6235 = vand.u32 2147483647, %v6036
    %v6236 = vand.u32 2147483647, %v6038
    %v6237 = vand.u32 2147483647, %v6109
    %v6238 = vand.u32 2147483647, %v6111
    %v6239 = vand.u32 2147483647, %v6182
    %v6240 = vand.u32 2147483647, %v6184
    %v6241 = vand.u32 2147483647, %v5967
    %v6242 = vand.u32 2147483647, %v5969
    %v6243 = vand.u32 2147483647, %v6040
    %v6244 = vand.u32 2147483647, %v6042
    %v6245 = vand.u32 2147483647, %v6113
    %v6246 = vand.u32 2147483647, %v6115
    %v6247 = vand.u32 2147483647, %v6186
    %v6248 = vand.u32 2147483647, %v6188
    %v6249 = vand.u32 2147483647, %v5973
    %v6250 = vand.u32 2147483647, %v5975
    %v6251 = vand.u32 2147483647, %v6046
    %v6252 = vand.u32 2147483647, %v6048
    %v6253 = vand.u32 2147483647, %v6119
    %v6254 = vand.u32 2147483647, %v6121
    %v6255 = vand.u32 2147483647, %v6192
    %v6256 = vand.u32 2147483647, %v6194
    %v6257 = vand.u32 2147483647, %v5977
    %v6258 = vand.u32 2147483647, %v5979
    %v6259 = vand.u32 2147483647, %v6050
    %v6260 = vand.u32 2147483647, %v6052
    %v6261 = vand.u32 2147483647, %v6123
    %v6262 = vand.u32 2147483647, %v6125
    %v6263 = vand.u32 2147483647, %v6196
    %v6264 = vand.u32 2147483647, %v6198
    %v6265 = vrsqrt.pop %v6201
    %v6266 = vmul.f32 %v6201, %v6265
    %vm6267 = vcmp.eq.f32.partialorder %v6201, inf
    %v6268 = vsel %vm6267, %v6201, %v6266
    %vm6269 = vcmp.eq.f32.partialorder %v6201, 0.0
    %v6270 = vand.u32 %v6201, 2147483648
    %v6271 = vsel %vm6269, %v6270, %v6268
    %v6272 = vrsqrt.pop %v6202
    %v6273 = vmul.f32 %v6202, %v6272
    %vm6274 = vcmp.eq.f32.partialorder %v6202, inf
    %v6275 = vsel %vm6274, %v6202, %v6273
    %vm6276 = vcmp.eq.f32.partialorder %v6202, 0.0
    %v6277 = vand.u32 %v6202, 2147483648
    %v6278 = vsel %vm6276, %v6277, %v6275
    %v6279 = vrsqrt.pop %v6203
    %v6280 = vmul.f32 %v6203, %v6279
    %vm6281 = vcmp.eq.f32.partialorder %v6203, inf
    %v6282 = vsel %vm6281, %v6203, %v6280
    %vm6283 = vcmp.eq.f32.partialorder %v6203, 0.0
    %v6284 = vand.u32 %v6203, 2147483648
    %v6285 = vsel %vm6283, %v6284, %v6282
    %v6286 = vrsqrt.pop %v6204
    %v6287 = vmul.f32 %v6204, %v6286
    %vm6288 = vcmp.eq.f32.partialorder %v6204, inf
    %v6289 = vsel %vm6288, %v6204, %v6287
    %vm6290 = vcmp.eq.f32.partialorder %v6204, 0.0
    %v6291 = vand.u32 %v6204, 2147483648
    %v6292 = vsel %vm6290, %v6291, %v6289
    %v6293 = vrsqrt.pop %v6205
    %v6294 = vmul.f32 %v6205, %v6293
    %vm6295 = vcmp.eq.f32.partialorder %v6205, inf
    %v6296 = vsel %vm6295, %v6205, %v6294
    %vm6297 = vcmp.eq.f32.partialorder %v6205, 0.0
    %v6298 = vand.u32 %v6205, 2147483648
    %v6299 = vsel %vm6297, %v6298, %v6296
    %v6300 = vrsqrt.pop %v6206
    %v6301 = vmul.f32 %v6206, %v6300
    %vm6302 = vcmp.eq.f32.partialorder %v6206, inf
    %v6303 = vsel %vm6302, %v6206, %v6301
    %vm6304 = vcmp.eq.f32.partialorder %v6206, 0.0
    %v6305 = vand.u32 %v6206, 2147483648
    %v6306 = vsel %vm6304, %v6305, %v6303
    %v6307 = vrsqrt.pop %v6207
    %v6308 = vmul.f32 %v6207, %v6307
    %vm6309 = vcmp.eq.f32.partialorder %v6207, inf
    %v6310 = vsel %vm6309, %v6207, %v6308
    %vm6311 = vcmp.eq.f32.partialorder %v6207, 0.0
    %v6312 = vand.u32 %v6207, 2147483648
    %v6313 = vsel %vm6311, %v6312, %v6310
    %v6314 = vrsqrt.pop %v6208
    %v6315 = vmul.f32 %v6208, %v6314
    %vm6316 = vcmp.eq.f32.partialorder %v6208, inf
    %v6317 = vsel %vm6316, %v6208, %v6315
    %vm6318 = vcmp.eq.f32.partialorder %v6208, 0.0
    %v6319 = vand.u32 %v6208, 2147483648
    %v6320 = vsel %vm6318, %v6319, %v6317
    %v6321 = vrsqrt.pop %v6209
    %v6322 = vmul.f32 %v6209, %v6321
    %vm6323 = vcmp.eq.f32.partialorder %v6209, inf
    %v6324 = vsel %vm6323, %v6209, %v6322
    %vm6325 = vcmp.eq.f32.partialorder %v6209, 0.0
    %v6326 = vand.u32 %v6209, 2147483648
    %v6327 = vsel %vm6325, %v6326, %v6324
    %v6328 = vrsqrt.pop %v6210
    %v6329 = vmul.f32 %v6210, %v6328
    %vm6330 = vcmp.eq.f32.partialorder %v6210, inf
    %v6331 = vsel %vm6330, %v6210, %v6329
    %vm6332 = vcmp.eq.f32.partialorder %v6210, 0.0
    %v6333 = vand.u32 %v6210, 2147483648
    %v6334 = vsel %vm6332, %v6333, %v6331
    %v6335 = vrsqrt.pop %v6211
    %v6336 = vmul.f32 %v6211, %v6335
    %vm6337 = vcmp.eq.f32.partialorder %v6211, inf
    %v6338 = vsel %vm6337, %v6211, %v6336
    %vm6339 = vcmp.eq.f32.partialorder %v6211, 0.0
    %v6340 = vand.u32 %v6211, 2147483648
    %v6341 = vsel %vm6339, %v6340, %v6338
    %v6342 = vrsqrt.pop %v6212
    %v6343 = vmul.f32 %v6212, %v6342
    %vm6344 = vcmp.eq.f32.partialorder %v6212, inf
    %v6345 = vsel %vm6344, %v6212, %v6343
    %vm6346 = vcmp.eq.f32.partialorder %v6212, 0.0
    %v6347 = vand.u32 %v6212, 2147483648
    %v6348 = vsel %vm6346, %v6347, %v6345
    %v6349 = vrsqrt.pop %v6213
    %v6350 = vmul.f32 %v6213, %v6349
    %vm6351 = vcmp.eq.f32.partialorder %v6213, inf
    %v6352 = vsel %vm6351, %v6213, %v6350
    %vm6353 = vcmp.eq.f32.partialorder %v6213, 0.0
    %v6354 = vand.u32 %v6213, 2147483648
    %v6355 = vsel %vm6353, %v6354, %v6352
    %v6356 = vrsqrt.pop %v6214
    %v6357 = vmul.f32 %v6214, %v6356
    %vm6358 = vcmp.eq.f32.partialorder %v6214, inf
    %v6359 = vsel %vm6358, %v6214, %v6357
    %vm6360 = vcmp.eq.f32.partialorder %v6214, 0.0
    %v6361 = vand.u32 %v6214, 2147483648
    %v6362 = vsel %vm6360, %v6361, %v6359
    %v6363 = vrsqrt.pop %v6215
    %v6364 = vmul.f32 %v6215, %v6363
    %vm6365 = vcmp.eq.f32.partialorder %v6215, inf
    %v6366 = vsel %vm6365, %v6215, %v6364
    %vm6367 = vcmp.eq.f32.partialorder %v6215, 0.0
    %v6368 = vand.u32 %v6215, 2147483648
    %v6369 = vsel %vm6367, %v6368, %v6366
    %v6370 = vrsqrt.pop %v6216
    %v6371 = vmul.f32 %v6216, %v6370
    %vm6372 = vcmp.eq.f32.partialorder %v6216, inf
    %v6373 = vsel %vm6372, %v6216, %v6371
    %vm6374 = vcmp.eq.f32.partialorder %v6216, 0.0
    %v6375 = vand.u32 %v6216, 2147483648
    %v6376 = vsel %vm6374, %v6375, %v6373
    %v6377 = vrsqrt.pop %v6217
    %v6378 = vmul.f32 %v6217, %v6377
    %vm6379 = vcmp.eq.f32.partialorder %v6217, inf
    %v6380 = vsel %vm6379, %v6217, %v6378
    %vm6381 = vcmp.eq.f32.partialorder %v6217, 0.0
    %v6382 = vand.u32 %v6217, 2147483648
    %v6383 = vsel %vm6381, %v6382, %v6380
    %v6384 = vrsqrt.pop %v6218
    %v6385 = vmul.f32 %v6218, %v6384
    %vm6386 = vcmp.eq.f32.partialorder %v6218, inf
    %v6387 = vsel %vm6386, %v6218, %v6385
    %vm6388 = vcmp.eq.f32.partialorder %v6218, 0.0
    %v6389 = vand.u32 %v6218, 2147483648
    %v6390 = vsel %vm6388, %v6389, %v6387
    %v6391 = vrsqrt.pop %v6219
    %v6392 = vmul.f32 %v6219, %v6391
    %vm6393 = vcmp.eq.f32.partialorder %v6219, inf
    %v6394 = vsel %vm6393, %v6219, %v6392
    %vm6395 = vcmp.eq.f32.partialorder %v6219, 0.0
    %v6396 = vand.u32 %v6219, 2147483648
    %v6397 = vsel %vm6395, %v6396, %v6394
    %v6398 = vrsqrt.pop %v6220
    %v6399 = vmul.f32 %v6220, %v6398
    %vm6400 = vcmp.eq.f32.partialorder %v6220, inf
    %v6401 = vsel %vm6400, %v6220, %v6399
    %vm6402 = vcmp.eq.f32.partialorder %v6220, 0.0
    %v6403 = vand.u32 %v6220, 2147483648
    %v6404 = vsel %vm6402, %v6403, %v6401
    %v6405 = vrsqrt.pop %v6221
    %v6406 = vmul.f32 %v6221, %v6405
    %vm6407 = vcmp.eq.f32.partialorder %v6221, inf
    %v6408 = vsel %vm6407, %v6221, %v6406
    %vm6409 = vcmp.eq.f32.partialorder %v6221, 0.0
    %v6410 = vand.u32 %v6221, 2147483648
    %v6411 = vsel %vm6409, %v6410, %v6408
    %v6412 = vrsqrt.pop %v6222
    %v6413 = vmul.f32 %v6222, %v6412
    %vm6414 = vcmp.eq.f32.partialorder %v6222, inf
    %v6415 = vsel %vm6414, %v6222, %v6413
    %vm6416 = vcmp.eq.f32.partialorder %v6222, 0.0
    %v6417 = vand.u32 %v6222, 2147483648
    %v6418 = vsel %vm6416, %v6417, %v6415
    %v6419 = vrsqrt.pop %v6223
    %v6420 = vmul.f32 %v6223, %v6419
    %vm6421 = vcmp.eq.f32.partialorder %v6223, inf
    %v6422 = vsel %vm6421, %v6223, %v6420
    %vm6423 = vcmp.eq.f32.partialorder %v6223, 0.0
    %v6424 = vand.u32 %v6223, 2147483648
    %v6425 = vsel %vm6423, %v6424, %v6422
    %v6426 = vrsqrt.pop %v6224
    %v6427 = vmul.f32 %v6224, %v6426
    %vm6428 = vcmp.eq.f32.partialorder %v6224, inf
    %v6429 = vsel %vm6428, %v6224, %v6427
    %vm6430 = vcmp.eq.f32.partialorder %v6224, 0.0
    %v6431 = vand.u32 %v6224, 2147483648
    %v6432 = vsel %vm6430, %v6431, %v6429
    %v6433 = vrsqrt.pop %v6225
    %v6434 = vmul.f32 %v6225, %v6433
    %vm6435 = vcmp.eq.f32.partialorder %v6225, inf
    %v6436 = vsel %vm6435, %v6225, %v6434
    %vm6437 = vcmp.eq.f32.partialorder %v6225, 0.0
    %v6438 = vand.u32 %v6225, 2147483648
    %v6439 = vsel %vm6437, %v6438, %v6436
    %v6440 = vrsqrt.pop %v6226
    %v6441 = vmul.f32 %v6226, %v6440
    %vm6442 = vcmp.eq.f32.partialorder %v6226, inf
    %v6443 = vsel %vm6442, %v6226, %v6441
    %vm6444 = vcmp.eq.f32.partialorder %v6226, 0.0
    %v6445 = vand.u32 %v6226, 2147483648
    %v6446 = vsel %vm6444, %v6445, %v6443
    %v6447 = vrsqrt.pop %v6227
    %v6448 = vmul.f32 %v6227, %v6447
    %vm6449 = vcmp.eq.f32.partialorder %v6227, inf
    %v6450 = vsel %vm6449, %v6227, %v6448
    %vm6451 = vcmp.eq.f32.partialorder %v6227, 0.0
    %v6452 = vand.u32 %v6227, 2147483648
    %v6453 = vsel %vm6451, %v6452, %v6450
    %v6454 = vrsqrt.pop %v6228
    %v6455 = vmul.f32 %v6228, %v6454
    %vm6456 = vcmp.eq.f32.partialorder %v6228, inf
    %v6457 = vsel %vm6456, %v6228, %v6455
    %vm6458 = vcmp.eq.f32.partialorder %v6228, 0.0
    %v6459 = vand.u32 %v6228, 2147483648
    %v6460 = vsel %vm6458, %v6459, %v6457
    %v6461 = vrsqrt.pop %v6229
    %v6462 = vmul.f32 %v6229, %v6461
    %vm6463 = vcmp.eq.f32.partialorder %v6229, inf
    %v6464 = vsel %vm6463, %v6229, %v6462
    %vm6465 = vcmp.eq.f32.partialorder %v6229, 0.0
    %v6466 = vand.u32 %v6229, 2147483648
    %v6467 = vsel %vm6465, %v6466, %v6464
    %v6468 = vrsqrt.pop %v6230
    %v6469 = vmul.f32 %v6230, %v6468
    %vm6470 = vcmp.eq.f32.partialorder %v6230, inf
    %v6471 = vsel %vm6470, %v6230, %v6469
    %vm6472 = vcmp.eq.f32.partialorder %v6230, 0.0
    %v6473 = vand.u32 %v6230, 2147483648
    %v6474 = vsel %vm6472, %v6473, %v6471
    %v6475 = vrsqrt.pop %v6231
    %v6476 = vmul.f32 %v6231, %v6475
    %vm6477 = vcmp.eq.f32.partialorder %v6231, inf
    %v6478 = vsel %vm6477, %v6231, %v6476
    %vm6479 = vcmp.eq.f32.partialorder %v6231, 0.0
    %v6480 = vand.u32 %v6231, 2147483648
    %v6481 = vsel %vm6479, %v6480, %v6478
    %v6482 = vrsqrt.pop %v6232
    %v6483 = vmul.f32 %v6232, %v6482
    %vm6484 = vcmp.eq.f32.partialorder %v6232, inf
    %v6485 = vsel %vm6484, %v6232, %v6483
    %vm6486 = vcmp.eq.f32.partialorder %v6232, 0.0
    %v6487 = vand.u32 %v6232, 2147483648
    %v6488 = vsel %vm6486, %v6487, %v6485
    %v6489 = vrsqrt.pop %v6233
    %v6490 = vmul.f32 %v6233, %v6489
    %vm6491 = vcmp.eq.f32.partialorder %v6233, inf
    %v6492 = vsel %vm6491, %v6233, %v6490
    %vm6493 = vcmp.eq.f32.partialorder %v6233, 0.0
    %v6494 = vand.u32 %v6233, 2147483648
    %v6495 = vsel %vm6493, %v6494, %v6492
    %v6496 = vrsqrt.pop %v6234
    %v6497 = vmul.f32 %v6234, %v6496
    %vm6498 = vcmp.eq.f32.partialorder %v6234, inf
    %v6499 = vsel %vm6498, %v6234, %v6497
    %vm6500 = vcmp.eq.f32.partialorder %v6234, 0.0
    %v6501 = vand.u32 %v6234, 2147483648
    %v6502 = vsel %vm6500, %v6501, %v6499
    %v6503 = vrsqrt.pop %v6235
    %v6504 = vmul.f32 %v6235, %v6503
    %vm6505 = vcmp.eq.f32.partialorder %v6235, inf
    %v6506 = vsel %vm6505, %v6235, %v6504
    %vm6507 = vcmp.eq.f32.partialorder %v6235, 0.0
    %v6508 = vand.u32 %v6235, 2147483648
    %v6509 = vsel %vm6507, %v6508, %v6506
    %v6510 = vrsqrt.pop %v6236
    %v6511 = vmul.f32 %v6236, %v6510
    %vm6512 = vcmp.eq.f32.partialorder %v6236, inf
    %v6513 = vsel %vm6512, %v6236, %v6511
    %vm6514 = vcmp.eq.f32.partialorder %v6236, 0.0
    %v6515 = vand.u32 %v6236, 2147483648
    %v6516 = vsel %vm6514, %v6515, %v6513
    %v6517 = vrsqrt.pop %v6237
    %v6518 = vmul.f32 %v6237, %v6517
    %vm6519 = vcmp.eq.f32.partialorder %v6237, inf
    %v6520 = vsel %vm6519, %v6237, %v6518
    %vm6521 = vcmp.eq.f32.partialorder %v6237, 0.0
    %v6522 = vand.u32 %v6237, 2147483648
    %v6523 = vsel %vm6521, %v6522, %v6520
    %v6524 = vrsqrt.pop %v6238
    %v6525 = vmul.f32 %v6238, %v6524
    %vm6526 = vcmp.eq.f32.partialorder %v6238, inf
    %v6527 = vsel %vm6526, %v6238, %v6525
    %vm6528 = vcmp.eq.f32.partialorder %v6238, 0.0
    %v6529 = vand.u32 %v6238, 2147483648
    %v6530 = vsel %vm6528, %v6529, %v6527
    %v6531 = vrsqrt.pop %v6239
    %v6532 = vmul.f32 %v6239, %v6531
    %vm6533 = vcmp.eq.f32.partialorder %v6239, inf
    %v6534 = vsel %vm6533, %v6239, %v6532
    %vm6535 = vcmp.eq.f32.partialorder %v6239, 0.0
    %v6536 = vand.u32 %v6239, 2147483648
    %v6537 = vsel %vm6535, %v6536, %v6534
    %v6538 = vrsqrt.pop %v6240
    %v6539 = vmul.f32 %v6240, %v6538
    %vm6540 = vcmp.eq.f32.partialorder %v6240, inf
    %v6541 = vsel %vm6540, %v6240, %v6539
    %vm6542 = vcmp.eq.f32.partialorder %v6240, 0.0
    %v6543 = vand.u32 %v6240, 2147483648
    %v6544 = vsel %vm6542, %v6543, %v6541
    %v6545 = vrsqrt.pop %v6241
    %v6546 = vmul.f32 %v6241, %v6545
    %vm6547 = vcmp.eq.f32.partialorder %v6241, inf
    %v6548 = vsel %vm6547, %v6241, %v6546
    %vm6549 = vcmp.eq.f32.partialorder %v6241, 0.0
    %v6550 = vand.u32 %v6241, 2147483648
    %v6551 = vsel %vm6549, %v6550, %v6548
    %v6552 = vrsqrt.pop %v6242
    %v6553 = vmul.f32 %v6242, %v6552
    %vm6554 = vcmp.eq.f32.partialorder %v6242, inf
    %v6555 = vsel %vm6554, %v6242, %v6553
    %vm6556 = vcmp.eq.f32.partialorder %v6242, 0.0
    %v6557 = vand.u32 %v6242, 2147483648
    %v6558 = vsel %vm6556, %v6557, %v6555
    %v6559 = vrsqrt.pop %v6243
    %v6560 = vmul.f32 %v6243, %v6559
    %vm6561 = vcmp.eq.f32.partialorder %v6243, inf
    %v6562 = vsel %vm6561, %v6243, %v6560
    %vm6563 = vcmp.eq.f32.partialorder %v6243, 0.0
    %v6564 = vand.u32 %v6243, 2147483648
    %v6565 = vsel %vm6563, %v6564, %v6562
    %v6566 = vrsqrt.pop %v6244
    %v6567 = vmul.f32 %v6244, %v6566
    %vm6568 = vcmp.eq.f32.partialorder %v6244, inf
    %v6569 = vsel %vm6568, %v6244, %v6567
    %vm6570 = vcmp.eq.f32.partialorder %v6244, 0.0
    %v6571 = vand.u32 %v6244, 2147483648
    %v6572 = vsel %vm6570, %v6571, %v6569
    %v6573 = vrsqrt.pop %v6245
    %v6574 = vmul.f32 %v6245, %v6573
    %vm6575 = vcmp.eq.f32.partialorder %v6245, inf
    %v6576 = vsel %vm6575, %v6245, %v6574
    %vm6577 = vcmp.eq.f32.partialorder %v6245, 0.0
    %v6578 = vand.u32 %v6245, 2147483648
    %v6579 = vsel %vm6577, %v6578, %v6576
    %v6580 = vrsqrt.pop %v6246
    %v6581 = vmul.f32 %v6246, %v6580
    %vm6582 = vcmp.eq.f32.partialorder %v6246, inf
    %v6583 = vsel %vm6582, %v6246, %v6581
    %vm6584 = vcmp.eq.f32.partialorder %v6246, 0.0
    %v6585 = vand.u32 %v6246, 2147483648
    %v6586 = vsel %vm6584, %v6585, %v6583
    %v6587 = vrsqrt.pop %v6247
    %v6588 = vmul.f32 %v6247, %v6587
    %vm6589 = vcmp.eq.f32.partialorder %v6247, inf
    %v6590 = vsel %vm6589, %v6247, %v6588
    %vm6591 = vcmp.eq.f32.partialorder %v6247, 0.0
    %v6592 = vand.u32 %v6247, 2147483648
    %v6593 = vsel %vm6591, %v6592, %v6590
    %v6594 = vrsqrt.pop %v6248
    %v6595 = vmul.f32 %v6248, %v6594
    %vm6596 = vcmp.eq.f32.partialorder %v6248, inf
    %v6597 = vsel %vm6596, %v6248, %v6595
    %vm6598 = vcmp.eq.f32.partialorder %v6248, 0.0
    %v6599 = vand.u32 %v6248, 2147483648
    %v6600 = vsel %vm6598, %v6599, %v6597
    %v6601 = vrsqrt.pop %v6249
    %v6602 = vmul.f32 %v6249, %v6601
    %vm6603 = vcmp.eq.f32.partialorder %v6249, inf
    %v6604 = vsel %vm6603, %v6249, %v6602
    %vm6605 = vcmp.eq.f32.partialorder %v6249, 0.0
    %v6606 = vand.u32 %v6249, 2147483648
    %v6607 = vsel %vm6605, %v6606, %v6604
    %v6608 = vrsqrt.pop %v6250
    %v6609 = vmul.f32 %v6250, %v6608
    %vm6610 = vcmp.eq.f32.partialorder %v6250, inf
    %v6611 = vsel %vm6610, %v6250, %v6609
    %vm6612 = vcmp.eq.f32.partialorder %v6250, 0.0
    %v6613 = vand.u32 %v6250, 2147483648
    %v6614 = vsel %vm6612, %v6613, %v6611
    %v6615 = vrsqrt.pop %v6251
    %v6616 = vmul.f32 %v6251, %v6615
    %vm6617 = vcmp.eq.f32.partialorder %v6251, inf
    %v6618 = vsel %vm6617, %v6251, %v6616
    %vm6619 = vcmp.eq.f32.partialorder %v6251, 0.0
    %v6620 = vand.u32 %v6251, 2147483648
    %v6621 = vsel %vm6619, %v6620, %v6618
    %v6622 = vrsqrt.pop %v6252
    %v6623 = vmul.f32 %v6252, %v6622
    %vm6624 = vcmp.eq.f32.partialorder %v6252, inf
    %v6625 = vsel %vm6624, %v6252, %v6623
    %vm6626 = vcmp.eq.f32.partialorder %v6252, 0.0
    %v6627 = vand.u32 %v6252, 2147483648
    %v6628 = vsel %vm6626, %v6627, %v6625
    %v6629 = vrsqrt.pop %v6253
    %v6630 = vmul.f32 %v6253, %v6629
    %vm6631 = vcmp.eq.f32.partialorder %v6253, inf
    %v6632 = vsel %vm6631, %v6253, %v6630
    %vm6633 = vcmp.eq.f32.partialorder %v6253, 0.0
    %v6634 = vand.u32 %v6253, 2147483648
    %v6635 = vsel %vm6633, %v6634, %v6632
    %v6636 = vrsqrt.pop %v6254
    %v6637 = vmul.f32 %v6254, %v6636
    %vm6638 = vcmp.eq.f32.partialorder %v6254, inf
    %v6639 = vsel %vm6638, %v6254, %v6637
    %vm6640 = vcmp.eq.f32.partialorder %v6254, 0.0
    %v6641 = vand.u32 %v6254, 2147483648
    %v6642 = vsel %vm6640, %v6641, %v6639
    %v6643 = vrsqrt.pop %v6255
    %v6644 = vmul.f32 %v6255, %v6643
    %vm6645 = vcmp.eq.f32.partialorder %v6255, inf
    %v6646 = vsel %vm6645, %v6255, %v6644
    %vm6647 = vcmp.eq.f32.partialorder %v6255, 0.0
    %v6648 = vand.u32 %v6255, 2147483648
    %v6649 = vsel %vm6647, %v6648, %v6646
    %v6650 = vrsqrt.pop %v6256
    %v6651 = vmul.f32 %v6256, %v6650
    %vm6652 = vcmp.eq.f32.partialorder %v6256, inf
    %v6653 = vsel %vm6652, %v6256, %v6651
    %vm6654 = vcmp.eq.f32.partialorder %v6256, 0.0
    %v6655 = vand.u32 %v6256, 2147483648
    %v6656 = vsel %vm6654, %v6655, %v6653
    %v6657 = vrsqrt.pop %v6257
    %v6658 = vmul.f32 %v6257, %v6657
    %vm6659 = vcmp.eq.f32.partialorder %v6257, inf
    %v6660 = vsel %vm6659, %v6257, %v6658
    %vm6661 = vcmp.eq.f32.partialorder %v6257, 0.0
    %v6662 = vand.u32 %v6257, 2147483648
    %v6663 = vsel %vm6661, %v6662, %v6660
    %v6664 = vrsqrt.pop %v6258
    %v6665 = vmul.f32 %v6258, %v6664
    %vm6666 = vcmp.eq.f32.partialorder %v6258, inf
    %v6667 = vsel %vm6666, %v6258, %v6665
    %vm6668 = vcmp.eq.f32.partialorder %v6258, 0.0
    %v6669 = vand.u32 %v6258, 2147483648
    %v6670 = vsel %vm6668, %v6669, %v6667
    %v6671 = vrsqrt.pop %v6259
    %v6672 = vmul.f32 %v6259, %v6671
    %vm6673 = vcmp.eq.f32.partialorder %v6259, inf
    %v6674 = vsel %vm6673, %v6259, %v6672
    %vm6675 = vcmp.eq.f32.partialorder %v6259, 0.0
    %v6676 = vand.u32 %v6259, 2147483648
    %v6677 = vsel %vm6675, %v6676, %v6674
    %v6678 = vrsqrt.pop %v6260
    %v6679 = vmul.f32 %v6260, %v6678
    %vm6680 = vcmp.eq.f32.partialorder %v6260, inf
    %v6681 = vsel %vm6680, %v6260, %v6679
    %vm6682 = vcmp.eq.f32.partialorder %v6260, 0.0
    %v6683 = vand.u32 %v6260, 2147483648
    %v6684 = vsel %vm6682, %v6683, %v6681
    %v6685 = vrsqrt.pop %v6261
    %v6686 = vmul.f32 %v6261, %v6685
    %vm6687 = vcmp.eq.f32.partialorder %v6261, inf
    %v6688 = vsel %vm6687, %v6261, %v6686
    %vm6689 = vcmp.eq.f32.partialorder %v6261, 0.0
    %v6690 = vand.u32 %v6261, 2147483648
    %v6691 = vsel %vm6689, %v6690, %v6688
    %v6692 = vrsqrt.pop %v6262
    %v6693 = vmul.f32 %v6262, %v6692
    %vm6694 = vcmp.eq.f32.partialorder %v6262, inf
    %v6695 = vsel %vm6694, %v6262, %v6693
    %vm6696 = vcmp.eq.f32.partialorder %v6262, 0.0
    %v6697 = vand.u32 %v6262, 2147483648
    %v6698 = vsel %vm6696, %v6697, %v6695
    %v6699 = vrsqrt.pop %v6263
    %v6700 = vmul.f32 %v6263, %v6699
    %vm6701 = vcmp.eq.f32.partialorder %v6263, inf
    %v6702 = vsel %vm6701, %v6263, %v6700
    %vm6703 = vcmp.eq.f32.partialorder %v6263, 0.0
    %v6704 = vand.u32 %v6263, 2147483648
    %v6705 = vsel %vm6703, %v6704, %v6702
    %v6706 = vrsqrt.pop %v6264
    %v6707 = vmul.f32 %v6264, %v6706
    %vm6708 = vcmp.eq.f32.partialorder %v6264, inf
    %v6709 = vsel %vm6708, %v6264, %v6707
    %vm6710 = vcmp.eq.f32.partialorder %v6264, 0.0
    %v6711 = vand.u32 %v6264, 2147483648
    %v6712 = vsel %vm6710, %v6711, %v6709
    %v6713 = vsub.f32 %v6271, 1.0
    %v6714 = vsub.f32 %v6278, 1.0
    %v6715 = vsub.f32 %v6285, 1.0
    %v6716 = vsub.f32 %v6292, 1.0
    %v6717 = vsub.f32 %v6299, 1.0
    %v6718 = vsub.f32 %v6306, 1.0
    %v6719 = vsub.f32 %v6313, 1.0
    %v6720 = vsub.f32 %v6320, 1.0
    %v6721 = vsub.f32 %v6327, 1.0
    %v6722 = vsub.f32 %v6334, 1.0
    %v6723 = vsub.f32 %v6341, 1.0
    %v6724 = vsub.f32 %v6348, 1.0
    %v6725 = vsub.f32 %v6355, 1.0
    %v6726 = vsub.f32 %v6362, 1.0
    %v6727 = vsub.f32 %v6369, 1.0
    %v6728 = vsub.f32 %v6376, 1.0
    %v6729 = vsub.f32 %v6383, 1.0
    %v6730 = vsub.f32 %v6390, 1.0
    %v6731 = vsub.f32 %v6397, 1.0
    %v6732 = vsub.f32 %v6404, 1.0
    %v6733 = vsub.f32 %v6411, 1.0
    %v6734 = vsub.f32 %v6418, 1.0
    %v6735 = vsub.f32 %v6425, 1.0
    %v6736 = vsub.f32 %v6432, 1.0
    %v6737 = vsub.f32 %v6439, 1.0
    %v6738 = vsub.f32 %v6446, 1.0
    %v6739 = vsub.f32 %v6453, 1.0
    %v6740 = vsub.f32 %v6460, 1.0
    %v6741 = vsub.f32 %v6467, 1.0
    %v6742 = vsub.f32 %v6474, 1.0
    %v6743 = vsub.f32 %v6481, 1.0
    %v6744 = vsub.f32 %v6488, 1.0
    %v6745 = vsub.f32 %v6495, 1.0
    %v6746 = vsub.f32 %v6502, 1.0
    %v6747 = vsub.f32 %v6509, 1.0
    %v6748 = vsub.f32 %v6516, 1.0
    %v6749 = vsub.f32 %v6523, 1.0
    %v6750 = vsub.f32 %v6530, 1.0
    %v6751 = vsub.f32 %v6537, 1.0
    %v6752 = vsub.f32 %v6544, 1.0
    %v6753 = vsub.f32 %v6551, 1.0
    %v6754 = vsub.f32 %v6558, 1.0
    %v6755 = vsub.f32 %v6565, 1.0
    %v6756 = vsub.f32 %v6572, 1.0
    %v6757 = vsub.f32 %v6579, 1.0
    %v6758 = vsub.f32 %v6586, 1.0
    %v6759 = vsub.f32 %v6593, 1.0
    %v6760 = vsub.f32 %v6600, 1.0
    %v6761 = vsub.f32 %v6607, 1.0
    %v6762 = vsub.f32 %v6614, 1.0
    %v6763 = vsub.f32 %v6621, 1.0
    %v6764 = vsub.f32 %v6628, 1.0
    %v6765 = vsub.f32 %v6635, 1.0
    %v6766 = vsub.f32 %v6642, 1.0
    %v6767 = vsub.f32 %v6649, 1.0
    %v6768 = vsub.f32 %v6656, 1.0
    %v6769 = vsub.f32 %v6663, 1.0
    %v6770 = vsub.f32 %v6670, 1.0
    %v6771 = vsub.f32 %v6677, 1.0
    %v6772 = vsub.f32 %v6684, 1.0
    %v6773 = vsub.f32 %v6691, 1.0
    %v6774 = vsub.f32 %v6698, 1.0
    %v6775 = vsub.f32 %v6705, 1.0
    %v6776 = vsub.f32 %v6712, 1.0
    %v6778 = vlaneseq
    %v6779 = vshrl.u32 %v6778, 7
    %v6780 = vsub.s32 0, %v6779
    %v6781 = vrot.slane %v6200, %v6780
    %v6782 = vlaneseq
    %v6783 = vshrl.u32 %v6782, 7
    %v6784 = vsub.s32 1, %v6783
    %v6785 = vrot.slane %v6200, %v6784
    %v6786 = vlaneseq
    %v6787 = vshrl.u32 %v6786, 7
    %v6788 = vsub.s32 2, %v6787
    %v6789 = vrot.slane %v6200, %v6788
    %v6790 = vlaneseq
    %v6791 = vshrl.u32 %v6790, 7
    %v6792 = vsub.s32 3, %v6791
    %v6793 = vrot.slane %v6200, %v6792
    %v6794 = vlaneseq
    %v6795 = vshrl.u32 %v6794, 7
    %v6796 = vsub.s32 4, %v6795
    %v6797 = vrot.slane %v6200, %v6796
    %v6798 = vlaneseq
    %v6799 = vshrl.u32 %v6798, 7
    %v6800 = vsub.s32 5, %v6799
    %v6801 = vrot.slane %v6200, %v6800
    %v6802 = vlaneseq
    %v6803 = vshrl.u32 %v6802, 7
    %v6804 = vsub.s32 6, %v6803
    %v6805 = vrot.slane %v6200, %v6804
    %v6806 = vlaneseq
    %v6807 = vshrl.u32 %v6806, 7
    %v6808 = vsub.s32 7, %v6807
    %v6809 = vrot.slane %v6200, %v6808
    %v6818 = vmul.f32 %v6781, %v6713
    %v6819 = vmul.f32 %v6785, %v6714
    %v6820 = vmul.f32 %v6789, %v6715
    %v6821 = vmul.f32 %v6793, %v6716
    %v6822 = vmul.f32 %v6797, %v6717
    %v6823 = vmul.f32 %v6801, %v6718
    %v6824 = vmul.f32 %v6805, %v6719
    %v6825 = vmul.f32 %v6809, %v6720
    %v6826 = vmul.f32 %v6781, %v6721
    %v6827 = vmul.f32 %v6785, %v6722
    %v6828 = vmul.f32 %v6789, %v6723
    %v6829 = vmul.f32 %v6793, %v6724
    %v6830 = vmul.f32 %v6797, %v6725
    %v6831 = vmul.f32 %v6801, %v6726
    %v6832 = vmul.f32 %v6805, %v6727
    %v6833 = vmul.f32 %v6809, %v6728
    %v6834 = vmul.f32 %v6781, %v6729
    %v6835 = vmul.f32 %v6785, %v6730
    %v6836 = vmul.f32 %v6789, %v6731
    %v6837 = vmul.f32 %v6793, %v6732
    %v6838 = vmul.f32 %v6797, %v6733
    %v6839 = vmul.f32 %v6801, %v6734
    %v6840 = vmul.f32 %v6805, %v6735
    %v6841 = vmul.f32 %v6809, %v6736
    %v6842 = vmul.f32 %v6781, %v6737
    %v6843 = vmul.f32 %v6785, %v6738
    %v6844 = vmul.f32 %v6789, %v6739
    %v6845 = vmul.f32 %v6793, %v6740
    %v6846 = vmul.f32 %v6797, %v6741
    %v6847 = vmul.f32 %v6801, %v6742
    %v6848 = vmul.f32 %v6805, %v6743
    %v6849 = vmul.f32 %v6809, %v6744
    %v6850 = vmul.f32 %v6781, %v6745
    %v6851 = vmul.f32 %v6785, %v6746
    %v6852 = vmul.f32 %v6789, %v6747
    %v6853 = vmul.f32 %v6793, %v6748
    %v6854 = vmul.f32 %v6797, %v6749
    %v6855 = vmul.f32 %v6801, %v6750
    %v6856 = vmul.f32 %v6805, %v6751
    %v6857 = vmul.f32 %v6809, %v6752
    %v6858 = vmul.f32 %v6781, %v6753
    %v6859 = vmul.f32 %v6785, %v6754
    %v6860 = vmul.f32 %v6789, %v6755
    %v6861 = vmul.f32 %v6793, %v6756
    %v6862 = vmul.f32 %v6797, %v6757
    %v6863 = vmul.f32 %v6801, %v6758
    %v6864 = vmul.f32 %v6805, %v6759
    %v6865 = vmul.f32 %v6809, %v6760
    %v6866 = vmul.f32 %v6781, %v6761
    %v6867 = vmul.f32 %v6785, %v6762
    %v6868 = vmul.f32 %v6789, %v6763
    %v6869 = vmul.f32 %v6793, %v6764
    %v6870 = vmul.f32 %v6797, %v6765
    %v6871 = vmul.f32 %v6801, %v6766
    %v6872 = vmul.f32 %v6805, %v6767
    %v6873 = vmul.f32 %v6809, %v6768
    %v6874 = vmul.f32 %v6781, %v6769
    %v6875 = vmul.f32 %v6785, %v6770
    %v6876 = vmul.f32 %v6789, %v6771
    %v6877 = vmul.f32 %v6793, %v6772
    %v6878 = vmul.f32 %v6797, %v6773
    %v6879 = vmul.f32 %v6801, %v6774
    %v6880 = vmul.f32 %v6805, %v6775
    %v6881 = vmul.f32 %v6809, %v6776
    %v6882 = vadd.f32 %v6818, 1.000001
    %v6883 = vadd.f32 %v6819, 1.000001
    %v6884 = vadd.f32 %v6820, 1.000001
    %v6885 = vadd.f32 %v6821, 1.000001
    %v6886 = vadd.f32 %v6822, 1.000001
    %v6887 = vadd.f32 %v6823, 1.000001
    %v6888 = vadd.f32 %v6824, 1.000001
    %v6889 = vadd.f32 %v6825, 1.000001
    %v6890 = vadd.f32 %v6826, 1.000001
    %v6891 = vadd.f32 %v6827, 1.000001
    %v6892 = vadd.f32 %v6828, 1.000001
    %v6893 = vadd.f32 %v6829, 1.000001
    %v6894 = vadd.f32 %v6830, 1.000001
    %v6895 = vadd.f32 %v6831, 1.000001
    %v6896 = vadd.f32 %v6832, 1.000001
    %v6897 = vadd.f32 %v6833, 1.000001
    %v6898 = vadd.f32 %v6834, 1.000001
    %v6899 = vadd.f32 %v6835, 1.000001
    %v6900 = vadd.f32 %v6836, 1.000001
    %v6901 = vadd.f32 %v6837, 1.000001
    %v6902 = vadd.f32 %v6838, 1.000001
    %v6903 = vadd.f32 %v6839, 1.000001
    %v6904 = vadd.f32 %v6840, 1.000001
    %v6905 = vadd.f32 %v6841, 1.000001
    %v6906 = vadd.f32 %v6842, 1.000001
    %v6907 = vadd.f32 %v6843, 1.000001
    %v6908 = vadd.f32 %v6844, 1.000001
    %v6909 = vadd.f32 %v6845, 1.000001
    %v6910 = vadd.f32 %v6846, 1.000001
    %v6911 = vadd.f32 %v6847, 1.000001
    %v6912 = vadd.f32 %v6848, 1.000001
    %v6913 = vadd.f32 %v6849, 1.000001
    %v6914 = vadd.f32 %v6850, 1.000001
    %v6915 = vadd.f32 %v6851, 1.000001
    %v6916 = vadd.f32 %v6852, 1.000001
    %v6917 = vadd.f32 %v6853, 1.000001
    %v6918 = vadd.f32 %v6854, 1.000001
    %v6919 = vadd.f32 %v6855, 1.000001
    %v6920 = vadd.f32 %v6856, 1.000001
    %v6921 = vadd.f32 %v6857, 1.000001
    %v6922 = vadd.f32 %v6858, 1.000001
    %v6923 = vadd.f32 %v6859, 1.000001
    %v6924 = vadd.f32 %v6860, 1.000001
    %v6925 = vadd.f32 %v6861, 1.000001
    %v6926 = vadd.f32 %v6862, 1.000001
    %v6927 = vadd.f32 %v6863, 1.000001
    %v6928 = vadd.f32 %v6864, 1.000001
    %v6929 = vadd.f32 %v6865, 1.000001
    %v6930 = vadd.f32 %v6866, 1.000001
    %v6931 = vadd.f32 %v6867, 1.000001
    %v6932 = vadd.f32 %v6868, 1.000001
    %v6933 = vadd.f32 %v6869, 1.000001
    %v6934 = vadd.f32 %v6870, 1.000001
    %v6935 = vadd.f32 %v6871, 1.000001
    %v6936 = vadd.f32 %v6872, 1.000001
    %v6937 = vadd.f32 %v6873, 1.000001
    %v6938 = vadd.f32 %v6874, 1.000001
    %v6939 = vadd.f32 %v6875, 1.000001
    %v6940 = vadd.f32 %v6876, 1.000001
    %v6941 = vadd.f32 %v6877, 1.000001
    %v6942 = vadd.f32 %v6878, 1.000001
    %v6943 = vadd.f32 %v6879, 1.000001
    %v6944 = vadd.f32 %v6880, 1.000001
    %v6945 = vadd.f32 %v6881, 1.000001
    %v6946 = vrcp.pop %v6882
    %v6947 = vrcp.pop %v6883
    %v6948 = vrcp.pop %v6884
    %v6949 = vrcp.pop %v6885
    %v6950 = vrcp.pop %v6886
    %v6951 = vrcp.pop %v6887
    %v6952 = vrcp.pop %v6888
    %v6953 = vrcp.pop %v6889
    %v6954 = vrcp.pop %v6890
    %v6955 = vrcp.pop %v6891
    %v6956 = vrcp.pop %v6892
    %v6957 = vrcp.pop %v6893
    %v6958 = vrcp.pop %v6894
    %v6959 = vrcp.pop %v6895
    %v6960 = vrcp.pop %v6896
    %v6961 = vrcp.pop %v6897
    %v6962 = vrcp.pop %v6898
    %v6963 = vrcp.pop %v6899
    %v6964 = vrcp.pop %v6900
    %v6965 = vrcp.pop %v6901
    %v6966 = vrcp.pop %v6902
    %v6967 = vrcp.pop %v6903
    %v6968 = vrcp.pop %v6904
    %v6969 = vrcp.pop %v6905
    %v6970 = vrcp.pop %v6906
    %v6971 = vrcp.pop %v6907
    %v6972 = vrcp.pop %v6908
    %v6973 = vrcp.pop %v6909
    %v6974 = vrcp.pop %v6910
    %v6975 = vrcp.pop %v6911
    %v6976 = vrcp.pop %v6912
    %v6977 = vrcp.pop %v6913
    %v6978 = vrcp.pop %v6914
    %v6979 = vrcp.pop %v6915
    %v6980 = vrcp.pop %v6916
    %v6981 = vrcp.pop %v6917
    %v6982 = vrcp.pop %v6918
    %v6983 = vrcp.pop %v6919
    %v6984 = vrcp.pop %v6920
    %v6985 = vrcp.pop %v6921
    %v6986 = vrcp.pop %v6922
    %v6987 = vrcp.pop %v6923
    %v6988 = vrcp.pop %v6924
    %v6989 = vrcp.pop %v6925
    %v6990 = vrcp.pop %v6926
    %v6991 = vrcp.pop %v6927
    %v6992 = vrcp.pop %v6928
    %v6993 = vrcp.pop %v6929
    %v6994 = vrcp.pop %v6930
    %v6995 = vrcp.pop %v6931
    %v6996 = vrcp.pop %v6932
    %v6997 = vrcp.pop %v6933
    %v6998 = vrcp.pop %v6934
    %v6999 = vrcp.pop %v6935
    %v7000 = vrcp.pop %v6936
    %v7001 = vrcp.pop %v6937
    %v7002 = vrcp.pop %v6938
    %v7003 = vrcp.pop %v6939
    %v7004 = vrcp.pop %v6940
    %v7005 = vrcp.pop %v6941
    %v7006 = vrcp.pop %v6942
    %v7007 = vrcp.pop %v6943
    %v7008 = vrcp.pop %v6944
    %v7009 = vrcp.pop %v6945
    %v7010 = vld [vmem:[#allocation18] sm:$0xff]
    %v7011 = vld [vmem:[#allocation18 + $0x8] sm:$0xff]
    %v7012 = vld [vmem:[#allocation18 + $0x10] sm:$0xff]
    %v7013 = vld [vmem:[#allocation18 + $0x18] sm:$0xff]
    %v7014 = vld [vmem:[#allocation18 + $0x20] sm:$0xff]
    %v7015 = vld [vmem:[#allocation18 + $0x28] sm:$0xff]
    %v7016 = vld [vmem:[#allocation18 + $0x30] sm:$0xff]
    %v7017 = vld [vmem:[#allocation18 + $0x38] sm:$0xff]
    %v7018 = vld [vmem:[#allocation18 + $0x40] sm:$0xff]
    %v7019 = vld [vmem:[#allocation18 + $0x48] sm:$0xff]
    %v7020 = vld [vmem:[#allocation18 + $0x50] sm:$0xff]
    %v7021 = vld [vmem:[#allocation18 + $0x58] sm:$0xff]
    %v7022 = vld [vmem:[#allocation18 + $0x60] sm:$0xff]
    %v7023 = vld [vmem:[#allocation18 + $0x68] sm:$0xff]
    %v7024 = vld [vmem:[#allocation18 + $0x70] sm:$0xff]
    %v7025 = vld [vmem:[#allocation18 + $0x78] sm:$0xff]
    %v7026 = vld [vmem:[#allocation18 + $0x80] sm:$0xff]
    %v7027 = vld [vmem:[#allocation18 + $0x88] sm:$0xff]
    %v7028 = vld [vmem:[#allocation18 + $0x90] sm:$0xff]
    %v7029 = vld [vmem:[#allocation18 + $0x98] sm:$0xff]
    %v7030 = vld [vmem:[#allocation18 + $0xa0] sm:$0xff]
    %v7031 = vld [vmem:[#allocation18 + $0xa8] sm:$0xff]
    %v7032 = vld [vmem:[#allocation18 + $0xb0] sm:$0xff]
    %v7033 = vld [vmem:[#allocation18 + $0xb8] sm:$0xff]
    %v7034 = vld [vmem:[#allocation18 + $0xc0] sm:$0xff]
    %v7035 = vld [vmem:[#allocation18 + $0xc8] sm:$0xff]
    %v7036 = vld [vmem:[#allocation18 + $0xd0] sm:$0xff]
    %v7037 = vld [vmem:[#allocation18 + $0xd8] sm:$0xff]
    %v7038 = vld [vmem:[#allocation18 + $0xe0] sm:$0xff]
    %v7039 = vld [vmem:[#allocation18 + $0xe8] sm:$0xff]
    %v7040 = vld [vmem:[#allocation18 + $0xf0] sm:$0xff]
    %v7041 = vld [vmem:[#allocation18 + $0xf8] sm:$0xff]
    %v7042 = vld [vmem:[#allocation18 + $0x100] sm:$0xff]
    %v7043 = vld [vmem:[#allocation18 + $0x108] sm:$0xff]
    %v7044 = vld [vmem:[#allocation18 + $0x110] sm:$0xff]
    %v7045 = vld [vmem:[#allocation18 + $0x118] sm:$0xff]
    %v7046 = vld [vmem:[#allocation18 + $0x120] sm:$0xff]
    %v7047 = vld [vmem:[#allocation18 + $0x128] sm:$0xff]
    %v7048 = vld [vmem:[#allocation18 + $0x130] sm:$0xff]
    %v7049 = vld [vmem:[#allocation18 + $0x138] sm:$0xff]
    %v7050 = vld [vmem:[#allocation18 + $0x140] sm:$0xff]
    %v7051 = vld [vmem:[#allocation18 + $0x148] sm:$0xff]
    %v7052 = vld [vmem:[#allocation18 + $0x150] sm:$0xff]
    %v7053 = vld [vmem:[#allocation18 + $0x158] sm:$0xff]
    %v7054 = vld [vmem:[#allocation18 + $0x160] sm:$0xff]
    %v7055 = vld [vmem:[#allocation18 + $0x168] sm:$0xff]
    %v7056 = vld [vmem:[#allocation18 + $0x170] sm:$0xff]
    %v7057 = vld [vmem:[#allocation18 + $0x178] sm:$0xff]
    %v7058 = vld [vmem:[#allocation18 + $0x180] sm:$0xff]
    %v7059 = vld [vmem:[#allocation18 + $0x188] sm:$0xff]
    %v7060 = vld [vmem:[#allocation18 + $0x190] sm:$0xff]
    %v7061 = vld [vmem:[#allocation18 + $0x198] sm:$0xff]
    %v7062 = vld [vmem:[#allocation18 + $0x1a0] sm:$0xff]
    %v7063 = vld [vmem:[#allocation18 + $0x1a8] sm:$0xff]
    %v7064 = vld [vmem:[#allocation18 + $0x1b0] sm:$0xff]
    %v7065 = vld [vmem:[#allocation18 + $0x1b8] sm:$0xff]
    %v7066 = vld [vmem:[#allocation18 + $0x1c0] sm:$0xff]
    %v7067 = vld [vmem:[#allocation18 + $0x1c8] sm:$0xff]
    %v7068 = vld [vmem:[#allocation18 + $0x1d0] sm:$0xff]
    %v7069 = vld [vmem:[#allocation18 + $0x1d8] sm:$0xff]
    %v7070 = vld [vmem:[#allocation18 + $0x1e0] sm:$0xff]
    %v7071 = vld [vmem:[#allocation18 + $0x1e8] sm:$0xff]
    %v7072 = vld [vmem:[#allocation18 + $0x1f0] sm:$0xff]
    %v7073 = vld [vmem:[#allocation18 + $0x1f8] sm:$0xff]
    %v7074 = vld [vmem:[#allocation18 + $0x200] sm:$0xff]
    %v7075 = vld [vmem:[#allocation18 + $0x208] sm:$0xff]
    %v7076 = vld [vmem:[#allocation18 + $0x210] sm:$0xff]
    %v7077 = vld [vmem:[#allocation18 + $0x218] sm:$0xff]
    %v7078 = vld [vmem:[#allocation18 + $0x220] sm:$0xff]
    %v7079 = vld [vmem:[#allocation18 + $0x228] sm:$0xff]
    %v7080 = vld [vmem:[#allocation18 + $0x230] sm:$0xff]
    %v7081 = vld [vmem:[#allocation18 + $0x238] sm:$0xff]
    %v7082 = vld [vmem:[#allocation18 + $0x240] sm:$0xff]
    %v7083 = vld [vmem:[#allocation18 + $0x248] sm:$0xff]
    %v7084 = vld [vmem:[#allocation18 + $0x250] sm:$0xff]
    %v7085 = vld [vmem:[#allocation18 + $0x258] sm:$0xff]
    %v7086 = vld [vmem:[#allocation18 + $0x260] sm:$0xff]
    %v7087 = vld [vmem:[#allocation18 + $0x268] sm:$0xff]
    %v7088 = vld [vmem:[#allocation18 + $0x270] sm:$0xff]
    %v7089 = vld [vmem:[#allocation18 + $0x278] sm:$0xff]
    %v7090 = vld [vmem:[#allocation18 + $0x280] sm:$0xff]
    %v7091 = vld [vmem:[#allocation18 + $0x288] sm:$0xff]
    %v7092 = vld [vmem:[#allocation18 + $0x290] sm:$0xff]
    %v7093 = vld [vmem:[#allocation18 + $0x298] sm:$0xff]
    %v7094 = vld [vmem:[#allocation18 + $0x2a0] sm:$0xff]
    %v7095 = vld [vmem:[#allocation18 + $0x2a8] sm:$0xff]
    %v7096 = vld [vmem:[#allocation18 + $0x2b0] sm:$0xff]
    %v7097 = vld [vmem:[#allocation18 + $0x2b8] sm:$0xff]
    %v7098 = vld [vmem:[#allocation18 + $0x2c0] sm:$0xff]
    %v7099 = vld [vmem:[#allocation18 + $0x2c8] sm:$0xff]
    %v7100 = vld [vmem:[#allocation18 + $0x2d0] sm:$0xff]
    %v7101 = vld [vmem:[#allocation18 + $0x2d8] sm:$0xff]
    %v7102 = vld [vmem:[#allocation18 + $0x2e0] sm:$0xff]
    %v7103 = vld [vmem:[#allocation18 + $0x2e8] sm:$0xff]
    %v7104 = vld [vmem:[#allocation18 + $0x2f0] sm:$0xff]
    %v7105 = vld [vmem:[#allocation18 + $0x2f8] sm:$0xff]
    %v7106 = vld [vmem:[#allocation18 + $0x300] sm:$0xff]
    %v7107 = vld [vmem:[#allocation18 + $0x308] sm:$0xff]
    %v7108 = vld [vmem:[#allocation18 + $0x310] sm:$0xff]
    %v7109 = vld [vmem:[#allocation18 + $0x318] sm:$0xff]
    %v7110 = vld [vmem:[#allocation18 + $0x320] sm:$0xff]
    %v7111 = vld [vmem:[#allocation18 + $0x328] sm:$0xff]
    %v7112 = vld [vmem:[#allocation18 + $0x330] sm:$0xff]
    %v7113 = vld [vmem:[#allocation18 + $0x338] sm:$0xff]
    %v7114 = vld [vmem:[#allocation18 + $0x340] sm:$0xff]
    %v7115 = vld [vmem:[#allocation18 + $0x348] sm:$0xff]
    %v7116 = vld [vmem:[#allocation18 + $0x350] sm:$0xff]
    %v7117 = vld [vmem:[#allocation18 + $0x358] sm:$0xff]
    %v7118 = vld [vmem:[#allocation18 + $0x360] sm:$0xff]
    %v7119 = vld [vmem:[#allocation18 + $0x368] sm:$0xff]
    %v7120 = vld [vmem:[#allocation18 + $0x370] sm:$0xff]
    %v7121 = vld [vmem:[#allocation18 + $0x378] sm:$0xff]
    %v7122 = vld [vmem:[#allocation18 + $0x380] sm:$0xff]
    %v7123 = vld [vmem:[#allocation18 + $0x388] sm:$0xff]
    %v7124 = vld [vmem:[#allocation18 + $0x390] sm:$0xff]
    %v7125 = vld [vmem:[#allocation18 + $0x398] sm:$0xff]
    %v7126 = vld [vmem:[#allocation18 + $0x3a0] sm:$0xff]
    %v7127 = vld [vmem:[#allocation18 + $0x3a8] sm:$0xff]
    %v7128 = vld [vmem:[#allocation18 + $0x3b0] sm:$0xff]
    %v7129 = vld [vmem:[#allocation18 + $0x3b8] sm:$0xff]
    %v7130 = vld [vmem:[#allocation18 + $0x3c0] sm:$0xff]
    %v7131 = vld [vmem:[#allocation18 + $0x3c8] sm:$0xff]
    %v7132 = vld [vmem:[#allocation18 + $0x3d0] sm:$0xff]
    %v7133 = vld [vmem:[#allocation18 + $0x3d8] sm:$0xff]
    %v7134 = vld [vmem:[#allocation18 + $0x3e0] sm:$0xff]
    %v7135 = vld [vmem:[#allocation18 + $0x3e8] sm:$0xff]
    %v7136 = vld [vmem:[#allocation18 + $0x3f0] sm:$0xff]
    %v7137 = vld [vmem:[#allocation18 + $0x3f8] sm:$0xff]
    %v7138 = vld [vmem:[#allocation18 + $0x400] sm:$0xff]
    %v7139 = vld [vmem:[#allocation18 + $0x408] sm:$0xff]
    %v7140 = vld [vmem:[#allocation18 + $0x410] sm:$0xff]
    %v7141 = vld [vmem:[#allocation18 + $0x418] sm:$0xff]
    %v7142 = vld [vmem:[#allocation18 + $0x420] sm:$0xff]
    %v7143 = vld [vmem:[#allocation18 + $0x428] sm:$0xff]
    %v7144 = vld [vmem:[#allocation18 + $0x430] sm:$0xff]
    %v7145 = vld [vmem:[#allocation18 + $0x438] sm:$0xff]
    %v7146 = vld [vmem:[#allocation18 + $0x440] sm:$0xff]
    %v7147 = vld [vmem:[#allocation18 + $0x448] sm:$0xff]
    %v7148 = vld [vmem:[#allocation18 + $0x450] sm:$0xff]
    %v7149 = vld [vmem:[#allocation18 + $0x458] sm:$0xff]
    %v7150 = vld [vmem:[#allocation18 + $0x460] sm:$0xff]
    %v7151 = vld [vmem:[#allocation18 + $0x468] sm:$0xff]
    %v7152 = vld [vmem:[#allocation18 + $0x470] sm:$0xff]
    %v7153 = vld [vmem:[#allocation18 + $0x478] sm:$0xff]
    %v7154 = vld [vmem:[#allocation18 + $0x480] sm:$0xff]
    %v7155 = vld [vmem:[#allocation18 + $0x488] sm:$0xff]
    %v7156 = vld [vmem:[#allocation18 + $0x490] sm:$0xff]
    %v7157 = vld [vmem:[#allocation18 + $0x498] sm:$0xff]
    %v7158 = vld [vmem:[#allocation18 + $0x4a0] sm:$0xff]
    %v7159 = vld [vmem:[#allocation18 + $0x4a8] sm:$0xff]
    %v7160 = vld [vmem:[#allocation18 + $0x4b0] sm:$0xff]
    %v7161 = vld [vmem:[#allocation18 + $0x4b8] sm:$0xff]
    %v7162 = vld [vmem:[#allocation18 + $0x4c0] sm:$0xff]
    %v7163 = vld [vmem:[#allocation18 + $0x4c8] sm:$0xff]
    %v7164 = vld [vmem:[#allocation18 + $0x4d0] sm:$0xff]
    %v7165 = vld [vmem:[#allocation18 + $0x4d8] sm:$0xff]
    %v7166 = vld [vmem:[#allocation18 + $0x4e0] sm:$0xff]
    %v7167 = vld [vmem:[#allocation18 + $0x4e8] sm:$0xff]
    %v7168 = vld [vmem:[#allocation18 + $0x4f0] sm:$0xff]
    %v7169 = vld [vmem:[#allocation18 + $0x4f8] sm:$0xff]
    %v7170 = vld [vmem:[#allocation18 + $0x500] sm:$0xff]
    %v7171 = vld [vmem:[#allocation18 + $0x508] sm:$0xff]
    %v7172 = vld [vmem:[#allocation18 + $0x510] sm:$0xff]
    %v7173 = vld [vmem:[#allocation18 + $0x518] sm:$0xff]
    %v7174 = vld [vmem:[#allocation18 + $0x520] sm:$0xff]
    %v7175 = vld [vmem:[#allocation18 + $0x528] sm:$0xff]
    %v7176 = vld [vmem:[#allocation18 + $0x530] sm:$0xff]
    %v7177 = vld [vmem:[#allocation18 + $0x538] sm:$0xff]
    %v7178 = vld [vmem:[#allocation18 + $0x540] sm:$0xff]
    %v7179 = vld [vmem:[#allocation18 + $0x548] sm:$0xff]
    %v7180 = vld [vmem:[#allocation18 + $0x550] sm:$0xff]
    %v7181 = vld [vmem:[#allocation18 + $0x558] sm:$0xff]
    %v7182 = vld [vmem:[#allocation18 + $0x560] sm:$0xff]
    %v7183 = vld [vmem:[#allocation18 + $0x568] sm:$0xff]
    %v7184 = vld [vmem:[#allocation18 + $0x570] sm:$0xff]
    %v7185 = vld [vmem:[#allocation18 + $0x578] sm:$0xff]
    %v7186 = vld [vmem:[#allocation18 + $0x580] sm:$0xff]
    %v7187 = vld [vmem:[#allocation18 + $0x588] sm:$0xff]
    %v7188 = vld [vmem:[#allocation18 + $0x590] sm:$0xff]
    %v7189 = vld [vmem:[#allocation18 + $0x598] sm:$0xff]
    %v7190 = vld [vmem:[#allocation18 + $0x5a0] sm:$0xff]
    %v7191 = vld [vmem:[#allocation18 + $0x5a8] sm:$0xff]
    %v7192 = vld [vmem:[#allocation18 + $0x5b0] sm:$0xff]
    %v7193 = vld [vmem:[#allocation18 + $0x5b8] sm:$0xff]
    %v7194 = vld [vmem:[#allocation18 + $0x5c0] sm:$0xff]
    %v7195 = vld [vmem:[#allocation18 + $0x5c8] sm:$0xff]
    %v7196 = vld [vmem:[#allocation18 + $0x5d0] sm:$0xff]
    %v7197 = vld [vmem:[#allocation18 + $0x5d8] sm:$0xff]
    %v7198 = vld [vmem:[#allocation18 + $0x5e0] sm:$0xff]
    %v7199 = vld [vmem:[#allocation18 + $0x5e8] sm:$0xff]
    %v7200 = vld [vmem:[#allocation18 + $0x5f0] sm:$0xff]
    %v7201 = vld [vmem:[#allocation18 + $0x5f8] sm:$0xff]
    %v7202 = vld [vmem:[#allocation18 + $0x600] sm:$0xff]
    %v7203 = vld [vmem:[#allocation18 + $0x608] sm:$0xff]
    %v7204 = vld [vmem:[#allocation18 + $0x610] sm:$0xff]
    %v7205 = vld [vmem:[#allocation18 + $0x618] sm:$0xff]
    %v7206 = vld [vmem:[#allocation18 + $0x620] sm:$0xff]
    %v7207 = vld [vmem:[#allocation18 + $0x628] sm:$0xff]
    %v7208 = vld [vmem:[#allocation18 + $0x630] sm:$0xff]
    %v7209 = vld [vmem:[#allocation18 + $0x638] sm:$0xff]
    %v7210 = vld [vmem:[#allocation18 + $0x640] sm:$0xff]
    %v7211 = vld [vmem:[#allocation18 + $0x648] sm:$0xff]
    %v7212 = vld [vmem:[#allocation18 + $0x650] sm:$0xff]
    %v7213 = vld [vmem:[#allocation18 + $0x658] sm:$0xff]
    %v7214 = vld [vmem:[#allocation18 + $0x660] sm:$0xff]
    %v7215 = vld [vmem:[#allocation18 + $0x668] sm:$0xff]
    %v7216 = vld [vmem:[#allocation18 + $0x670] sm:$0xff]
    %v7217 = vld [vmem:[#allocation18 + $0x678] sm:$0xff]
    %v7218 = vld [vmem:[#allocation18 + $0x680] sm:$0xff]
    %v7219 = vld [vmem:[#allocation18 + $0x688] sm:$0xff]
    %v7220 = vld [vmem:[#allocation18 + $0x690] sm:$0xff]
    %v7221 = vld [vmem:[#allocation18 + $0x698] sm:$0xff]
    %v7222 = vld [vmem:[#allocation18 + $0x6a0] sm:$0xff]
    %v7223 = vld [vmem:[#allocation18 + $0x6a8] sm:$0xff]
    %v7224 = vld [vmem:[#allocation18 + $0x6b0] sm:$0xff]
    %v7225 = vld [vmem:[#allocation18 + $0x6b8] sm:$0xff]
    %v7226 = vld [vmem:[#allocation18 + $0x6c0] sm:$0xff]
    %v7227 = vld [vmem:[#allocation18 + $0x6c8] sm:$0xff]
    %v7228 = vld [vmem:[#allocation18 + $0x6d0] sm:$0xff]
    %v7229 = vld [vmem:[#allocation18 + $0x6d8] sm:$0xff]
    %v7230 = vld [vmem:[#allocation18 + $0x6e0] sm:$0xff]
    %v7231 = vld [vmem:[#allocation18 + $0x6e8] sm:$0xff]
    %v7232 = vld [vmem:[#allocation18 + $0x6f0] sm:$0xff]
    %v7233 = vld [vmem:[#allocation18 + $0x6f8] sm:$0xff]
    %v7234 = vld [vmem:[#allocation18 + $0x700] sm:$0xff]
    %v7235 = vld [vmem:[#allocation18 + $0x708] sm:$0xff]
    %v7236 = vld [vmem:[#allocation18 + $0x710] sm:$0xff]
    %v7237 = vld [vmem:[#allocation18 + $0x718] sm:$0xff]
    %v7238 = vld [vmem:[#allocation18 + $0x720] sm:$0xff]
    %v7239 = vld [vmem:[#allocation18 + $0x728] sm:$0xff]
    %v7240 = vld [vmem:[#allocation18 + $0x730] sm:$0xff]
    %v7241 = vld [vmem:[#allocation18 + $0x738] sm:$0xff]
    %v7242 = vld [vmem:[#allocation18 + $0x740] sm:$0xff]
    %v7243 = vld [vmem:[#allocation18 + $0x748] sm:$0xff]
    %v7244 = vld [vmem:[#allocation18 + $0x750] sm:$0xff]
    %v7245 = vld [vmem:[#allocation18 + $0x758] sm:$0xff]
    %v7246 = vld [vmem:[#allocation18 + $0x760] sm:$0xff]
    %v7247 = vld [vmem:[#allocation18 + $0x768] sm:$0xff]
    %v7248 = vld [vmem:[#allocation18 + $0x770] sm:$0xff]
    %v7249 = vld [vmem:[#allocation18 + $0x778] sm:$0xff]
    %v7250 = vld [vmem:[#allocation18 + $0x780] sm:$0xff]
    %v7251 = vld [vmem:[#allocation18 + $0x788] sm:$0xff]
    %v7252 = vld [vmem:[#allocation18 + $0x790] sm:$0xff]
    %v7253 = vld [vmem:[#allocation18 + $0x798] sm:$0xff]
    %v7254 = vld [vmem:[#allocation18 + $0x7a0] sm:$0xff]
    %v7255 = vld [vmem:[#allocation18 + $0x7a8] sm:$0xff]
    %v7256 = vld [vmem:[#allocation18 + $0x7b0] sm:$0xff]
    %v7257 = vld [vmem:[#allocation18 + $0x7b8] sm:$0xff]
    %v7258 = vld [vmem:[#allocation18 + $0x7c0] sm:$0xff]
    %v7259 = vld [vmem:[#allocation18 + $0x7c8] sm:$0xff]
    %v7260 = vld [vmem:[#allocation18 + $0x7d0] sm:$0xff]
    %v7261 = vld [vmem:[#allocation18 + $0x7d8] sm:$0xff]
    %v7262 = vld [vmem:[#allocation18 + $0x7e0] sm:$0xff]
    %v7263 = vld [vmem:[#allocation18 + $0x7e8] sm:$0xff]
    %v7264 = vld [vmem:[#allocation18 + $0x7f0] sm:$0xff]
    %v7265 = vld [vmem:[#allocation18 + $0x7f8] sm:$0xff]
    %v7522 = vunpack.c.l.b16 %v7010
    %v7523 = vunpack.c.h.b16 %v7010
    %v7524 = vunpack.c.l.b16 %v7011
    %v7525 = vunpack.c.h.b16 %v7011
    %v7526 = vunpack.c.l.b16 %v7012
    %v7527 = vunpack.c.h.b16 %v7012
    %v7528 = vunpack.c.l.b16 %v7013
    %v7529 = vunpack.c.h.b16 %v7013
    %v7530 = vunpack.c.l.b16 %v7014
    %v7531 = vunpack.c.h.b16 %v7014
    %v7532 = vunpack.c.l.b16 %v7015
    %v7533 = vunpack.c.h.b16 %v7015
    %v7534 = vunpack.c.l.b16 %v7016
    %v7535 = vunpack.c.h.b16 %v7016
    %v7536 = vunpack.c.l.b16 %v7017
    %v7537 = vunpack.c.h.b16 %v7017
    %v7538 = vunpack.c.l.b16 %v7018
    %v7539 = vunpack.c.h.b16 %v7018
    %v7540 = vunpack.c.l.b16 %v7019
    %v7541 = vunpack.c.h.b16 %v7019
    %v7542 = vunpack.c.l.b16 %v7020
    %v7543 = vunpack.c.h.b16 %v7020
    %v7544 = vunpack.c.l.b16 %v7021
    %v7545 = vunpack.c.h.b16 %v7021
    %v7546 = vunpack.c.l.b16 %v7022
    %v7547 = vunpack.c.h.b16 %v7022
    %v7548 = vunpack.c.l.b16 %v7023
    %v7549 = vunpack.c.h.b16 %v7023
    %v7550 = vunpack.c.l.b16 %v7024
    %v7551 = vunpack.c.h.b16 %v7024
    %v7552 = vunpack.c.l.b16 %v7025
    %v7553 = vunpack.c.h.b16 %v7025
    %v7554 = vunpack.c.l.b16 %v7026
    %v7555 = vunpack.c.h.b16 %v7026
    %v7556 = vunpack.c.l.b16 %v7027
    %v7557 = vunpack.c.h.b16 %v7027
    %v7558 = vunpack.c.l.b16 %v7028
    %v7559 = vunpack.c.h.b16 %v7028
    %v7560 = vunpack.c.l.b16 %v7029
    %v7561 = vunpack.c.h.b16 %v7029
    %v7562 = vunpack.c.l.b16 %v7030
    %v7563 = vunpack.c.h.b16 %v7030
    %v7564 = vunpack.c.l.b16 %v7031
    %v7565 = vunpack.c.h.b16 %v7031
    %v7566 = vunpack.c.l.b16 %v7032
    %v7567 = vunpack.c.h.b16 %v7032
    %v7568 = vunpack.c.l.b16 %v7033
    %v7569 = vunpack.c.h.b16 %v7033
    %v7570 = vunpack.c.l.b16 %v7034
    %v7571 = vunpack.c.h.b16 %v7034
    %v7572 = vunpack.c.l.b16 %v7035
    %v7573 = vunpack.c.h.b16 %v7035
    %v7574 = vunpack.c.l.b16 %v7036
    %v7575 = vunpack.c.h.b16 %v7036
    %v7576 = vunpack.c.l.b16 %v7037
    %v7577 = vunpack.c.h.b16 %v7037
    %v7578 = vunpack.c.l.b16 %v7038
    %v7579 = vunpack.c.h.b16 %v7038
    %v7580 = vunpack.c.l.b16 %v7039
    %v7581 = vunpack.c.h.b16 %v7039
    %v7582 = vunpack.c.l.b16 %v7040
    %v7583 = vunpack.c.h.b16 %v7040
    %v7584 = vunpack.c.l.b16 %v7041
    %v7585 = vunpack.c.h.b16 %v7041
    %v7586 = vunpack.c.l.b16 %v7042
    %v7587 = vunpack.c.h.b16 %v7042
    %v7588 = vunpack.c.l.b16 %v7043
    %v7589 = vunpack.c.h.b16 %v7043
    %v7590 = vunpack.c.l.b16 %v7044
    %v7591 = vunpack.c.h.b16 %v7044
    %v7592 = vunpack.c.l.b16 %v7045
    %v7593 = vunpack.c.h.b16 %v7045
    %v7594 = vunpack.c.l.b16 %v7046
    %v7595 = vunpack.c.h.b16 %v7046
    %v7596 = vunpack.c.l.b16 %v7047
    %v7597 = vunpack.c.h.b16 %v7047
    %v7598 = vunpack.c.l.b16 %v7048
    %v7599 = vunpack.c.h.b16 %v7048
    %v7600 = vunpack.c.l.b16 %v7049
    %v7601 = vunpack.c.h.b16 %v7049
    %v7602 = vunpack.c.l.b16 %v7050
    %v7603 = vunpack.c.h.b16 %v7050
    %v7604 = vunpack.c.l.b16 %v7051
    %v7605 = vunpack.c.h.b16 %v7051
    %v7606 = vunpack.c.l.b16 %v7052
    %v7607 = vunpack.c.h.b16 %v7052
    %v7608 = vunpack.c.l.b16 %v7053
    %v7609 = vunpack.c.h.b16 %v7053
    %v7610 = vunpack.c.l.b16 %v7054
    %v7611 = vunpack.c.h.b16 %v7054
    %v7612 = vunpack.c.l.b16 %v7055
    %v7613 = vunpack.c.h.b16 %v7055
    %v7614 = vunpack.c.l.b16 %v7056
    %v7615 = vunpack.c.h.b16 %v7056
    %v7616 = vunpack.c.l.b16 %v7057
    %v7617 = vunpack.c.h.b16 %v7057
    %v7618 = vunpack.c.l.b16 %v7058
    %v7619 = vunpack.c.h.b16 %v7058
    %v7620 = vunpack.c.l.b16 %v7059
    %v7621 = vunpack.c.h.b16 %v7059
    %v7622 = vunpack.c.l.b16 %v7060
    %v7623 = vunpack.c.h.b16 %v7060
    %v7624 = vunpack.c.l.b16 %v7061
    %v7625 = vunpack.c.h.b16 %v7061
    %v7626 = vunpack.c.l.b16 %v7062
    %v7627 = vunpack.c.h.b16 %v7062
    %v7628 = vunpack.c.l.b16 %v7063
    %v7629 = vunpack.c.h.b16 %v7063
    %v7630 = vunpack.c.l.b16 %v7064
    %v7631 = vunpack.c.h.b16 %v7064
    %v7632 = vunpack.c.l.b16 %v7065
    %v7633 = vunpack.c.h.b16 %v7065
    %v7634 = vunpack.c.l.b16 %v7066
    %v7635 = vunpack.c.h.b16 %v7066
    %v7636 = vunpack.c.l.b16 %v7067
    %v7637 = vunpack.c.h.b16 %v7067
    %v7638 = vunpack.c.l.b16 %v7068
    %v7639 = vunpack.c.h.b16 %v7068
    %v7640 = vunpack.c.l.b16 %v7069
    %v7641 = vunpack.c.h.b16 %v7069
    %v7642 = vunpack.c.l.b16 %v7070
    %v7643 = vunpack.c.h.b16 %v7070
    %v7644 = vunpack.c.l.b16 %v7071
    %v7645 = vunpack.c.h.b16 %v7071
    %v7646 = vunpack.c.l.b16 %v7072
    %v7647 = vunpack.c.h.b16 %v7072
    %v7648 = vunpack.c.l.b16 %v7073
    %v7649 = vunpack.c.h.b16 %v7073
    %v7650 = vunpack.c.l.b16 %v7074
    %v7651 = vunpack.c.h.b16 %v7074
    %v7652 = vunpack.c.l.b16 %v7075
    %v7653 = vunpack.c.h.b16 %v7075
    %v7654 = vunpack.c.l.b16 %v7076
    %v7655 = vunpack.c.h.b16 %v7076
    %v7656 = vunpack.c.l.b16 %v7077
    %v7657 = vunpack.c.h.b16 %v7077
    %v7658 = vunpack.c.l.b16 %v7078
    %v7659 = vunpack.c.h.b16 %v7078
    %v7660 = vunpack.c.l.b16 %v7079
    %v7661 = vunpack.c.h.b16 %v7079
    %v7662 = vunpack.c.l.b16 %v7080
    %v7663 = vunpack.c.h.b16 %v7080
    %v7664 = vunpack.c.l.b16 %v7081
    %v7665 = vunpack.c.h.b16 %v7081
    %v7666 = vunpack.c.l.b16 %v7082
    %v7667 = vunpack.c.h.b16 %v7082
    %v7668 = vunpack.c.l.b16 %v7083
    %v7669 = vunpack.c.h.b16 %v7083
    %v7670 = vunpack.c.l.b16 %v7084
    %v7671 = vunpack.c.h.b16 %v7084
    %v7672 = vunpack.c.l.b16 %v7085
    %v7673 = vunpack.c.h.b16 %v7085
    %v7674 = vunpack.c.l.b16 %v7086
    %v7675 = vunpack.c.h.b16 %v7086
    %v7676 = vunpack.c.l.b16 %v7087
    %v7677 = vunpack.c.h.b16 %v7087
    %v7678 = vunpack.c.l.b16 %v7088
    %v7679 = vunpack.c.h.b16 %v7088
    %v7680 = vunpack.c.l.b16 %v7089
    %v7681 = vunpack.c.h.b16 %v7089
    %v7682 = vunpack.c.l.b16 %v7090
    %v7683 = vunpack.c.h.b16 %v7090
    %v7684 = vunpack.c.l.b16 %v7091
    %v7685 = vunpack.c.h.b16 %v7091
    %v7686 = vunpack.c.l.b16 %v7092
    %v7687 = vunpack.c.h.b16 %v7092
    %v7688 = vunpack.c.l.b16 %v7093
    %v7689 = vunpack.c.h.b16 %v7093
    %v7690 = vunpack.c.l.b16 %v7094
    %v7691 = vunpack.c.h.b16 %v7094
    %v7692 = vunpack.c.l.b16 %v7095
    %v7693 = vunpack.c.h.b16 %v7095
    %v7694 = vunpack.c.l.b16 %v7096
    %v7695 = vunpack.c.h.b16 %v7096
    %v7696 = vunpack.c.l.b16 %v7097
    %v7697 = vunpack.c.h.b16 %v7097
    %v7698 = vunpack.c.l.b16 %v7098
    %v7699 = vunpack.c.h.b16 %v7098
    %v7700 = vunpack.c.l.b16 %v7099
    %v7701 = vunpack.c.h.b16 %v7099
    %v7702 = vunpack.c.l.b16 %v7100
    %v7703 = vunpack.c.h.b16 %v7100
    %v7704 = vunpack.c.l.b16 %v7101
    %v7705 = vunpack.c.h.b16 %v7101
    %v7706 = vunpack.c.l.b16 %v7102
    %v7707 = vunpack.c.h.b16 %v7102
    %v7708 = vunpack.c.l.b16 %v7103
    %v7709 = vunpack.c.h.b16 %v7103
    %v7710 = vunpack.c.l.b16 %v7104
    %v7711 = vunpack.c.h.b16 %v7104
    %v7712 = vunpack.c.l.b16 %v7105
    %v7713 = vunpack.c.h.b16 %v7105
    %v7714 = vunpack.c.l.b16 %v7106
    %v7715 = vunpack.c.h.b16 %v7106
    %v7716 = vunpack.c.l.b16 %v7107
    %v7717 = vunpack.c.h.b16 %v7107
    %v7718 = vunpack.c.l.b16 %v7108
    %v7719 = vunpack.c.h.b16 %v7108
    %v7720 = vunpack.c.l.b16 %v7109
    %v7721 = vunpack.c.h.b16 %v7109
    %v7722 = vunpack.c.l.b16 %v7110
    %v7723 = vunpack.c.h.b16 %v7110
    %v7724 = vunpack.c.l.b16 %v7111
    %v7725 = vunpack.c.h.b16 %v7111
    %v7726 = vunpack.c.l.b16 %v7112
    %v7727 = vunpack.c.h.b16 %v7112
    %v7728 = vunpack.c.l.b16 %v7113
    %v7729 = vunpack.c.h.b16 %v7113
    %v7730 = vunpack.c.l.b16 %v7114
    %v7731 = vunpack.c.h.b16 %v7114
    %v7732 = vunpack.c.l.b16 %v7115
    %v7733 = vunpack.c.h.b16 %v7115
    %v7734 = vunpack.c.l.b16 %v7116
    %v7735 = vunpack.c.h.b16 %v7116
    %v7736 = vunpack.c.l.b16 %v7117
    %v7737 = vunpack.c.h.b16 %v7117
    %v7738 = vunpack.c.l.b16 %v7118
    %v7739 = vunpack.c.h.b16 %v7118
    %v7740 = vunpack.c.l.b16 %v7119
    %v7741 = vunpack.c.h.b16 %v7119
    %v7742 = vunpack.c.l.b16 %v7120
    %v7743 = vunpack.c.h.b16 %v7120
    %v7744 = vunpack.c.l.b16 %v7121
    %v7745 = vunpack.c.h.b16 %v7121
    %v7746 = vunpack.c.l.b16 %v7122
    %v7747 = vunpack.c.h.b16 %v7122
    %v7748 = vunpack.c.l.b16 %v7123
    %v7749 = vunpack.c.h.b16 %v7123
    %v7750 = vunpack.c.l.b16 %v7124
    %v7751 = vunpack.c.h.b16 %v7124
    %v7752 = vunpack.c.l.b16 %v7125
    %v7753 = vunpack.c.h.b16 %v7125
    %v7754 = vunpack.c.l.b16 %v7126
    %v7755 = vunpack.c.h.b16 %v7126
    %v7756 = vunpack.c.l.b16 %v7127
    %v7757 = vunpack.c.h.b16 %v7127
    %v7758 = vunpack.c.l.b16 %v7128
    %v7759 = vunpack.c.h.b16 %v7128
    %v7760 = vunpack.c.l.b16 %v7129
    %v7761 = vunpack.c.h.b16 %v7129
    %v7762 = vunpack.c.l.b16 %v7130
    %v7763 = vunpack.c.h.b16 %v7130
    %v7764 = vunpack.c.l.b16 %v7131
    %v7765 = vunpack.c.h.b16 %v7131
    %v7766 = vunpack.c.l.b16 %v7132
    %v7767 = vunpack.c.h.b16 %v7132
    %v7768 = vunpack.c.l.b16 %v7133
    %v7769 = vunpack.c.h.b16 %v7133
    %v7770 = vunpack.c.l.b16 %v7134
    %v7771 = vunpack.c.h.b16 %v7134
    %v7772 = vunpack.c.l.b16 %v7135
    %v7773 = vunpack.c.h.b16 %v7135
    %v7774 = vunpack.c.l.b16 %v7136
    %v7775 = vunpack.c.h.b16 %v7136
    %v7776 = vunpack.c.l.b16 %v7137
    %v7777 = vunpack.c.h.b16 %v7137
    %v7778 = vunpack.c.l.b16 %v7138
    %v7779 = vunpack.c.h.b16 %v7138
    %v7780 = vunpack.c.l.b16 %v7139
    %v7781 = vunpack.c.h.b16 %v7139
    %v7782 = vunpack.c.l.b16 %v7140
    %v7783 = vunpack.c.h.b16 %v7140
    %v7784 = vunpack.c.l.b16 %v7141
    %v7785 = vunpack.c.h.b16 %v7141
    %v7786 = vunpack.c.l.b16 %v7142
    %v7787 = vunpack.c.h.b16 %v7142
    %v7788 = vunpack.c.l.b16 %v7143
    %v7789 = vunpack.c.h.b16 %v7143
    %v7790 = vunpack.c.l.b16 %v7144
    %v7791 = vunpack.c.h.b16 %v7144
    %v7792 = vunpack.c.l.b16 %v7145
    %v7793 = vunpack.c.h.b16 %v7145
    %v7794 = vunpack.c.l.b16 %v7146
    %v7795 = vunpack.c.h.b16 %v7146
    %v7796 = vunpack.c.l.b16 %v7147
    %v7797 = vunpack.c.h.b16 %v7147
    %v7798 = vunpack.c.l.b16 %v7148
    %v7799 = vunpack.c.h.b16 %v7148
    %v7800 = vunpack.c.l.b16 %v7149
    %v7801 = vunpack.c.h.b16 %v7149
    %v7802 = vunpack.c.l.b16 %v7150
    %v7803 = vunpack.c.h.b16 %v7150
    %v7804 = vunpack.c.l.b16 %v7151
    %v7805 = vunpack.c.h.b16 %v7151
    %v7806 = vunpack.c.l.b16 %v7152
    %v7807 = vunpack.c.h.b16 %v7152
    %v7808 = vunpack.c.l.b16 %v7153
    %v7809 = vunpack.c.h.b16 %v7153
    %v7810 = vunpack.c.l.b16 %v7154
    %v7811 = vunpack.c.h.b16 %v7154
    %v7812 = vunpack.c.l.b16 %v7155
    %v7813 = vunpack.c.h.b16 %v7155
    %v7814 = vunpack.c.l.b16 %v7156
    %v7815 = vunpack.c.h.b16 %v7156
    %v7816 = vunpack.c.l.b16 %v7157
    %v7817 = vunpack.c.h.b16 %v7157
    %v7818 = vunpack.c.l.b16 %v7158
    %v7819 = vunpack.c.h.b16 %v7158
    %v7820 = vunpack.c.l.b16 %v7159
    %v7821 = vunpack.c.h.b16 %v7159
    %v7822 = vunpack.c.l.b16 %v7160
    %v7823 = vunpack.c.h.b16 %v7160
    %v7824 = vunpack.c.l.b16 %v7161
    %v7825 = vunpack.c.h.b16 %v7161
    %v7826 = vunpack.c.l.b16 %v7162
    %v7827 = vunpack.c.h.b16 %v7162
    %v7828 = vunpack.c.l.b16 %v7163
    %v7829 = vunpack.c.h.b16 %v7163
    %v7830 = vunpack.c.l.b16 %v7164
    %v7831 = vunpack.c.h.b16 %v7164
    %v7832 = vunpack.c.l.b16 %v7165
    %v7833 = vunpack.c.h.b16 %v7165
    %v7834 = vunpack.c.l.b16 %v7166
    %v7835 = vunpack.c.h.b16 %v7166
    %v7836 = vunpack.c.l.b16 %v7167
    %v7837 = vunpack.c.h.b16 %v7167
    %v7838 = vunpack.c.l.b16 %v7168
    %v7839 = vunpack.c.h.b16 %v7168
    %v7840 = vunpack.c.l.b16 %v7169
    %v7841 = vunpack.c.h.b16 %v7169
    %v7842 = vunpack.c.l.b16 %v7170
    %v7843 = vunpack.c.h.b16 %v7170
    %v7844 = vunpack.c.l.b16 %v7171
    %v7845 = vunpack.c.h.b16 %v7171
    %v7846 = vunpack.c.l.b16 %v7172
    %v7847 = vunpack.c.h.b16 %v7172
    %v7848 = vunpack.c.l.b16 %v7173
    %v7849 = vunpack.c.h.b16 %v7173
    %v7850 = vunpack.c.l.b16 %v7174
    %v7851 = vunpack.c.h.b16 %v7174
    %v7852 = vunpack.c.l.b16 %v7175
    %v7853 = vunpack.c.h.b16 %v7175
    %v7854 = vunpack.c.l.b16 %v7176
    %v7855 = vunpack.c.h.b16 %v7176
    %v7856 = vunpack.c.l.b16 %v7177
    %v7857 = vunpack.c.h.b16 %v7177
    %v7858 = vunpack.c.l.b16 %v7178
    %v7859 = vunpack.c.h.b16 %v7178
    %v7860 = vunpack.c.l.b16 %v7179
    %v7861 = vunpack.c.h.b16 %v7179
    %v7862 = vunpack.c.l.b16 %v7180
    %v7863 = vunpack.c.h.b16 %v7180
    %v7864 = vunpack.c.l.b16 %v7181
    %v7865 = vunpack.c.h.b16 %v7181
    %v7866 = vunpack.c.l.b16 %v7182
    %v7867 = vunpack.c.h.b16 %v7182
    %v7868 = vunpack.c.l.b16 %v7183
    %v7869 = vunpack.c.h.b16 %v7183
    %v7870 = vunpack.c.l.b16 %v7184
    %v7871 = vunpack.c.h.b16 %v7184
    %v7872 = vunpack.c.l.b16 %v7185
    %v7873 = vunpack.c.h.b16 %v7185
    %v7874 = vunpack.c.l.b16 %v7186
    %v7875 = vunpack.c.h.b16 %v7186
    %v7876 = vunpack.c.l.b16 %v7187
    %v7877 = vunpack.c.h.b16 %v7187
    %v7878 = vunpack.c.l.b16 %v7188
    %v7879 = vunpack.c.h.b16 %v7188
    %v7880 = vunpack.c.l.b16 %v7189
    %v7881 = vunpack.c.h.b16 %v7189
    %v7882 = vunpack.c.l.b16 %v7190
    %v7883 = vunpack.c.h.b16 %v7190
    %v7884 = vunpack.c.l.b16 %v7191
    %v7885 = vunpack.c.h.b16 %v7191
    %v7886 = vunpack.c.l.b16 %v7192
    %v7887 = vunpack.c.h.b16 %v7192
    %v7888 = vunpack.c.l.b16 %v7193
    %v7889 = vunpack.c.h.b16 %v7193
    %v7890 = vunpack.c.l.b16 %v7194
    %v7891 = vunpack.c.h.b16 %v7194
    %v7892 = vunpack.c.l.b16 %v7195
    %v7893 = vunpack.c.h.b16 %v7195
    %v7894 = vunpack.c.l.b16 %v7196
    %v7895 = vunpack.c.h.b16 %v7196
    %v7896 = vunpack.c.l.b16 %v7197
    %v7897 = vunpack.c.h.b16 %v7197
    %v7898 = vunpack.c.l.b16 %v7198
    %v7899 = vunpack.c.h.b16 %v7198
    %v7900 = vunpack.c.l.b16 %v7199
    %v7901 = vunpack.c.h.b16 %v7199
    %v7902 = vunpack.c.l.b16 %v7200
    %v7903 = vunpack.c.h.b16 %v7200
    %v7904 = vunpack.c.l.b16 %v7201
    %v7905 = vunpack.c.h.b16 %v7201
    %v7906 = vunpack.c.l.b16 %v7202
    %v7907 = vunpack.c.h.b16 %v7202
    %v7908 = vunpack.c.l.b16 %v7203
    %v7909 = vunpack.c.h.b16 %v7203
    %v7910 = vunpack.c.l.b16 %v7204
    %v7911 = vunpack.c.h.b16 %v7204
    %v7912 = vunpack.c.l.b16 %v7205
    %v7913 = vunpack.c.h.b16 %v7205
    %v7914 = vunpack.c.l.b16 %v7206
    %v7915 = vunpack.c.h.b16 %v7206
    %v7916 = vunpack.c.l.b16 %v7207
    %v7917 = vunpack.c.h.b16 %v7207
    %v7918 = vunpack.c.l.b16 %v7208
    %v7919 = vunpack.c.h.b16 %v7208
    %v7920 = vunpack.c.l.b16 %v7209
    %v7921 = vunpack.c.h.b16 %v7209
    %v7922 = vunpack.c.l.b16 %v7210
    %v7923 = vunpack.c.h.b16 %v7210
    %v7924 = vunpack.c.l.b16 %v7211
    %v7925 = vunpack.c.h.b16 %v7211
    %v7926 = vunpack.c.l.b16 %v7212
    %v7927 = vunpack.c.h.b16 %v7212
    %v7928 = vunpack.c.l.b16 %v7213
    %v7929 = vunpack.c.h.b16 %v7213
    %v7930 = vunpack.c.l.b16 %v7214
    %v7931 = vunpack.c.h.b16 %v7214
    %v7932 = vunpack.c.l.b16 %v7215
    %v7933 = vunpack.c.h.b16 %v7215
    %v7934 = vunpack.c.l.b16 %v7216
    %v7935 = vunpack.c.h.b16 %v7216
    %v7936 = vunpack.c.l.b16 %v7217
    %v7937 = vunpack.c.h.b16 %v7217
    %v7938 = vunpack.c.l.b16 %v7218
    %v7939 = vunpack.c.h.b16 %v7218
    %v7940 = vunpack.c.l.b16 %v7219
    %v7941 = vunpack.c.h.b16 %v7219
    %v7942 = vunpack.c.l.b16 %v7220
    %v7943 = vunpack.c.h.b16 %v7220
    %v7944 = vunpack.c.l.b16 %v7221
    %v7945 = vunpack.c.h.b16 %v7221
    %v7946 = vunpack.c.l.b16 %v7222
    %v7947 = vunpack.c.h.b16 %v7222
    %v7948 = vunpack.c.l.b16 %v7223
    %v7949 = vunpack.c.h.b16 %v7223
    %v7950 = vunpack.c.l.b16 %v7224
    %v7951 = vunpack.c.h.b16 %v7224
    %v7952 = vunpack.c.l.b16 %v7225
    %v7953 = vunpack.c.h.b16 %v7225
    %v7954 = vunpack.c.l.b16 %v7226
    %v7955 = vunpack.c.h.b16 %v7226
    %v7956 = vunpack.c.l.b16 %v7227
    %v7957 = vunpack.c.h.b16 %v7227
    %v7958 = vunpack.c.l.b16 %v7228
    %v7959 = vunpack.c.h.b16 %v7228
    %v7960 = vunpack.c.l.b16 %v7229
    %v7961 = vunpack.c.h.b16 %v7229
    %v7962 = vunpack.c.l.b16 %v7230
    %v7963 = vunpack.c.h.b16 %v7230
    %v7964 = vunpack.c.l.b16 %v7231
    %v7965 = vunpack.c.h.b16 %v7231
    %v7966 = vunpack.c.l.b16 %v7232
    %v7967 = vunpack.c.h.b16 %v7232
    %v7968 = vunpack.c.l.b16 %v7233
    %v7969 = vunpack.c.h.b16 %v7233
    %v7970 = vunpack.c.l.b16 %v7234
    %v7971 = vunpack.c.h.b16 %v7234
    %v7972 = vunpack.c.l.b16 %v7235
    %v7973 = vunpack.c.h.b16 %v7235
    %v7974 = vunpack.c.l.b16 %v7236
    %v7975 = vunpack.c.h.b16 %v7236
    %v7976 = vunpack.c.l.b16 %v7237
    %v7977 = vunpack.c.h.b16 %v7237
    %v7978 = vunpack.c.l.b16 %v7238
    %v7979 = vunpack.c.h.b16 %v7238
    %v7980 = vunpack.c.l.b16 %v7239
    %v7981 = vunpack.c.h.b16 %v7239
    %v7982 = vunpack.c.l.b16 %v7240
    %v7983 = vunpack.c.h.b16 %v7240
    %v7984 = vunpack.c.l.b16 %v7241
    %v7985 = vunpack.c.h.b16 %v7241
    %v7986 = vunpack.c.l.b16 %v7242
    %v7987 = vunpack.c.h.b16 %v7242
    %v7988 = vunpack.c.l.b16 %v7243
    %v7989 = vunpack.c.h.b16 %v7243
    %v7990 = vunpack.c.l.b16 %v7244
    %v7991 = vunpack.c.h.b16 %v7244
    %v7992 = vunpack.c.l.b16 %v7245
    %v7993 = vunpack.c.h.b16 %v7245
    %v7994 = vunpack.c.l.b16 %v7246
    %v7995 = vunpack.c.h.b16 %v7246
    %v7996 = vunpack.c.l.b16 %v7247
    %v7997 = vunpack.c.h.b16 %v7247
    %v7998 = vunpack.c.l.b16 %v7248
    %v7999 = vunpack.c.h.b16 %v7248
    %v8000 = vunpack.c.l.b16 %v7249
    %v8001 = vunpack.c.h.b16 %v7249
    %v8002 = vunpack.c.l.b16 %v7250
    %v8003 = vunpack.c.h.b16 %v7250
    %v8004 = vunpack.c.l.b16 %v7251
    %v8005 = vunpack.c.h.b16 %v7251
    %v8006 = vunpack.c.l.b16 %v7252
    %v8007 = vunpack.c.h.b16 %v7252
    %v8008 = vunpack.c.l.b16 %v7253
    %v8009 = vunpack.c.h.b16 %v7253
    %v8010 = vunpack.c.l.b16 %v7254
    %v8011 = vunpack.c.h.b16 %v7254
    %v8012 = vunpack.c.l.b16 %v7255
    %v8013 = vunpack.c.h.b16 %v7255
    %v8014 = vunpack.c.l.b16 %v7256
    %v8015 = vunpack.c.h.b16 %v7256
    %v8016 = vunpack.c.l.b16 %v7257
    %v8017 = vunpack.c.h.b16 %v7257
    %v8018 = vunpack.c.l.b16 %v7258
    %v8019 = vunpack.c.h.b16 %v7258
    %v8020 = vunpack.c.l.b16 %v7259
    %v8021 = vunpack.c.h.b16 %v7259
    %v8022 = vunpack.c.l.b16 %v7260
    %v8023 = vunpack.c.h.b16 %v7260
    %v8024 = vunpack.c.l.b16 %v7261
    %v8025 = vunpack.c.h.b16 %v7261
    %v8026 = vunpack.c.l.b16 %v7262
    %v8027 = vunpack.c.h.b16 %v7262
    %v8028 = vunpack.c.l.b16 %v7263
    %v8029 = vunpack.c.h.b16 %v7263
    %v8030 = vunpack.c.l.b16 %v7264
    %v8031 = vunpack.c.h.b16 %v7264
    %v8032 = vunpack.c.l.b16 %v7265
    %v8033 = vunpack.c.h.b16 %v7265
    %v8034 = vpack.c.b16 %v7538, %v7522
    %v8035 = vpack.c.b16 %v7539, %v7523
    %v8036 = vpack.c.b16 %v7540, %v7524
    %v8037 = vpack.c.b16 %v7541, %v7525
    %v8038 = vpack.c.b16 %v7542, %v7526
    %v8039 = vpack.c.b16 %v7543, %v7527
    %v8040 = vpack.c.b16 %v7544, %v7528
    %v8041 = vpack.c.b16 %v7545, %v7529
    %v8042 = vpack.c.b16 %v7546, %v7530
    %v8043 = vpack.c.b16 %v7547, %v7531
    %v8044 = vpack.c.b16 %v7548, %v7532
    %v8045 = vpack.c.b16 %v7549, %v7533
    %v8046 = vpack.c.b16 %v7550, %v7534
    %v8047 = vpack.c.b16 %v7551, %v7535
    %v8048 = vpack.c.b16 %v7552, %v7536
    %v8049 = vpack.c.b16 %v7553, %v7537
    %v8050 = vpack.c.b16 %v7570, %v7554
    %v8051 = vpack.c.b16 %v7571, %v7555
    %v8052 = vpack.c.b16 %v7572, %v7556
    %v8053 = vpack.c.b16 %v7573, %v7557
    %v8054 = vpack.c.b16 %v7574, %v7558
    %v8055 = vpack.c.b16 %v7575, %v7559
    %v8056 = vpack.c.b16 %v7576, %v7560
    %v8057 = vpack.c.b16 %v7577, %v7561
    %v8058 = vpack.c.b16 %v7578, %v7562
    %v8059 = vpack.c.b16 %v7579, %v7563
    %v8060 = vpack.c.b16 %v7580, %v7564
    %v8061 = vpack.c.b16 %v7581, %v7565
    %v8062 = vpack.c.b16 %v7582, %v7566
    %v8063 = vpack.c.b16 %v7583, %v7567
    %v8064 = vpack.c.b16 %v7584, %v7568
    %v8065 = vpack.c.b16 %v7585, %v7569
    %v8066 = vpack.c.b16 %v7602, %v7586
    %v8067 = vpack.c.b16 %v7603, %v7587
    %v8068 = vpack.c.b16 %v7604, %v7588
    %v8069 = vpack.c.b16 %v7605, %v7589
    %v8070 = vpack.c.b16 %v7606, %v7590
    %v8071 = vpack.c.b16 %v7607, %v7591
    %v8072 = vpack.c.b16 %v7608, %v7592
    %v8073 = vpack.c.b16 %v7609, %v7593
    %v8074 = vpack.c.b16 %v7610, %v7594
    %v8075 = vpack.c.b16 %v7611, %v7595
    %v8076 = vpack.c.b16 %v7612, %v7596
    %v8077 = vpack.c.b16 %v7613, %v7597
    %v8078 = vpack.c.b16 %v7614, %v7598
    %v8079 = vpack.c.b16 %v7615, %v7599
    %v8080 = vpack.c.b16 %v7616, %v7600
    %v8081 = vpack.c.b16 %v7617, %v7601
    %v8082 = vpack.c.b16 %v7634, %v7618
    %v8083 = vpack.c.b16 %v7635, %v7619
    %v8084 = vpack.c.b16 %v7636, %v7620
    %v8085 = vpack.c.b16 %v7637, %v7621
    %v8086 = vpack.c.b16 %v7638, %v7622
    %v8087 = vpack.c.b16 %v7639, %v7623
    %v8088 = vpack.c.b16 %v7640, %v7624
    %v8089 = vpack.c.b16 %v7641, %v7625
    %v8090 = vpack.c.b16 %v7642, %v7626
    %v8091 = vpack.c.b16 %v7643, %v7627
    %v8092 = vpack.c.b16 %v7644, %v7628
    %v8093 = vpack.c.b16 %v7645, %v7629
    %v8094 = vpack.c.b16 %v7646, %v7630
    %v8095 = vpack.c.b16 %v7647, %v7631
    %v8096 = vpack.c.b16 %v7648, %v7632
    %v8097 = vpack.c.b16 %v7649, %v7633
    %v8098 = vpack.c.b16 %v7666, %v7650
    %v8099 = vpack.c.b16 %v7667, %v7651
    %v8100 = vpack.c.b16 %v7668, %v7652
    %v8101 = vpack.c.b16 %v7669, %v7653
    %v8102 = vpack.c.b16 %v7670, %v7654
    %v8103 = vpack.c.b16 %v7671, %v7655
    %v8104 = vpack.c.b16 %v7672, %v7656
    %v8105 = vpack.c.b16 %v7673, %v7657
    %v8106 = vpack.c.b16 %v7674, %v7658
    %v8107 = vpack.c.b16 %v7675, %v7659
    %v8108 = vpack.c.b16 %v7676, %v7660
    %v8109 = vpack.c.b16 %v7677, %v7661
    %v8110 = vpack.c.b16 %v7678, %v7662
    %v8111 = vpack.c.b16 %v7679, %v7663
    %v8112 = vpack.c.b16 %v7680, %v7664
    %v8113 = vpack.c.b16 %v7681, %v7665
    %v8114 = vpack.c.b16 %v7698, %v7682
    %v8115 = vpack.c.b16 %v7699, %v7683
    %v8116 = vpack.c.b16 %v7700, %v7684
    %v8117 = vpack.c.b16 %v7701, %v7685
    %v8118 = vpack.c.b16 %v7702, %v7686
    %v8119 = vpack.c.b16 %v7703, %v7687
    %v8120 = vpack.c.b16 %v7704, %v7688
    %v8121 = vpack.c.b16 %v7705, %v7689
    %v8122 = vpack.c.b16 %v7706, %v7690
    %v8123 = vpack.c.b16 %v7707, %v7691
    %v8124 = vpack.c.b16 %v7708, %v7692
    %v8125 = vpack.c.b16 %v7709, %v7693
    %v8126 = vpack.c.b16 %v7710, %v7694
    %v8127 = vpack.c.b16 %v7711, %v7695
    %v8128 = vpack.c.b16 %v7712, %v7696
    %v8129 = vpack.c.b16 %v7713, %v7697
    %v8130 = vpack.c.b16 %v7730, %v7714
    %v8131 = vpack.c.b16 %v7731, %v7715
    %v8132 = vpack.c.b16 %v7732, %v7716
    %v8133 = vpack.c.b16 %v7733, %v7717
    %v8134 = vpack.c.b16 %v7734, %v7718
    %v8135 = vpack.c.b16 %v7735, %v7719
    %v8136 = vpack.c.b16 %v7736, %v7720
    %v8137 = vpack.c.b16 %v7737, %v7721
    %v8138 = vpack.c.b16 %v7738, %v7722
    %v8139 = vpack.c.b16 %v7739, %v7723
    %v8140 = vpack.c.b16 %v7740, %v7724
    %v8141 = vpack.c.b16 %v7741, %v7725
    %v8142 = vpack.c.b16 %v7742, %v7726
    %v8143 = vpack.c.b16 %v7743, %v7727
    %v8144 = vpack.c.b16 %v7744, %v7728
    %v8145 = vpack.c.b16 %v7745, %v7729
    %v8146 = vpack.c.b16 %v7762, %v7746
    %v8147 = vpack.c.b16 %v7763, %v7747
    %v8148 = vpack.c.b16 %v7764, %v7748
    %v8149 = vpack.c.b16 %v7765, %v7749
    %v8150 = vpack.c.b16 %v7766, %v7750
    %v8151 = vpack.c.b16 %v7767, %v7751
    %v8152 = vpack.c.b16 %v7768, %v7752
    %v8153 = vpack.c.b16 %v7769, %v7753
    %v8154 = vpack.c.b16 %v7770, %v7754
    %v8155 = vpack.c.b16 %v7771, %v7755
    %v8156 = vpack.c.b16 %v7772, %v7756
    %v8157 = vpack.c.b16 %v7773, %v7757
    %v8158 = vpack.c.b16 %v7774, %v7758
    %v8159 = vpack.c.b16 %v7775, %v7759
    %v8160 = vpack.c.b16 %v7776, %v7760
    %v8161 = vpack.c.b16 %v7777, %v7761
    %v8162 = vpack.c.b16 %v7794, %v7778
    %v8163 = vpack.c.b16 %v7795, %v7779
    %v8164 = vpack.c.b16 %v7796, %v7780
    %v8165 = vpack.c.b16 %v7797, %v7781
    %v8166 = vpack.c.b16 %v7798, %v7782
    %v8167 = vpack.c.b16 %v7799, %v7783
    %v8168 = vpack.c.b16 %v7800, %v7784
    %v8169 = vpack.c.b16 %v7801, %v7785
    %v8170 = vpack.c.b16 %v7802, %v7786
    %v8171 = vpack.c.b16 %v7803, %v7787
    %v8172 = vpack.c.b16 %v7804, %v7788
    %v8173 = vpack.c.b16 %v7805, %v7789
    %v8174 = vpack.c.b16 %v7806, %v7790
    %v8175 = vpack.c.b16 %v7807, %v7791
    %v8176 = vpack.c.b16 %v7808, %v7792
    %v8177 = vpack.c.b16 %v7809, %v7793
    %v8178 = vpack.c.b16 %v7826, %v7810
    %v8179 = vpack.c.b16 %v7827, %v7811
    %v8180 = vpack.c.b16 %v7828, %v7812
    %v8181 = vpack.c.b16 %v7829, %v7813
    %v8182 = vpack.c.b16 %v7830, %v7814
    %v8183 = vpack.c.b16 %v7831, %v7815
    %v8184 = vpack.c.b16 %v7832, %v7816
    %v8185 = vpack.c.b16 %v7833, %v7817
    %v8186 = vpack.c.b16 %v7834, %v7818
    %v8187 = vpack.c.b16 %v7835, %v7819
    %v8188 = vpack.c.b16 %v7836, %v7820
    %v8189 = vpack.c.b16 %v7837, %v7821
    %v8190 = vpack.c.b16 %v7838, %v7822
    %v8191 = vpack.c.b16 %v7839, %v7823
    %v8192 = vpack.c.b16 %v7840, %v7824
    %v8193 = vpack.c.b16 %v7841, %v7825
    %v8194 = vpack.c.b16 %v7858, %v7842
    %v8195 = vpack.c.b16 %v7859, %v7843
    %v8196 = vpack.c.b16 %v7860, %v7844
    %v8197 = vpack.c.b16 %v7861, %v7845
    %v8198 = vpack.c.b16 %v7862, %v7846
    %v8199 = vpack.c.b16 %v7863, %v7847
    %v8200 = vpack.c.b16 %v7864, %v7848
    %v8201 = vpack.c.b16 %v7865, %v7849
    %v8202 = vpack.c.b16 %v7866, %v7850
    %v8203 = vpack.c.b16 %v7867, %v7851
    %v8204 = vpack.c.b16 %v7868, %v7852
    %v8205 = vpack.c.b16 %v7869, %v7853
    %v8206 = vpack.c.b16 %v7870, %v7854
    %v8207 = vpack.c.b16 %v7871, %v7855
    %v8208 = vpack.c.b16 %v7872, %v7856
    %v8209 = vpack.c.b16 %v7873, %v7857
    %v8210 = vpack.c.b16 %v7890, %v7874
    %v8211 = vpack.c.b16 %v7891, %v7875
    %v8212 = vpack.c.b16 %v7892, %v7876
    %v8213 = vpack.c.b16 %v7893, %v7877
    %v8214 = vpack.c.b16 %v7894, %v7878
    %v8215 = vpack.c.b16 %v7895, %v7879
    %v8216 = vpack.c.b16 %v7896, %v7880
    %v8217 = vpack.c.b16 %v7897, %v7881
    %v8218 = vpack.c.b16 %v7898, %v7882
    %v8219 = vpack.c.b16 %v7899, %v7883
    %v8220 = vpack.c.b16 %v7900, %v7884
    %v8221 = vpack.c.b16 %v7901, %v7885
    %v8222 = vpack.c.b16 %v7902, %v7886
    %v8223 = vpack.c.b16 %v7903, %v7887
    %v8224 = vpack.c.b16 %v7904, %v7888
    %v8225 = vpack.c.b16 %v7905, %v7889
    %v8226 = vpack.c.b16 %v7922, %v7906
    %v8227 = vpack.c.b16 %v7923, %v7907
    %v8228 = vpack.c.b16 %v7924, %v7908
    %v8229 = vpack.c.b16 %v7925, %v7909
    %v8230 = vpack.c.b16 %v7926, %v7910
    %v8231 = vpack.c.b16 %v7927, %v7911
    %v8232 = vpack.c.b16 %v7928, %v7912
    %v8233 = vpack.c.b16 %v7929, %v7913
    %v8234 = vpack.c.b16 %v7930, %v7914
    %v8235 = vpack.c.b16 %v7931, %v7915
    %v8236 = vpack.c.b16 %v7932, %v7916
    %v8237 = vpack.c.b16 %v7933, %v7917
    %v8238 = vpack.c.b16 %v7934, %v7918
    %v8239 = vpack.c.b16 %v7935, %v7919
    %v8240 = vpack.c.b16 %v7936, %v7920
    %v8241 = vpack.c.b16 %v7937, %v7921
    %v8242 = vpack.c.b16 %v7954, %v7938
    %v8243 = vpack.c.b16 %v7955, %v7939
    %v8244 = vpack.c.b16 %v7956, %v7940
    %v8245 = vpack.c.b16 %v7957, %v7941
    %v8246 = vpack.c.b16 %v7958, %v7942
    %v8247 = vpack.c.b16 %v7959, %v7943
    %v8248 = vpack.c.b16 %v7960, %v7944
    %v8249 = vpack.c.b16 %v7961, %v7945
    %v8250 = vpack.c.b16 %v7962, %v7946
    %v8251 = vpack.c.b16 %v7963, %v7947
    %v8252 = vpack.c.b16 %v7964, %v7948
    %v8253 = vpack.c.b16 %v7965, %v7949
    %v8254 = vpack.c.b16 %v7966, %v7950
    %v8255 = vpack.c.b16 %v7967, %v7951
    %v8256 = vpack.c.b16 %v7968, %v7952
    %v8257 = vpack.c.b16 %v7969, %v7953
    %v8258 = vpack.c.b16 %v7986, %v7970
    %v8259 = vpack.c.b16 %v7987, %v7971
    %v8260 = vpack.c.b16 %v7988, %v7972
    %v8261 = vpack.c.b16 %v7989, %v7973
    %v8262 = vpack.c.b16 %v7990, %v7974
    %v8263 = vpack.c.b16 %v7991, %v7975
    %v8264 = vpack.c.b16 %v7992, %v7976
    %v8265 = vpack.c.b16 %v7993, %v7977
    %v8266 = vpack.c.b16 %v7994, %v7978
    %v8267 = vpack.c.b16 %v7995, %v7979
    %v8268 = vpack.c.b16 %v7996, %v7980
    %v8269 = vpack.c.b16 %v7997, %v7981
    %v8270 = vpack.c.b16 %v7998, %v7982
    %v8271 = vpack.c.b16 %v7999, %v7983
    %v8272 = vpack.c.b16 %v8000, %v7984
    %v8273 = vpack.c.b16 %v8001, %v7985
    %v8274 = vpack.c.b16 %v8018, %v8002
    %v8275 = vpack.c.b16 %v8019, %v8003
    %v8276 = vpack.c.b16 %v8020, %v8004
    %v8277 = vpack.c.b16 %v8021, %v8005
    %v8278 = vpack.c.b16 %v8022, %v8006
    %v8279 = vpack.c.b16 %v8023, %v8007
    %v8280 = vpack.c.b16 %v8024, %v8008
    %v8281 = vpack.c.b16 %v8025, %v8009
    %v8282 = vpack.c.b16 %v8026, %v8010
    %v8283 = vpack.c.b16 %v8027, %v8011
    %v8284 = vpack.c.b16 %v8028, %v8012
    %v8285 = vpack.c.b16 %v8029, %v8013
    %v8286 = vpack.c.b16 %v8030, %v8014
    %v8287 = vpack.c.b16 %v8031, %v8015
    %v8288 = vpack.c.b16 %v8032, %v8016
    %v8289 = vpack.c.b16 %v8033, %v8017
    %8546 = vmatprep.subr.bf16.mxu0 %v8035
    %8547 = vmatpush1.bf16.msra.mxu0 %v8034
    %8548 = vmatprep.subr.bf16.mxu0 %v8051
    %8549 = vmatpush1.bf16.msra.mxu0 %v8050
    %8550 = vmatprep.subr.bf16.mxu0 %v8067
    %8551 = vmatpush1.bf16.msra.mxu0 %v8066
    %8552 = vmatprep.subr.bf16.mxu0 %v8083
    %8553 = vmatpush1.bf16.msra.mxu0 %v8082
    %8554 = vmatprep.subr.bf16.mxu0 %v8099
    %8555 = vmatpush1.bf16.msra.mxu0 %v8098
    %8556 = vmatprep.subr.bf16.mxu0 %v8115
    %8557 = vmatpush1.bf16.msra.mxu0 %v8114
    %8558 = vmatprep.subr.bf16.mxu0 %v8131
    %8559 = vmatpush1.bf16.msra.mxu0 %v8130
    %8560 = vmatprep.subr.bf16.mxu0 %v8147
    %8561 = vmatpush1.bf16.msra.mxu0 %v8146
    %8562 = vmatprep.subr.bf16.mxu0 %v8163
    %8563 = vmatpush1.bf16.msra.mxu0 %v8162
    %8564 = vmatprep.subr.bf16.mxu0 %v8179
    %8565 = vmatpush1.bf16.msra.mxu0 %v8178
    %8566 = vmatprep.subr.bf16.mxu0 %v8195
    %8567 = vmatpush1.bf16.msra.mxu0 %v8194
    %8568 = vmatprep.subr.bf16.mxu0 %v8211
    %8569 = vmatpush1.bf16.msra.mxu0 %v8210
    %8570 = vmatprep.subr.bf16.mxu0 %v8227
    %8571 = vmatpush1.bf16.msra.mxu0 %v8226
    %8572 = vmatprep.subr.bf16.mxu0 %v8243
    %8573 = vmatpush1.bf16.msra.mxu0 %v8242
    %8574 = vmatprep.subr.bf16.mxu0 %v8259
    %8575 = vmatpush1.bf16.msra.mxu0 %v8258
    %8576 = vmatprep.subr.bf16.mxu0 %v8275
    %8577 = vmatpush1.bf16.msra.mxu0 %v8274
    %8578 = vmatprep.mubr.bf16.mxu0 %v4844
    %8579 = vmatmul.mubr.bf16.gmra.mrb[0].mxu0 %v4843
    %v8580 = vpop.f32.mrb[0].mxu0
    %v8581 = vadd.f32 0.0, %v8580
    %v8582 = vpop.f32.mrb[0].mxu0
    %v8583 = vadd.f32 0.0, %v8582
    %v8584 = vpop.f32.mrb[0].mxu0
    %v8585 = vadd.f32 0.0, %v8584
    %v8586 = vpop.f32.mrb[0].mxu0
    %v8587 = vadd.f32 0.0, %v8586
    %8588 = vmatprep.mubr.bf16.mxu0 %v4846
    %8589 = vmatmul.mubr.bf16.gmra.mrb[0].mxu0 %v4845
    %v8590 = vpop.f32.mrb[0].mxu0
    %v8591 = vadd.f32 0.0, %v8590
    %v8592 = vpop.f32.mrb[0].mxu0
    %v8593 = vadd.f32 0.0, %v8592
    %v8594 = vpop.f32.mrb[0].mxu0
    %v8595 = vadd.f32 0.0, %v8594
    %v8596 = vpop.f32.mrb[0].mxu0
    %v8597 = vadd.f32 0.0, %v8596
    %8598 = vmatprep.mubr.bf16.mxu0 %v4848
    %8599 = vmatmul.mubr.bf16.gmra.mrb[0].mxu0 %v4847
    %v8600 = vpop.f32.mrb[0].mxu0
    %v8601 = vadd.f32 0.0, %v8600
    %v8602 = vpop.f32.mrb[0].mxu0
    %v8603 = vadd.f32 0.0, %v8602
    %v8604 = vpop.f32.mrb[0].mxu0
    %v8605 = vadd.f32 0.0, %v8604
    %v8606 = vpop.f32.mrb[0].mxu0
    %v8607 = vadd.f32 0.0, %v8606
    %8608 = vmatprep.mubr.bf16.mxu0 %v4850
    %8609 = vmatmul.mubr.bf16.gmra.mrb[0].mxu0 %v4849
    %v8610 = vpop.f32.mrb[0].mxu0
    %v8611 = vadd.f32 0.0, %v8610
    %v8612 = vpop.f32.mrb[0].mxu0
    %v8613 = vadd.f32 0.0, %v8612
    %v8614 = vpop.f32.mrb[0].mxu0
    %v8615 = vadd.f32 0.0, %v8614
    %v8616 = vpop.f32.mrb[0].mxu0
    %v8617 = vadd.f32 0.0, %v8616
    %8618 = vdwg.mxu0
    %8619 = vmatprep.subr.bf16.mxu0 %v8037
    %8620 = vmatpush1.bf16.msra.mxu0 %v8036
    %8621 = vmatprep.subr.bf16.mxu0 %v8053
    %8622 = vmatpush1.bf16.msra.mxu0 %v8052
    %8623 = vmatprep.subr.bf16.mxu0 %v8069
    %8624 = vmatpush1.bf16.msra.mxu0 %v8068
    %8625 = vmatprep.subr.bf16.mxu0 %v8085
    %8626 = vmatpush1.bf16.msra.mxu0 %v8084
    %8627 = vmatprep.subr.bf16.mxu0 %v8101
    %8628 = vmatpush1.bf16.msra.mxu0 %v8100
    %8629 = vmatprep.subr.bf16.mxu0 %v8117
    %8630 = vmatpush1.bf16.msra.mxu0 %v8116
    %8631 = vmatprep.subr.bf16.mxu0 %v8133
    %8632 = vmatpush1.bf16.msra.mxu0 %v8132
    %8633 = vmatprep.subr.bf16.mxu0 %v8149
    %8634 = vmatpush1.bf16.msra.mxu0 %v8148
    %8635 = vmatprep.subr.bf16.mxu0 %v8165
    %8636 = vmatpush1.bf16.msra.mxu0 %v8164
    %8637 = vmatprep.subr.bf16.mxu0 %v8181
    %8638 = vmatpush1.bf16.msra.mxu0 %v8180
    %8639 = vmatprep.subr.bf16.mxu0 %v8197
    %8640 = vmatpush1.bf16.msra.mxu0 %v8196
    %8641 = vmatprep.subr.bf16.mxu0 %v8213
    %8642 = vmatpush1.bf16.msra.mxu0 %v8212
    %8643 = vmatprep.subr.bf16.mxu0 %v8229
    %8644 = vmatpush1.bf16.msra.mxu0 %v8228
    %8645 = vmatprep.subr.bf16.mxu0 %v8245
    %8646 = vmatpush1.bf16.msra.mxu0 %v8244
    %8647 = vmatprep.subr.bf16.mxu0 %v8261
    %8648 = vmatpush1.bf16.msra.mxu0 %v8260
    %8649 = vmatprep.subr.bf16.mxu0 %v8277
    %8650 = vmatpush1.bf16.msra.mxu0 %v8276
    %8651 = vmatprep.mubr.bf16.mxu0 %v4844
    %8652 = vmatmul.mubr.bf16.gmra.mrb[0].mxu0 %v4843
    %v8653 = vpop.f32.mrb[0].mxu0
    %v8654 = vadd.f32 0.0, %v8653
    %v8655 = vpop.f32.mrb[0].mxu0
    %v8656 = vadd.f32 0.0, %v8655
    %v8657 = vpop.f32.mrb[0].mxu0
    %v8658 = vadd.f32 0.0, %v8657
    %v8659 = vpop.f32.mrb[0].mxu0
    %v8660 = vadd.f32 0.0, %v8659
    %8661 = vmatprep.mubr.bf16.mxu0 %v4846
    %8662 = vmatmul.mubr.bf16.gmra.mrb[0].mxu0 %v4845
    %v8663 = vpop.f32.mrb[0].mxu0
    %v8664 = vadd.f32 0.0, %v8663
    %v8665 = vpop.f32.mrb[0].mxu0
    %v8666 = vadd.f32 0.0, %v8665
    %v8667 = vpop.f32.mrb[0].mxu0
    %v8668 = vadd.f32 0.0, %v8667
    %v8669 = vpop.f32.mrb[0].mxu0
    %v8670 = vadd.f32 0.0, %v8669
    %8671 = vmatprep.mubr.bf16.mxu0 %v4848
    %8672 = vmatmul.mubr.bf16.gmra.mrb[0].mxu0 %v4847
    %v8673 = vpop.f32.mrb[0].mxu0
    %v8674 = vadd.f32 0.0, %v8673
    %v8675 = vpop.f32.mrb[0].mxu0
    %v8676 = vadd.f32 0.0, %v8675
    %v8677 = vpop.f32.mrb[0].mxu0
    %v8678 = vadd.f32 0.0, %v8677
    %v8679 = vpop.f32.mrb[0].mxu0
    %v8680 = vadd.f32 0.0, %v8679
    %8681 = vmatprep.mubr.bf16.mxu0 %v4850
    %8682 = vmatmul.mubr.bf16.gmra.mrb[0].mxu0 %v4849
    %v8683 = vpop.f32.mrb[0].mxu0
    %v8684 = vadd.f32 0.0, %v8683
    %v8685 = vpop.f32.mrb[0].mxu0
    %v8686 = vadd.f32 0.0, %v8685
    %v8687 = vpop.f32.mrb[0].mxu0
    %v8688 = vadd.f32 0.0, %v8687
    %v8689 = vpop.f32.mrb[0].mxu0
    %v8690 = vadd.f32 0.0, %v8689
    %8691 = vdwg.mxu0
    %8692 = vmatprep.subr.bf16.mxu0 %v8039
    %8693 = vmatpush1.bf16.msra.mxu0 %v8038
    %8694 = vmatprep.subr.bf16.mxu0 %v8055
    %8695 = vmatpush1.bf16.msra.mxu0 %v8054
    %8696 = vmatprep.subr.bf16.mxu0 %v8071
    %8697 = vmatpush1.bf16.msra.mxu0 %v8070
    %8698 = vmatprep.subr.bf16.mxu0 %v8087
    %8699 = vmatpush1.bf16.msra.mxu0 %v8086
    %8700 = vmatprep.subr.bf16.mxu0 %v8103
    %8701 = vmatpush1.bf16.msra.mxu0 %v8102
    %8702 = vmatprep.subr.bf16.mxu0 %v8119
    %8703 = vmatpush1.bf16.msra.mxu0 %v8118
    %8704 = vmatprep.subr.bf16.mxu0 %v8135
    %8705 = vmatpush1.bf16.msra.mxu0 %v8134
    %8706 = vmatprep.subr.bf16.mxu0 %v8151
    %8707 = vmatpush1.bf16.msra.mxu0 %v8150
    %8708 = vmatprep.subr.bf16.mxu0 %v8167
    %8709 = vmatpush1.bf16.msra.mxu0 %v8166
    %8710 = vmatprep.subr.bf16.mxu0 %v8183
    %8711 = vmatpush1.bf16.msra.mxu0 %v8182
    %8712 = vmatprep.subr.bf16.mxu0 %v8199
    %8713 = vmatpush1.bf16.msra.mxu0 %v8198
    %8714 = vmatprep.subr.bf16.mxu0 %v8215
    %8715 = vmatpush1.bf16.msra.mxu0 %v8214
    %8716 = vmatprep.subr.bf16.mxu0 %v8231
    %8717 = vmatpush1.bf16.msra.mxu0 %v8230
    %8718 = vmatprep.subr.bf16.mxu0 %v8247
    %8719 = vmatpush1.bf16.msra.mxu0 %v8246
    %8720 = vmatprep.subr.bf16.mxu0 %v8263
    %8721 = vmatpush1.bf16.msra.mxu0 %v8262
    %8722 = vmatprep.subr.bf16.mxu0 %v8279
    %8723 = vmatpush1.bf16.msra.mxu0 %v8278
    %8724 = vmatprep.mubr.bf16.mxu0 %v4844
    %8725 = vmatmul.mubr.bf16.gmra.mrb[0].mxu0 %v4843
    %v8726 = vpop.f32.mrb[0].mxu0
    %v8727 = vadd.f32 0.0, %v8726
    %v8728 = vpop.f32.mrb[0].mxu0
    %v8729 = vadd.f32 0.0, %v8728
    %v8730 = vpop.f32.mrb[0].mxu0
    %v8731 = vadd.f32 0.0, %v8730
    %v8732 = vpop.f32.mrb[0].mxu0
    %v8733 = vadd.f32 0.0, %v8732
    %8734 = vmatprep.mubr.bf16.mxu0 %v4846
    %8735 = vmatmul.mubr.bf16.gmra.mrb[0].mxu0 %v4845
    %v8736 = vpop.f32.mrb[0].mxu0
    %v8737 = vadd.f32 0.0, %v8736
    %v8738 = vpop.f32.mrb[0].mxu0
    %v8739 = vadd.f32 0.0, %v8738
    %v8740 = vpop.f32.mrb[0].mxu0
    %v8741 = vadd.f32 0.0, %v8740
    %v8742 = vpop.f32.mrb[0].mxu0
    %v8743 = vadd.f32 0.0, %v8742
    %8744 = vmatprep.mubr.bf16.mxu0 %v4848
    %8745 = vmatmul.mubr.bf16.gmra.mrb[0].mxu0 %v4847
    %v8746 = vpop.f32.mrb[0].mxu0
    %v8747 = vadd.f32 0.0, %v8746
    %v8748 = vpop.f32.mrb[0].mxu0
    %v8749 = vadd.f32 0.0, %v8748
    %v8750 = vpop.f32.mrb[0].mxu0
    %v8751 = vadd.f32 0.0, %v8750
    %v8752 = vpop.f32.mrb[0].mxu0
    %v8753 = vadd.f32 0.0, %v8752
    %8754 = vmatprep.mubr.bf16.mxu0 %v4850
    %8755 = vmatmul.mubr.bf16.gmra.mrb[0].mxu0 %v4849
    %v8756 = vpop.f32.mrb[0].mxu0
    %v8757 = vadd.f32 0.0, %v8756
    %v8758 = vpop.f32.mrb[0].mxu0
    %v8759 = vadd.f32 0.0, %v8758
    %v8760 = vpop.f32.mrb[0].mxu0
    %v8761 = vadd.f32 0.0, %v8760
    %v8762 = vpop.f32.mrb[0].mxu0
    %v8763 = vadd.f32 0.0, %v8762
    %8764 = vdwg.mxu0
    %8765 = vmatprep.subr.bf16.mxu0 %v8041
    %8766 = vmatpush1.bf16.msra.mxu0 %v8040
    %8767 = vmatprep.subr.bf16.mxu0 %v8057
    %8768 = vmatpush1.bf16.msra.mxu0 %v8056
    %8769 = vmatprep.subr.bf16.mxu0 %v8073
    %8770 = vmatpush1.bf16.msra.mxu0 %v8072
    %8771 = vmatprep.subr.bf16.mxu0 %v8089
    %8772 = vmatpush1.bf16.msra.mxu0 %v8088
    %8773 = vmatprep.subr.bf16.mxu0 %v8105
    %8774 = vmatpush1.bf16.msra.mxu0 %v8104
    %8775 = vmatprep.subr.bf16.mxu0 %v8121
    %8776 = vmatpush1.bf16.msra.mxu0 %v8120
    %8777 = vmatprep.subr.bf16.mxu0 %v8137
    %8778 = vmatpush1.bf16.msra.mxu0 %v8136
    %8779 = vmatprep.subr.bf16.mxu0 %v8153
    %8780 = vmatpush1.bf16.msra.mxu0 %v8152
    %8781 = vmatprep.subr.bf16.mxu0 %v8169
    %8782 = vmatpush1.bf16.msra.mxu0 %v8168
    %8783 = vmatprep.subr.bf16.mxu0 %v8185
    %8784 = vmatpush1.bf16.msra.mxu0 %v8184
    %8785 = vmatprep.subr.bf16.mxu0 %v8201
    %8786 = vmatpush1.bf16.msra.mxu0 %v8200
    %8787 = vmatprep.subr.bf16.mxu0 %v8217
    %8788 = vmatpush1.bf16.msra.mxu0 %v8216
    %8789 = vmatprep.subr.bf16.mxu0 %v8233
    %8790 = vmatpush1.bf16.msra.mxu0 %v8232
    %8791 = vmatprep.subr.bf16.mxu0 %v8249
    %8792 = vmatpush1.bf16.msra.mxu0 %v8248
    %8793 = vmatprep.subr.bf16.mxu0 %v8265
    %8794 = vmatpush1.bf16.msra.mxu0 %v8264
    %8795 = vmatprep.subr.bf16.mxu0 %v8281
    %8796 = vmatpush1.bf16.msra.mxu0 %v8280
    %8797 = vmatprep.mubr.bf16.mxu0 %v4844
    %8798 = vmatmul.mubr.bf16.gmra.mrb[0].mxu0 %v4843
    %v8799 = vpop.f32.mrb[0].mxu0
    %v8800 = vadd.f32 0.0, %v8799
    %v8801 = vpop.f32.mrb[0].mxu0
    %v8802 = vadd.f32 0.0, %v8801
    %v8803 = vpop.f32.mrb[0].mxu0
    %v8804 = vadd.f32 0.0, %v8803
    %v8805 = vpop.f32.mrb[0].mxu0
    %v8806 = vadd.f32 0.0, %v8805
    %8807 = vmatprep.mubr.bf16.mxu0 %v4846
    %8808 = vmatmul.mubr.bf16.gmra.mrb[0].mxu0 %v4845
    %v8809 = vpop.f32.mrb[0].mxu0
    %v8810 = vadd.f32 0.0, %v8809
    %v8811 = vpop.f32.mrb[0].mxu0
    %v8812 = vadd.f32 0.0, %v8811
    %v8813 = vpop.f32.mrb[0].mxu0
    %v8814 = vadd.f32 0.0, %v8813
    %v8815 = vpop.f32.mrb[0].mxu0
    %v8816 = vadd.f32 0.0, %v8815
    %8817 = vmatprep.mubr.bf16.mxu0 %v4848
    %8818 = vmatmul.mubr.bf16.gmra.mrb[0].mxu0 %v4847
    %v8819 = vpop.f32.mrb[0].mxu0
    %v8820 = vadd.f32 0.0, %v8819
    %v8821 = vpop.f32.mrb[0].mxu0
    %v8822 = vadd.f32 0.0, %v8821
    %v8823 = vpop.f32.mrb[0].mxu0
    %v8824 = vadd.f32 0.0, %v8823
    %v8825 = vpop.f32.mrb[0].mxu0
    %v8826 = vadd.f32 0.0, %v8825
    %8827 = vmatprep.mubr.bf16.mxu0 %v4850
    %8828 = vmatmul.mubr.bf16.gmra.mrb[0].mxu0 %v4849
    %v8829 = vpop.f32.mrb[0].mxu0
    %v8830 = vadd.f32 0.0, %v8829
    %v8831 = vpop.f32.mrb[0].mxu0
    %v8832 = vadd.f32 0.0, %v8831
    %v8833 = vpop.f32.mrb[0].mxu0
    %v8834 = vadd.f32 0.0, %v8833
    %v8835 = vpop.f32.mrb[0].mxu0
    %v8836 = vadd.f32 0.0, %v8835
    %8837 = vdwg.mxu0
    %8838 = vmatprep.subr.bf16.mxu0 %v8043
    %8839 = vmatpush1.bf16.msra.mxu0 %v8042
    %8840 = vmatprep.subr.bf16.mxu0 %v8059
    %8841 = vmatpush1.bf16.msra.mxu0 %v8058
    %8842 = vmatprep.subr.bf16.mxu0 %v8075
    %8843 = vmatpush1.bf16.msra.mxu0 %v8074
    %8844 = vmatprep.subr.bf16.mxu0 %v8091
    %8845 = vmatpush1.bf16.msra.mxu0 %v8090
    %8846 = vmatprep.subr.bf16.mxu0 %v8107
    %8847 = vmatpush1.bf16.msra.mxu0 %v8106
    %8848 = vmatprep.subr.bf16.mxu0 %v8123
    %8849 = vmatpush1.bf16.msra.mxu0 %v8122
    %8850 = vmatprep.subr.bf16.mxu0 %v8139
    %8851 = vmatpush1.bf16.msra.mxu0 %v8138
    %8852 = vmatprep.subr.bf16.mxu0 %v8155
    %8853 = vmatpush1.bf16.msra.mxu0 %v8154
    %8854 = vmatprep.subr.bf16.mxu0 %v8171
    %8855 = vmatpush1.bf16.msra.mxu0 %v8170
    %8856 = vmatprep.subr.bf16.mxu0 %v8187
    %8857 = vmatpush1.bf16.msra.mxu0 %v8186
    %8858 = vmatprep.subr.bf16.mxu0 %v8203
    %8859 = vmatpush1.bf16.msra.mxu0 %v8202
    %8860 = vmatprep.subr.bf16.mxu0 %v8219
    %8861 = vmatpush1.bf16.msra.mxu0 %v8218
    %8862 = vmatprep.subr.bf16.mxu0 %v8235
    %8863 = vmatpush1.bf16.msra.mxu0 %v8234
    %8864 = vmatprep.subr.bf16.mxu0 %v8251
    %8865 = vmatpush1.bf16.msra.mxu0 %v8250
    %8866 = vmatprep.subr.bf16.mxu0 %v8267
    %8867 = vmatpush1.bf16.msra.mxu0 %v8266
    %8868 = vmatprep.subr.bf16.mxu0 %v8283
    %8869 = vmatpush1.bf16.msra.mxu0 %v8282
    %8870 = vmatprep.mubr.bf16.mxu0 %v4844
    %8871 = vmatmul.mubr.bf16.gmra.mrb[0].mxu0 %v4843
    %v8872 = vpop.f32.mrb[0].mxu0
    %v8873 = vadd.f32 0.0, %v8872
    %v8874 = vpop.f32.mrb[0].mxu0
    %v8875 = vadd.f32 0.0, %v8874
    %v8876 = vpop.f32.mrb[0].mxu0
    %v8877 = vadd.f32 0.0, %v8876
    %v8878 = vpop.f32.mrb[0].mxu0
    %v8879 = vadd.f32 0.0, %v8878
    %8880 = vmatprep.mubr.bf16.mxu0 %v4846
    %8881 = vmatmul.mubr.bf16.gmra.mrb[0].mxu0 %v4845
    %v8882 = vpop.f32.mrb[0].mxu0
    %v8883 = vadd.f32 0.0, %v8882
    %v8884 = vpop.f32.mrb[0].mxu0
    %v8885 = vadd.f32 0.0, %v8884
    %v8886 = vpop.f32.mrb[0].mxu0
    %v8887 = vadd.f32 0.0, %v8886
    %v8888 = vpop.f32.mrb[0].mxu0
    %v8889 = vadd.f32 0.0, %v8888
    %8890 = vmatprep.mubr.bf16.mxu0 %v4848
    %8891 = vmatmul.mubr.bf16.gmra.mrb[0].mxu0 %v4847
    %v8892 = vpop.f32.mrb[0].mxu0
    %v8893 = vadd.f32 0.0, %v8892
    %v8894 = vpop.f32.mrb[0].mxu0
    %v8895 = vadd.f32 0.0, %v8894
    %v8896 = vpop.f32.mrb[0].mxu0
    %v8897 = vadd.f32 0.0, %v8896
    %v8898 = vpop.f32.mrb[0].mxu0
    %v8899 = vadd.f32 0.0, %v8898
    %8900 = vmatprep.mubr.bf16.mxu0 %v4850
    %8901 = vmatmul.mubr.bf16.gmra.mrb[0].mxu0 %v4849
    %v8902 = vpop.f32.mrb[0].mxu0
    %v8903 = vadd.f32 0.0, %v8902
    %v8904 = vpop.f32.mrb[0].mxu0
    %v8905 = vadd.f32 0.0, %v8904
    %v8906 = vpop.f32.mrb[0].mxu0
    %v8907 = vadd.f32 0.0, %v8906
    %v8908 = vpop.f32.mrb[0].mxu0
    %v8909 = vadd.f32 0.0, %v8908
    %8910 = vdwg.mxu0
    %8911 = vmatprep.subr.bf16.mxu0 %v8045
    %8912 = vmatpush1.bf16.msra.mxu0 %v8044
    %8913 = vmatprep.subr.bf16.mxu0 %v8061
    %8914 = vmatpush1.bf16.msra.mxu0 %v8060
    %8915 = vmatprep.subr.bf16.mxu0 %v8077
    %8916 = vmatpush1.bf16.msra.mxu0 %v8076
    %8917 = vmatprep.subr.bf16.mxu0 %v8093
    %8918 = vmatpush1.bf16.msra.mxu0 %v8092
    %8919 = vmatprep.subr.bf16.mxu0 %v8109
    %8920 = vmatpush1.bf16.msra.mxu0 %v8108
    %8921 = vmatprep.subr.bf16.mxu0 %v8125
    %8922 = vmatpush1.bf16.msra.mxu0 %v8124
    %8923 = vmatprep.subr.bf16.mxu0 %v8141
    %8924 = vmatpush1.bf16.msra.mxu0 %v8140
    %8925 = vmatprep.subr.bf16.mxu0 %v8157
    %8926 = vmatpush1.bf16.msra.mxu0 %v8156
    %8927 = vmatprep.subr.bf16.mxu0 %v8173
    %8928 = vmatpush1.bf16.msra.mxu0 %v8172
    %8929 = vmatprep.subr.bf16.mxu0 %v8189
    %8930 = vmatpush1.bf16.msra.mxu0 %v8188
    %8931 = vmatprep.subr.bf16.mxu0 %v8205
    %8932 = vmatpush1.bf16.msra.mxu0 %v8204
    %8933 = vmatprep.subr.bf16.mxu0 %v8221
    %8934 = vmatpush1.bf16.msra.mxu0 %v8220
    %8935 = vmatprep.subr.bf16.mxu0 %v8237
    %8936 = vmatpush1.bf16.msra.mxu0 %v8236
    %8937 = vmatprep.subr.bf16.mxu0 %v8253
    %8938 = vmatpush1.bf16.msra.mxu0 %v8252
    %8939 = vmatprep.subr.bf16.mxu0 %v8269
    %8940 = vmatpush1.bf16.msra.mxu0 %v8268
    %8941 = vmatprep.subr.bf16.mxu0 %v8285
    %8942 = vmatpush1.bf16.msra.mxu0 %v8284
    %8943 = vmatprep.mubr.bf16.mxu0 %v4844
    %8944 = vmatmul.mubr.bf16.gmra.mrb[0].mxu0 %v4843
    %v8945 = vpop.f32.mrb[0].mxu0
    %v8946 = vadd.f32 0.0, %v8945
    %v8947 = vpop.f32.mrb[0].mxu0
    %v8948 = vadd.f32 0.0, %v8947
    %v8949 = vpop.f32.mrb[0].mxu0
    %v8950 = vadd.f32 0.0, %v8949
    %v8951 = vpop.f32.mrb[0].mxu0
    %v8952 = vadd.f32 0.0, %v8951
    %8953 = vmatprep.mubr.bf16.mxu0 %v4846
    %8954 = vmatmul.mubr.bf16.gmra.mrb[0].mxu0 %v4845
    %v8955 = vpop.f32.mrb[0].mxu0
    %v8956 = vadd.f32 0.0, %v8955
    %v8957 = vpop.f32.mrb[0].mxu0
    %v8958 = vadd.f32 0.0, %v8957
    %v8959 = vpop.f32.mrb[0].mxu0
    %v8960 = vadd.f32 0.0, %v8959
    %v8961 = vpop.f32.mrb[0].mxu0
    %v8962 = vadd.f32 0.0, %v8961
    %8963 = vmatprep.mubr.bf16.mxu0 %v4848
    %8964 = vmatmul.mubr.bf16.gmra.mrb[0].mxu0 %v4847
    %v8965 = vpop.f32.mrb[0].mxu0
    %v8966 = vadd.f32 0.0, %v8965
    %v8967 = vpop.f32.mrb[0].mxu0
    %v8968 = vadd.f32 0.0, %v8967
    %v8969 = vpop.f32.mrb[0].mxu0
    %v8970 = vadd.f32 0.0, %v8969
    %v8971 = vpop.f32.mrb[0].mxu0
    %v8972 = vadd.f32 0.0, %v8971
    %8973 = vmatprep.mubr.bf16.mxu0 %v4850
    %8974 = vmatmul.mubr.bf16.gmra.mrb[0].mxu0 %v4849
    %v8975 = vpop.f32.mrb[0].mxu0
    %v8976 = vadd.f32 0.0, %v8975
    %v8977 = vpop.f32.mrb[0].mxu0
    %v8978 = vadd.f32 0.0, %v8977
    %v8979 = vpop.f32.mrb[0].mxu0
    %v8980 = vadd.f32 0.0, %v8979
    %v8981 = vpop.f32.mrb[0].mxu0
    %v8982 = vadd.f32 0.0, %v8981
    %8983 = vdwg.mxu0
    %8984 = vmatprep.subr.bf16.mxu0 %v8047
    %8985 = vmatpush1.bf16.msra.mxu0 %v8046
    %8986 = vmatprep.subr.bf16.mxu0 %v8063
    %8987 = vmatpush1.bf16.msra.mxu0 %v8062
    %8988 = vmatprep.subr.bf16.mxu0 %v8079
    %8989 = vmatpush1.bf16.msra.mxu0 %v8078
    %8990 = vmatprep.subr.bf16.mxu0 %v8095
    %8991 = vmatpush1.bf16.msra.mxu0 %v8094
    %8992 = vmatprep.subr.bf16.mxu0 %v8111
    %8993 = vmatpush1.bf16.msra.mxu0 %v8110
    %8994 = vmatprep.subr.bf16.mxu0 %v8127
    %8995 = vmatpush1.bf16.msra.mxu0 %v8126
    %8996 = vmatprep.subr.bf16.mxu0 %v8143
    %8997 = vmatpush1.bf16.msra.mxu0 %v8142
    %8998 = vmatprep.subr.bf16.mxu0 %v8159
    %8999 = vmatpush1.bf16.msra.mxu0 %v8158
    %9000 = vmatprep.subr.bf16.mxu0 %v8175
    %9001 = vmatpush1.bf16.msra.mxu0 %v8174
    %9002 = vmatprep.subr.bf16.mxu0 %v8191
    %9003 = vmatpush1.bf16.msra.mxu0 %v8190
    %9004 = vmatprep.subr.bf16.mxu0 %v8207
    %9005 = vmatpush1.bf16.msra.mxu0 %v8206
    %9006 = vmatprep.subr.bf16.mxu0 %v8223
    %9007 = vmatpush1.bf16.msra.mxu0 %v8222
    %9008 = vmatprep.subr.bf16.mxu0 %v8239
    %9009 = vmatpush1.bf16.msra.mxu0 %v8238
    %9010 = vmatprep.subr.bf16.mxu0 %v8255
    %9011 = vmatpush1.bf16.msra.mxu0 %v8254
    %9012 = vmatprep.subr.bf16.mxu0 %v8271
    %9013 = vmatpush1.bf16.msra.mxu0 %v8270
    %9014 = vmatprep.subr.bf16.mxu0 %v8287
    %9015 = vmatpush1.bf16.msra.mxu0 %v8286
    %9016 = vmatprep.mubr.bf16.mxu0 %v4844
    %9017 = vmatmul.mubr.bf16.gmra.mrb[0].mxu0 %v4843
    %v9018 = vpop.f32.mrb[0].mxu0
    %v9019 = vadd.f32 0.0, %v9018
    %v9020 = vpop.f32.mrb[0].mxu0
    %v9021 = vadd.f32 0.0, %v9020
    %v9022 = vpop.f32.mrb[0].mxu0
    %v9023 = vadd.f32 0.0, %v9022
    %v9024 = vpop.f32.mrb[0].mxu0
    %v9025 = vadd.f32 0.0, %v9024
    %9026 = vmatprep.mubr.bf16.mxu0 %v4846
    %9027 = vmatmul.mubr.bf16.gmra.mrb[0].mxu0 %v4845
    %v9028 = vpop.f32.mrb[0].mxu0
    %v9029 = vadd.f32 0.0, %v9028
    %v9030 = vpop.f32.mrb[0].mxu0
    %v9031 = vadd.f32 0.0, %v9030
    %v9032 = vpop.f32.mrb[0].mxu0
    %v9033 = vadd.f32 0.0, %v9032
    %v9034 = vpop.f32.mrb[0].mxu0
    %v9035 = vadd.f32 0.0, %v9034
    %9036 = vmatprep.mubr.bf16.mxu0 %v4848
    %9037 = vmatmul.mubr.bf16.gmra.mrb[0].mxu0 %v4847
    %v9038 = vpop.f32.mrb[0].mxu0
    %v9039 = vadd.f32 0.0, %v9038
    %v9040 = vpop.f32.mrb[0].mxu0
    %v9041 = vadd.f32 0.0, %v9040
    %v9042 = vpop.f32.mrb[0].mxu0
    %v9043 = vadd.f32 0.0, %v9042
    %v9044 = vpop.f32.mrb[0].mxu0
    %v9045 = vadd.f32 0.0, %v9044
    %9046 = vmatprep.mubr.bf16.mxu0 %v4850
    %9047 = vmatmul.mubr.bf16.gmra.mrb[0].mxu0 %v4849
    %v9048 = vpop.f32.mrb[0].mxu0
    %v9049 = vadd.f32 0.0, %v9048
    %v9050 = vpop.f32.mrb[0].mxu0
    %v9051 = vadd.f32 0.0, %v9050
    %v9052 = vpop.f32.mrb[0].mxu0
    %v9053 = vadd.f32 0.0, %v9052
    %v9054 = vpop.f32.mrb[0].mxu0
    %v9055 = vadd.f32 0.0, %v9054
    %9056 = vdwg.mxu0
    %9057 = vmatprep.subr.bf16.mxu0 %v8049
    %9058 = vmatpush1.bf16.msra.mxu0 %v8048
    %9059 = vmatprep.subr.bf16.mxu0 %v8065
    %9060 = vmatpush1.bf16.msra.mxu0 %v8064
    %9061 = vmatprep.subr.bf16.mxu0 %v8081
    %9062 = vmatpush1.bf16.msra.mxu0 %v8080
    %9063 = vmatprep.subr.bf16.mxu0 %v8097
    %9064 = vmatpush1.bf16.msra.mxu0 %v8096
    %9065 = vmatprep.subr.bf16.mxu0 %v8113
    %9066 = vmatpush1.bf16.msra.mxu0 %v8112
    %9067 = vmatprep.subr.bf16.mxu0 %v8129
    %9068 = vmatpush1.bf16.msra.mxu0 %v8128
    %9069 = vmatprep.subr.bf16.mxu0 %v8145
    %9070 = vmatpush1.bf16.msra.mxu0 %v8144
    %9071 = vmatprep.subr.bf16.mxu0 %v8161
    %9072 = vmatpush1.bf16.msra.mxu0 %v8160
    %9073 = vmatprep.subr.bf16.mxu0 %v8177
    %9074 = vmatpush1.bf16.msra.mxu0 %v8176
    %9075 = vmatprep.subr.bf16.mxu0 %v8193
    %9076 = vmatpush1.bf16.msra.mxu0 %v8192
    %9077 = vmatprep.subr.bf16.mxu0 %v8209
    %9078 = vmatpush1.bf16.msra.mxu0 %v8208
    %9079 = vmatprep.subr.bf16.mxu0 %v8225
    %9080 = vmatpush1.bf16.msra.mxu0 %v8224
    %9081 = vmatprep.subr.bf16.mxu0 %v8241
    %9082 = vmatpush1.bf16.msra.mxu0 %v8240
    %9083 = vmatprep.subr.bf16.mxu0 %v8257
    %9084 = vmatpush1.bf16.msra.mxu0 %v8256
    %9085 = vmatprep.subr.bf16.mxu0 %v8273
    %9086 = vmatpush1.bf16.msra.mxu0 %v8272
    %9087 = vmatprep.subr.bf16.mxu0 %v8289
    %9088 = vmatpush1.bf16.msra.mxu0 %v8288
    %9089 = vmatprep.mubr.bf16.mxu0 %v4844
    %9090 = vmatmul.mubr.bf16.gmra.mrb[0].mxu0 %v4843
    %v9091 = vpop.f32.mrb[0].mxu0
    %v9092 = vadd.f32 0.0, %v9091
    %v9093 = vpop.f32.mrb[0].mxu0
    %v9094 = vadd.f32 0.0, %v9093
    %v9095 = vpop.f32.mrb[0].mxu0
    %v9096 = vadd.f32 0.0, %v9095
    %v9097 = vpop.f32.mrb[0].mxu0
    %v9098 = vadd.f32 0.0, %v9097
    %9099 = vmatprep.mubr.bf16.mxu0 %v4846
    %9100 = vmatmul.mubr.bf16.gmra.mrb[0].mxu0 %v4845
    %v9101 = vpop.f32.mrb[0].mxu0
    %v9102 = vadd.f32 0.0, %v9101
    %v9103 = vpop.f32.mrb[0].mxu0
    %v9104 = vadd.f32 0.0, %v9103
    %v9105 = vpop.f32.mrb[0].mxu0
    %v9106 = vadd.f32 0.0, %v9105
    %v9107 = vpop.f32.mrb[0].mxu0
    %v9108 = vadd.f32 0.0, %v9107
    %9109 = vmatprep.mubr.bf16.mxu0 %v4848
    %9110 = vmatmul.mubr.bf16.gmra.mrb[0].mxu0 %v4847
    %v9111 = vpop.f32.mrb[0].mxu0
    %v9112 = vadd.f32 0.0, %v9111
    %v9113 = vpop.f32.mrb[0].mxu0
    %v9114 = vadd.f32 0.0, %v9113
    %v9115 = vpop.f32.mrb[0].mxu0
    %v9116 = vadd.f32 0.0, %v9115
    %v9117 = vpop.f32.mrb[0].mxu0
    %v9118 = vadd.f32 0.0, %v9117
    %9119 = vmatprep.mubr.bf16.mxu0 %v4850
    %9120 = vmatmul.mubr.bf16.gmra.mrb[0].mxu0 %v4849
    %v9121 = vpop.f32.mrb[0].mxu0
    %v9122 = vadd.f32 0.0, %v9121
    %v9123 = vpop.f32.mrb[0].mxu0
    %v9124 = vadd.f32 0.0, %v9123
    %v9125 = vpop.f32.mrb[0].mxu0
    %v9126 = vadd.f32 0.0, %v9125
    %v9127 = vpop.f32.mrb[0].mxu0
    %v9128 = vadd.f32 0.0, %v9127
    %9129 = vdwg.mxu0
    %v9130 = vmul.f32 %v4827, %v8581
    %v9131 = vmul.f32 %v4828, %v8583
    %v9132 = vmul.f32 %v4829, %v8585
    %v9133 = vmul.f32 %v4830, %v8587
    %v9134 = vmul.f32 %v4831, %v8591
    %v9135 = vmul.f32 %v4832, %v8593
    %v9136 = vmul.f32 %v4833, %v8595
    %v9137 = vmul.f32 %v4834, %v8597
    %v9138 = vmul.f32 %v4835, %v8601
    %v9139 = vmul.f32 %v4836, %v8603
    %v9140 = vmul.f32 %v4837, %v8605
    %v9141 = vmul.f32 %v4838, %v8607
    %v9142 = vmul.f32 %v4839, %v8611
    %v9143 = vmul.f32 %v4840, %v8613
    %v9144 = vmul.f32 %v4841, %v8615
    %v9145 = vmul.f32 %v4842, %v8617
    %v9146 = vmul.f32 %v9130, %v6946
    %v9147 = vmul.f32 %v9131, %v6947
    %v9148 = vmul.f32 %v9132, %v6954
    %v9149 = vmul.f32 %v9133, %v6955
    %v9150 = vmul.f32 %v9134, %v6962
    %v9151 = vmul.f32 %v9135, %v6963
    %v9152 = vmul.f32 %v9136, %v6970
    %v9153 = vmul.f32 %v9137, %v6971
    %v9154 = vmul.f32 %v9138, %v6978
    %v9155 = vmul.f32 %v9139, %v6979
    %v9156 = vmul.f32 %v9140, %v6986
    %v9157 = vmul.f32 %v9141, %v6987
    %v9158 = vmul.f32 %v9142, %v6994
    %v9159 = vmul.f32 %v9143, %v6995
    %v9160 = vmul.f32 %v9144, %v7002
    %v9161 = vmul.f32 %v9145, %v7003
    %v9162 = vpack.c.bf16 %v9148, %v9146
    %v9163 = vpack.c.bf16 %v9149, %v9147
    %v9164 = vpack.c.bf16 %v9152, %v9150
    %v9165 = vpack.c.bf16 %v9153, %v9151
    %v9166 = vpack.c.bf16 %v9156, %v9154
    %v9167 = vpack.c.bf16 %v9157, %v9155
    %v9168 = vpack.c.bf16 %v9160, %v9158
    %v9169 = vpack.c.bf16 %v9161, %v9159
    %v9170 = vmul.f32 %v4827, %v8654
    %v9171 = vmul.f32 %v4828, %v8656
    %v9172 = vmul.f32 %v4829, %v8658
    %v9173 = vmul.f32 %v4830, %v8660
    %v9174 = vmul.f32 %v4831, %v8664
    %v9175 = vmul.f32 %v4832, %v8666
    %v9176 = vmul.f32 %v4833, %v8668
    %v9177 = vmul.f32 %v4834, %v8670
    %v9178 = vmul.f32 %v4835, %v8674
    %v9179 = vmul.f32 %v4836, %v8676
    %v9180 = vmul.f32 %v4837, %v8678
    %v9181 = vmul.f32 %v4838, %v8680
    %v9182 = vmul.f32 %v4839, %v8684
    %v9183 = vmul.f32 %v4840, %v8686
    %v9184 = vmul.f32 %v4841, %v8688
    %v9185 = vmul.f32 %v4842, %v8690
    %v9186 = vmul.f32 %v9170, %v6948
    %v9187 = vmul.f32 %v9171, %v6949
    %v9188 = vmul.f32 %v9172, %v6956
    %v9189 = vmul.f32 %v9173, %v6957
    %v9190 = vmul.f32 %v9174, %v6964
    %v9191 = vmul.f32 %v9175, %v6965
    %v9192 = vmul.f32 %v9176, %v6972
    %v9193 = vmul.f32 %v9177, %v6973
    %v9194 = vmul.f32 %v9178, %v6980
    %v9195 = vmul.f32 %v9179, %v6981
    %v9196 = vmul.f32 %v9180, %v6988
    %v9197 = vmul.f32 %v9181, %v6989
    %v9198 = vmul.f32 %v9182, %v6996
    %v9199 = vmul.f32 %v9183, %v6997
    %v9200 = vmul.f32 %v9184, %v7004
    %v9201 = vmul.f32 %v9185, %v7005
    %v9202 = vpack.c.bf16 %v9188, %v9186
    %v9203 = vpack.c.bf16 %v9189, %v9187
    %v9204 = vpack.c.bf16 %v9192, %v9190
    %v9205 = vpack.c.bf16 %v9193, %v9191
    %v9206 = vpack.c.bf16 %v9196, %v9194
    %v9207 = vpack.c.bf16 %v9197, %v9195
    %v9208 = vpack.c.bf16 %v9200, %v9198
    %v9209 = vpack.c.bf16 %v9201, %v9199
    %v9210 = vmul.f32 %v4827, %v8727
    %v9211 = vmul.f32 %v4828, %v8729
    %v9212 = vmul.f32 %v4829, %v8731
    %v9213 = vmul.f32 %v4830, %v8733
    %v9214 = vmul.f32 %v4831, %v8737
    %v9215 = vmul.f32 %v4832, %v8739
    %v9216 = vmul.f32 %v4833, %v8741
    %v9217 = vmul.f32 %v4834, %v8743
    %v9218 = vmul.f32 %v4835, %v8747
    %v9219 = vmul.f32 %v4836, %v8749
    %v9220 = vmul.f32 %v4837, %v8751
    %v9221 = vmul.f32 %v4838, %v8753
    %v9222 = vmul.f32 %v4839, %v8757
    %v9223 = vmul.f32 %v4840, %v8759
    %v9224 = vmul.f32 %v4841, %v8761
    %v9225 = vmul.f32 %v4842, %v8763
    %v9226 = vmul.f32 %v9210, %v6948
    %v9227 = vmul.f32 %v9211, %v6949
    %v9228 = vmul.f32 %v9212, %v6956
    %v9229 = vmul.f32 %v9213, %v6957
    %v9230 = vmul.f32 %v9214, %v6964
    %v9231 = vmul.f32 %v9215, %v6965
    %v9232 = vmul.f32 %v9216, %v6972
    %v9233 = vmul.f32 %v9217, %v6973
    %v9234 = vmul.f32 %v9218, %v6980
    %v9235 = vmul.f32 %v9219, %v6981
    %v9236 = vmul.f32 %v9220, %v6988
    %v9237 = vmul.f32 %v9221, %v6989
    %v9238 = vmul.f32 %v9222, %v6996
    %v9239 = vmul.f32 %v9223, %v6997
    %v9240 = vmul.f32 %v9224, %v7004
    %v9241 = vmul.f32 %v9225, %v7005
    %v9242 = vpack.c.bf16 %v9228, %v9226
    %v9243 = vpack.c.bf16 %v9229, %v9227
    %v9244 = vpack.c.bf16 %v9232, %v9230
    %v9245 = vpack.c.bf16 %v9233, %v9231
    %v9246 = vpack.c.bf16 %v9236, %v9234
    %v9247 = vpack.c.bf16 %v9237, %v9235
    %v9248 = vpack.c.bf16 %v9240, %v9238
    %v9249 = vpack.c.bf16 %v9241, %v9239
    %v9250 = vmul.f32 %v4827, %v8800
    %v9251 = vmul.f32 %v4828, %v8802
    %v9252 = vmul.f32 %v4829, %v8804
    %v9253 = vmul.f32 %v4830, %v8806
    %v9254 = vmul.f32 %v4831, %v8810
    %v9255 = vmul.f32 %v4832, %v8812
    %v9256 = vmul.f32 %v4833, %v8814
    %v9257 = vmul.f32 %v4834, %v8816
    %v9258 = vmul.f32 %v4835, %v8820
    %v9259 = vmul.f32 %v4836, %v8822
    %v9260 = vmul.f32 %v4837, %v8824
    %v9261 = vmul.f32 %v4838, %v8826
    %v9262 = vmul.f32 %v4839, %v8830
    %v9263 = vmul.f32 %v4840, %v8832
    %v9264 = vmul.f32 %v4841, %v8834
    %v9265 = vmul.f32 %v4842, %v8836
    %v9266 = vmul.f32 %v9250, %v6948
    %v9267 = vmul.f32 %v9251, %v6949
    %v9268 = vmul.f32 %v9252, %v6956
    %v9269 = vmul.f32 %v9253, %v6957
    %v9270 = vmul.f32 %v9254, %v6964
    %v9271 = vmul.f32 %v9255, %v6965
    %v9272 = vmul.f32 %v9256, %v6972
    %v9273 = vmul.f32 %v9257, %v6973
    %v9274 = vmul.f32 %v9258, %v6980
    %v9275 = vmul.f32 %v9259, %v6981
    %v9276 = vmul.f32 %v9260, %v6988
    %v9277 = vmul.f32 %v9261, %v6989
    %v9278 = vmul.f32 %v9262, %v6996
    %v9279 = vmul.f32 %v9263, %v6997
    %v9280 = vmul.f32 %v9264, %v7004
    %v9281 = vmul.f32 %v9265, %v7005
    %v9282 = vpack.c.bf16 %v9268, %v9266
    %v9283 = vpack.c.bf16 %v9269, %v9267
    %v9284 = vpack.c.bf16 %v9272, %v9270
    %v9285 = vpack.c.bf16 %v9273, %v9271
    %v9286 = vpack.c.bf16 %v9276, %v9274
    %v9287 = vpack.c.bf16 %v9277, %v9275
    %v9288 = vpack.c.bf16 %v9280, %v9278
    %v9289 = vpack.c.bf16 %v9281, %v9279
    %v9290 = vmul.f32 %v4827, %v8873
    %v9291 = vmul.f32 %v4828, %v8875
    %v9292 = vmul.f32 %v4829, %v8877
    %v9293 = vmul.f32 %v4830, %v8879
    %v9294 = vmul.f32 %v4831, %v8883
    %v9295 = vmul.f32 %v4832, %v8885
    %v9296 = vmul.f32 %v4833, %v8887
    %v9297 = vmul.f32 %v4834, %v8889
    %v9298 = vmul.f32 %v4835, %v8893
    %v9299 = vmul.f32 %v4836, %v8895
    %v9300 = vmul.f32 %v4837, %v8897
    %v9301 = vmul.f32 %v4838, %v8899
    %v9302 = vmul.f32 %v4839, %v8903
    %v9303 = vmul.f32 %v4840, %v8905
    %v9304 = vmul.f32 %v4841, %v8907
    %v9305 = vmul.f32 %v4842, %v8909
    %v9306 = vmul.f32 %v9290, %v6950
    %v9307 = vmul.f32 %v9291, %v6951
    %v9308 = vmul.f32 %v9292, %v6958
    %v9309 = vmul.f32 %v9293, %v6959
    %v9310 = vmul.f32 %v9294, %v6966
    %v9311 = vmul.f32 %v9295, %v6967
    %v9312 = vmul.f32 %v9296, %v6974
    %v9313 = vmul.f32 %v9297, %v6975
    %v9314 = vmul.f32 %v9298, %v6982
    %v9315 = vmul.f32 %v9299, %v6983
    %v9316 = vmul.f32 %v9300, %v6990
    %v9317 = vmul.f32 %v9301, %v6991
    %v9318 = vmul.f32 %v9302, %v6998
    %v9319 = vmul.f32 %v9303, %v6999
    %v9320 = vmul.f32 %v9304, %v7006
    %v9321 = vmul.f32 %v9305, %v7007
    %v9322 = vpack.c.bf16 %v9308, %v9306
    %v9323 = vpack.c.bf16 %v9309, %v9307
    %v9324 = vpack.c.bf16 %v9312, %v9310
    %v9325 = vpack.c.bf16 %v9313, %v9311
    %v9326 = vpack.c.bf16 %v9316, %v9314
    %v9327 = vpack.c.bf16 %v9317, %v9315
    %v9328 = vpack.c.bf16 %v9320, %v9318
    %v9329 = vpack.c.bf16 %v9321, %v9319
    %v9330 = vmul.f32 %v4827, %v8946
    %v9331 = vmul.f32 %v4828, %v8948
    %v9332 = vmul.f32 %v4829, %v8950
    %v9333 = vmul.f32 %v4830, %v8952
    %v9334 = vmul.f32 %v4831, %v8956
    %v9335 = vmul.f32 %v4832, %v8958
    %v9336 = vmul.f32 %v4833, %v8960
    %v9337 = vmul.f32 %v4834, %v8962
    %v9338 = vmul.f32 %v4835, %v8966
    %v9339 = vmul.f32 %v4836, %v8968
    %v9340 = vmul.f32 %v4837, %v8970
    %v9341 = vmul.f32 %v4838, %v8972
    %v9342 = vmul.f32 %v4839, %v8976
    %v9343 = vmul.f32 %v4840, %v8978
    %v9344 = vmul.f32 %v4841, %v8980
    %v9345 = vmul.f32 %v4842, %v8982
    %v9346 = vmul.f32 %v9330, %v6950
    %v9347 = vmul.f32 %v9331, %v6951
    %v9348 = vmul.f32 %v9332, %v6958
    %v9349 = vmul.f32 %v9333, %v6959
    %v9350 = vmul.f32 %v9334, %v6966
    %v9351 = vmul.f32 %v9335, %v6967
    %v9352 = vmul.f32 %v9336, %v6974
    %v9353 = vmul.f32 %v9337, %v6975
    %v9354 = vmul.f32 %v9338, %v6982
    %v9355 = vmul.f32 %v9339, %v6983
    %v9356 = vmul.f32 %v9340, %v6990
    %v9357 = vmul.f32 %v9341, %v6991
    %v9358 = vmul.f32 %v9342, %v6998
    %v9359 = vmul.f32 %v9343, %v6999
    %v9360 = vmul.f32 %v9344, %v7006
    %v9361 = vmul.f32 %v9345, %v7007
    %v9362 = vpack.c.bf16 %v9348, %v9346
    %v9363 = vpack.c.bf16 %v9349, %v9347
    %v9364 = vpack.c.bf16 %v9352, %v9350
    %v9365 = vpack.c.bf16 %v9353, %v9351
    %v9366 = vpack.c.bf16 %v9356, %v9354
    %v9367 = vpack.c.bf16 %v9357, %v9355
    %v9368 = vpack.c.bf16 %v9360, %v9358
    %v9369 = vpack.c.bf16 %v9361, %v9359
    %v9370 = vmul.f32 %v4827, %v9019
    %v9371 = vmul.f32 %v4828, %v9021
    %v9372 = vmul.f32 %v4829, %v9023
    %v9373 = vmul.f32 %v4830, %v9025
    %v9374 = vmul.f32 %v4831, %v9029
    %v9375 = vmul.f32 %v4832, %v9031
    %v9376 = vmul.f32 %v4833, %v9033
    %v9377 = vmul.f32 %v4834, %v9035
    %v9378 = vmul.f32 %v4835, %v9039
    %v9379 = vmul.f32 %v4836, %v9041
    %v9380 = vmul.f32 %v4837, %v9043
    %v9381 = vmul.f32 %v4838, %v9045
    %v9382 = vmul.f32 %v4839, %v9049
    %v9383 = vmul.f32 %v4840, %v9051
    %v9384 = vmul.f32 %v4841, %v9053
    %v9385 = vmul.f32 %v4842, %v9055
    %v9386 = vmul.f32 %v9370, %v6950
    %v9387 = vmul.f32 %v9371, %v6951
    %v9388 = vmul.f32 %v9372, %v6958
    %v9389 = vmul.f32 %v9373, %v6959
    %v9390 = vmul.f32 %v9374, %v6966
    %v9391 = vmul.f32 %v9375, %v6967
    %v9392 = vmul.f32 %v9376, %v6974
    %v9393 = vmul.f32 %v9377, %v6975
    %v9394 = vmul.f32 %v9378, %v6982
    %v9395 = vmul.f32 %v9379, %v6983
    %v9396 = vmul.f32 %v9380, %v6990
    %v9397 = vmul.f32 %v9381, %v6991
    %v9398 = vmul.f32 %v9382, %v6998
    %v9399 = vmul.f32 %v9383, %v6999
    %v9400 = vmul.f32 %v9384, %v7006
    %v9401 = vmul.f32 %v9385, %v7007
    %v9402 = vpack.c.bf16 %v9388, %v9386
    %v9403 = vpack.c.bf16 %v9389, %v9387
    %v9404 = vpack.c.bf16 %v9392, %v9390
    %v9405 = vpack.c.bf16 %v9393, %v9391
    %v9406 = vpack.c.bf16 %v9396, %v9394
    %v9407 = vpack.c.bf16 %v9397, %v9395
    %v9408 = vpack.c.bf16 %v9400, %v9398
    %v9409 = vpack.c.bf16 %v9401, %v9399
    %v9410 = vmul.f32 %v4827, %v9092
    %v9411 = vmul.f32 %v4828, %v9094
    %v9412 = vmul.f32 %v4829, %v9096
    %v9413 = vmul.f32 %v4830, %v9098
    %v9414 = vmul.f32 %v4831, %v9102
    %v9415 = vmul.f32 %v4832, %v9104
    %v9416 = vmul.f32 %v4833, %v9106
    %v9417 = vmul.f32 %v4834, %v9108
    %v9418 = vmul.f32 %v4835, %v9112
    %v9419 = vmul.f32 %v4836, %v9114
    %v9420 = vmul.f32 %v4837, %v9116
    %v9421 = vmul.f32 %v4838, %v9118
    %v9422 = vmul.f32 %v4839, %v9122
    %v9423 = vmul.f32 %v4840, %v9124
    %v9424 = vmul.f32 %v4841, %v9126
    %v9425 = vmul.f32 %v4842, %v9128
    %v9426 = vmul.f32 %v9410, %v6952
    %v9427 = vmul.f32 %v9411, %v6953
    %v9428 = vmul.f32 %v9412, %v6960
    %v9429 = vmul.f32 %v9413, %v6961
    %v9430 = vmul.f32 %v9414, %v6968
    %v9431 = vmul.f32 %v9415, %v6969
    %v9432 = vmul.f32 %v9416, %v6976
    %v9433 = vmul.f32 %v9417, %v6977
    %v9434 = vmul.f32 %v9418, %v6984
    %v9435 = vmul.f32 %v9419, %v6985
    %v9436 = vmul.f32 %v9420, %v6992
    %v9437 = vmul.f32 %v9421, %v6993
    %v9438 = vmul.f32 %v9422, %v7000
    %v9439 = vmul.f32 %v9423, %v7001
    %v9440 = vmul.f32 %v9424, %v7008
    %v9441 = vmul.f32 %v9425, %v7009
    %v9442 = vpack.c.bf16 %v9428, %v9426
    %v9443 = vpack.c.bf16 %v9429, %v9427
    %v9444 = vpack.c.bf16 %v9432, %v9430
    %v9445 = vpack.c.bf16 %v9433, %v9431
    %v9446 = vpack.c.bf16 %v9436, %v9434
    %v9447 = vpack.c.bf16 %v9437, %v9435
    %v9448 = vpack.c.bf16 %v9440, %v9438
    %v9449 = vpack.c.bf16 %v9441, %v9439
    %v9450 = vld [vmem:[%s16] sm:$0xf]
    %v9451 = vld [vmem:[%s16 + $0x4] sm:$0xf]
    %v9452 = vld [vmem:[%s16 + $0x8] sm:$0xf]
    %v9453 = vld [vmem:[%s16 + $0xc] sm:$0xf]
    %v9454 = vld [vmem:[%s16 + $0x10] sm:$0xf]
    %v9455 = vld [vmem:[%s16 + $0x14] sm:$0xf]
    %v9456 = vld [vmem:[%s16 + $0x18] sm:$0xf]
    %v9457 = vld [vmem:[%s16 + $0x1c] sm:$0xf]
    %v9458 = vld [vmem:[%s16 + $0x20] sm:$0xf]
    %v9459 = vld [vmem:[%s16 + $0x24] sm:$0xf]
    %v9460 = vld [vmem:[%s16 + $0x28] sm:$0xf]
    %v9461 = vld [vmem:[%s16 + $0x2c] sm:$0xf]
    %v9462 = vld [vmem:[%s16 + $0x30] sm:$0xf]
    %v9463 = vld [vmem:[%s16 + $0x34] sm:$0xf]
    %v9464 = vld [vmem:[%s16 + $0x38] sm:$0xf]
    %v9465 = vld [vmem:[%s16 + $0x3c] sm:$0xf]
    %v9466 = vld [vmem:[%s16 + $0x40] sm:$0xf]
    %v9467 = vld [vmem:[%s16 + $0x44] sm:$0xf]
    %v9468 = vld [vmem:[%s16 + $0x48] sm:$0xf]
    %v9469 = vld [vmem:[%s16 + $0x4c] sm:$0xf]
    %v9470 = vld [vmem:[%s16 + $0x50] sm:$0xf]
    %v9471 = vld [vmem:[%s16 + $0x54] sm:$0xf]
    %v9472 = vld [vmem:[%s16 + $0x58] sm:$0xf]
    %v9473 = vld [vmem:[%s16 + $0x5c] sm:$0xf]
    %v9474 = vld [vmem:[%s16 + $0x60] sm:$0xf]
    %v9475 = vld [vmem:[%s16 + $0x64] sm:$0xf]
    %v9476 = vld [vmem:[%s16 + $0x68] sm:$0xf]
    %v9477 = vld [vmem:[%s16 + $0x6c] sm:$0xf]
    %v9478 = vld [vmem:[%s16 + $0x70] sm:$0xf]
    %v9479 = vld [vmem:[%s16 + $0x74] sm:$0xf]
    %v9480 = vld [vmem:[%s16 + $0x78] sm:$0xf]
    %v9481 = vld [vmem:[%s16 + $0x7c] sm:$0xf]
    %v9482 = vld [vmem:[%s16 + $0x80] sm:$0xf]
    %v9483 = vld [vmem:[%s16 + $0x84] sm:$0xf]
    %v9484 = vld [vmem:[%s16 + $0x88] sm:$0xf]
    %v9485 = vld [vmem:[%s16 + $0x8c] sm:$0xf]
    %v9486 = vld [vmem:[%s16 + $0x90] sm:$0xf]
    %v9487 = vld [vmem:[%s16 + $0x94] sm:$0xf]
    %v9488 = vld [vmem:[%s16 + $0x98] sm:$0xf]
    %v9489 = vld [vmem:[%s16 + $0x9c] sm:$0xf]
    %v9490 = vld [vmem:[%s16 + $0xa0] sm:$0xf]
    %v9491 = vld [vmem:[%s16 + $0xa4] sm:$0xf]
    %v9492 = vld [vmem:[%s16 + $0xa8] sm:$0xf]
    %v9493 = vld [vmem:[%s16 + $0xac] sm:$0xf]
    %v9494 = vld [vmem:[%s16 + $0xb0] sm:$0xf]
    %v9495 = vld [vmem:[%s16 + $0xb4] sm:$0xf]
    %v9496 = vld [vmem:[%s16 + $0xb8] sm:$0xf]
    %v9497 = vld [vmem:[%s16 + $0xbc] sm:$0xf]
    %v9498 = vld [vmem:[%s16 + $0xc0] sm:$0xf]
    %v9499 = vld [vmem:[%s16 + $0xc4] sm:$0xf]
    %v9500 = vld [vmem:[%s16 + $0xc8] sm:$0xf]
    %v9501 = vld [vmem:[%s16 + $0xcc] sm:$0xf]
    %v9502 = vld [vmem:[%s16 + $0xd0] sm:$0xf]
    %v9503 = vld [vmem:[%s16 + $0xd4] sm:$0xf]
    %v9504 = vld [vmem:[%s16 + $0xd8] sm:$0xf]
    %v9505 = vld [vmem:[%s16 + $0xdc] sm:$0xf]
    %v9506 = vld [vmem:[%s16 + $0xe0] sm:$0xf]
    %v9507 = vld [vmem:[%s16 + $0xe4] sm:$0xf]
    %v9508 = vld [vmem:[%s16 + $0xe8] sm:$0xf]
    %v9509 = vld [vmem:[%s16 + $0xec] sm:$0xf]
    %v9510 = vld [vmem:[%s16 + $0xf0] sm:$0xf]
    %v9511 = vld [vmem:[%s16 + $0xf4] sm:$0xf]
    %v9512 = vld [vmem:[%s16 + $0xf8] sm:$0xf]
    %v9513 = vld [vmem:[%s16 + $0xfc] sm:$0xf]
    %v9514 = vld [vmem:[%s16 + $0x100] sm:$0xf]
    %v9515 = vld [vmem:[%s16 + $0x104] sm:$0xf]
    %v9516 = vld [vmem:[%s16 + $0x108] sm:$0xf]
    %v9517 = vld [vmem:[%s16 + $0x10c] sm:$0xf]
    %v9518 = vld [vmem:[%s16 + $0x110] sm:$0xf]
    %v9519 = vld [vmem:[%s16 + $0x114] sm:$0xf]
    %v9520 = vld [vmem:[%s16 + $0x118] sm:$0xf]
    %v9521 = vld [vmem:[%s16 + $0x11c] sm:$0xf]
    %v9522 = vld [vmem:[%s16 + $0x120] sm:$0xf]
    %v9523 = vld [vmem:[%s16 + $0x124] sm:$0xf]
    %v9524 = vld [vmem:[%s16 + $0x128] sm:$0xf]
    %v9525 = vld [vmem:[%s16 + $0x12c] sm:$0xf]
    %v9526 = vld [vmem:[%s16 + $0x130] sm:$0xf]
    %v9527 = vld [vmem:[%s16 + $0x134] sm:$0xf]
    %v9528 = vld [vmem:[%s16 + $0x138] sm:$0xf]
    %v9529 = vld [vmem:[%s16 + $0x13c] sm:$0xf]
    %v9530 = vld [vmem:[%s16 + $0x140] sm:$0xf]
    %v9531 = vld [vmem:[%s16 + $0x144] sm:$0xf]
    %v9532 = vld [vmem:[%s16 + $0x148] sm:$0xf]
    %v9533 = vld [vmem:[%s16 + $0x14c] sm:$0xf]
    %v9534 = vld [vmem:[%s16 + $0x150] sm:$0xf]
    %v9535 = vld [vmem:[%s16 + $0x154] sm:$0xf]
    %v9536 = vld [vmem:[%s16 + $0x158] sm:$0xf]
    %v9537 = vld [vmem:[%s16 + $0x15c] sm:$0xf]
    %v9538 = vld [vmem:[%s16 + $0x160] sm:$0xf]
    %v9539 = vld [vmem:[%s16 + $0x164] sm:$0xf]
    %v9540 = vld [vmem:[%s16 + $0x168] sm:$0xf]
    %v9541 = vld [vmem:[%s16 + $0x16c] sm:$0xf]
    %v9542 = vld [vmem:[%s16 + $0x170] sm:$0xf]
    %v9543 = vld [vmem:[%s16 + $0x174] sm:$0xf]
    %v9544 = vld [vmem:[%s16 + $0x178] sm:$0xf]
    %v9545 = vld [vmem:[%s16 + $0x17c] sm:$0xf]
    %v9546 = vld [vmem:[%s16 + $0x180] sm:$0xf]
    %v9547 = vld [vmem:[%s16 + $0x184] sm:$0xf]
    %v9548 = vld [vmem:[%s16 + $0x188] sm:$0xf]
    %v9549 = vld [vmem:[%s16 + $0x18c] sm:$0xf]
    %v9550 = vld [vmem:[%s16 + $0x190] sm:$0xf]
    %v9551 = vld [vmem:[%s16 + $0x194] sm:$0xf]
    %v9552 = vld [vmem:[%s16 + $0x198] sm:$0xf]
    %v9553 = vld [vmem:[%s16 + $0x19c] sm:$0xf]
    %v9554 = vld [vmem:[%s16 + $0x1a0] sm:$0xf]
    %v9555 = vld [vmem:[%s16 + $0x1a4] sm:$0xf]
    %v9556 = vld [vmem:[%s16 + $0x1a8] sm:$0xf]
    %v9557 = vld [vmem:[%s16 + $0x1ac] sm:$0xf]
    %v9558 = vld [vmem:[%s16 + $0x1b0] sm:$0xf]
    %v9559 = vld [vmem:[%s16 + $0x1b4] sm:$0xf]
    %v9560 = vld [vmem:[%s16 + $0x1b8] sm:$0xf]
    %v9561 = vld [vmem:[%s16 + $0x1bc] sm:$0xf]
    %v9562 = vld [vmem:[%s16 + $0x1c0] sm:$0xf]
    %v9563 = vld [vmem:[%s16 + $0x1c4] sm:$0xf]
    %v9564 = vld [vmem:[%s16 + $0x1c8] sm:$0xf]
    %v9565 = vld [vmem:[%s16 + $0x1cc] sm:$0xf]
    %v9566 = vld [vmem:[%s16 + $0x1d0] sm:$0xf]
    %v9567 = vld [vmem:[%s16 + $0x1d4] sm:$0xf]
    %v9568 = vld [vmem:[%s16 + $0x1d8] sm:$0xf]
    %v9569 = vld [vmem:[%s16 + $0x1dc] sm:$0xf]
    %v9570 = vld [vmem:[%s16 + $0x1e0] sm:$0xf]
    %v9571 = vld [vmem:[%s16 + $0x1e4] sm:$0xf]
    %v9572 = vld [vmem:[%s16 + $0x1e8] sm:$0xf]
    %v9573 = vld [vmem:[%s16 + $0x1ec] sm:$0xf]
    %v9574 = vld [vmem:[%s16 + $0x1f0] sm:$0xf]
    %v9575 = vld [vmem:[%s16 + $0x1f4] sm:$0xf]
    %v9576 = vld [vmem:[%s16 + $0x1f8] sm:$0xf]
    %v9577 = vld [vmem:[%s16 + $0x1fc] sm:$0xf]
    %v9578 = vld [vmem:[%s16 + $0x200] sm:$0xf]
    %v9579 = vld [vmem:[%s16 + $0x204] sm:$0xf]
    %v9580 = vld [vmem:[%s16 + $0x208] sm:$0xf]
    %v9581 = vld [vmem:[%s16 + $0x20c] sm:$0xf]
    %v9582 = vld [vmem:[%s16 + $0x210] sm:$0xf]
    %v9583 = vld [vmem:[%s16 + $0x214] sm:$0xf]
    %v9584 = vld [vmem:[%s16 + $0x218] sm:$0xf]
    %v9585 = vld [vmem:[%s16 + $0x21c] sm:$0xf]
    %v9586 = vld [vmem:[%s16 + $0x220] sm:$0xf]
    %v9587 = vld [vmem:[%s16 + $0x224] sm:$0xf]
    %v9588 = vld [vmem:[%s16 + $0x228] sm:$0xf]
    %v9589 = vld [vmem:[%s16 + $0x22c] sm:$0xf]
    %v9590 = vld [vmem:[%s16 + $0x230] sm:$0xf]
    %v9591 = vld [vmem:[%s16 + $0x234] sm:$0xf]
    %v9592 = vld [vmem:[%s16 + $0x238] sm:$0xf]
    %v9593 = vld [vmem:[%s16 + $0x23c] sm:$0xf]
    %v9594 = vld [vmem:[%s16 + $0x240] sm:$0xf]
    %v9595 = vld [vmem:[%s16 + $0x244] sm:$0xf]
    %v9596 = vld [vmem:[%s16 + $0x248] sm:$0xf]
    %v9597 = vld [vmem:[%s16 + $0x24c] sm:$0xf]
    %v9598 = vld [vmem:[%s16 + $0x250] sm:$0xf]
    %v9599 = vld [vmem:[%s16 + $0x254] sm:$0xf]
    %v9600 = vld [vmem:[%s16 + $0x258] sm:$0xf]
    %v9601 = vld [vmem:[%s16 + $0x25c] sm:$0xf]
    %v9602 = vld [vmem:[%s16 + $0x260] sm:$0xf]
    %v9603 = vld [vmem:[%s16 + $0x264] sm:$0xf]
    %v9604 = vld [vmem:[%s16 + $0x268] sm:$0xf]
    %v9605 = vld [vmem:[%s16 + $0x26c] sm:$0xf]
    %v9606 = vld [vmem:[%s16 + $0x270] sm:$0xf]
    %v9607 = vld [vmem:[%s16 + $0x274] sm:$0xf]
    %v9608 = vld [vmem:[%s16 + $0x278] sm:$0xf]
    %v9609 = vld [vmem:[%s16 + $0x27c] sm:$0xf]
    %v9610 = vld [vmem:[%s16 + $0x280] sm:$0xf]
    %v9611 = vld [vmem:[%s16 + $0x284] sm:$0xf]
    %v9612 = vld [vmem:[%s16 + $0x288] sm:$0xf]
    %v9613 = vld [vmem:[%s16 + $0x28c] sm:$0xf]
    %v9614 = vld [vmem:[%s16 + $0x290] sm:$0xf]
    %v9615 = vld [vmem:[%s16 + $0x294] sm:$0xf]
    %v9616 = vld [vmem:[%s16 + $0x298] sm:$0xf]
    %v9617 = vld [vmem:[%s16 + $0x29c] sm:$0xf]
    %v9618 = vld [vmem:[%s16 + $0x2a0] sm:$0xf]
    %v9619 = vld [vmem:[%s16 + $0x2a4] sm:$0xf]
    %v9620 = vld [vmem:[%s16 + $0x2a8] sm:$0xf]
    %v9621 = vld [vmem:[%s16 + $0x2ac] sm:$0xf]
    %v9622 = vld [vmem:[%s16 + $0x2b0] sm:$0xf]
    %v9623 = vld [vmem:[%s16 + $0x2b4] sm:$0xf]
    %v9624 = vld [vmem:[%s16 + $0x2b8] sm:$0xf]
    %v9625 = vld [vmem:[%s16 + $0x2bc] sm:$0xf]
    %v9626 = vld [vmem:[%s16 + $0x2c0] sm:$0xf]
    %v9627 = vld [vmem:[%s16 + $0x2c4] sm:$0xf]
    %v9628 = vld [vmem:[%s16 + $0x2c8] sm:$0xf]
    %v9629 = vld [vmem:[%s16 + $0x2cc] sm:$0xf]
    %v9630 = vld [vmem:[%s16 + $0x2d0] sm:$0xf]
    %v9631 = vld [vmem:[%s16 + $0x2d4] sm:$0xf]
    %v9632 = vld [vmem:[%s16 + $0x2d8] sm:$0xf]
    %v9633 = vld [vmem:[%s16 + $0x2dc] sm:$0xf]
    %v9634 = vld [vmem:[%s16 + $0x2e0] sm:$0xf]
    %v9635 = vld [vmem:[%s16 + $0x2e4] sm:$0xf]
    %v9636 = vld [vmem:[%s16 + $0x2e8] sm:$0xf]
    %v9637 = vld [vmem:[%s16 + $0x2ec] sm:$0xf]
    %v9638 = vld [vmem:[%s16 + $0x2f0] sm:$0xf]
    %v9639 = vld [vmem:[%s16 + $0x2f4] sm:$0xf]
    %v9640 = vld [vmem:[%s16 + $0x2f8] sm:$0xf]
    %v9641 = vld [vmem:[%s16 + $0x2fc] sm:$0xf]
    %v9642 = vld [vmem:[%s16 + $0x300] sm:$0xf]
    %v9643 = vld [vmem:[%s16 + $0x304] sm:$0xf]
    %v9644 = vld [vmem:[%s16 + $0x308] sm:$0xf]
    %v9645 = vld [vmem:[%s16 + $0x30c] sm:$0xf]
    %v9646 = vld [vmem:[%s16 + $0x310] sm:$0xf]
    %v9647 = vld [vmem:[%s16 + $0x314] sm:$0xf]
    %v9648 = vld [vmem:[%s16 + $0x318] sm:$0xf]
    %v9649 = vld [vmem:[%s16 + $0x31c] sm:$0xf]
    %v9650 = vld [vmem:[%s16 + $0x320] sm:$0xf]
    %v9651 = vld [vmem:[%s16 + $0x324] sm:$0xf]
    %v9652 = vld [vmem:[%s16 + $0x328] sm:$0xf]
    %v9653 = vld [vmem:[%s16 + $0x32c] sm:$0xf]
    %v9654 = vld [vmem:[%s16 + $0x330] sm:$0xf]
    %v9655 = vld [vmem:[%s16 + $0x334] sm:$0xf]
    %v9656 = vld [vmem:[%s16 + $0x338] sm:$0xf]
    %v9657 = vld [vmem:[%s16 + $0x33c] sm:$0xf]
    %v9658 = vld [vmem:[%s16 + $0x340] sm:$0xf]
    %v9659 = vld [vmem:[%s16 + $0x344] sm:$0xf]
    %v9660 = vld [vmem:[%s16 + $0x348] sm:$0xf]
    %v9661 = vld [vmem:[%s16 + $0x34c] sm:$0xf]
    %v9662 = vld [vmem:[%s16 + $0x350] sm:$0xf]
    %v9663 = vld [vmem:[%s16 + $0x354] sm:$0xf]
    %v9664 = vld [vmem:[%s16 + $0x358] sm:$0xf]
    %v9665 = vld [vmem:[%s16 + $0x35c] sm:$0xf]
    %v9666 = vld [vmem:[%s16 + $0x360] sm:$0xf]
    %v9667 = vld [vmem:[%s16 + $0x364] sm:$0xf]
    %v9668 = vld [vmem:[%s16 + $0x368] sm:$0xf]
    %v9669 = vld [vmem:[%s16 + $0x36c] sm:$0xf]
    %v9670 = vld [vmem:[%s16 + $0x370] sm:$0xf]
    %v9671 = vld [vmem:[%s16 + $0x374] sm:$0xf]
    %v9672 = vld [vmem:[%s16 + $0x378] sm:$0xf]
    %v9673 = vld [vmem:[%s16 + $0x37c] sm:$0xf]
    %v9674 = vld [vmem:[%s16 + $0x380] sm:$0xf]
    %v9675 = vld [vmem:[%s16 + $0x384] sm:$0xf]
    %v9676 = vld [vmem:[%s16 + $0x388] sm:$0xf]
    %v9677 = vld [vmem:[%s16 + $0x38c] sm:$0xf]
    %v9678 = vld [vmem:[%s16 + $0x390] sm:$0xf]
    %v9679 = vld [vmem:[%s16 + $0x394] sm:$0xf]
    %v9680 = vld [vmem:[%s16 + $0x398] sm:$0xf]
    %v9681 = vld [vmem:[%s16 + $0x39c] sm:$0xf]
    %v9682 = vld [vmem:[%s16 + $0x3a0] sm:$0xf]
    %v9683 = vld [vmem:[%s16 + $0x3a4] sm:$0xf]
    %v9684 = vld [vmem:[%s16 + $0x3a8] sm:$0xf]
    %v9685 = vld [vmem:[%s16 + $0x3ac] sm:$0xf]
    %v9686 = vld [vmem:[%s16 + $0x3b0] sm:$0xf]
    %v9687 = vld [vmem:[%s16 + $0x3b4] sm:$0xf]
    %v9688 = vld [vmem:[%s16 + $0x3b8] sm:$0xf]
    %v9689 = vld [vmem:[%s16 + $0x3bc] sm:$0xf]
    %v9690 = vld [vmem:[%s16 + $0x3c0] sm:$0xf]
    %v9691 = vld [vmem:[%s16 + $0x3c4] sm:$0xf]
    %v9692 = vld [vmem:[%s16 + $0x3c8] sm:$0xf]
    %v9693 = vld [vmem:[%s16 + $0x3cc] sm:$0xf]
    %v9694 = vld [vmem:[%s16 + $0x3d0] sm:$0xf]
    %v9695 = vld [vmem:[%s16 + $0x3d4] sm:$0xf]
    %v9696 = vld [vmem:[%s16 + $0x3d8] sm:$0xf]
    %v9697 = vld [vmem:[%s16 + $0x3dc] sm:$0xf]
    %v9698 = vld [vmem:[%s16 + $0x3e0] sm:$0xf]
    %v9699 = vld [vmem:[%s16 + $0x3e4] sm:$0xf]
    %v9700 = vld [vmem:[%s16 + $0x3e8] sm:$0xf]
    %v9701 = vld [vmem:[%s16 + $0x3ec] sm:$0xf]
    %v9702 = vld [vmem:[%s16 + $0x3f0] sm:$0xf]
    %v9703 = vld [vmem:[%s16 + $0x3f4] sm:$0xf]
    %v9704 = vld [vmem:[%s16 + $0x3f8] sm:$0xf]
    %v9705 = vld [vmem:[%s16 + $0x3fc] sm:$0xf]
    %v9962 = vunpack.c.l.b16 %v9450
    %v9963 = vunpack.c.l.b16 %v9451
    %v9964 = vunpack.c.l.b16 %v9452
    %v9965 = vunpack.c.l.b16 %v9453
    %v9966 = vunpack.c.l.b16 %v9454
    %v9967 = vunpack.c.l.b16 %v9455
    %v9968 = vunpack.c.l.b16 %v9456
    %v9969 = vunpack.c.l.b16 %v9457
    %v9970 = vunpack.c.l.b16 %v9458
    %v9971 = vunpack.c.l.b16 %v9459
    %v9972 = vunpack.c.l.b16 %v9460
    %v9973 = vunpack.c.l.b16 %v9461
    %v9974 = vunpack.c.l.b16 %v9462
    %v9975 = vunpack.c.l.b16 %v9463
    %v9976 = vunpack.c.l.b16 %v9464
    %v9977 = vunpack.c.l.b16 %v9465
    %v9978 = vunpack.c.l.b16 %v9466
    %v9979 = vunpack.c.l.b16 %v9467
    %v9980 = vunpack.c.l.b16 %v9468
    %v9981 = vunpack.c.l.b16 %v9469
    %v9982 = vunpack.c.l.b16 %v9470
    %v9983 = vunpack.c.l.b16 %v9471
    %v9984 = vunpack.c.l.b16 %v9472
    %v9985 = vunpack.c.l.b16 %v9473
    %v9986 = vunpack.c.l.b16 %v9474
    %v9987 = vunpack.c.l.b16 %v9475
    %v9988 = vunpack.c.l.b16 %v9476
    %v9989 = vunpack.c.l.b16 %v9477
    %v9990 = vunpack.c.l.b16 %v9478
    %v9991 = vunpack.c.l.b16 %v9479
    %v9992 = vunpack.c.l.b16 %v9480
    %v9993 = vunpack.c.l.b16 %v9481
    %v9994 = vunpack.c.l.b16 %v9482
    %v9995 = vunpack.c.l.b16 %v9483
    %v9996 = vunpack.c.l.b16 %v9484
    %v9997 = vunpack.c.l.b16 %v9485
    %v9998 = vunpack.c.l.b16 %v9486
    %v9999 = vunpack.c.l.b16 %v9487
    %v10000 = vunpack.c.l.b16 %v9488
    %v10001 = vunpack.c.l.b16 %v9489
    %v10002 = vunpack.c.l.b16 %v9490
    %v10003 = vunpack.c.l.b16 %v9491
    %v10004 = vunpack.c.l.b16 %v9492
    %v10005 = vunpack.c.l.b16 %v9493
    %v10006 = vunpack.c.l.b16 %v9494
    %v10007 = vunpack.c.l.b16 %v9495
    %v10008 = vunpack.c.l.b16 %v9496
    %v10009 = vunpack.c.l.b16 %v9497
    %v10010 = vunpack.c.l.b16 %v9498
    %v10011 = vunpack.c.l.b16 %v9499
    %v10012 = vunpack.c.l.b16 %v9500
    %v10013 = vunpack.c.l.b16 %v9501
    %v10014 = vunpack.c.l.b16 %v9502
    %v10015 = vunpack.c.l.b16 %v9503
    %v10016 = vunpack.c.l.b16 %v9504
    %v10017 = vunpack.c.l.b16 %v9505
    %v10018 = vunpack.c.l.b16 %v9506
    %v10019 = vunpack.c.l.b16 %v9507
    %v10020 = vunpack.c.l.b16 %v9508
    %v10021 = vunpack.c.l.b16 %v9509
    %v10022 = vunpack.c.l.b16 %v9510
    %v10023 = vunpack.c.l.b16 %v9511
    %v10024 = vunpack.c.l.b16 %v9512
    %v10025 = vunpack.c.l.b16 %v9513
    %v10026 = vunpack.c.l.b16 %v9514
    %v10027 = vunpack.c.l.b16 %v9515
    %v10028 = vunpack.c.l.b16 %v9516
    %v10029 = vunpack.c.l.b16 %v9517
    %v10030 = vunpack.c.l.b16 %v9518
    %v10031 = vunpack.c.l.b16 %v9519
    %v10032 = vunpack.c.l.b16 %v9520
    %v10033 = vunpack.c.l.b16 %v9521
    %v10034 = vunpack.c.l.b16 %v9522
    %v10035 = vunpack.c.l.b16 %v9523
    %v10036 = vunpack.c.l.b16 %v9524
    %v10037 = vunpack.c.l.b16 %v9525
    %v10038 = vunpack.c.l.b16 %v9526
    %v10039 = vunpack.c.l.b16 %v9527
    %v10040 = vunpack.c.l.b16 %v9528
    %v10041 = vunpack.c.l.b16 %v9529
    %v10042 = vunpack.c.l.b16 %v9530
    %v10043 = vunpack.c.l.b16 %v9531
    %v10044 = vunpack.c.l.b16 %v9532
    %v10045 = vunpack.c.l.b16 %v9533
    %v10046 = vunpack.c.l.b16 %v9534
    %v10047 = vunpack.c.l.b16 %v9535
    %v10048 = vunpack.c.l.b16 %v9536
    %v10049 = vunpack.c.l.b16 %v9537
    %v10050 = vunpack.c.l.b16 %v9538
    %v10051 = vunpack.c.l.b16 %v9539
    %v10052 = vunpack.c.l.b16 %v9540
    %v10053 = vunpack.c.l.b16 %v9541
    %v10054 = vunpack.c.l.b16 %v9542
    %v10055 = vunpack.c.l.b16 %v9543
    %v10056 = vunpack.c.l.b16 %v9544
    %v10057 = vunpack.c.l.b16 %v9545
    %v10058 = vunpack.c.l.b16 %v9546
    %v10059 = vunpack.c.l.b16 %v9547
    %v10060 = vunpack.c.l.b16 %v9548
    %v10061 = vunpack.c.l.b16 %v9549
    %v10062 = vunpack.c.l.b16 %v9550
    %v10063 = vunpack.c.l.b16 %v9551
    %v10064 = vunpack.c.l.b16 %v9552
    %v10065 = vunpack.c.l.b16 %v9553
    %v10066 = vunpack.c.l.b16 %v9554
    %v10067 = vunpack.c.l.b16 %v9555
    %v10068 = vunpack.c.l.b16 %v9556
    %v10069 = vunpack.c.l.b16 %v9557
    %v10070 = vunpack.c.l.b16 %v9558
    %v10071 = vunpack.c.l.b16 %v9559
    %v10072 = vunpack.c.l.b16 %v9560
    %v10073 = vunpack.c.l.b16 %v9561
    %v10074 = vunpack.c.l.b16 %v9562
    %v10075 = vunpack.c.l.b16 %v9563
    %v10076 = vunpack.c.l.b16 %v9564
    %v10077 = vunpack.c.l.b16 %v9565
    %v10078 = vunpack.c.l.b16 %v9566
    %v10079 = vunpack.c.l.b16 %v9567
    %v10080 = vunpack.c.l.b16 %v9568
    %v10081 = vunpack.c.l.b16 %v9569
    %v10082 = vunpack.c.l.b16 %v9570
    %v10083 = vunpack.c.l.b16 %v9571
    %v10084 = vunpack.c.l.b16 %v9572
    %v10085 = vunpack.c.l.b16 %v9573
    %v10086 = vunpack.c.l.b16 %v9574
    %v10087 = vunpack.c.l.b16 %v9575
    %v10088 = vunpack.c.l.b16 %v9576
    %v10089 = vunpack.c.l.b16 %v9577
    %v10090 = vunpack.c.l.b16 %v9578
    %v10091 = vunpack.c.l.b16 %v9579
    %v10092 = vunpack.c.l.b16 %v9580
    %v10093 = vunpack.c.l.b16 %v9581
    %v10094 = vunpack.c.l.b16 %v9582
    %v10095 = vunpack.c.l.b16 %v9583
    %v10096 = vunpack.c.l.b16 %v9584
    %v10097 = vunpack.c.l.b16 %v9585
    %v10098 = vunpack.c.l.b16 %v9586
    %v10099 = vunpack.c.l.b16 %v9587
    %v10100 = vunpack.c.l.b16 %v9588
    %v10101 = vunpack.c.l.b16 %v9589
    %v10102 = vunpack.c.l.b16 %v9590
    %v10103 = vunpack.c.l.b16 %v9591
    %v10104 = vunpack.c.l.b16 %v9592
    %v10105 = vunpack.c.l.b16 %v9593
    %v10106 = vunpack.c.l.b16 %v9594
    %v10107 = vunpack.c.l.b16 %v9595
    %v10108 = vunpack.c.l.b16 %v9596
    %v10109 = vunpack.c.l.b16 %v9597
    %v10110 = vunpack.c.l.b16 %v9598
    %v10111 = vunpack.c.l.b16 %v9599
    %v10112 = vunpack.c.l.b16 %v9600
    %v10113 = vunpack.c.l.b16 %v9601
    %v10114 = vunpack.c.l.b16 %v9602
    %v10115 = vunpack.c.l.b16 %v9603
    %v10116 = vunpack.c.l.b16 %v9604
    %v10117 = vunpack.c.l.b16 %v9605
    %v10118 = vunpack.c.l.b16 %v9606
    %v10119 = vunpack.c.l.b16 %v9607
    %v10120 = vunpack.c.l.b16 %v9608
    %v10121 = vunpack.c.l.b16 %v9609
    %v10122 = vunpack.c.l.b16 %v9610
    %v10123 = vunpack.c.l.b16 %v9611
    %v10124 = vunpack.c.l.b16 %v9612
    %v10125 = vunpack.c.l.b16 %v9613
    %v10126 = vunpack.c.l.b16 %v9614
    %v10127 = vunpack.c.l.b16 %v9615
    %v10128 = vunpack.c.l.b16 %v9616
    %v10129 = vunpack.c.l.b16 %v9617
    %v10130 = vunpack.c.l.b16 %v9618
    %v10131 = vunpack.c.l.b16 %v9619
    %v10132 = vunpack.c.l.b16 %v9620
    %v10133 = vunpack.c.l.b16 %v9621
    %v10134 = vunpack.c.l.b16 %v9622
    %v10135 = vunpack.c.l.b16 %v9623
    %v10136 = vunpack.c.l.b16 %v9624
    %v10137 = vunpack.c.l.b16 %v9625
    %v10138 = vunpack.c.l.b16 %v9626
    %v10139 = vunpack.c.l.b16 %v9627
    %v10140 = vunpack.c.l.b16 %v9628
    %v10141 = vunpack.c.l.b16 %v9629
    %v10142 = vunpack.c.l.b16 %v9630
    %v10143 = vunpack.c.l.b16 %v9631
    %v10144 = vunpack.c.l.b16 %v9632
    %v10145 = vunpack.c.l.b16 %v9633
    %v10146 = vunpack.c.l.b16 %v9634
    %v10147 = vunpack.c.l.b16 %v9635
    %v10148 = vunpack.c.l.b16 %v9636
    %v10149 = vunpack.c.l.b16 %v9637
    %v10150 = vunpack.c.l.b16 %v9638
    %v10151 = vunpack.c.l.b16 %v9639
    %v10152 = vunpack.c.l.b16 %v9640
    %v10153 = vunpack.c.l.b16 %v9641
    %v10154 = vunpack.c.l.b16 %v9642
    %v10155 = vunpack.c.l.b16 %v9643
    %v10156 = vunpack.c.l.b16 %v9644
    %v10157 = vunpack.c.l.b16 %v9645
    %v10158 = vunpack.c.l.b16 %v9646
    %v10159 = vunpack.c.l.b16 %v9647
    %v10160 = vunpack.c.l.b16 %v9648
    %v10161 = vunpack.c.l.b16 %v9649
    %v10162 = vunpack.c.l.b16 %v9650
    %v10163 = vunpack.c.l.b16 %v9651
    %v10164 = vunpack.c.l.b16 %v9652
    %v10165 = vunpack.c.l.b16 %v9653
    %v10166 = vunpack.c.l.b16 %v9654
    %v10167 = vunpack.c.l.b16 %v9655
    %v10168 = vunpack.c.l.b16 %v9656
    %v10169 = vunpack.c.l.b16 %v9657
    %v10170 = vunpack.c.l.b16 %v9658
    %v10171 = vunpack.c.l.b16 %v9659
    %v10172 = vunpack.c.l.b16 %v9660
    %v10173 = vunpack.c.l.b16 %v9661
    %v10174 = vunpack.c.l.b16 %v9662
    %v10175 = vunpack.c.l.b16 %v9663
    %v10176 = vunpack.c.l.b16 %v9664
    %v10177 = vunpack.c.l.b16 %v9665
    %v10178 = vunpack.c.l.b16 %v9666
    %v10179 = vunpack.c.l.b16 %v9667
    %v10180 = vunpack.c.l.b16 %v9668
    %v10181 = vunpack.c.l.b16 %v9669
    %v10182 = vunpack.c.l.b16 %v9670
    %v10183 = vunpack.c.l.b16 %v9671
    %v10184 = vunpack.c.l.b16 %v9672
    %v10185 = vunpack.c.l.b16 %v9673
    %v10186 = vunpack.c.l.b16 %v9674
    %v10187 = vunpack.c.l.b16 %v9675
    %v10188 = vunpack.c.l.b16 %v9676
    %v10189 = vunpack.c.l.b16 %v9677
    %v10190 = vunpack.c.l.b16 %v9678
    %v10191 = vunpack.c.l.b16 %v9679
    %v10192 = vunpack.c.l.b16 %v9680
    %v10193 = vunpack.c.l.b16 %v9681
    %v10194 = vunpack.c.l.b16 %v9682
    %v10195 = vunpack.c.l.b16 %v9683
    %v10196 = vunpack.c.l.b16 %v9684
    %v10197 = vunpack.c.l.b16 %v9685
    %v10198 = vunpack.c.l.b16 %v9686
    %v10199 = vunpack.c.l.b16 %v9687
    %v10200 = vunpack.c.l.b16 %v9688
    %v10201 = vunpack.c.l.b16 %v9689
    %v10202 = vunpack.c.l.b16 %v9690
    %v10203 = vunpack.c.l.b16 %v9691
    %v10204 = vunpack.c.l.b16 %v9692
    %v10205 = vunpack.c.l.b16 %v9693
    %v10206 = vunpack.c.l.b16 %v9694
    %v10207 = vunpack.c.l.b16 %v9695
    %v10208 = vunpack.c.l.b16 %v9696
    %v10209 = vunpack.c.l.b16 %v9697
    %v10210 = vunpack.c.l.b16 %v9698
    %v10211 = vunpack.c.l.b16 %v9699
    %v10212 = vunpack.c.l.b16 %v9700
    %v10213 = vunpack.c.l.b16 %v9701
    %v10214 = vunpack.c.l.b16 %v9702
    %v10215 = vunpack.c.l.b16 %v9703
    %v10216 = vunpack.c.l.b16 %v9704
    %v10217 = vunpack.c.l.b16 %v9705
    %v10218 = vpack.c.b16 %v9963, %v9962
    %v10219 = vpack.c.b16 %v9965, %v9964
    %v10220 = vpack.c.b16 %v9967, %v9966
    %v10221 = vpack.c.b16 %v9969, %v9968
    %v10222 = vpack.c.b16 %v9971, %v9970
    %v10223 = vpack.c.b16 %v9973, %v9972
    %v10224 = vpack.c.b16 %v9975, %v9974
    %v10225 = vpack.c.b16 %v9977, %v9976
    %v10226 = vpack.c.b16 %v9979, %v9978
    %v10227 = vpack.c.b16 %v9981, %v9980
    %v10228 = vpack.c.b16 %v9983, %v9982
    %v10229 = vpack.c.b16 %v9985, %v9984
    %v10230 = vpack.c.b16 %v9987, %v9986
    %v10231 = vpack.c.b16 %v9989, %v9988
    %v10232 = vpack.c.b16 %v9991, %v9990
    %v10233 = vpack.c.b16 %v9993, %v9992
    %v10234 = vpack.c.b16 %v9995, %v9994
    %v10235 = vpack.c.b16 %v9997, %v9996
    %v10236 = vpack.c.b16 %v9999, %v9998
    %v10237 = vpack.c.b16 %v10001, %v10000
    %v10238 = vpack.c.b16 %v10003, %v10002
    %v10239 = vpack.c.b16 %v10005, %v10004
    %v10240 = vpack.c.b16 %v10007, %v10006
    %v10241 = vpack.c.b16 %v10009, %v10008
    %v10242 = vpack.c.b16 %v10011, %v10010
    %v10243 = vpack.c.b16 %v10013, %v10012
    %v10244 = vpack.c.b16 %v10015, %v10014
    %v10245 = vpack.c.b16 %v10017, %v10016
    %v10246 = vpack.c.b16 %v10019, %v10018
    %v10247 = vpack.c.b16 %v10021, %v10020
    %v10248 = vpack.c.b16 %v10023, %v10022
    %v10249 = vpack.c.b16 %v10025, %v10024
    %v10250 = vpack.c.b16 %v10027, %v10026
    %v10251 = vpack.c.b16 %v10029, %v10028
    %v10252 = vpack.c.b16 %v10031, %v10030
    %v10253 = vpack.c.b16 %v10033, %v10032
    %v10254 = vpack.c.b16 %v10035, %v10034
    %v10255 = vpack.c.b16 %v10037, %v10036
    %v10256 = vpack.c.b16 %v10039, %v10038
    %v10257 = vpack.c.b16 %v10041, %v10040
    %v10258 = vpack.c.b16 %v10043, %v10042
    %v10259 = vpack.c.b16 %v10045, %v10044
    %v10260 = vpack.c.b16 %v10047, %v10046
    %v10261 = vpack.c.b16 %v10049, %v10048
    %v10262 = vpack.c.b16 %v10051, %v10050
    %v10263 = vpack.c.b16 %v10053, %v10052
    %v10264 = vpack.c.b16 %v10055, %v10054
    %v10265 = vpack.c.b16 %v10057, %v10056
    %v10266 = vpack.c.b16 %v10059, %v10058
    %v10267 = vpack.c.b16 %v10061, %v10060
    %v10268 = vpack.c.b16 %v10063, %v10062
    %v10269 = vpack.c.b16 %v10065, %v10064
    %v10270 = vpack.c.b16 %v10067, %v10066
    %v10271 = vpack.c.b16 %v10069, %v10068
    %v10272 = vpack.c.b16 %v10071, %v10070
    %v10273 = vpack.c.b16 %v10073, %v10072
    %v10274 = vpack.c.b16 %v10075, %v10074
    %v10275 = vpack.c.b16 %v10077, %v10076
    %v10276 = vpack.c.b16 %v10079, %v10078
    %v10277 = vpack.c.b16 %v10081, %v10080
    %v10278 = vpack.c.b16 %v10083, %v10082
    %v10279 = vpack.c.b16 %v10085, %v10084
    %v10280 = vpack.c.b16 %v10087, %v10086
    %v10281 = vpack.c.b16 %v10089, %v10088
    %v10282 = vpack.c.b16 %v10091, %v10090
    %v10283 = vpack.c.b16 %v10093, %v10092
    %v10284 = vpack.c.b16 %v10095, %v10094
    %v10285 = vpack.c.b16 %v10097, %v10096
    %v10286 = vpack.c.b16 %v10099, %v10098
    %v10287 = vpack.c.b16 %v10101, %v10100
    %v10288 = vpack.c.b16 %v10103, %v10102
    %v10289 = vpack.c.b16 %v10105, %v10104
    %v10290 = vpack.c.b16 %v10107, %v10106
    %v10291 = vpack.c.b16 %v10109, %v10108
    %v10292 = vpack.c.b16 %v10111, %v10110
    %v10293 = vpack.c.b16 %v10113, %v10112
    %v10294 = vpack.c.b16 %v10115, %v10114
    %v10295 = vpack.c.b16 %v10117, %v10116
    %v10296 = vpack.c.b16 %v10119, %v10118
    %v10297 = vpack.c.b16 %v10121, %v10120
    %v10298 = vpack.c.b16 %v10123, %v10122
    %v10299 = vpack.c.b16 %v10125, %v10124
    %v10300 = vpack.c.b16 %v10127, %v10126
    %v10301 = vpack.c.b16 %v10129, %v10128
    %v10302 = vpack.c.b16 %v10131, %v10130
    %v10303 = vpack.c.b16 %v10133, %v10132
    %v10304 = vpack.c.b16 %v10135, %v10134
    %v10305 = vpack.c.b16 %v10137, %v10136
    %v10306 = vpack.c.b16 %v10139, %v10138
    %v10307 = vpack.c.b16 %v10141, %v10140
    %v10308 = vpack.c.b16 %v10143, %v10142
    %v10309 = vpack.c.b16 %v10145, %v10144
    %v10310 = vpack.c.b16 %v10147, %v10146
    %v10311 = vpack.c.b16 %v10149, %v10148
    %v10312 = vpack.c.b16 %v10151, %v10150
    %v10313 = vpack.c.b16 %v10153, %v10152
    %v10314 = vpack.c.b16 %v10155, %v10154
    %v10315 = vpack.c.b16 %v10157, %v10156
    %v10316 = vpack.c.b16 %v10159, %v10158
    %v10317 = vpack.c.b16 %v10161, %v10160
    %v10318 = vpack.c.b16 %v10163, %v10162
    %v10319 = vpack.c.b16 %v10165, %v10164
    %v10320 = vpack.c.b16 %v10167, %v10166
    %v10321 = vpack.c.b16 %v10169, %v10168
    %v10322 = vpack.c.b16 %v10171, %v10170
    %v10323 = vpack.c.b16 %v10173, %v10172
    %v10324 = vpack.c.b16 %v10175, %v10174
    %v10325 = vpack.c.b16 %v10177, %v10176
    %v10326 = vpack.c.b16 %v10179, %v10178
    %v10327 = vpack.c.b16 %v10181, %v10180
    %v10328 = vpack.c.b16 %v10183, %v10182
    %v10329 = vpack.c.b16 %v10185, %v10184
    %v10330 = vpack.c.b16 %v10187, %v10186
    %v10331 = vpack.c.b16 %v10189, %v10188
    %v10332 = vpack.c.b16 %v10191, %v10190
    %v10333 = vpack.c.b16 %v10193, %v10192
    %v10334 = vpack.c.b16 %v10195, %v10194
    %v10335 = vpack.c.b16 %v10197, %v10196
    %v10336 = vpack.c.b16 %v10199, %v10198
    %v10337 = vpack.c.b16 %v10201, %v10200
    %v10338 = vpack.c.b16 %v10203, %v10202
    %v10339 = vpack.c.b16 %v10205, %v10204
    %v10340 = vpack.c.b16 %v10207, %v10206
    %v10341 = vpack.c.b16 %v10209, %v10208
    %v10342 = vpack.c.b16 %v10211, %v10210
    %v10343 = vpack.c.b16 %v10213, %v10212
    %v10344 = vpack.c.b16 %v10215, %v10214
    %v10345 = vpack.c.b16 %v10217, %v10216
    %10474 = vmatprep.subr.bf16.mxu0 0
    %10475 = vmatpush1.bf16.msra.mxu0 %v10218
    %10476 = vmatprep.subr.bf16.mxu0 0
    %10477 = vmatpush1.bf16.msra.mxu0 %v10219
    %10478 = vmatprep.subr.bf16.mxu0 0
    %10479 = vmatpush1.bf16.msra.mxu0 %v10220
    %10480 = vmatprep.subr.bf16.mxu0 0
    %10481 = vmatpush1.bf16.msra.mxu0 %v10221
    %10482 = vmatprep.subr.bf16.mxu0 0
    %10483 = vmatpush1.bf16.msra.mxu0 %v10222
    %10484 = vmatprep.subr.bf16.mxu0 0
    %10485 = vmatpush1.bf16.msra.mxu0 %v10223
    %10486 = vmatprep.subr.bf16.mxu0 0
    %10487 = vmatpush1.bf16.msra.mxu0 %v10224
    %10488 = vmatprep.subr.bf16.mxu0 0
    %10489 = vmatpush1.bf16.msra.mxu0 %v10225
    %10490 = vmatprep.subr.bf16.mxu0 0
    %10491 = vmatpush1.bf16.msra.mxu0 %v10226
    %10492 = vmatprep.subr.bf16.mxu0 0
    %10493 = vmatpush1.bf16.msra.mxu0 %v10227
    %10494 = vmatprep.subr.bf16.mxu0 0
    %10495 = vmatpush1.bf16.msra.mxu0 %v10228
    %10496 = vmatprep.subr.bf16.mxu0 0
    %10497 = vmatpush1.bf16.msra.mxu0 %v10229
    %10498 = vmatprep.subr.bf16.mxu0 0
    %10499 = vmatpush1.bf16.msra.mxu0 %v10230
    %10500 = vmatprep.subr.bf16.mxu0 0
    %10501 = vmatpush1.bf16.msra.mxu0 %v10231
    %10502 = vmatprep.subr.bf16.mxu0 0
    %10503 = vmatpush1.bf16.msra.mxu0 %v10232
    %10504 = vmatprep.subr.bf16.mxu0 0
    %10505 = vmatpush1.bf16.msra.mxu0 %v10233
    %10506 = vmatprep.mubr.bf16.mxu0 %v9163
    %10507 = vmatmul.mubr.bf16.gmra.mrb[0].mxu0 %v9162
    %v10508 = vpop.f32.mrb[0].mxu0
    %v10509 = vadd.f32 0.0, %v10508
    %v10510 = vpop.f32.mrb[0].mxu0
    %v10511 = vpop.f32.mrb[0].mxu0
    %v10512 = vadd.f32 0.0, %v10511
    %v10513 = vpop.f32.mrb[0].mxu0
    %10514 = vmatprep.mubr.bf16.mxu0 %v9165
    %10515 = vmatmul.mubr.bf16.gmra.mrb[0].mxu0 %v9164
    %v10516 = vpop.f32.mrb[0].mxu0
    %v10517 = vadd.f32 0.0, %v10516
    %v10518 = vpop.f32.mrb[0].mxu0
    %v10519 = vpop.f32.mrb[0].mxu0
    %v10520 = vadd.f32 0.0, %v10519
    %v10521 = vpop.f32.mrb[0].mxu0
    %10522 = vmatprep.mubr.bf16.mxu0 %v9167
    %10523 = vmatmul.mubr.bf16.gmra.mrb[0].mxu0 %v9166
    %v10524 = vpop.f32.mrb[0].mxu0
    %v10525 = vadd.f32 0.0, %v10524
    %v10526 = vpop.f32.mrb[0].mxu0
    %v10527 = vpop.f32.mrb[0].mxu0
    %v10528 = vadd.f32 0.0, %v10527
    %v10529 = vpop.f32.mrb[0].mxu0
    %10530 = vmatprep.mubr.bf16.mxu0 %v9169
    %10531 = vmatmul.mubr.bf16.gmra.mrb[0].mxu0 %v9168
    %v10532 = vpop.f32.mrb[0].mxu0
    %v10533 = vadd.f32 0.0, %v10532
    %v10534 = vpop.f32.mrb[0].mxu0
    %v10535 = vpop.f32.mrb[0].mxu0
    %v10536 = vadd.f32 0.0, %v10535
    %v10537 = vpop.f32.mrb[0].mxu0
    %10538 = vdwg.mxu0
    %10539 = vmatprep.subr.bf16.mxu0 0
    %10540 = vmatpush1.bf16.msra.mxu0 %v10234
    %10541 = vmatprep.subr.bf16.mxu0 0
    %10542 = vmatpush1.bf16.msra.mxu0 %v10235
    %10543 = vmatprep.subr.bf16.mxu0 0
    %10544 = vmatpush1.bf16.msra.mxu0 %v10236
    %10545 = vmatprep.subr.bf16.mxu0 0
    %10546 = vmatpush1.bf16.msra.mxu0 %v10237
    %10547 = vmatprep.subr.bf16.mxu0 0
    %10548 = vmatpush1.bf16.msra.mxu0 %v10238
    %10549 = vmatprep.subr.bf16.mxu0 0
    %10550 = vmatpush1.bf16.msra.mxu0 %v10239
    %10551 = vmatprep.subr.bf16.mxu0 0
    %10552 = vmatpush1.bf16.msra.mxu0 %v10240
    %10553 = vmatprep.subr.bf16.mxu0 0
    %10554 = vmatpush1.bf16.msra.mxu0 %v10241
    %10555 = vmatprep.subr.bf16.mxu0 0
    %10556 = vmatpush1.bf16.msra.mxu0 %v10242
    %10557 = vmatprep.subr.bf16.mxu0 0
    %10558 = vmatpush1.bf16.msra.mxu0 %v10243
    %10559 = vmatprep.subr.bf16.mxu0 0
    %10560 = vmatpush1.bf16.msra.mxu0 %v10244
    %10561 = vmatprep.subr.bf16.mxu0 0
    %10562 = vmatpush1.bf16.msra.mxu0 %v10245
    %10563 = vmatprep.subr.bf16.mxu0 0
    %10564 = vmatpush1.bf16.msra.mxu0 %v10246
    %10565 = vmatprep.subr.bf16.mxu0 0
    %10566 = vmatpush1.bf16.msra.mxu0 %v10247
    %10567 = vmatprep.subr.bf16.mxu0 0
    %10568 = vmatpush1.bf16.msra.mxu0 %v10248
    %10569 = vmatprep.subr.bf16.mxu0 0
    %10570 = vmatpush1.bf16.msra.mxu0 %v10249
    %10571 = vmatprep.mubr.bf16.mxu0 %v9203
    %10572 = vmatmul.mubr.bf16.gmra.mrb[0].mxu0 %v9202
    %v10573 = vpop.f32.mrb[0].mxu0
    %v10574 = vadd.f32 %v10509, %v10573
    %v10575 = vpop.f32.mrb[0].mxu0
    %v10576 = vpop.f32.mrb[0].mxu0
    %v10577 = vadd.f32 %v10512, %v10576
    %v10578 = vpop.f32.mrb[0].mxu0
    %10579 = vmatprep.mubr.bf16.mxu0 %v9205
    %10580 = vmatmul.mubr.bf16.gmra.mrb[0].mxu0 %v9204
    %v10581 = vpop.f32.mrb[0].mxu0
    %v10582 = vadd.f32 %v10517, %v10581
    %v10583 = vpop.f32.mrb[0].mxu0
    %v10584 = vpop.f32.mrb[0].mxu0
    %v10585 = vadd.f32 %v10520, %v10584
    %v10586 = vpop.f32.mrb[0].mxu0
    %10587 = vmatprep.mubr.bf16.mxu0 %v9207
    %10588 = vmatmul.mubr.bf16.gmra.mrb[0].mxu0 %v9206
    %v10589 = vpop.f32.mrb[0].mxu0
    %v10590 = vadd.f32 %v10525, %v10589
    %v10591 = vpop.f32.mrb[0].mxu0
    %v10592 = vpop.f32.mrb[0].mxu0
    %v10593 = vadd.f32 %v10528, %v10592
    %v10594 = vpop.f32.mrb[0].mxu0
    %10595 = vmatprep.mubr.bf16.mxu0 %v9209
    %10596 = vmatmul.mubr.bf16.gmra.mrb[0].mxu0 %v9208
    %v10597 = vpop.f32.mrb[0].mxu0
    %v10598 = vadd.f32 %v10533, %v10597
    %v10599 = vpop.f32.mrb[0].mxu0
    %v10600 = vpop.f32.mrb[0].mxu0
    %v10601 = vadd.f32 %v10536, %v10600
    %v10602 = vpop.f32.mrb[0].mxu0
    %10603 = vdwg.mxu0
    %10604 = vmatprep.subr.bf16.mxu0 0
    %10605 = vmatpush1.bf16.msra.mxu0 %v10250
    %10606 = vmatprep.subr.bf16.mxu0 0
    %10607 = vmatpush1.bf16.msra.mxu0 %v10251
    %10608 = vmatprep.subr.bf16.mxu0 0
    %10609 = vmatpush1.bf16.msra.mxu0 %v10252
    %10610 = vmatprep.subr.bf16.mxu0 0
    %10611 = vmatpush1.bf16.msra.mxu0 %v10253
    %10612 = vmatprep.subr.bf16.mxu0 0
    %10613 = vmatpush1.bf16.msra.mxu0 %v10254
    %10614 = vmatprep.subr.bf16.mxu0 0
    %10615 = vmatpush1.bf16.msra.mxu0 %v10255
    %10616 = vmatprep.subr.bf16.mxu0 0
    %10617 = vmatpush1.bf16.msra.mxu0 %v10256
    %10618 = vmatprep.subr.bf16.mxu0 0
    %10619 = vmatpush1.bf16.msra.mxu0 %v10257
    %10620 = vmatprep.subr.bf16.mxu0 0
    %10621 = vmatpush1.bf16.msra.mxu0 %v10258
    %10622 = vmatprep.subr.bf16.mxu0 0
    %10623 = vmatpush1.bf16.msra.mxu0 %v10259
    %10624 = vmatprep.subr.bf16.mxu0 0
    %10625 = vmatpush1.bf16.msra.mxu0 %v10260
    %10626 = vmatprep.subr.bf16.mxu0 0
    %10627 = vmatpush1.bf16.msra.mxu0 %v10261
    %10628 = vmatprep.subr.bf16.mxu0 0
    %10629 = vmatpush1.bf16.msra.mxu0 %v10262
    %10630 = vmatprep.subr.bf16.mxu0 0
    %10631 = vmatpush1.bf16.msra.mxu0 %v10263
    %10632 = vmatprep.subr.bf16.mxu0 0
    %10633 = vmatpush1.bf16.msra.mxu0 %v10264
    %10634 = vmatprep.subr.bf16.mxu0 0
    %10635 = vmatpush1.bf16.msra.mxu0 %v10265
    %10636 = vmatprep.mubr.bf16.mxu0 %v9243
    %10637 = vmatmul.mubr.bf16.gmra.mrb[0].mxu0 %v9242
    %v10638 = vpop.f32.mrb[0].mxu0
    %v10639 = vadd.f32 %v10574, %v10638
    %v10640 = vpop.f32.mrb[0].mxu0
    %v10641 = vpop.f32.mrb[0].mxu0
    %v10642 = vadd.f32 %v10577, %v10641
    %v10643 = vpop.f32.mrb[0].mxu0
    %10644 = vmatprep.mubr.bf16.mxu0 %v9245
    %10645 = vmatmul.mubr.bf16.gmra.mrb[0].mxu0 %v9244
    %v10646 = vpop.f32.mrb[0].mxu0
    %v10647 = vadd.f32 %v10582, %v10646
    %v10648 = vpop.f32.mrb[0].mxu0
    %v10649 = vpop.f32.mrb[0].mxu0
    %v10650 = vadd.f32 %v10585, %v10649
    %v10651 = vpop.f32.mrb[0].mxu0
    %10652 = vmatprep.mubr.bf16.mxu0 %v9247
    %10653 = vmatmul.mubr.bf16.gmra.mrb[0].mxu0 %v9246
    %v10654 = vpop.f32.mrb[0].mxu0
    %v10655 = vadd.f32 %v10590, %v10654
    %v10656 = vpop.f32.mrb[0].mxu0
    %v10657 = vpop.f32.mrb[0].mxu0
    %v10658 = vadd.f32 %v10593, %v10657
    %v10659 = vpop.f32.mrb[0].mxu0
    %10660 = vmatprep.mubr.bf16.mxu0 %v9249
    %10661 = vmatmul.mubr.bf16.gmra.mrb[0].mxu0 %v9248
    %v10662 = vpop.f32.mrb[0].mxu0
    %v10663 = vadd.f32 %v10598, %v10662
    %v10664 = vpop.f32.mrb[0].mxu0
    %v10665 = vpop.f32.mrb[0].mxu0
    %v10666 = vadd.f32 %v10601, %v10665
    %v10667 = vpop.f32.mrb[0].mxu0
    %10668 = vdwg.mxu0
    %10669 = vmatprep.subr.bf16.mxu0 0
    %10670 = vmatpush1.bf16.msra.mxu0 %v10266
    %10671 = vmatprep.subr.bf16.mxu0 0
    %10672 = vmatpush1.bf16.msra.mxu0 %v10267
    %10673 = vmatprep.subr.bf16.mxu0 0
    %10674 = vmatpush1.bf16.msra.mxu0 %v10268
    %10675 = vmatprep.subr.bf16.mxu0 0
    %10676 = vmatpush1.bf16.msra.mxu0 %v10269
    %10677 = vmatprep.subr.bf16.mxu0 0
    %10678 = vmatpush1.bf16.msra.mxu0 %v10270
    %10679 = vmatprep.subr.bf16.mxu0 0
    %10680 = vmatpush1.bf16.msra.mxu0 %v10271
    %10681 = vmatprep.subr.bf16.mxu0 0
    %10682 = vmatpush1.bf16.msra.mxu0 %v10272
    %10683 = vmatprep.subr.bf16.mxu0 0
    %10684 = vmatpush1.bf16.msra.mxu0 %v10273
    %10685 = vmatprep.subr.bf16.mxu0 0
    %10686 = vmatpush1.bf16.msra.mxu0 %v10274
    %10687 = vmatprep.subr.bf16.mxu0 0
    %10688 = vmatpush1.bf16.msra.mxu0 %v10275
    %10689 = vmatprep.subr.bf16.mxu0 0
    %10690 = vmatpush1.bf16.msra.mxu0 %v10276
    %10691 = vmatprep.subr.bf16.mxu0 0
    %10692 = vmatpush1.bf16.msra.mxu0 %v10277
    %10693 = vmatprep.subr.bf16.mxu0 0
    %10694 = vmatpush1.bf16.msra.mxu0 %v10278
    %10695 = vmatprep.subr.bf16.mxu0 0
    %10696 = vmatpush1.bf16.msra.mxu0 %v10279
    %10697 = vmatprep.subr.bf16.mxu0 0
    %10698 = vmatpush1.bf16.msra.mxu0 %v10280
    %10699 = vmatprep.subr.bf16.mxu0 0
    %10700 = vmatpush1.bf16.msra.mxu0 %v10281
    %10701 = vmatprep.mubr.bf16.mxu0 %v9283
    %10702 = vmatmul.mubr.bf16.gmra.mrb[0].mxu0 %v9282
    %v10703 = vpop.f32.mrb[0].mxu0
    %v10704 = vadd.f32 %v10639, %v10703
    %v10705 = vpop.f32.mrb[0].mxu0
    %v10706 = vpop.f32.mrb[0].mxu0
    %v10707 = vadd.f32 %v10642, %v10706
    %v10708 = vpop.f32.mrb[0].mxu0
    %10709 = vmatprep.mubr.bf16.mxu0 %v9285
    %10710 = vmatmul.mubr.bf16.gmra.mrb[0].mxu0 %v9284
    %v10711 = vpop.f32.mrb[0].mxu0
    %v10712 = vadd.f32 %v10647, %v10711
    %v10713 = vpop.f32.mrb[0].mxu0
    %v10714 = vpop.f32.mrb[0].mxu0
    %v10715 = vadd.f32 %v10650, %v10714
    %v10716 = vpop.f32.mrb[0].mxu0
    %10717 = vmatprep.mubr.bf16.mxu0 %v9287
    %10718 = vmatmul.mubr.bf16.gmra.mrb[0].mxu0 %v9286
    %v10719 = vpop.f32.mrb[0].mxu0
    %v10720 = vadd.f32 %v10655, %v10719
    %v10721 = vpop.f32.mrb[0].mxu0
    %v10722 = vpop.f32.mrb[0].mxu0
    %v10723 = vadd.f32 %v10658, %v10722
    %v10724 = vpop.f32.mrb[0].mxu0
    %10725 = vmatprep.mubr.bf16.mxu0 %v9289
    %10726 = vmatmul.mubr.bf16.gmra.mrb[0].mxu0 %v9288
    %v10727 = vpop.f32.mrb[0].mxu0
    %v10728 = vadd.f32 %v10663, %v10727
    %v10729 = vpop.f32.mrb[0].mxu0
    %v10730 = vpop.f32.mrb[0].mxu0
    %v10731 = vadd.f32 %v10666, %v10730
    %v10732 = vpop.f32.mrb[0].mxu0
    %10733 = vdwg.mxu0
    %10734 = vmatprep.subr.bf16.mxu0 0
    %10735 = vmatpush1.bf16.msra.mxu0 %v10282
    %10736 = vmatprep.subr.bf16.mxu0 0
    %10737 = vmatpush1.bf16.msra.mxu0 %v10283
    %10738 = vmatprep.subr.bf16.mxu0 0
    %10739 = vmatpush1.bf16.msra.mxu0 %v10284
    %10740 = vmatprep.subr.bf16.mxu0 0
    %10741 = vmatpush1.bf16.msra.mxu0 %v10285
    %10742 = vmatprep.subr.bf16.mxu0 0
    %10743 = vmatpush1.bf16.msra.mxu0 %v10286
    %10744 = vmatprep.subr.bf16.mxu0 0
    %10745 = vmatpush1.bf16.msra.mxu0 %v10287
    %10746 = vmatprep.subr.bf16.mxu0 0
    %10747 = vmatpush1.bf16.msra.mxu0 %v10288
    %10748 = vmatprep.subr.bf16.mxu0 0
    %10749 = vmatpush1.bf16.msra.mxu0 %v10289
    %10750 = vmatprep.subr.bf16.mxu0 0
    %10751 = vmatpush1.bf16.msra.mxu0 %v10290
    %10752 = vmatprep.subr.bf16.mxu0 0
    %10753 = vmatpush1.bf16.msra.mxu0 %v10291
    %10754 = vmatprep.subr.bf16.mxu0 0
    %10755 = vmatpush1.bf16.msra.mxu0 %v10292
    %10756 = vmatprep.subr.bf16.mxu0 0
    %10757 = vmatpush1.bf16.msra.mxu0 %v10293
    %10758 = vmatprep.subr.bf16.mxu0 0
    %10759 = vmatpush1.bf16.msra.mxu0 %v10294
    %10760 = vmatprep.subr.bf16.mxu0 0
    %10761 = vmatpush1.bf16.msra.mxu0 %v10295
    %10762 = vmatprep.subr.bf16.mxu0 0
    %10763 = vmatpush1.bf16.msra.mxu0 %v10296
    %10764 = vmatprep.subr.bf16.mxu0 0
    %10765 = vmatpush1.bf16.msra.mxu0 %v10297
    %10766 = vmatprep.mubr.bf16.mxu0 %v9323
    %10767 = vmatmul.mubr.bf16.gmra.mrb[0].mxu0 %v9322
    %v10768 = vpop.f32.mrb[0].mxu0
    %v10769 = vadd.f32 %v10704, %v10768
    %v10770 = vpop.f32.mrb[0].mxu0
    %v10771 = vpop.f32.mrb[0].mxu0
    %v10772 = vadd.f32 %v10707, %v10771
    %v10773 = vpop.f32.mrb[0].mxu0
    %10774 = vmatprep.mubr.bf16.mxu0 %v9325
    %10775 = vmatmul.mubr.bf16.gmra.mrb[0].mxu0 %v9324
    %v10776 = vpop.f32.mrb[0].mxu0
    %v10777 = vadd.f32 %v10712, %v10776
    %v10778 = vpop.f32.mrb[0].mxu0
    %v10779 = vpop.f32.mrb[0].mxu0
    %v10780 = vadd.f32 %v10715, %v10779
    %v10781 = vpop.f32.mrb[0].mxu0
    %10782 = vmatprep.mubr.bf16.mxu0 %v9327
    %10783 = vmatmul.mubr.bf16.gmra.mrb[0].mxu0 %v9326
    %v10784 = vpop.f32.mrb[0].mxu0
    %v10785 = vadd.f32 %v10720, %v10784
    %v10786 = vpop.f32.mrb[0].mxu0
    %v10787 = vpop.f32.mrb[0].mxu0
    %v10788 = vadd.f32 %v10723, %v10787
    %v10789 = vpop.f32.mrb[0].mxu0
    %10790 = vmatprep.mubr.bf16.mxu0 %v9329
    %10791 = vmatmul.mubr.bf16.gmra.mrb[0].mxu0 %v9328
    %v10792 = vpop.f32.mrb[0].mxu0
    %v10793 = vadd.f32 %v10728, %v10792
    %v10794 = vpop.f32.mrb[0].mxu0
    %v10795 = vpop.f32.mrb[0].mxu0
    %v10796 = vadd.f32 %v10731, %v10795
    %v10797 = vpop.f32.mrb[0].mxu0
    %10798 = vdwg.mxu0
    %10799 = vmatprep.subr.bf16.mxu0 0
    %10800 = vmatpush1.bf16.msra.mxu0 %v10298
    %10801 = vmatprep.subr.bf16.mxu0 0
    %10802 = vmatpush1.bf16.msra.mxu0 %v10299
    %10803 = vmatprep.subr.bf16.mxu0 0
    %10804 = vmatpush1.bf16.msra.mxu0 %v10300
    %10805 = vmatprep.subr.bf16.mxu0 0
    %10806 = vmatpush1.bf16.msra.mxu0 %v10301
    %10807 = vmatprep.subr.bf16.mxu0 0
    %10808 = vmatpush1.bf16.msra.mxu0 %v10302
    %10809 = vmatprep.subr.bf16.mxu0 0
    %10810 = vmatpush1.bf16.msra.mxu0 %v10303
    %10811 = vmatprep.subr.bf16.mxu0 0
    %10812 = vmatpush1.bf16.msra.mxu0 %v10304
    %10813 = vmatprep.subr.bf16.mxu0 0
    %10814 = vmatpush1.bf16.msra.mxu0 %v10305
    %10815 = vmatprep.subr.bf16.mxu0 0
    %10816 = vmatpush1.bf16.msra.mxu0 %v10306
    %10817 = vmatprep.subr.bf16.mxu0 0
    %10818 = vmatpush1.bf16.msra.mxu0 %v10307
    %10819 = vmatprep.subr.bf16.mxu0 0
    %10820 = vmatpush1.bf16.msra.mxu0 %v10308
    %10821 = vmatprep.subr.bf16.mxu0 0
    %10822 = vmatpush1.bf16.msra.mxu0 %v10309
    %10823 = vmatprep.subr.bf16.mxu0 0
    %10824 = vmatpush1.bf16.msra.mxu0 %v10310
    %10825 = vmatprep.subr.bf16.mxu0 0
    %10826 = vmatpush1.bf16.msra.mxu0 %v10311
    %10827 = vmatprep.subr.bf16.mxu0 0
    %10828 = vmatpush1.bf16.msra.mxu0 %v10312
    %10829 = vmatprep.subr.bf16.mxu0 0
    %10830 = vmatpush1.bf16.msra.mxu0 %v10313
    %10831 = vmatprep.mubr.bf16.mxu0 %v9363
    %10832 = vmatmul.mubr.bf16.gmra.mrb[0].mxu0 %v9362
    %v10833 = vpop.f32.mrb[0].mxu0
    %v10834 = vadd.f32 %v10769, %v10833
    %v10835 = vpop.f32.mrb[0].mxu0
    %v10836 = vpop.f32.mrb[0].mxu0
    %v10837 = vadd.f32 %v10772, %v10836
    %v10838 = vpop.f32.mrb[0].mxu0
    %10839 = vmatprep.mubr.bf16.mxu0 %v9365
    %10840 = vmatmul.mubr.bf16.gmra.mrb[0].mxu0 %v9364
    %v10841 = vpop.f32.mrb[0].mxu0
    %v10842 = vadd.f32 %v10777, %v10841
    %v10843 = vpop.f32.mrb[0].mxu0
    %v10844 = vpop.f32.mrb[0].mxu0
    %v10845 = vadd.f32 %v10780, %v10844
    %v10846 = vpop.f32.mrb[0].mxu0
    %10847 = vmatprep.mubr.bf16.mxu0 %v9367
    %10848 = vmatmul.mubr.bf16.gmra.mrb[0].mxu0 %v9366
    %v10849 = vpop.f32.mrb[0].mxu0
    %v10850 = vadd.f32 %v10785, %v10849
    %v10851 = vpop.f32.mrb[0].mxu0
    %v10852 = vpop.f32.mrb[0].mxu0
    %v10853 = vadd.f32 %v10788, %v10852
    %v10854 = vpop.f32.mrb[0].mxu0
    %10855 = vmatprep.mubr.bf16.mxu0 %v9369
    %10856 = vmatmul.mubr.bf16.gmra.mrb[0].mxu0 %v9368
    %v10857 = vpop.f32.mrb[0].mxu0
    %v10858 = vadd.f32 %v10793, %v10857
    %v10859 = vpop.f32.mrb[0].mxu0
    %v10860 = vpop.f32.mrb[0].mxu0
    %v10861 = vadd.f32 %v10796, %v10860
    %v10862 = vpop.f32.mrb[0].mxu0
    %10863 = vdwg.mxu0
    %10864 = vmatprep.subr.bf16.mxu0 0
    %10865 = vmatpush1.bf16.msra.mxu0 %v10314
    %10866 = vmatprep.subr.bf16.mxu0 0
    %10867 = vmatpush1.bf16.msra.mxu0 %v10315
    %10868 = vmatprep.subr.bf16.mxu0 0
    %10869 = vmatpush1.bf16.msra.mxu0 %v10316
    %10870 = vmatprep.subr.bf16.mxu0 0
    %10871 = vmatpush1.bf16.msra.mxu0 %v10317
    %10872 = vmatprep.subr.bf16.mxu0 0
    %10873 = vmatpush1.bf16.msra.mxu0 %v10318
    %10874 = vmatprep.subr.bf16.mxu0 0
    %10875 = vmatpush1.bf16.msra.mxu0 %v10319
    %10876 = vmatprep.subr.bf16.mxu0 0
    %10877 = vmatpush1.bf16.msra.mxu0 %v10320
    %10878 = vmatprep.subr.bf16.mxu0 0
    %10879 = vmatpush1.bf16.msra.mxu0 %v10321
    %10880 = vmatprep.subr.bf16.mxu0 0
    %10881 = vmatpush1.bf16.msra.mxu0 %v10322
    %10882 = vmatprep.subr.bf16.mxu0 0
    %10883 = vmatpush1.bf16.msra.mxu0 %v10323
    %10884 = vmatprep.subr.bf16.mxu0 0
    %10885 = vmatpush1.bf16.msra.mxu0 %v10324
    %10886 = vmatprep.subr.bf16.mxu0 0
    %10887 = vmatpush1.bf16.msra.mxu0 %v10325
    %10888 = vmatprep.subr.bf16.mxu0 0
    %10889 = vmatpush1.bf16.msra.mxu0 %v10326
    %10890 = vmatprep.subr.bf16.mxu0 0
    %10891 = vmatpush1.bf16.msra.mxu0 %v10327
    %10892 = vmatprep.subr.bf16.mxu0 0
    %10893 = vmatpush1.bf16.msra.mxu0 %v10328
    %10894 = vmatprep.subr.bf16.mxu0 0
    %10895 = vmatpush1.bf16.msra.mxu0 %v10329
    %10896 = vmatprep.mubr.bf16.mxu0 %v9403
    %10897 = vmatmul.mubr.bf16.gmra.mrb[0].mxu0 %v9402
    %v10898 = vpop.f32.mrb[0].mxu0
    %v10899 = vadd.f32 %v10834, %v10898
    %v10900 = vpop.f32.mrb[0].mxu0
    %v10901 = vpop.f32.mrb[0].mxu0
    %v10902 = vadd.f32 %v10837, %v10901
    %v10903 = vpop.f32.mrb[0].mxu0
    %10904 = vmatprep.mubr.bf16.mxu0 %v9405
    %10905 = vmatmul.mubr.bf16.gmra.mrb[0].mxu0 %v9404
    %v10906 = vpop.f32.mrb[0].mxu0
    %v10907 = vadd.f32 %v10842, %v10906
    %v10908 = vpop.f32.mrb[0].mxu0
    %v10909 = vpop.f32.mrb[0].mxu0
    %v10910 = vadd.f32 %v10845, %v10909
    %v10911 = vpop.f32.mrb[0].mxu0
    %10912 = vmatprep.mubr.bf16.mxu0 %v9407
    %10913 = vmatmul.mubr.bf16.gmra.mrb[0].mxu0 %v9406
    %v10914 = vpop.f32.mrb[0].mxu0
    %v10915 = vadd.f32 %v10850, %v10914
    %v10916 = vpop.f32.mrb[0].mxu0
    %v10917 = vpop.f32.mrb[0].mxu0
    %v10918 = vadd.f32 %v10853, %v10917
    %v10919 = vpop.f32.mrb[0].mxu0
    %10920 = vmatprep.mubr.bf16.mxu0 %v9409
    %10921 = vmatmul.mubr.bf16.gmra.mrb[0].mxu0 %v9408
    %v10922 = vpop.f32.mrb[0].mxu0
    %v10923 = vadd.f32 %v10858, %v10922
    %v10924 = vpop.f32.mrb[0].mxu0
    %v10925 = vpop.f32.mrb[0].mxu0
    %v10926 = vadd.f32 %v10861, %v10925
    %v10927 = vpop.f32.mrb[0].mxu0
    %10928 = vdwg.mxu0
    %10929 = vmatprep.subr.bf16.mxu0 0
    %10930 = vmatpush1.bf16.msra.mxu0 %v10330
    %10931 = vmatprep.subr.bf16.mxu0 0
    %10932 = vmatpush1.bf16.msra.mxu0 %v10331
    %10933 = vmatprep.subr.bf16.mxu0 0
    %10934 = vmatpush1.bf16.msra.mxu0 %v10332
    %10935 = vmatprep.subr.bf16.mxu0 0
    %10936 = vmatpush1.bf16.msra.mxu0 %v10333
    %10937 = vmatprep.subr.bf16.mxu0 0
    %10938 = vmatpush1.bf16.msra.mxu0 %v10334
    %10939 = vmatprep.subr.bf16.mxu0 0
    %10940 = vmatpush1.bf16.msra.mxu0 %v10335
    %10941 = vmatprep.subr.bf16.mxu0 0
    %10942 = vmatpush1.bf16.msra.mxu0 %v10336
    %10943 = vmatprep.subr.bf16.mxu0 0
    %10944 = vmatpush1.bf16.msra.mxu0 %v10337
    %10945 = vmatprep.subr.bf16.mxu0 0
    %10946 = vmatpush1.bf16.msra.mxu0 %v10338
    %10947 = vmatprep.subr.bf16.mxu0 0
    %10948 = vmatpush1.bf16.msra.mxu0 %v10339
    %10949 = vmatprep.subr.bf16.mxu0 0
    %10950 = vmatpush1.bf16.msra.mxu0 %v10340
    %10951 = vmatprep.subr.bf16.mxu0 0
    %10952 = vmatpush1.bf16.msra.mxu0 %v10341
    %10953 = vmatprep.subr.bf16.mxu0 0
    %10954 = vmatpush1.bf16.msra.mxu0 %v10342
    %10955 = vmatprep.subr.bf16.mxu0 0
    %10956 = vmatpush1.bf16.msra.mxu0 %v10343
    %10957 = vmatprep.subr.bf16.mxu0 0
    %10958 = vmatpush1.bf16.msra.mxu0 %v10344
    %10959 = vmatprep.subr.bf16.mxu0 0
    %10960 = vmatpush1.bf16.msra.mxu0 %v10345
    %10961 = vmatprep.mubr.bf16.mxu0 %v9443
    %10962 = vmatmul.mubr.bf16.gmra.mrb[0].mxu0 %v9442
    %v10963 = vpop.f32.mrb[0].mxu0
    %v10964 = vadd.f32 %v10899, %v10963
    %v10965 = vpop.f32.mrb[0].mxu0
    %v10966 = vpop.f32.mrb[0].mxu0
    %v10967 = vadd.f32 %v10902, %v10966
    %v10968 = vpop.f32.mrb[0].mxu0
    %10969 = vmatprep.mubr.bf16.mxu0 %v9445
    %10970 = vmatmul.mubr.bf16.gmra.mrb[0].mxu0 %v9444
    %v10971 = vpop.f32.mrb[0].mxu0
    %v10972 = vadd.f32 %v10907, %v10971
    %v10973 = vpop.f32.mrb[0].mxu0
    %v10974 = vpop.f32.mrb[0].mxu0
    %v10975 = vadd.f32 %v10910, %v10974
    %v10976 = vpop.f32.mrb[0].mxu0
    %10977 = vmatprep.mubr.bf16.mxu0 %v9447
    %10978 = vmatmul.mubr.bf16.gmra.mrb[0].mxu0 %v9446
    %v10979 = vpop.f32.mrb[0].mxu0
    %v10980 = vadd.f32 %v10915, %v10979
    %v10981 = vpop.f32.mrb[0].mxu0
    %v10982 = vpop.f32.mrb[0].mxu0
    %v10983 = vadd.f32 %v10918, %v10982
    %v10984 = vpop.f32.mrb[0].mxu0
    %10985 = vmatprep.mubr.bf16.mxu0 %v9449
    %10986 = vmatmul.mubr.bf16.gmra.mrb[0].mxu0 %v9448
    %v10987 = vpop.f32.mrb[0].mxu0
    %v10988 = vadd.f32 %v10923, %v10987
    %v10989 = vpop.f32.mrb[0].mxu0
    %v10990 = vpop.f32.mrb[0].mxu0
    %v10991 = vadd.f32 %v10926, %v10990
    %v10992 = vpop.f32.mrb[0].mxu0
    %10993 = vdwg.mxu0
    %v10994 = vld [vmem:[%s17] sm:$0xf]
    %v10995 = vld [vmem:[%s17 + $0x4] sm:$0xf]
    %v10996 = vld [vmem:[%s17 + $0x8] sm:$0xf]
    %v10997 = vld [vmem:[%s17 + $0xc] sm:$0xf]
    %v10998 = vld [vmem:[%s17 + $0x10] sm:$0xf]
    %v10999 = vld [vmem:[%s17 + $0x14] sm:$0xf]
    %v11000 = vld [vmem:[%s17 + $0x18] sm:$0xf]
    %v11001 = vld [vmem:[%s17 + $0x1c] sm:$0xf]
    %v11002 = vld [vmem:[%s17 + $0x20] sm:$0xf]
    %v11003 = vld [vmem:[%s17 + $0x24] sm:$0xf]
    %v11004 = vld [vmem:[%s17 + $0x28] sm:$0xf]
    %v11005 = vld [vmem:[%s17 + $0x2c] sm:$0xf]
    %v11006 = vld [vmem:[%s17 + $0x30] sm:$0xf]
    %v11007 = vld [vmem:[%s17 + $0x34] sm:$0xf]
    %v11008 = vld [vmem:[%s17 + $0x38] sm:$0xf]
    %v11009 = vld [vmem:[%s17 + $0x3c] sm:$0xf]
    %v11010 = vld [vmem:[%s17 + $0x40] sm:$0xf]
    %v11011 = vld [vmem:[%s17 + $0x44] sm:$0xf]
    %v11012 = vld [vmem:[%s17 + $0x48] sm:$0xf]
    %v11013 = vld [vmem:[%s17 + $0x4c] sm:$0xf]
    %v11014 = vld [vmem:[%s17 + $0x50] sm:$0xf]
    %v11015 = vld [vmem:[%s17 + $0x54] sm:$0xf]
    %v11016 = vld [vmem:[%s17 + $0x58] sm:$0xf]
    %v11017 = vld [vmem:[%s17 + $0x5c] sm:$0xf]
    %v11018 = vld [vmem:[%s17 + $0x60] sm:$0xf]
    %v11019 = vld [vmem:[%s17 + $0x64] sm:$0xf]
    %v11020 = vld [vmem:[%s17 + $0x68] sm:$0xf]
    %v11021 = vld [vmem:[%s17 + $0x6c] sm:$0xf]
    %v11022 = vld [vmem:[%s17 + $0x70] sm:$0xf]
    %v11023 = vld [vmem:[%s17 + $0x74] sm:$0xf]
    %v11024 = vld [vmem:[%s17 + $0x78] sm:$0xf]
    %v11025 = vld [vmem:[%s17 + $0x7c] sm:$0xf]
    %v11026 = vld [vmem:[#allocation22] sm:$0x1]
    %v11028 = vlaneseq
    %v11029 = vshrl.u32 %v11028, 7
    %v11030 = vsub.s32 0, %v11029
    %v11031 = vrot.slane %v11026, %v11030
    %v11065 = vunpack.c.l.b16 %v10994
    %v11066 = vunpack.c.l.b16 %v10995
    %v11067 = vunpack.c.l.b16 %v10996
    %v11068 = vunpack.c.l.b16 %v10997
    %v11069 = vunpack.c.l.b16 %v10998
    %v11070 = vunpack.c.l.b16 %v10999
    %v11071 = vunpack.c.l.b16 %v11000
    %v11072 = vunpack.c.l.b16 %v11001
    %v11073 = vunpack.c.l.b16 %v11002
    %v11074 = vunpack.c.l.b16 %v11003
    %v11075 = vunpack.c.l.b16 %v11004
    %v11076 = vunpack.c.l.b16 %v11005
    %v11077 = vunpack.c.l.b16 %v11006
    %v11078 = vunpack.c.l.b16 %v11007
    %v11079 = vunpack.c.l.b16 %v11008
    %v11080 = vunpack.c.l.b16 %v11009
    %v11081 = vunpack.c.l.b16 %v11010
    %v11082 = vunpack.c.l.b16 %v11011
    %v11083 = vunpack.c.l.b16 %v11012
    %v11084 = vunpack.c.l.b16 %v11013
    %v11085 = vunpack.c.l.b16 %v11014
    %v11086 = vunpack.c.l.b16 %v11015
    %v11087 = vunpack.c.l.b16 %v11016
    %v11088 = vunpack.c.l.b16 %v11017
    %v11089 = vunpack.c.l.b16 %v11018
    %v11090 = vunpack.c.l.b16 %v11019
    %v11091 = vunpack.c.l.b16 %v11020
    %v11092 = vunpack.c.l.b16 %v11021
    %v11093 = vunpack.c.l.b16 %v11022
    %v11094 = vunpack.c.l.b16 %v11023
    %v11095 = vunpack.c.l.b16 %v11024
    %v11096 = vunpack.c.l.b16 %v11025
    %v11097 = vpack.c.b16 %v11066, %v11065
    %v11098 = vpack.c.b16 %v11068, %v11067
    %v11099 = vpack.c.b16 %v11070, %v11069
    %v11100 = vpack.c.b16 %v11072, %v11071
    %v11101 = vpack.c.b16 %v11074, %v11073
    %v11102 = vpack.c.b16 %v11076, %v11075
    %v11103 = vpack.c.b16 %v11078, %v11077
    %v11104 = vpack.c.b16 %v11080, %v11079
    %v11105 = vpack.c.b16 %v11082, %v11081
    %v11106 = vpack.c.b16 %v11084, %v11083
    %v11107 = vpack.c.b16 %v11086, %v11085
    %v11108 = vpack.c.b16 %v11088, %v11087
    %v11109 = vpack.c.b16 %v11090, %v11089
    %v11110 = vpack.c.b16 %v11092, %v11091
    %v11111 = vpack.c.b16 %v11094, %v11093
    %v11112 = vpack.c.b16 %v11096, %v11095
    %11129 = vmatprep.subr.bf16.mxu0 0
    %11130 = vmatpush1.bf16.msra.mxu0 %v11097
    %11131 = vmatprep.subr.bf16.mxu0 0
    %11132 = vmatpush1.bf16.msra.mxu0 %v11098
    %11133 = vmatprep.subr.bf16.mxu0 0
    %11134 = vmatpush1.bf16.msra.mxu0 %v11099
    %11135 = vmatprep.subr.bf16.mxu0 0
    %11136 = vmatpush1.bf16.msra.mxu0 %v11100
    %11137 = vmatprep.subr.bf16.mxu0 0
    %11138 = vmatpush1.bf16.msra.mxu0 %v11101
    %11139 = vmatprep.subr.bf16.mxu0 0
    %11140 = vmatpush1.bf16.msra.mxu0 %v11102
    %11141 = vmatprep.subr.bf16.mxu0 0
    %11142 = vmatpush1.bf16.msra.mxu0 %v11103
    %11143 = vmatprep.subr.bf16.mxu0 0
    %11144 = vmatpush1.bf16.msra.mxu0 %v11104
    %11145 = vmatprep.subr.bf16.mxu0 0
    %11146 = vmatpush1.bf16.msra.mxu0 %v11105
    %11147 = vmatprep.subr.bf16.mxu0 0
    %11148 = vmatpush1.bf16.msra.mxu0 %v11106
    %11149 = vmatprep.subr.bf16.mxu0 0
    %11150 = vmatpush1.bf16.msra.mxu0 %v11107
    %11151 = vmatprep.subr.bf16.mxu0 0
    %11152 = vmatpush1.bf16.msra.mxu0 %v11108
    %11153 = vmatprep.subr.bf16.mxu0 0
    %11154 = vmatpush1.bf16.msra.mxu0 %v11109
    %11155 = vmatprep.subr.bf16.mxu0 0
    %11156 = vmatpush1.bf16.msra.mxu0 %v11110
    %11157 = vmatprep.subr.bf16.mxu0 0
    %11158 = vmatpush1.bf16.msra.mxu0 %v11111
    %11159 = vmatprep.subr.bf16.mxu0 0
    %11160 = vmatpush1.bf16.msra.mxu0 %v11112
    %11161 = vmatprep.mubr.bf16.mxu0 %v4844
    %11162 = vmatmul.mubr.bf16.gmra.mrb[0].mxu0 %v4843
    %v11163 = vpop.f32.mrb[0].mxu0
    %v11164 = vadd.f32 %v11031, %v11163
    %v11165 = vpop.f32.mrb[0].mxu0
    %v11166 = vpop.f32.mrb[0].mxu0
    %v11167 = vadd.f32 %v11031, %v11166
    %v11168 = vpop.f32.mrb[0].mxu0
    %11169 = vmatprep.mubr.bf16.mxu0 %v4846
    %11170 = vmatmul.mubr.bf16.gmra.mrb[0].mxu0 %v4845
    %v11171 = vpop.f32.mrb[0].mxu0
    %v11172 = vadd.f32 %v11031, %v11171
    %v11173 = vpop.f32.mrb[0].mxu0
    %v11174 = vpop.f32.mrb[0].mxu0
    %v11175 = vadd.f32 %v11031, %v11174
    %v11176 = vpop.f32.mrb[0].mxu0
    %11177 = vmatprep.mubr.bf16.mxu0 %v4848
    %11178 = vmatmul.mubr.bf16.gmra.mrb[0].mxu0 %v4847
    %v11179 = vpop.f32.mrb[0].mxu0
    %v11180 = vadd.f32 %v11031, %v11179
    %v11181 = vpop.f32.mrb[0].mxu0
    %v11182 = vpop.f32.mrb[0].mxu0
    %v11183 = vadd.f32 %v11031, %v11182
    %v11184 = vpop.f32.mrb[0].mxu0
    %11185 = vmatprep.mubr.bf16.mxu0 %v4850
    %11186 = vmatmul.mubr.bf16.gmra.mrb[0].mxu0 %v4849
    %v11187 = vpop.f32.mrb[0].mxu0
    %v11188 = vadd.f32 %v11031, %v11187
    %v11189 = vpop.f32.mrb[0].mxu0
    %v11190 = vpop.f32.mrb[0].mxu0
    %v11191 = vadd.f32 %v11031, %v11190
    %v11192 = vpop.f32.mrb[0].mxu0
    %11193 = vdwg.mxu0
    %v11194 = vadd.f32 %v11164, %v10964
    %v11195 = vadd.f32 %v11167, %v10967
    %v11196 = vadd.f32 %v11172, %v10972
    %v11197 = vadd.f32 %v11175, %v10975
    %v11198 = vadd.f32 %v11180, %v10980
    %v11199 = vadd.f32 %v11183, %v10983
    %v11200 = vadd.f32 %v11188, %v10988
    %v11201 = vadd.f32 %v11191, %v10991
    %vm11202 = vcmask 64512
    %11203 = vst.msk [vmem:[%s19] sm:$0xff] %vm11202, %v11194
    %11204 = vst.msk [vmem:[%s19 + $0x8] sm:$0xff] %vm11202, %v11195
    %11205 = vst.msk [vmem:[%s19 + $0x10] sm:$0xff] %vm11202, %v11196
    %11206 = vst.msk [vmem:[%s19 + $0x18] sm:$0xff] %vm11202, %v11197
    %11207 = vst.msk [vmem:[%s19 + $0x20] sm:$0xff] %vm11202, %v11198
    %11208 = vst.msk [vmem:[%s19 + $0x28] sm:$0xff] %vm11202, %v11199
    %11209 = vst.msk [vmem:[%s19 + $0x30] sm:$0xff] %vm11202, %v11200
    %11210 = vst.msk [vmem:[%s19 + $0x38] sm:$0xff] %vm11202, %v11201
    // Predicated region
    $region134: #{tpu_custom_call.1} parent=1 // pred_check
      _
    $region135: #{tpu_custom_call.1} parent=1 // pred_check_branch
      %11212 = sbr.rel (0) target = $region137
    $region136: #{tpu_custom_call.1} parent=1 // pred_region
      _
    $region137: #{tpu_custom_call.1} parent=1 // pred_fallthru
      _
    // Predicated region
    $region138: #{tpu_custom_call.1} parent=1 // pred_check
      _
    $region139: #{tpu_custom_call.1} parent=1 // pred_check_branch
      %11214 = sbr.rel (0) target = $region141
    $region140: #{tpu_custom_call.1} parent=1 // pred_region
      _
    $region141: #{tpu_custom_call.1} parent=1 // pred_fallthru
      _
    %11215 = vsyncpa [#allocation3], 1
    %11216 = vsyncpa [#allocation5], 1
    %11217 = vsyncpa [#allocation8], 1
    %11218 = vsyncpa [#allocation11], 1
    %11219 = vsyncpa [#allocation14], 1
    %11220 = vsyncpa [#allocation17], 1
    %11221 = vsyncpa [#allocation20], 1
    %11222 = vsyncpa [#allocation23], 1

</llo_original>
